<compile_context>
chip_gen: v6e
topology: v6e:2x2x1
jax: 0.10.0
libtpu: 0.0.40
codegen_flags: <defaults>
</compile_context>

<pallas_src>
import functools

import jax
import jax.numpy as jnp
from jax.experimental import pallas as pl
from jax.experimental.pallas import tpu as pltpu


def _round_up(n, m):
    return ((n + m - 1) // m) * m


def _pad2(a, rows, cols):
    return jnp.pad(a, ((0, rows - a.shape[0]), (0, cols - a.shape[1])))


def prepare_head_params(w_base, w1, b1, w2, b2):
    """One-time weight prep: zero-pad to lane/MXU-friendly shapes, store bf16.

    bf16 halves the dominant HBM weight traffic (the kernel is weight-bandwidth
    bound); zero-padding keeps the math exact and the output store lane-dense.
    Biases stay f32 (they are added to f32 accumulators).
    """
    Kin, F = w_base.shape
    out_dim = w2.shape[1]
    Kp = _round_up(Kin, 128)
    Fp = _round_up(F, 128)        # 1000 -> 1024
    Op = _round_up(out_dim, 128)  # e.g. 64 -> 128
    return dict(
        wb=_pad2(w_base, Kp, Fp).astype(jnp.bfloat16),
        w1=_pad2(w1, Fp, Fp).astype(jnp.bfloat16),
        b1=_pad2(b1.reshape(1, -1), 1, Fp).astype(jnp.float32),
        w2=_pad2(w2, Fp, Op).astype(jnp.bfloat16),
        b2=_pad2(b2.reshape(1, -1), 1, Op).astype(jnp.float32),
        out_dim=out_dim,
    )


def _head_kernel(x_ref, wb_ref, w1_ref, b1_ref, w2_ref, b2_ref, o_ref):
    """Fused chain, one grid step per batch block; all weights VMEM-resident.

    feat = x @ Wb
    h    = feat @ W1 + b1
    out  = h @ W2 + b2        (no ReLU: the module never applies self.R)
    """
    # TODO(synk): `base_model` is an external backbone passed into __init__;
    # stood in here by a flatten + linear projection to 1000 features, fused as
    # the first matmul of the chain.
    feat = jnp.dot(x_ref[...], wb_ref[...],
                   preferred_element_type=jnp.float32)
    h = jnp.dot(feat.astype(w1_ref.dtype), w1_ref[...],
                preferred_element_type=jnp.float32) + b1_ref[...]
    out = jnp.dot(h.astype(w2_ref.dtype), w2_ref[...],
                  preferred_element_type=jnp.float32) + b2_ref[...]
    o_ref[...] = out.astype(o_ref.dtype)


@functools.partial(jax.jit, static_argnames=("out_dim", "tb"))
def light_angles_head_fused(x, wb, w1, b1, w2, b2, *, out_dim, tb=None):
    """x: (B, C, H, W). Weights are the pre-padded bf16 params from prepare_head_params.

    Returns (B, out_dim) f32 heatmap logits.
    """
    B = x.shape[0]
    x_flat = x.reshape(B, -1).astype(jnp.bfloat16)
    Kp, Fp = wb.shape
    Op = w2.shape[1]

    if tb is None:
        # 8-row sublane floor; 256 cap (v6e/v7x MXU height). For B <= 256 this
        # collapses the whole head into a single grid step; for larger batches
        # the "parallel" batch axis lets v7x megacore shard the blocks while the
        # constant-index weight blocks are never re-fetched from HBM.
        tb = max(8, min(_round_up(B, 8), 256))
    Bp = _round_up(max(B, tb), tb)
    x_p = jnp.pad(x_flat, ((0, Bp - B), (0, Kp - x_flat.shape[1])))

    grid = (Bp // tb,)

    out_p = pl.pallas_call(
        _head_kernel,
        out_shape=jax.ShapeDtypeStruct((Bp, Op), jnp.float32),
        grid_spec=pltpu.PrefetchScalarGridSpec(
            num_scalar_prefetch=0,
            grid=grid,
            in_specs=[
                pl.BlockSpec((tb, Kp), lambda i: (i, 0)),   # x_flat (per batch block)
                pl.BlockSpec((Kp, Fp), lambda i: (0, 0)),   # w_base   (resident, fetched once)
                pl.BlockSpec((Fp, Fp), lambda i: (0, 0)),   # W1       (resident, fetched once)
                pl.BlockSpec((1, Fp),  lambda i: (0, 0)),   # b1       (resident)
                pl.BlockSpec((Fp, Op), lambda i: (0, 0)),   # W2       (resident, fetched once)
                pl.BlockSpec((1, Op),  lambda i: (0, 0)),   # b2       (resident)
            ],
            out_specs=pl.BlockSpec((tb, Op), lambda i: (i, 0)),
            scratch_shapes=[],
        ),
        compiler_params=pltpu.CompilerParams(
            # Independent batch blocks: megacore-shardable on v7x once B > tb.
            dimension_semantics=("parallel",),
        ),
    )(x_p, wb, w1, b1, w2, b2)

    return out_p[:B, :out_dim]


if __name__ == "__main__":
    key = jax.random.PRNGKey(0)
    B, C, H, W = 2, 4, 16, 16          # small NCHW input to the (stubbed) backbone
    a_bins, b_bins = 8, 8
    FEAT = 1000                         # fixed by the module definition

    k1, k2, k3, k4, k5, k6 = jax.random.split(key, 6)
    x = jax.random.normal(k1, (B, C, H, W), dtype=jnp.float32)

    # base_model stand-in: flatten + linear projection to 1000 features.
    w_base = jax.random.normal(k2, (C * H * W, FEAT), dtype=jnp.float32) * 0.02
    w1 = jax.random.normal(k3, (FEAT, FEAT), dtype=jnp.float32) * 0.02              # Layer1.weight.T
    b1 = jax.random.normal(k4, (FEAT,), dtype=jnp.float32) * 0.01                   # Layer1.bias
    w2 = jax.random.normal(k5, (FEAT, a_bins * b_bins), dtype=jnp.float32) * 0.02   # Layer_heatmap.weight.T
    b2 = jax.random.normal(k6, (a_bins * b_bins,), dtype=jnp.float32) * 0.01        # Layer_heatmap.bias

    # One-time weight prep (store bf16, pad to lane-dense shapes).
    params = prepare_head_params(w_base, w1, b1, w2, b2)

    heatmap = light_angles_head_fused(
        x, params["wb"], params["w1"], params["b1"], params["w2"], params["b2"],
        out_dim=params["out_dim"])
    heatmap = jax.block_until_ready(heatmap)
    assert heatmap.shape == (B, a_bins * b_bins), heatmap.shape

    # Reference check (mirrors the kernel's bf16 weight/activation streaming).
    xb = x.reshape(B, -1).astype(jnp.bfloat16).astype(jnp.float32)
    wbb = w_base.astype(jnp.bfloat16).astype(jnp.float32)
    w1b = w1.astype(jnp.bfloat16).astype(jnp.float32)
    w2b = w2.astype(jnp.bfloat16).astype(jnp.float32)
    feat_ref = (xb @ wbb).astype(jnp.bfloat16).astype(jnp.float32)
    h_ref = feat_ref @ w1b + b1
    ref = h_ref.astype(jnp.bfloat16).astype(jnp.float32) @ w2b + b2
    err = float(jnp.max(jnp.abs(heatmap - ref)))
    assert jnp.allclose(heatmap, ref, atol=2e-2, rtol=2e-2), f"mismatch vs reference, max abs err {err}"

    print("KERNEL_OK")
</pallas_src>

<mosaic_0001>
module attributes {stable_mosaic.version = 11 : i64} {
  func.func @_head_kernel(%arg0: i32, %arg1: memref<8x1024xbf16, #tpu.memory_space<vmem>>, %arg2: memref<1024x1024xbf16, #tpu.memory_space<vmem>>, %arg3: memref<1024x1024xbf16, #tpu.memory_space<vmem>>, %arg4: memref<1x1024xf32, #tpu.memory_space<vmem>>, %arg5: memref<1024x128xbf16, #tpu.memory_space<vmem>>, %arg6: memref<1x128xf32, #tpu.memory_space<vmem>>, %arg7: memref<8x128xf32, #tpu.memory_space<vmem>>) attributes {dimension_semantics = [#tpu.dimension_semantics<parallel>], iteration_bounds = array<i64: 1>, scalar_prefetch = 0 : i64, scratch_operands = 0 : i64, tpu.core_type = #tpu.core_type<tc>, window_params = [{transform_indices = @transform_0, window_bounds = array<i64: 8, 1024>}, {pipeline_mode = #tpu.pipeline_mode<synchronous>, transform_indices = @transform_1, window_bounds = array<i64: 1024, 1024>}, {pipeline_mode = #tpu.pipeline_mode<synchronous>, transform_indices = @transform_2, window_bounds = array<i64: 1024, 1024>}, {pipeline_mode = #tpu.pipeline_mode<synchronous>, transform_indices = @transform_3, window_bounds = array<i64: 1, 1024>}, {pipeline_mode = #tpu.pipeline_mode<synchronous>, transform_indices = @transform_4, window_bounds = array<i64: 1024, 128>}, {pipeline_mode = #tpu.pipeline_mode<synchronous>, transform_indices = @transform_5, window_bounds = array<i64: 1, 128>}, {transform_indices = @transform_6, window_bounds = array<i64: 8, 128>}]} {
    %c0 = arith.constant 0 : index
    %c0_0 = arith.constant 0 : index
    %0 = vector.load %arg1[%c0, %c0_0] : memref<8x1024xbf16, #tpu.memory_space<vmem>>, vector<8x1024xbf16>
    %c0_1 = arith.constant 0 : index
    %c0_2 = arith.constant 0 : index
    %1 = vector.load %arg2[%c0_1, %c0_2] : memref<1024x1024xbf16, #tpu.memory_space<vmem>>, vector<1024x1024xbf16>
    %cst = arith.constant dense<0.000000e+00> : vector<8x1024xf32>
    %2 = tpu.matmul %0, %1, %cst {dimension_numbers = #tpu.dot_dimension_numbers<[1], [0], [0], [1], [0, 0, 1, 1], [], []>} : vector<8x1024xbf16>, vector<1024x1024xbf16>, vector<8x1024xf32> -> vector<8x1024xf32>
    %3 = arith.truncf %2 : vector<8x1024xf32> to vector<8x1024xbf16>
    %c0_3 = arith.constant 0 : index
    %c0_4 = arith.constant 0 : index
    %4 = vector.load %arg3[%c0_3, %c0_4] : memref<1024x1024xbf16, #tpu.memory_space<vmem>>, vector<1024x1024xbf16>
    %cst_5 = arith.constant dense<0.000000e+00> : vector<8x1024xf32>
    %5 = tpu.matmul %3, %4, %cst_5 {dimension_numbers = #tpu.dot_dimension_numbers<[1], [0], [0], [1], [0, 0, 1, 1], [], []>} : vector<8x1024xbf16>, vector<1024x1024xbf16>, vector<8x1024xf32> -> vector<8x1024xf32>
    %c0_6 = arith.constant 0 : index
    %c0_7 = arith.constant 0 : index
    %6 = vector.load %arg4[%c0_6, %c0_7] : memref<1x1024xf32, #tpu.memory_space<vmem>>, vector<1x1024xf32>
    %7 = vector.broadcast %6 : vector<1x1024xf32> to vector<8x1024xf32>
    %8 = arith.addf %5, %7 : vector<8x1024xf32>
    %9 = arith.truncf %8 : vector<8x1024xf32> to vector<8x1024xbf16>
    %c0_8 = arith.constant 0 : index
    %c0_9 = arith.constant 0 : index
    %10 = vector.load %arg5[%c0_8, %c0_9] : memref<1024x128xbf16, #tpu.memory_space<vmem>>, vector<1024x128xbf16>
    %cst_10 = arith.constant dense<0.000000e+00> : vector<8x128xf32>
    %11 = tpu.matmul %9, %10, %cst_10 {dimension_numbers = #tpu.dot_dimension_numbers<[1], [0], [0], [1], [0, 0, 1, 1], [], []>} : vector<8x1024xbf16>, vector<1024x128xbf16>, vector<8x128xf32> -> vector<8x128xf32>
    %c0_11 = arith.constant 0 : index
    %c0_12 = arith.constant 0 : index
    %12 = vector.load %arg6[%c0_11, %c0_12] : memref<1x128xf32, #tpu.memory_space<vmem>>, vector<1x128xf32>
    %13 = vector.broadcast %12 : vector<1x128xf32> to vector<8x128xf32>
    %14 = arith.addf %11, %13 : vector<8x128xf32>
    %c0_13 = arith.constant 0 : index
    %c0_14 = arith.constant 0 : index
    %15 = vector.load %arg7[%c0_13, %c0_14] : memref<8x128xf32, #tpu.memory_space<vmem>>, vector<8x128xf32>
    tpu.vector_store %arg7[%c0_13, %c0_14], %14 {strides = array<i32>} : memref<8x128xf32, #tpu.memory_space<vmem>>, vector<8x128xf32>,
    return
  }
  func.func @transform_0(%arg0: i32) -> (i32, i32) {
    %c0_i32 = arith.constant 0 : i32
    %c0_i32_0 = arith.constant 0 : i32
    return %arg0, %c0_i32 : i32, i32
  }
  func.func @transform_1(%arg0: i32) -> (i32, i32) {
    %c0_i32 = arith.constant 0 : i32
    %c0_i32_0 = arith.constant 0 : i32
    %c0_i32_1 = arith.constant 0 : i32
    return %c0_i32, %c0_i32_0 : i32, i32
  }
  func.func @transform_2(%arg0: i32) -> (i32, i32) {
    %c0_i32 = arith.constant 0 : i32
    %c0_i32_0 = arith.constant 0 : i32
    %c0_i32_1 = arith.constant 0 : i32
    return %c0_i32, %c0_i32_0 : i32, i32
  }
  func.func @transform_3(%arg0: i32) -> (i32, i32) {
    %c0_i32 = arith.constant 0 : i32
    %c0_i32_0 = arith.constant 0 : i32
    %c0_i32_1 = arith.constant 0 : i32
    return %c0_i32, %c0_i32_0 : i32, i32
  }
  func.func @transform_4(%arg0: i32) -> (i32, i32) {
    %c0_i32 = arith.constant 0 : i32
    %c0_i32_0 = arith.constant 0 : i32
    %c0_i32_1 = arith.constant 0 : i32
    return %c0_i32, %c0_i32_0 : i32, i32
  }
  func.func @transform_5(%arg0: i32) -> (i32, i32) {
    %c0_i32 = arith.constant 0 : i32
    %c0_i32_0 = arith.constant 0 : i32
    %c0_i32_1 = arith.constant 0 : i32
    return %c0_i32, %c0_i32_0 : i32, i32
  }
  func.func @transform_6(%arg0: i32) -> (i32, i32) {
    %c0_i32 = arith.constant 0 : i32
    %c0_i32_0 = arith.constant 0 : i32
    return %arg0, %c0_i32 : i32, i32
  }
}

</mosaic_0001>

<llo_original>
// kernel: light_angles_head_fused.1
$region0: #{light_angles_head_fused.1}
  #allocation0 [shape = 'u32[]', space=smem, size = 0x4, offset = 0x4, fixed_abs, tag = 'smem constant byte address 0x4 - core index']
  #allocation1 [shape = 'u32[144,128]{1,0:T(1,128)}', space=vmem, size = 0x12000, scoped, tag = 'internal scratch']
  %s0 = inlined_call_operand.vmem [shape: bf16[8,1024], index: 0, kind: input, shape index: {}]
  %s1 = inlined_call_operand.hbm [shape: bf16[1024,1024], index: 1, kind: input, shape index: {}]
  %s2 = inlined_call_operand.hbm [shape: bf16[1024,1024], index: 2, kind: input, shape index: {}]
  %s3 = inlined_call_operand.hbm [shape: f32[1,1024], index: 3, kind: input, shape index: {}]
  %s4 = inlined_call_operand.hbm [shape: bf16[1024,128], index: 4, kind: input, shape index: {}]
  %s5 = inlined_call_operand.hbm [shape: f32[1,128], index: 5, kind: input, shape index: {}]
  %s6 = inlined_call_operand.vmem [shape: f32[8,128], index: 6, kind: output, shape index: {}]
  %s7 = sld [smem:[#allocation0]]
  $region54: #{light_angles_head_fused.1} parent=0
    _
  %s9 = ssub.s32 1, %s7
  %s10 = scalar_select 0, %s9, %s7
  $region1: #{light_angles_head_fused.1} parent=0
    #allocation2 [shape = 'u8[2097152]{0}', space=vmem, size = 0x200000, scoped, tag = 'input window, operand 1, single buffered']
    #allocation3 [shape = 's32[1]{0}', space=sflag, size = 0x4, scoped, tag = 'scoped memory for light_angles_head_fused.1']
    #allocation4 [shape = 'u8[2097152]{0}', space=vmem, size = 0x200000, scoped, tag = 'input window, operand 2, single buffered']
    #allocation5 [shape = 's32[1]{0}', space=sflag, size = 0x4, scoped, tag = 'scoped memory for light_angles_head_fused.1']
    #allocation6 [shape = 'u8[4096]{0}', space=vmem, size = 0x1000, scoped, tag = 'input window, operand 3, single buffered']
    #allocation7 [shape = 'u8[262144]{0}', space=vmem, size = 0x40000, scoped, tag = 'input window, operand 4, single buffered']
    #allocation8 [shape = 's32[1]{0}', space=sflag, size = 0x4, scoped, tag = 'scoped memory for light_angles_head_fused.1']
    #allocation9 [shape = 'u8[512]{0}', space=vmem, size = 0x400, scoped, tag = 'input window, operand 5, single buffered']
    %11 = vsyncpa [#allocation3], 0
    %12 = vsyncpa [#allocation5], 0
    %13 = vsyncpa [#allocation8], 0
    // Predicated region
    $region2: #{light_angles_head_fused.1} parent=1 // pred_check
      _
    $region3: #{light_angles_head_fused.1} parent=1 // pred_check_branch
      %15 = sbr.rel (0) target = $region5
    $region4: #{light_angles_head_fused.1} parent=1 // pred_region
      _
    $region5: #{light_angles_head_fused.1} parent=1 // pred_fallthru
      _
    // Predicated region
    $region6: #{light_angles_head_fused.1} parent=1 // pred_check
      _
    $region7: #{light_angles_head_fused.1} parent=1 // pred_check_branch
      %17 = sbr.rel (0) target = $region9
    $region8: #{light_angles_head_fused.1} parent=1 // pred_region
      %s19 = ssub.s32 65536, 65536
      %20 = vsyncadd [#allocation3], %s19
      %s21 = sshll.u32 [#allocation2], 4
      %s22 = int_to_ptr.vmem [resolvable:$true] %s21
      %27 = dma.hbm_to_vmem [thread:$0]  %s1, 65536, %s22, [#allocation3], 512, 512, 32
    $region9: #{light_angles_head_fused.1} parent=1 // pred_fallthru
      _
    // Predicated region
    $region10: #{light_angles_head_fused.1} parent=1 // pred_check
      _
    $region11: #{light_angles_head_fused.1} parent=1 // pred_check_branch
      %29 = sbr.rel (0) target = $region13
    $region12: #{light_angles_head_fused.1} parent=1 // pred_region
      %s31 = ssub.s32 65536, 65536
      %32 = vsyncadd [#allocation5], %s31
      %s33 = sshll.u32 [#allocation4], 4
      %s34 = int_to_ptr.vmem [resolvable:$true] %s33
      %39 = dma.hbm_to_vmem [thread:$0]  %s2, 65536, %s34, [#allocation5], 512, 512, 32
    $region13: #{light_angles_head_fused.1} parent=1 // pred_fallthru
      _
    // Predicated region
    $region14: #{light_angles_head_fused.1} parent=1 // pred_check
      _
    $region15: #{light_angles_head_fused.1} parent=1 // pred_check_branch
      %41 = sbr.rel (0) target = $region17
    $region16: #{light_angles_head_fused.1} parent=1 // pred_region
      %s43 = ssub.s32 128, 128
      %44 = vsyncadd [#allocation5], %s43
      %s46 = sshll.u32 [#allocation6], 4
      %s47 = int_to_ptr.vmem [resolvable:$true] %s46
      %49 = dma.hbm_to_vmem [thread:$0]  %s3, 128, %s47, [#allocation5]
    $region17: #{light_angles_head_fused.1} parent=1 // pred_fallthru
      _
    // Predicated region
    $region18: #{light_angles_head_fused.1} parent=1 // pred_check
      _
    $region19: #{light_angles_head_fused.1} parent=1 // pred_check_branch
      %51 = sbr.rel (0) target = $region21
    $region20: #{light_angles_head_fused.1} parent=1 // pred_region
      %s53 = ssub.s32 8192, 8192
      %54 = vsyncadd [#allocation8], %s53
      %s55 = sshll.u32 [#allocation7], 4
      %s56 = int_to_ptr.vmem [resolvable:$true] %s55
      %61 = dma.hbm_to_vmem [thread:$0]  %s4, 8192, %s56, [#allocation8], 64, 64, 4
    $region21: #{light_angles_head_fused.1} parent=1 // pred_fallthru
      _
    // Predicated region
    $region22: #{light_angles_head_fused.1} parent=1 // pred_check
      _
    $region23: #{light_angles_head_fused.1} parent=1 // pred_check_branch
      %63 = sbr.rel (0) target = $region25
    $region24: #{light_angles_head_fused.1} parent=1 // pred_region
      %s65 = ssub.s32 16, 16
      %66 = vsyncadd [#allocation8], %s65
      %s68 = sshll.u32 [#allocation9], 4
      %s69 = int_to_ptr.vmem [resolvable:$true] %s68
      %71 = dma.hbm_to_vmem [thread:$0]  %s5, 16, %s69, [#allocation8]
    $region25: #{light_angles_head_fused.1} parent=1 // pred_fallthru
      _
    // Predicated region
    $region26: #{light_angles_head_fused.1} parent=1 // pred_check
      _
    $region27: #{light_angles_head_fused.1} parent=1 // pred_check_branch
      %73 = sbr.rel (0) target = $region29
    $region28: #{light_angles_head_fused.1} parent=1 // pred_region
      %74 = dma.done [#allocation3], 65536
    $region29: #{light_angles_head_fused.1} parent=1 // pred_fallthru
      _
    // Predicated region
    $region30: #{light_angles_head_fused.1} parent=1 // pred_check
      _
    $region31: #{light_angles_head_fused.1} parent=1 // pred_check_branch
      %76 = sbr.rel (0) target = $region33
    $region32: #{light_angles_head_fused.1} parent=1 // pred_region
      %77 = dma.done [#allocation5], 65536
    $region33: #{light_angles_head_fused.1} parent=1 // pred_fallthru
      _
    // Predicated region
    $region34: #{light_angles_head_fused.1} parent=1 // pred_check
      _
    $region35: #{light_angles_head_fused.1} parent=1 // pred_check_branch
      %79 = sbr.rel (0) target = $region37
    $region36: #{light_angles_head_fused.1} parent=1 // pred_region
      %80 = dma.done [#allocation5], 128
    $region37: #{light_angles_head_fused.1} parent=1 // pred_fallthru
      _
    // Predicated region
    $region38: #{light_angles_head_fused.1} parent=1 // pred_check
      _
    $region39: #{light_angles_head_fused.1} parent=1 // pred_check_branch
      %82 = sbr.rel (0) target = $region41
    $region40: #{light_angles_head_fused.1} parent=1 // pred_region
      %83 = dma.done [#allocation8], 8192
    $region41: #{light_angles_head_fused.1} parent=1 // pred_fallthru
      _
    // Predicated region
    $region42: #{light_angles_head_fused.1} parent=1 // pred_check
      _
    $region43: #{light_angles_head_fused.1} parent=1 // pred_check_branch
      %85 = sbr.rel (0) target = $region45
    $region44: #{light_angles_head_fused.1} parent=1 // pred_region
      %86 = dma.done [#allocation8], 16
    $region45: #{light_angles_head_fused.1} parent=1 // pred_fallthru
      _
    %v88 = vld [vmem:[%s0] sm:$0xff]
    %v89 = vld [vmem:[%s0 + $0x8] sm:$0xff]
    %v90 = vld [vmem:[%s0 + $0x10] sm:$0xff]
    %v91 = vld [vmem:[%s0 + $0x18] sm:$0xff]
    %v92 = vld [vmem:[#allocation2] sm:$0xff]
    %v93 = vld [vmem:[#allocation2 + $0x8] sm:$0xff]
    %v94 = vld [vmem:[#allocation2 + $0x10] sm:$0xff]
    %v95 = vld [vmem:[#allocation2 + $0x18] sm:$0xff]
    %v96 = vld [vmem:[#allocation2 + $0x20] sm:$0xff]
    %v97 = vld [vmem:[#allocation2 + $0x28] sm:$0xff]
    %v98 = vld [vmem:[#allocation2 + $0x30] sm:$0xff]
    %v99 = vld [vmem:[#allocation2 + $0x38] sm:$0xff]
    %v100 = vld [vmem:[#allocation2 + $0x40] sm:$0xff]
    %v101 = vld [vmem:[#allocation2 + $0x48] sm:$0xff]
    %v102 = vld [vmem:[#allocation2 + $0x50] sm:$0xff]
    %v103 = vld [vmem:[#allocation2 + $0x58] sm:$0xff]
    %v104 = vld [vmem:[#allocation2 + $0x60] sm:$0xff]
    %v105 = vld [vmem:[#allocation2 + $0x68] sm:$0xff]
    %v106 = vld [vmem:[#allocation2 + $0x70] sm:$0xff]
    %v107 = vld [vmem:[#allocation2 + $0x78] sm:$0xff]
    %v108 = vld [vmem:[#allocation2 + $0x80] sm:$0xff]
    %v109 = vld [vmem:[#allocation2 + $0x88] sm:$0xff]
    %v110 = vld [vmem:[#allocation2 + $0x90] sm:$0xff]
    %v111 = vld [vmem:[#allocation2 + $0x98] sm:$0xff]
    %v112 = vld [vmem:[#allocation2 + $0xa0] sm:$0xff]
    %v113 = vld [vmem:[#allocation2 + $0xa8] sm:$0xff]
    %v114 = vld [vmem:[#allocation2 + $0xb0] sm:$0xff]
    %v115 = vld [vmem:[#allocation2 + $0xb8] sm:$0xff]
    %v116 = vld [vmem:[#allocation2 + $0xc0] sm:$0xff]
    %v117 = vld [vmem:[#allocation2 + $0xc8] sm:$0xff]
    %v118 = vld [vmem:[#allocation2 + $0xd0] sm:$0xff]
    %v119 = vld [vmem:[#allocation2 + $0xd8] sm:$0xff]
    %v120 = vld [vmem:[#allocation2 + $0xe0] sm:$0xff]
    %v121 = vld [vmem:[#allocation2 + $0xe8] sm:$0xff]
    %v122 = vld [vmem:[#allocation2 + $0xf0] sm:$0xff]
    %v123 = vld [vmem:[#allocation2 + $0xf8] sm:$0xff]
    %v124 = vld [vmem:[#allocation2 + $0x100] sm:$0xff]
    %v125 = vld [vmem:[#allocation2 + $0x108] sm:$0xff]
    %v126 = vld [vmem:[#allocation2 + $0x110] sm:$0xff]
    %v127 = vld [vmem:[#allocation2 + $0x118] sm:$0xff]
    %v128 = vld [vmem:[#allocation2 + $0x120] sm:$0xff]
    %v129 = vld [vmem:[#allocation2 + $0x128] sm:$0xff]
    %v130 = vld [vmem:[#allocation2 + $0x130] sm:$0xff]
    %v131 = vld [vmem:[#allocation2 + $0x138] sm:$0xff]
    %v132 = vld [vmem:[#allocation2 + $0x140] sm:$0xff]
    %v133 = vld [vmem:[#allocation2 + $0x148] sm:$0xff]
    %v134 = vld [vmem:[#allocation2 + $0x150] sm:$0xff]
    %v135 = vld [vmem:[#allocation2 + $0x158] sm:$0xff]
    %v136 = vld [vmem:[#allocation2 + $0x160] sm:$0xff]
    %v137 = vld [vmem:[#allocation2 + $0x168] sm:$0xff]
    %v138 = vld [vmem:[#allocation2 + $0x170] sm:$0xff]
    %v139 = vld [vmem:[#allocation2 + $0x178] sm:$0xff]
    %v140 = vld [vmem:[#allocation2 + $0x180] sm:$0xff]
    %v141 = vld [vmem:[#allocation2 + $0x188] sm:$0xff]
    %v142 = vld [vmem:[#allocation2 + $0x190] sm:$0xff]
    %v143 = vld [vmem:[#allocation2 + $0x198] sm:$0xff]
    %v144 = vld [vmem:[#allocation2 + $0x1a0] sm:$0xff]
    %v145 = vld [vmem:[#allocation2 + $0x1a8] sm:$0xff]
    %v146 = vld [vmem:[#allocation2 + $0x1b0] sm:$0xff]
    %v147 = vld [vmem:[#allocation2 + $0x1b8] sm:$0xff]
    %v148 = vld [vmem:[#allocation2 + $0x1c0] sm:$0xff]
    %v149 = vld [vmem:[#allocation2 + $0x1c8] sm:$0xff]
    %v150 = vld [vmem:[#allocation2 + $0x1d0] sm:$0xff]
    %v151 = vld [vmem:[#allocation2 + $0x1d8] sm:$0xff]
    %v152 = vld [vmem:[#allocation2 + $0x1e0] sm:$0xff]
    %v153 = vld [vmem:[#allocation2 + $0x1e8] sm:$0xff]
    %v154 = vld [vmem:[#allocation2 + $0x1f0] sm:$0xff]
    %v155 = vld [vmem:[#allocation2 + $0x1f8] sm:$0xff]
    %v156 = vld [vmem:[#allocation2 + $0x200] sm:$0xff]
    %v157 = vld [vmem:[#allocation2 + $0x208] sm:$0xff]
    %v158 = vld [vmem:[#allocation2 + $0x210] sm:$0xff]
    %v159 = vld [vmem:[#allocation2 + $0x218] sm:$0xff]
    %v160 = vld [vmem:[#allocation2 + $0x220] sm:$0xff]
    %v161 = vld [vmem:[#allocation2 + $0x228] sm:$0xff]
    %v162 = vld [vmem:[#allocation2 + $0x230] sm:$0xff]
    %v163 = vld [vmem:[#allocation2 + $0x238] sm:$0xff]
    %v164 = vld [vmem:[#allocation2 + $0x240] sm:$0xff]
    %v165 = vld [vmem:[#allocation2 + $0x248] sm:$0xff]
    %v166 = vld [vmem:[#allocation2 + $0x250] sm:$0xff]
    %v167 = vld [vmem:[#allocation2 + $0x258] sm:$0xff]
    %v168 = vld [vmem:[#allocation2 + $0x260] sm:$0xff]
    %v169 = vld [vmem:[#allocation2 + $0x268] sm:$0xff]
    %v170 = vld [vmem:[#allocation2 + $0x270] sm:$0xff]
    %v171 = vld [vmem:[#allocation2 + $0x278] sm:$0xff]
    %v172 = vld [vmem:[#allocation2 + $0x280] sm:$0xff]
    %v173 = vld [vmem:[#allocation2 + $0x288] sm:$0xff]
    %v174 = vld [vmem:[#allocation2 + $0x290] sm:$0xff]
    %v175 = vld [vmem:[#allocation2 + $0x298] sm:$0xff]
    %v176 = vld [vmem:[#allocation2 + $0x2a0] sm:$0xff]
    %v177 = vld [vmem:[#allocation2 + $0x2a8] sm:$0xff]
    %v178 = vld [vmem:[#allocation2 + $0x2b0] sm:$0xff]
    %v179 = vld [vmem:[#allocation2 + $0x2b8] sm:$0xff]
    %v180 = vld [vmem:[#allocation2 + $0x2c0] sm:$0xff]
    %v181 = vld [vmem:[#allocation2 + $0x2c8] sm:$0xff]
    %v182 = vld [vmem:[#allocation2 + $0x2d0] sm:$0xff]
    %v183 = vld [vmem:[#allocation2 + $0x2d8] sm:$0xff]
    %v184 = vld [vmem:[#allocation2 + $0x2e0] sm:$0xff]
    %v185 = vld [vmem:[#allocation2 + $0x2e8] sm:$0xff]
    %v186 = vld [vmem:[#allocation2 + $0x2f0] sm:$0xff]
    %v187 = vld [vmem:[#allocation2 + $0x2f8] sm:$0xff]
    %v188 = vld [vmem:[#allocation2 + $0x300] sm:$0xff]
    %v189 = vld [vmem:[#allocation2 + $0x308] sm:$0xff]
    %v190 = vld [vmem:[#allocation2 + $0x310] sm:$0xff]
    %v191 = vld [vmem:[#allocation2 + $0x318] sm:$0xff]
    %v192 = vld [vmem:[#allocation2 + $0x320] sm:$0xff]
    %v193 = vld [vmem:[#allocation2 + $0x328] sm:$0xff]
    %v194 = vld [vmem:[#allocation2 + $0x330] sm:$0xff]
    %v195 = vld [vmem:[#allocation2 + $0x338] sm:$0xff]
    %v196 = vld [vmem:[#allocation2 + $0x340] sm:$0xff]
    %v197 = vld [vmem:[#allocation2 + $0x348] sm:$0xff]
    %v198 = vld [vmem:[#allocation2 + $0x350] sm:$0xff]
    %v199 = vld [vmem:[#allocation2 + $0x358] sm:$0xff]
    %v200 = vld [vmem:[#allocation2 + $0x360] sm:$0xff]
    %v201 = vld [vmem:[#allocation2 + $0x368] sm:$0xff]
    %v202 = vld [vmem:[#allocation2 + $0x370] sm:$0xff]
    %v203 = vld [vmem:[#allocation2 + $0x378] sm:$0xff]
    %v204 = vld [vmem:[#allocation2 + $0x380] sm:$0xff]
    %v205 = vld [vmem:[#allocation2 + $0x388] sm:$0xff]
    %v206 = vld [vmem:[#allocation2 + $0x390] sm:$0xff]
    %v207 = vld [vmem:[#allocation2 + $0x398] sm:$0xff]
    %v208 = vld [vmem:[#allocation2 + $0x3a0] sm:$0xff]
    %v209 = vld [vmem:[#allocation2 + $0x3a8] sm:$0xff]
    %v210 = vld [vmem:[#allocation2 + $0x3b0] sm:$0xff]
    %v211 = vld [vmem:[#allocation2 + $0x3b8] sm:$0xff]
    %v212 = vld [vmem:[#allocation2 + $0x3c0] sm:$0xff]
    %v213 = vld [vmem:[#allocation2 + $0x3c8] sm:$0xff]
    %v214 = vld [vmem:[#allocation2 + $0x3d0] sm:$0xff]
    %v215 = vld [vmem:[#allocation2 + $0x3d8] sm:$0xff]
    %v216 = vld [vmem:[#allocation2 + $0x3e0] sm:$0xff]
    %v217 = vld [vmem:[#allocation2 + $0x3e8] sm:$0xff]
    %v218 = vld [vmem:[#allocation2 + $0x3f0] sm:$0xff]
    %v219 = vld [vmem:[#allocation2 + $0x3f8] sm:$0xff]
    %v220 = vld [vmem:[#allocation2 + $0x400] sm:$0xff]
    %v221 = vld [vmem:[#allocation2 + $0x408] sm:$0xff]
    %v222 = vld [vmem:[#allocation2 + $0x410] sm:$0xff]
    %v223 = vld [vmem:[#allocation2 + $0x418] sm:$0xff]
    %v224 = vld [vmem:[#allocation2 + $0x420] sm:$0xff]
    %v225 = vld [vmem:[#allocation2 + $0x428] sm:$0xff]
    %v226 = vld [vmem:[#allocation2 + $0x430] sm:$0xff]
    %v227 = vld [vmem:[#allocation2 + $0x438] sm:$0xff]
    %v228 = vld [vmem:[#allocation2 + $0x440] sm:$0xff]
    %v229 = vld [vmem:[#allocation2 + $0x448] sm:$0xff]
    %v230 = vld [vmem:[#allocation2 + $0x450] sm:$0xff]
    %v231 = vld [vmem:[#allocation2 + $0x458] sm:$0xff]
    %v232 = vld [vmem:[#allocation2 + $0x460] sm:$0xff]
    %v233 = vld [vmem:[#allocation2 + $0x468] sm:$0xff]
    %v234 = vld [vmem:[#allocation2 + $0x470] sm:$0xff]
    %v235 = vld [vmem:[#allocation2 + $0x478] sm:$0xff]
    %v236 = vld [vmem:[#allocation2 + $0x480] sm:$0xff]
    %v237 = vld [vmem:[#allocation2 + $0x488] sm:$0xff]
    %v238 = vld [vmem:[#allocation2 + $0x490] sm:$0xff]
    %v239 = vld [vmem:[#allocation2 + $0x498] sm:$0xff]
    %v240 = vld [vmem:[#allocation2 + $0x4a0] sm:$0xff]
    %v241 = vld [vmem:[#allocation2 + $0x4a8] sm:$0xff]
    %v242 = vld [vmem:[#allocation2 + $0x4b0] sm:$0xff]
    %v243 = vld [vmem:[#allocation2 + $0x4b8] sm:$0xff]
    %v244 = vld [vmem:[#allocation2 + $0x4c0] sm:$0xff]
    %v245 = vld [vmem:[#allocation2 + $0x4c8] sm:$0xff]
    %v246 = vld [vmem:[#allocation2 + $0x4d0] sm:$0xff]
    %v247 = vld [vmem:[#allocation2 + $0x4d8] sm:$0xff]
    %v248 = vld [vmem:[#allocation2 + $0x4e0] sm:$0xff]
    %v249 = vld [vmem:[#allocation2 + $0x4e8] sm:$0xff]
    %v250 = vld [vmem:[#allocation2 + $0x4f0] sm:$0xff]
    %v251 = vld [vmem:[#allocation2 + $0x4f8] sm:$0xff]
    %v252 = vld [vmem:[#allocation2 + $0x500] sm:$0xff]
    %v253 = vld [vmem:[#allocation2 + $0x508] sm:$0xff]
    %v254 = vld [vmem:[#allocation2 + $0x510] sm:$0xff]
    %v255 = vld [vmem:[#allocation2 + $0x518] sm:$0xff]
    %v256 = vld [vmem:[#allocation2 + $0x520] sm:$0xff]
    %v257 = vld [vmem:[#allocation2 + $0x528] sm:$0xff]
    %v258 = vld [vmem:[#allocation2 + $0x530] sm:$0xff]
    %v259 = vld [vmem:[#allocation2 + $0x538] sm:$0xff]
    %v260 = vld [vmem:[#allocation2 + $0x540] sm:$0xff]
    %v261 = vld [vmem:[#allocation2 + $0x548] sm:$0xff]
    %v262 = vld [vmem:[#allocation2 + $0x550] sm:$0xff]
    %v263 = vld [vmem:[#allocation2 + $0x558] sm:$0xff]
    %v264 = vld [vmem:[#allocation2 + $0x560] sm:$0xff]
    %v265 = vld [vmem:[#allocation2 + $0x568] sm:$0xff]
    %v266 = vld [vmem:[#allocation2 + $0x570] sm:$0xff]
    %v267 = vld [vmem:[#allocation2 + $0x578] sm:$0xff]
    %v268 = vld [vmem:[#allocation2 + $0x580] sm:$0xff]
    %v269 = vld [vmem:[#allocation2 + $0x588] sm:$0xff]
    %v270 = vld [vmem:[#allocation2 + $0x590] sm:$0xff]
    %v271 = vld [vmem:[#allocation2 + $0x598] sm:$0xff]
    %v272 = vld [vmem:[#allocation2 + $0x5a0] sm:$0xff]
    %v273 = vld [vmem:[#allocation2 + $0x5a8] sm:$0xff]
    %v274 = vld [vmem:[#allocation2 + $0x5b0] sm:$0xff]
    %v275 = vld [vmem:[#allocation2 + $0x5b8] sm:$0xff]
    %v276 = vld [vmem:[#allocation2 + $0x5c0] sm:$0xff]
    %v277 = vld [vmem:[#allocation2 + $0x5c8] sm:$0xff]
    %v278 = vld [vmem:[#allocation2 + $0x5d0] sm:$0xff]
    %v279 = vld [vmem:[#allocation2 + $0x5d8] sm:$0xff]
    %v280 = vld [vmem:[#allocation2 + $0x5e0] sm:$0xff]
    %v281 = vld [vmem:[#allocation2 + $0x5e8] sm:$0xff]
    %v282 = vld [vmem:[#allocation2 + $0x5f0] sm:$0xff]
    %v283 = vld [vmem:[#allocation2 + $0x5f8] sm:$0xff]
    %v284 = vld [vmem:[#allocation2 + $0x600] sm:$0xff]
    %v285 = vld [vmem:[#allocation2 + $0x608] sm:$0xff]
    %v286 = vld [vmem:[#allocation2 + $0x610] sm:$0xff]
    %v287 = vld [vmem:[#allocation2 + $0x618] sm:$0xff]
    %v288 = vld [vmem:[#allocation2 + $0x620] sm:$0xff]
    %v289 = vld [vmem:[#allocation2 + $0x628] sm:$0xff]
    %v290 = vld [vmem:[#allocation2 + $0x630] sm:$0xff]
    %v291 = vld [vmem:[#allocation2 + $0x638] sm:$0xff]
    %v292 = vld [vmem:[#allocation2 + $0x640] sm:$0xff]
    %v293 = vld [vmem:[#allocation2 + $0x648] sm:$0xff]
    %v294 = vld [vmem:[#allocation2 + $0x650] sm:$0xff]
    %v295 = vld [vmem:[#allocation2 + $0x658] sm:$0xff]
    %v296 = vld [vmem:[#allocation2 + $0x660] sm:$0xff]
    %v297 = vld [vmem:[#allocation2 + $0x668] sm:$0xff]
    %v298 = vld [vmem:[#allocation2 + $0x670] sm:$0xff]
    %v299 = vld [vmem:[#allocation2 + $0x678] sm:$0xff]
    %v300 = vld [vmem:[#allocation2 + $0x680] sm:$0xff]
    %v301 = vld [vmem:[#allocation2 + $0x688] sm:$0xff]
    %v302 = vld [vmem:[#allocation2 + $0x690] sm:$0xff]
    %v303 = vld [vmem:[#allocation2 + $0x698] sm:$0xff]
    %v304 = vld [vmem:[#allocation2 + $0x6a0] sm:$0xff]
    %v305 = vld [vmem:[#allocation2 + $0x6a8] sm:$0xff]
    %v306 = vld [vmem:[#allocation2 + $0x6b0] sm:$0xff]
    %v307 = vld [vmem:[#allocation2 + $0x6b8] sm:$0xff]
    %v308 = vld [vmem:[#allocation2 + $0x6c0] sm:$0xff]
    %v309 = vld [vmem:[#allocation2 + $0x6c8] sm:$0xff]
    %v310 = vld [vmem:[#allocation2 + $0x6d0] sm:$0xff]
    %v311 = vld [vmem:[#allocation2 + $0x6d8] sm:$0xff]
    %v312 = vld [vmem:[#allocation2 + $0x6e0] sm:$0xff]
    %v313 = vld [vmem:[#allocation2 + $0x6e8] sm:$0xff]
    %v314 = vld [vmem:[#allocation2 + $0x6f0] sm:$0xff]
    %v315 = vld [vmem:[#allocation2 + $0x6f8] sm:$0xff]
    %v316 = vld [vmem:[#allocation2 + $0x700] sm:$0xff]
    %v317 = vld [vmem:[#allocation2 + $0x708] sm:$0xff]
    %v318 = vld [vmem:[#allocation2 + $0x710] sm:$0xff]
    %v319 = vld [vmem:[#allocation2 + $0x718] sm:$0xff]
    %v320 = vld [vmem:[#allocation2 + $0x720] sm:$0xff]
    %v321 = vld [vmem:[#allocation2 + $0x728] sm:$0xff]
    %v322 = vld [vmem:[#allocation2 + $0x730] sm:$0xff]
    %v323 = vld [vmem:[#allocation2 + $0x738] sm:$0xff]
    %v324 = vld [vmem:[#allocation2 + $0x740] sm:$0xff]
    %v325 = vld [vmem:[#allocation2 + $0x748] sm:$0xff]
    %v326 = vld [vmem:[#allocation2 + $0x750] sm:$0xff]
    %v327 = vld [vmem:[#allocation2 + $0x758] sm:$0xff]
    %v328 = vld [vmem:[#allocation2 + $0x760] sm:$0xff]
    %v329 = vld [vmem:[#allocation2 + $0x768] sm:$0xff]
    %v330 = vld [vmem:[#allocation2 + $0x770] sm:$0xff]
    %v331 = vld [vmem:[#allocation2 + $0x778] sm:$0xff]
    %v332 = vld [vmem:[#allocation2 + $0x780] sm:$0xff]
    %v333 = vld [vmem:[#allocation2 + $0x788] sm:$0xff]
    %v334 = vld [vmem:[#allocation2 + $0x790] sm:$0xff]
    %v335 = vld [vmem:[#allocation2 + $0x798] sm:$0xff]
    %v336 = vld [vmem:[#allocation2 + $0x7a0] sm:$0xff]
    %v337 = vld [vmem:[#allocation2 + $0x7a8] sm:$0xff]
    %v338 = vld [vmem:[#allocation2 + $0x7b0] sm:$0xff]
    %v339 = vld [vmem:[#allocation2 + $0x7b8] sm:$0xff]
    %v340 = vld [vmem:[#allocation2 + $0x7c0] sm:$0xff]
    %v341 = vld [vmem:[#allocation2 + $0x7c8] sm:$0xff]
    %v342 = vld [vmem:[#allocation2 + $0x7d0] sm:$0xff]
    %v343 = vld [vmem:[#allocation2 + $0x7d8] sm:$0xff]
    %v344 = vld [vmem:[#allocation2 + $0x7e0] sm:$0xff]
    %v345 = vld [vmem:[#allocation2 + $0x7e8] sm:$0xff]
    %v346 = vld [vmem:[#allocation2 + $0x7f0] sm:$0xff]
    %v347 = vld [vmem:[#allocation2 + $0x7f8] sm:$0xff]
    %v348 = vld [vmem:[#allocation2 + $0x800] sm:$0xff]
    %v349 = vld [vmem:[#allocation2 + $0x808] sm:$0xff]
    %v350 = vld [vmem:[#allocation2 + $0x810] sm:$0xff]
    %v351 = vld [vmem:[#allocation2 + $0x818] sm:$0xff]
    %v352 = vld [vmem:[#allocation2 + $0x820] sm:$0xff]
    %v353 = vld [vmem:[#allocation2 + $0x828] sm:$0xff]
    %v354 = vld [vmem:[#allocation2 + $0x830] sm:$0xff]
    %v355 = vld [vmem:[#allocation2 + $0x838] sm:$0xff]
    %v356 = vld [vmem:[#allocation2 + $0x840] sm:$0xff]
    %v357 = vld [vmem:[#allocation2 + $0x848] sm:$0xff]
    %v358 = vld [vmem:[#allocation2 + $0x850] sm:$0xff]
    %v359 = vld [vmem:[#allocation2 + $0x858] sm:$0xff]
    %v360 = vld [vmem:[#allocation2 + $0x860] sm:$0xff]
    %v361 = vld [vmem:[#allocation2 + $0x868] sm:$0xff]
    %v362 = vld [vmem:[#allocation2 + $0x870] sm:$0xff]
    %v363 = vld [vmem:[#allocation2 + $0x878] sm:$0xff]
    %v364 = vld [vmem:[#allocation2 + $0x880] sm:$0xff]
    %v365 = vld [vmem:[#allocation2 + $0x888] sm:$0xff]
    %v366 = vld [vmem:[#allocation2 + $0x890] sm:$0xff]
    %v367 = vld [vmem:[#allocation2 + $0x898] sm:$0xff]
    %v368 = vld [vmem:[#allocation2 + $0x8a0] sm:$0xff]
    %v369 = vld [vmem:[#allocation2 + $0x8a8] sm:$0xff]
    %v370 = vld [vmem:[#allocation2 + $0x8b0] sm:$0xff]
    %v371 = vld [vmem:[#allocation2 + $0x8b8] sm:$0xff]
    %v372 = vld [vmem:[#allocation2 + $0x8c0] sm:$0xff]
    %v373 = vld [vmem:[#allocation2 + $0x8c8] sm:$0xff]
    %v374 = vld [vmem:[#allocation2 + $0x8d0] sm:$0xff]
    %v375 = vld [vmem:[#allocation2 + $0x8d8] sm:$0xff]
    %v376 = vld [vmem:[#allocation2 + $0x8e0] sm:$0xff]
    %v377 = vld [vmem:[#allocation2 + $0x8e8] sm:$0xff]
    %v378 = vld [vmem:[#allocation2 + $0x8f0] sm:$0xff]
    %v379 = vld [vmem:[#allocation2 + $0x8f8] sm:$0xff]
    %v380 = vld [vmem:[#allocation2 + $0x900] sm:$0xff]
    %v381 = vld [vmem:[#allocation2 + $0x908] sm:$0xff]
    %v382 = vld [vmem:[#allocation2 + $0x910] sm:$0xff]
    %v383 = vld [vmem:[#allocation2 + $0x918] sm:$0xff]
    %v384 = vld [vmem:[#allocation2 + $0x920] sm:$0xff]
    %v385 = vld [vmem:[#allocation2 + $0x928] sm:$0xff]
    %v386 = vld [vmem:[#allocation2 + $0x930] sm:$0xff]
    %v387 = vld [vmem:[#allocation2 + $0x938] sm:$0xff]
    %v388 = vld [vmem:[#allocation2 + $0x940] sm:$0xff]
    %v389 = vld [vmem:[#allocation2 + $0x948] sm:$0xff]
    %v390 = vld [vmem:[#allocation2 + $0x950] sm:$0xff]
    %v391 = vld [vmem:[#allocation2 + $0x958] sm:$0xff]
    %v392 = vld [vmem:[#allocation2 + $0x960] sm:$0xff]
    %v393 = vld [vmem:[#allocation2 + $0x968] sm:$0xff]
    %v394 = vld [vmem:[#allocation2 + $0x970] sm:$0xff]
    %v395 = vld [vmem:[#allocation2 + $0x978] sm:$0xff]
    %v396 = vld [vmem:[#allocation2 + $0x980] sm:$0xff]
    %v397 = vld [vmem:[#allocation2 + $0x988] sm:$0xff]
    %v398 = vld [vmem:[#allocation2 + $0x990] sm:$0xff]
    %v399 = vld [vmem:[#allocation2 + $0x998] sm:$0xff]
    %v400 = vld [vmem:[#allocation2 + $0x9a0] sm:$0xff]
    %v401 = vld [vmem:[#allocation2 + $0x9a8] sm:$0xff]
    %v402 = vld [vmem:[#allocation2 + $0x9b0] sm:$0xff]
    %v403 = vld [vmem:[#allocation2 + $0x9b8] sm:$0xff]
    %v404 = vld [vmem:[#allocation2 + $0x9c0] sm:$0xff]
    %v405 = vld [vmem:[#allocation2 + $0x9c8] sm:$0xff]
    %v406 = vld [vmem:[#allocation2 + $0x9d0] sm:$0xff]
    %v407 = vld [vmem:[#allocation2 + $0x9d8] sm:$0xff]
    %v408 = vld [vmem:[#allocation2 + $0x9e0] sm:$0xff]
    %v409 = vld [vmem:[#allocation2 + $0x9e8] sm:$0xff]
    %v410 = vld [vmem:[#allocation2 + $0x9f0] sm:$0xff]
    %v411 = vld [vmem:[#allocation2 + $0x9f8] sm:$0xff]
    %v412 = vld [vmem:[#allocation2 + $0xa00] sm:$0xff]
    %v413 = vld [vmem:[#allocation2 + $0xa08] sm:$0xff]
    %v414 = vld [vmem:[#allocation2 + $0xa10] sm:$0xff]
    %v415 = vld [vmem:[#allocation2 + $0xa18] sm:$0xff]
    %v416 = vld [vmem:[#allocation2 + $0xa20] sm:$0xff]
    %v417 = vld [vmem:[#allocation2 + $0xa28] sm:$0xff]
    %v418 = vld [vmem:[#allocation2 + $0xa30] sm:$0xff]
    %v419 = vld [vmem:[#allocation2 + $0xa38] sm:$0xff]
    %v420 = vld [vmem:[#allocation2 + $0xa40] sm:$0xff]
    %v421 = vld [vmem:[#allocation2 + $0xa48] sm:$0xff]
    %v422 = vld [vmem:[#allocation2 + $0xa50] sm:$0xff]
    %v423 = vld [vmem:[#allocation2 + $0xa58] sm:$0xff]
    %v424 = vld [vmem:[#allocation2 + $0xa60] sm:$0xff]
    %v425 = vld [vmem:[#allocation2 + $0xa68] sm:$0xff]
    %v426 = vld [vmem:[#allocation2 + $0xa70] sm:$0xff]
    %v427 = vld [vmem:[#allocation2 + $0xa78] sm:$0xff]
    %v428 = vld [vmem:[#allocation2 + $0xa80] sm:$0xff]
    %v429 = vld [vmem:[#allocation2 + $0xa88] sm:$0xff]
    %v430 = vld [vmem:[#allocation2 + $0xa90] sm:$0xff]
    %v431 = vld [vmem:[#allocation2 + $0xa98] sm:$0xff]
    %v432 = vld [vmem:[#allocation2 + $0xaa0] sm:$0xff]
    %v433 = vld [vmem:[#allocation2 + $0xaa8] sm:$0xff]
    %v434 = vld [vmem:[#allocation2 + $0xab0] sm:$0xff]
    %v435 = vld [vmem:[#allocation2 + $0xab8] sm:$0xff]
    %v436 = vld [vmem:[#allocation2 + $0xac0] sm:$0xff]
    %v437 = vld [vmem:[#allocation2 + $0xac8] sm:$0xff]
    %v438 = vld [vmem:[#allocation2 + $0xad0] sm:$0xff]
    %v439 = vld [vmem:[#allocation2 + $0xad8] sm:$0xff]
    %v440 = vld [vmem:[#allocation2 + $0xae0] sm:$0xff]
    %v441 = vld [vmem:[#allocation2 + $0xae8] sm:$0xff]
    %v442 = vld [vmem:[#allocation2 + $0xaf0] sm:$0xff]
    %v443 = vld [vmem:[#allocation2 + $0xaf8] sm:$0xff]
    %v444 = vld [vmem:[#allocation2 + $0xb00] sm:$0xff]
    %v445 = vld [vmem:[#allocation2 + $0xb08] sm:$0xff]
    %v446 = vld [vmem:[#allocation2 + $0xb10] sm:$0xff]
    %v447 = vld [vmem:[#allocation2 + $0xb18] sm:$0xff]
    %v448 = vld [vmem:[#allocation2 + $0xb20] sm:$0xff]
    %v449 = vld [vmem:[#allocation2 + $0xb28] sm:$0xff]
    %v450 = vld [vmem:[#allocation2 + $0xb30] sm:$0xff]
    %v451 = vld [vmem:[#allocation2 + $0xb38] sm:$0xff]
    %v452 = vld [vmem:[#allocation2 + $0xb40] sm:$0xff]
    %v453 = vld [vmem:[#allocation2 + $0xb48] sm:$0xff]
    %v454 = vld [vmem:[#allocation2 + $0xb50] sm:$0xff]
    %v455 = vld [vmem:[#allocation2 + $0xb58] sm:$0xff]
    %v456 = vld [vmem:[#allocation2 + $0xb60] sm:$0xff]
    %v457 = vld [vmem:[#allocation2 + $0xb68] sm:$0xff]
    %v458 = vld [vmem:[#allocation2 + $0xb70] sm:$0xff]
    %v459 = vld [vmem:[#allocation2 + $0xb78] sm:$0xff]
    %v460 = vld [vmem:[#allocation2 + $0xb80] sm:$0xff]
    %v461 = vld [vmem:[#allocation2 + $0xb88] sm:$0xff]
    %v462 = vld [vmem:[#allocation2 + $0xb90] sm:$0xff]
    %v463 = vld [vmem:[#allocation2 + $0xb98] sm:$0xff]
    %v464 = vld [vmem:[#allocation2 + $0xba0] sm:$0xff]
    %v465 = vld [vmem:[#allocation2 + $0xba8] sm:$0xff]
    %v466 = vld [vmem:[#allocation2 + $0xbb0] sm:$0xff]
    %v467 = vld [vmem:[#allocation2 + $0xbb8] sm:$0xff]
    %v468 = vld [vmem:[#allocation2 + $0xbc0] sm:$0xff]
    %v469 = vld [vmem:[#allocation2 + $0xbc8] sm:$0xff]
    %v470 = vld [vmem:[#allocation2 + $0xbd0] sm:$0xff]
    %v471 = vld [vmem:[#allocation2 + $0xbd8] sm:$0xff]
    %v472 = vld [vmem:[#allocation2 + $0xbe0] sm:$0xff]
    %v473 = vld [vmem:[#allocation2 + $0xbe8] sm:$0xff]
    %v474 = vld [vmem:[#allocation2 + $0xbf0] sm:$0xff]
    %v475 = vld [vmem:[#allocation2 + $0xbf8] sm:$0xff]
    %v476 = vld [vmem:[#allocation2 + $0xc00] sm:$0xff]
    %v477 = vld [vmem:[#allocation2 + $0xc08] sm:$0xff]
    %v478 = vld [vmem:[#allocation2 + $0xc10] sm:$0xff]
    %v479 = vld [vmem:[#allocation2 + $0xc18] sm:$0xff]
    %v480 = vld [vmem:[#allocation2 + $0xc20] sm:$0xff]
    %v481 = vld [vmem:[#allocation2 + $0xc28] sm:$0xff]
    %v482 = vld [vmem:[#allocation2 + $0xc30] sm:$0xff]
    %v483 = vld [vmem:[#allocation2 + $0xc38] sm:$0xff]
    %v484 = vld [vmem:[#allocation2 + $0xc40] sm:$0xff]
    %v485 = vld [vmem:[#allocation2 + $0xc48] sm:$0xff]
    %v486 = vld [vmem:[#allocation2 + $0xc50] sm:$0xff]
    %v487 = vld [vmem:[#allocation2 + $0xc58] sm:$0xff]
    %v488 = vld [vmem:[#allocation2 + $0xc60] sm:$0xff]
    %v489 = vld [vmem:[#allocation2 + $0xc68] sm:$0xff]
    %v490 = vld [vmem:[#allocation2 + $0xc70] sm:$0xff]
    %v491 = vld [vmem:[#allocation2 + $0xc78] sm:$0xff]
    %v492 = vld [vmem:[#allocation2 + $0xc80] sm:$0xff]
    %v493 = vld [vmem:[#allocation2 + $0xc88] sm:$0xff]
    %v494 = vld [vmem:[#allocation2 + $0xc90] sm:$0xff]
    %v495 = vld [vmem:[#allocation2 + $0xc98] sm:$0xff]
    %v496 = vld [vmem:[#allocation2 + $0xca0] sm:$0xff]
    %v497 = vld [vmem:[#allocation2 + $0xca8] sm:$0xff]
    %v498 = vld [vmem:[#allocation2 + $0xcb0] sm:$0xff]
    %v499 = vld [vmem:[#allocation2 + $0xcb8] sm:$0xff]
    %v500 = vld [vmem:[#allocation2 + $0xcc0] sm:$0xff]
    %v501 = vld [vmem:[#allocation2 + $0xcc8] sm:$0xff]
    %v502 = vld [vmem:[#allocation2 + $0xcd0] sm:$0xff]
    %v503 = vld [vmem:[#allocation2 + $0xcd8] sm:$0xff]
    %v504 = vld [vmem:[#allocation2 + $0xce0] sm:$0xff]
    %v505 = vld [vmem:[#allocation2 + $0xce8] sm:$0xff]
    %v506 = vld [vmem:[#allocation2 + $0xcf0] sm:$0xff]
    %v507 = vld [vmem:[#allocation2 + $0xcf8] sm:$0xff]
    %v508 = vld [vmem:[#allocation2 + $0xd00] sm:$0xff]
    %v509 = vld [vmem:[#allocation2 + $0xd08] sm:$0xff]
    %v510 = vld [vmem:[#allocation2 + $0xd10] sm:$0xff]
    %v511 = vld [vmem:[#allocation2 + $0xd18] sm:$0xff]
    %v512 = vld [vmem:[#allocation2 + $0xd20] sm:$0xff]
    %v513 = vld [vmem:[#allocation2 + $0xd28] sm:$0xff]
    %v514 = vld [vmem:[#allocation2 + $0xd30] sm:$0xff]
    %v515 = vld [vmem:[#allocation2 + $0xd38] sm:$0xff]
    %v516 = vld [vmem:[#allocation2 + $0xd40] sm:$0xff]
    %v517 = vld [vmem:[#allocation2 + $0xd48] sm:$0xff]
    %v518 = vld [vmem:[#allocation2 + $0xd50] sm:$0xff]
    %v519 = vld [vmem:[#allocation2 + $0xd58] sm:$0xff]
    %v520 = vld [vmem:[#allocation2 + $0xd60] sm:$0xff]
    %v521 = vld [vmem:[#allocation2 + $0xd68] sm:$0xff]
    %v522 = vld [vmem:[#allocation2 + $0xd70] sm:$0xff]
    %v523 = vld [vmem:[#allocation2 + $0xd78] sm:$0xff]
    %v524 = vld [vmem:[#allocation2 + $0xd80] sm:$0xff]
    %v525 = vld [vmem:[#allocation2 + $0xd88] sm:$0xff]
    %v526 = vld [vmem:[#allocation2 + $0xd90] sm:$0xff]
    %v527 = vld [vmem:[#allocation2 + $0xd98] sm:$0xff]
    %v528 = vld [vmem:[#allocation2 + $0xda0] sm:$0xff]
    %v529 = vld [vmem:[#allocation2 + $0xda8] sm:$0xff]
    %v530 = vld [vmem:[#allocation2 + $0xdb0] sm:$0xff]
    %v531 = vld [vmem:[#allocation2 + $0xdb8] sm:$0xff]
    %v532 = vld [vmem:[#allocation2 + $0xdc0] sm:$0xff]
    %v533 = vld [vmem:[#allocation2 + $0xdc8] sm:$0xff]
    %v534 = vld [vmem:[#allocation2 + $0xdd0] sm:$0xff]
    %v535 = vld [vmem:[#allocation2 + $0xdd8] sm:$0xff]
    %v536 = vld [vmem:[#allocation2 + $0xde0] sm:$0xff]
    %v537 = vld [vmem:[#allocation2 + $0xde8] sm:$0xff]
    %v538 = vld [vmem:[#allocation2 + $0xdf0] sm:$0xff]
    %v539 = vld [vmem:[#allocation2 + $0xdf8] sm:$0xff]
    %v540 = vld [vmem:[#allocation2 + $0xe00] sm:$0xff]
    %v541 = vld [vmem:[#allocation2 + $0xe08] sm:$0xff]
    %v542 = vld [vmem:[#allocation2 + $0xe10] sm:$0xff]
    %v543 = vld [vmem:[#allocation2 + $0xe18] sm:$0xff]
    %v544 = vld [vmem:[#allocation2 + $0xe20] sm:$0xff]
    %v545 = vld [vmem:[#allocation2 + $0xe28] sm:$0xff]
    %v546 = vld [vmem:[#allocation2 + $0xe30] sm:$0xff]
    %v547 = vld [vmem:[#allocation2 + $0xe38] sm:$0xff]
    %v548 = vld [vmem:[#allocation2 + $0xe40] sm:$0xff]
    %v549 = vld [vmem:[#allocation2 + $0xe48] sm:$0xff]
    %v550 = vld [vmem:[#allocation2 + $0xe50] sm:$0xff]
    %v551 = vld [vmem:[#allocation2 + $0xe58] sm:$0xff]
    %v552 = vld [vmem:[#allocation2 + $0xe60] sm:$0xff]
    %v553 = vld [vmem:[#allocation2 + $0xe68] sm:$0xff]
    %v554 = vld [vmem:[#allocation2 + $0xe70] sm:$0xff]
    %v555 = vld [vmem:[#allocation2 + $0xe78] sm:$0xff]
    %v556 = vld [vmem:[#allocation2 + $0xe80] sm:$0xff]
    %v557 = vld [vmem:[#allocation2 + $0xe88] sm:$0xff]
    %v558 = vld [vmem:[#allocation2 + $0xe90] sm:$0xff]
    %v559 = vld [vmem:[#allocation2 + $0xe98] sm:$0xff]
    %v560 = vld [vmem:[#allocation2 + $0xea0] sm:$0xff]
    %v561 = vld [vmem:[#allocation2 + $0xea8] sm:$0xff]
    %v562 = vld [vmem:[#allocation2 + $0xeb0] sm:$0xff]
    %v563 = vld [vmem:[#allocation2 + $0xeb8] sm:$0xff]
    %v564 = vld [vmem:[#allocation2 + $0xec0] sm:$0xff]
    %v565 = vld [vmem:[#allocation2 + $0xec8] sm:$0xff]
    %v566 = vld [vmem:[#allocation2 + $0xed0] sm:$0xff]
    %v567 = vld [vmem:[#allocation2 + $0xed8] sm:$0xff]
    %v568 = vld [vmem:[#allocation2 + $0xee0] sm:$0xff]
    %v569 = vld [vmem:[#allocation2 + $0xee8] sm:$0xff]
    %v570 = vld [vmem:[#allocation2 + $0xef0] sm:$0xff]
    %v571 = vld [vmem:[#allocation2 + $0xef8] sm:$0xff]
    %v572 = vld [vmem:[#allocation2 + $0xf00] sm:$0xff]
    %v573 = vld [vmem:[#allocation2 + $0xf08] sm:$0xff]
    %v574 = vld [vmem:[#allocation2 + $0xf10] sm:$0xff]
    %v575 = vld [vmem:[#allocation2 + $0xf18] sm:$0xff]
    %v576 = vld [vmem:[#allocation2 + $0xf20] sm:$0xff]
    %v577 = vld [vmem:[#allocation2 + $0xf28] sm:$0xff]
    %v578 = vld [vmem:[#allocation2 + $0xf30] sm:$0xff]
    %v579 = vld [vmem:[#allocation2 + $0xf38] sm:$0xff]
    %v580 = vld [vmem:[#allocation2 + $0xf40] sm:$0xff]
    %v581 = vld [vmem:[#allocation2 + $0xf48] sm:$0xff]
    %v582 = vld [vmem:[#allocation2 + $0xf50] sm:$0xff]
    %v583 = vld [vmem:[#allocation2 + $0xf58] sm:$0xff]
    %v584 = vld [vmem:[#allocation2 + $0xf60] sm:$0xff]
    %v585 = vld [vmem:[#allocation2 + $0xf68] sm:$0xff]
    %v586 = vld [vmem:[#allocation2 + $0xf70] sm:$0xff]
    %v587 = vld [vmem:[#allocation2 + $0xf78] sm:$0xff]
    %v588 = vld [vmem:[#allocation2 + $0xf80] sm:$0xff]
    %v589 = vld [vmem:[#allocation2 + $0xf88] sm:$0xff]
    %v590 = vld [vmem:[#allocation2 + $0xf90] sm:$0xff]
    %v591 = vld [vmem:[#allocation2 + $0xf98] sm:$0xff]
    %v592 = vld [vmem:[#allocation2 + $0xfa0] sm:$0xff]
    %v593 = vld [vmem:[#allocation2 + $0xfa8] sm:$0xff]
    %v594 = vld [vmem:[#allocation2 + $0xfb0] sm:$0xff]
    %v595 = vld [vmem:[#allocation2 + $0xfb8] sm:$0xff]
    %v596 = vld [vmem:[#allocation2 + $0xfc0] sm:$0xff]
    %v597 = vld [vmem:[#allocation2 + $0xfc8] sm:$0xff]
    %v598 = vld [vmem:[#allocation2 + $0xfd0] sm:$0xff]
    %v599 = vld [vmem:[#allocation2 + $0xfd8] sm:$0xff]
    %v600 = vld [vmem:[#allocation2 + $0xfe0] sm:$0xff]
    %v601 = vld [vmem:[#allocation2 + $0xfe8] sm:$0xff]
    %v602 = vld [vmem:[#allocation2 + $0xff0] sm:$0xff]
    %v603 = vld [vmem:[#allocation2 + $0xff8] sm:$0xff]
    %v608 = vunpack.c.l.b16 %v88
    %v609 = vunpack.c.h.b16 %v88
    %v610 = vunpack.c.l.b16 %v89
    %v611 = vunpack.c.h.b16 %v89
    %v612 = vunpack.c.l.b16 %v90
    %v613 = vunpack.c.h.b16 %v90
    %v614 = vunpack.c.l.b16 %v91
    %v615 = vunpack.c.h.b16 %v91
    %v616 = vpack.c.b16 %v608, %v608
    %v617 = vpack.c.b16 %v609, %v609
    %v618 = vpack.c.b16 %v610, %v610
    %v619 = vpack.c.b16 %v611, %v611
    %v620 = vpack.c.b16 %v612, %v612
    %v621 = vpack.c.b16 %v613, %v613
    %v622 = vpack.c.b16 %v614, %v614
    %v623 = vpack.c.b16 %v615, %v615
    %v1144 = vunpack.c.l.b16 %v92
    %v1145 = vunpack.c.h.b16 %v92
    %v1146 = vunpack.c.l.b16 %v93
    %v1147 = vunpack.c.h.b16 %v93
    %v1148 = vunpack.c.l.b16 %v94
    %v1149 = vunpack.c.h.b16 %v94
    %v1150 = vunpack.c.l.b16 %v95
    %v1151 = vunpack.c.h.b16 %v95
    %v1152 = vunpack.c.l.b16 %v96
    %v1153 = vunpack.c.h.b16 %v96
    %v1154 = vunpack.c.l.b16 %v97
    %v1155 = vunpack.c.h.b16 %v97
    %v1156 = vunpack.c.l.b16 %v98
    %v1157 = vunpack.c.h.b16 %v98
    %v1158 = vunpack.c.l.b16 %v99
    %v1159 = vunpack.c.h.b16 %v99
    %v1160 = vunpack.c.l.b16 %v100
    %v1161 = vunpack.c.h.b16 %v100
    %v1162 = vunpack.c.l.b16 %v101
    %v1163 = vunpack.c.h.b16 %v101
    %v1164 = vunpack.c.l.b16 %v102
    %v1165 = vunpack.c.h.b16 %v102
    %v1166 = vunpack.c.l.b16 %v103
    %v1167 = vunpack.c.h.b16 %v103
    %v1168 = vunpack.c.l.b16 %v104
    %v1169 = vunpack.c.h.b16 %v104
    %v1170 = vunpack.c.l.b16 %v105
    %v1171 = vunpack.c.h.b16 %v105
    %v1172 = vunpack.c.l.b16 %v106
    %v1173 = vunpack.c.h.b16 %v106
    %v1174 = vunpack.c.l.b16 %v107
    %v1175 = vunpack.c.h.b16 %v107
    %v1176 = vunpack.c.l.b16 %v108
    %v1177 = vunpack.c.h.b16 %v108
    %v1178 = vunpack.c.l.b16 %v109
    %v1179 = vunpack.c.h.b16 %v109
    %v1180 = vunpack.c.l.b16 %v110
    %v1181 = vunpack.c.h.b16 %v110
    %v1182 = vunpack.c.l.b16 %v111
    %v1183 = vunpack.c.h.b16 %v111
    %v1184 = vunpack.c.l.b16 %v112
    %v1185 = vunpack.c.h.b16 %v112
    %v1186 = vunpack.c.l.b16 %v113
    %v1187 = vunpack.c.h.b16 %v113
    %v1188 = vunpack.c.l.b16 %v114
    %v1189 = vunpack.c.h.b16 %v114
    %v1190 = vunpack.c.l.b16 %v115
    %v1191 = vunpack.c.h.b16 %v115
    %v1192 = vunpack.c.l.b16 %v116
    %v1193 = vunpack.c.h.b16 %v116
    %v1194 = vunpack.c.l.b16 %v117
    %v1195 = vunpack.c.h.b16 %v117
    %v1196 = vunpack.c.l.b16 %v118
    %v1197 = vunpack.c.h.b16 %v118
    %v1198 = vunpack.c.l.b16 %v119
    %v1199 = vunpack.c.h.b16 %v119
    %v1200 = vunpack.c.l.b16 %v120
    %v1201 = vunpack.c.h.b16 %v120
    %v1202 = vunpack.c.l.b16 %v121
    %v1203 = vunpack.c.h.b16 %v121
    %v1204 = vunpack.c.l.b16 %v122
    %v1205 = vunpack.c.h.b16 %v122
    %v1206 = vunpack.c.l.b16 %v123
    %v1207 = vunpack.c.h.b16 %v123
    %v1208 = vunpack.c.l.b16 %v124
    %v1209 = vunpack.c.h.b16 %v124
    %v1210 = vunpack.c.l.b16 %v125
    %v1211 = vunpack.c.h.b16 %v125
    %v1212 = vunpack.c.l.b16 %v126
    %v1213 = vunpack.c.h.b16 %v126
    %v1214 = vunpack.c.l.b16 %v127
    %v1215 = vunpack.c.h.b16 %v127
    %v1216 = vunpack.c.l.b16 %v128
    %v1217 = vunpack.c.h.b16 %v128
    %v1218 = vunpack.c.l.b16 %v129
    %v1219 = vunpack.c.h.b16 %v129
    %v1220 = vunpack.c.l.b16 %v130
    %v1221 = vunpack.c.h.b16 %v130
    %v1222 = vunpack.c.l.b16 %v131
    %v1223 = vunpack.c.h.b16 %v131
    %v1224 = vunpack.c.l.b16 %v132
    %v1225 = vunpack.c.h.b16 %v132
    %v1226 = vunpack.c.l.b16 %v133
    %v1227 = vunpack.c.h.b16 %v133
    %v1228 = vunpack.c.l.b16 %v134
    %v1229 = vunpack.c.h.b16 %v134
    %v1230 = vunpack.c.l.b16 %v135
    %v1231 = vunpack.c.h.b16 %v135
    %v1232 = vunpack.c.l.b16 %v136
    %v1233 = vunpack.c.h.b16 %v136
    %v1234 = vunpack.c.l.b16 %v137
    %v1235 = vunpack.c.h.b16 %v137
    %v1236 = vunpack.c.l.b16 %v138
    %v1237 = vunpack.c.h.b16 %v138
    %v1238 = vunpack.c.l.b16 %v139
    %v1239 = vunpack.c.h.b16 %v139
    %v1240 = vunpack.c.l.b16 %v140
    %v1241 = vunpack.c.h.b16 %v140
    %v1242 = vunpack.c.l.b16 %v141
    %v1243 = vunpack.c.h.b16 %v141
    %v1244 = vunpack.c.l.b16 %v142
    %v1245 = vunpack.c.h.b16 %v142
    %v1246 = vunpack.c.l.b16 %v143
    %v1247 = vunpack.c.h.b16 %v143
    %v1248 = vunpack.c.l.b16 %v144
    %v1249 = vunpack.c.h.b16 %v144
    %v1250 = vunpack.c.l.b16 %v145
    %v1251 = vunpack.c.h.b16 %v145
    %v1252 = vunpack.c.l.b16 %v146
    %v1253 = vunpack.c.h.b16 %v146
    %v1254 = vunpack.c.l.b16 %v147
    %v1255 = vunpack.c.h.b16 %v147
    %v1256 = vunpack.c.l.b16 %v148
    %v1257 = vunpack.c.h.b16 %v148
    %v1258 = vunpack.c.l.b16 %v149
    %v1259 = vunpack.c.h.b16 %v149
    %v1260 = vunpack.c.l.b16 %v150
    %v1261 = vunpack.c.h.b16 %v150
    %v1262 = vunpack.c.l.b16 %v151
    %v1263 = vunpack.c.h.b16 %v151
    %v1264 = vunpack.c.l.b16 %v152
    %v1265 = vunpack.c.h.b16 %v152
    %v1266 = vunpack.c.l.b16 %v153
    %v1267 = vunpack.c.h.b16 %v153
    %v1268 = vunpack.c.l.b16 %v154
    %v1269 = vunpack.c.h.b16 %v154
    %v1270 = vunpack.c.l.b16 %v155
    %v1271 = vunpack.c.h.b16 %v155
    %v1272 = vunpack.c.l.b16 %v156
    %v1273 = vunpack.c.h.b16 %v156
    %v1274 = vunpack.c.l.b16 %v157
    %v1275 = vunpack.c.h.b16 %v157
    %v1276 = vunpack.c.l.b16 %v158
    %v1277 = vunpack.c.h.b16 %v158
    %v1278 = vunpack.c.l.b16 %v159
    %v1279 = vunpack.c.h.b16 %v159
    %v1280 = vunpack.c.l.b16 %v160
    %v1281 = vunpack.c.h.b16 %v160
    %v1282 = vunpack.c.l.b16 %v161
    %v1283 = vunpack.c.h.b16 %v161
    %v1284 = vunpack.c.l.b16 %v162
    %v1285 = vunpack.c.h.b16 %v162
    %v1286 = vunpack.c.l.b16 %v163
    %v1287 = vunpack.c.h.b16 %v163
    %v1288 = vunpack.c.l.b16 %v164
    %v1289 = vunpack.c.h.b16 %v164
    %v1290 = vunpack.c.l.b16 %v165
    %v1291 = vunpack.c.h.b16 %v165
    %v1292 = vunpack.c.l.b16 %v166
    %v1293 = vunpack.c.h.b16 %v166
    %v1294 = vunpack.c.l.b16 %v167
    %v1295 = vunpack.c.h.b16 %v167
    %v1296 = vunpack.c.l.b16 %v168
    %v1297 = vunpack.c.h.b16 %v168
    %v1298 = vunpack.c.l.b16 %v169
    %v1299 = vunpack.c.h.b16 %v169
    %v1300 = vunpack.c.l.b16 %v170
    %v1301 = vunpack.c.h.b16 %v170
    %v1302 = vunpack.c.l.b16 %v171
    %v1303 = vunpack.c.h.b16 %v171
    %v1304 = vunpack.c.l.b16 %v172
    %v1305 = vunpack.c.h.b16 %v172
    %v1306 = vunpack.c.l.b16 %v173
    %v1307 = vunpack.c.h.b16 %v173
    %v1308 = vunpack.c.l.b16 %v174
    %v1309 = vunpack.c.h.b16 %v174
    %v1310 = vunpack.c.l.b16 %v175
    %v1311 = vunpack.c.h.b16 %v175
    %v1312 = vunpack.c.l.b16 %v176
    %v1313 = vunpack.c.h.b16 %v176
    %v1314 = vunpack.c.l.b16 %v177
    %v1315 = vunpack.c.h.b16 %v177
    %v1316 = vunpack.c.l.b16 %v178
    %v1317 = vunpack.c.h.b16 %v178
    %v1318 = vunpack.c.l.b16 %v179
    %v1319 = vunpack.c.h.b16 %v179
    %v1320 = vunpack.c.l.b16 %v180
    %v1321 = vunpack.c.h.b16 %v180
    %v1322 = vunpack.c.l.b16 %v181
    %v1323 = vunpack.c.h.b16 %v181
    %v1324 = vunpack.c.l.b16 %v182
    %v1325 = vunpack.c.h.b16 %v182
    %v1326 = vunpack.c.l.b16 %v183
    %v1327 = vunpack.c.h.b16 %v183
    %v1328 = vunpack.c.l.b16 %v184
    %v1329 = vunpack.c.h.b16 %v184
    %v1330 = vunpack.c.l.b16 %v185
    %v1331 = vunpack.c.h.b16 %v185
    %v1332 = vunpack.c.l.b16 %v186
    %v1333 = vunpack.c.h.b16 %v186
    %v1334 = vunpack.c.l.b16 %v187
    %v1335 = vunpack.c.h.b16 %v187
    %v1336 = vunpack.c.l.b16 %v188
    %v1337 = vunpack.c.h.b16 %v188
    %v1338 = vunpack.c.l.b16 %v189
    %v1339 = vunpack.c.h.b16 %v189
    %v1340 = vunpack.c.l.b16 %v190
    %v1341 = vunpack.c.h.b16 %v190
    %v1342 = vunpack.c.l.b16 %v191
    %v1343 = vunpack.c.h.b16 %v191
    %v1344 = vunpack.c.l.b16 %v192
    %v1345 = vunpack.c.h.b16 %v192
    %v1346 = vunpack.c.l.b16 %v193
    %v1347 = vunpack.c.h.b16 %v193
    %v1348 = vunpack.c.l.b16 %v194
    %v1349 = vunpack.c.h.b16 %v194
    %v1350 = vunpack.c.l.b16 %v195
    %v1351 = vunpack.c.h.b16 %v195
    %v1352 = vunpack.c.l.b16 %v196
    %v1353 = vunpack.c.h.b16 %v196
    %v1354 = vunpack.c.l.b16 %v197
    %v1355 = vunpack.c.h.b16 %v197
    %v1356 = vunpack.c.l.b16 %v198
    %v1357 = vunpack.c.h.b16 %v198
    %v1358 = vunpack.c.l.b16 %v199
    %v1359 = vunpack.c.h.b16 %v199
    %v1360 = vunpack.c.l.b16 %v200
    %v1361 = vunpack.c.h.b16 %v200
    %v1362 = vunpack.c.l.b16 %v201
    %v1363 = vunpack.c.h.b16 %v201
    %v1364 = vunpack.c.l.b16 %v202
    %v1365 = vunpack.c.h.b16 %v202
    %v1366 = vunpack.c.l.b16 %v203
    %v1367 = vunpack.c.h.b16 %v203
    %v1368 = vunpack.c.l.b16 %v204
    %v1369 = vunpack.c.h.b16 %v204
    %v1370 = vunpack.c.l.b16 %v205
    %v1371 = vunpack.c.h.b16 %v205
    %v1372 = vunpack.c.l.b16 %v206
    %v1373 = vunpack.c.h.b16 %v206
    %v1374 = vunpack.c.l.b16 %v207
    %v1375 = vunpack.c.h.b16 %v207
    %v1376 = vunpack.c.l.b16 %v208
    %v1377 = vunpack.c.h.b16 %v208
    %v1378 = vunpack.c.l.b16 %v209
    %v1379 = vunpack.c.h.b16 %v209
    %v1380 = vunpack.c.l.b16 %v210
    %v1381 = vunpack.c.h.b16 %v210
    %v1382 = vunpack.c.l.b16 %v211
    %v1383 = vunpack.c.h.b16 %v211
    %v1384 = vunpack.c.l.b16 %v212
    %v1385 = vunpack.c.h.b16 %v212
    %v1386 = vunpack.c.l.b16 %v213
    %v1387 = vunpack.c.h.b16 %v213
    %v1388 = vunpack.c.l.b16 %v214
    %v1389 = vunpack.c.h.b16 %v214
    %v1390 = vunpack.c.l.b16 %v215
    %v1391 = vunpack.c.h.b16 %v215
    %v1392 = vunpack.c.l.b16 %v216
    %v1393 = vunpack.c.h.b16 %v216
    %v1394 = vunpack.c.l.b16 %v217
    %v1395 = vunpack.c.h.b16 %v217
    %v1396 = vunpack.c.l.b16 %v218
    %v1397 = vunpack.c.h.b16 %v218
    %v1398 = vunpack.c.l.b16 %v219
    %v1399 = vunpack.c.h.b16 %v219
    %v1400 = vunpack.c.l.b16 %v220
    %v1401 = vunpack.c.h.b16 %v220
    %v1402 = vunpack.c.l.b16 %v221
    %v1403 = vunpack.c.h.b16 %v221
    %v1404 = vunpack.c.l.b16 %v222
    %v1405 = vunpack.c.h.b16 %v222
    %v1406 = vunpack.c.l.b16 %v223
    %v1407 = vunpack.c.h.b16 %v223
    %v1408 = vunpack.c.l.b16 %v224
    %v1409 = vunpack.c.h.b16 %v224
    %v1410 = vunpack.c.l.b16 %v225
    %v1411 = vunpack.c.h.b16 %v225
    %v1412 = vunpack.c.l.b16 %v226
    %v1413 = vunpack.c.h.b16 %v226
    %v1414 = vunpack.c.l.b16 %v227
    %v1415 = vunpack.c.h.b16 %v227
    %v1416 = vunpack.c.l.b16 %v228
    %v1417 = vunpack.c.h.b16 %v228
    %v1418 = vunpack.c.l.b16 %v229
    %v1419 = vunpack.c.h.b16 %v229
    %v1420 = vunpack.c.l.b16 %v230
    %v1421 = vunpack.c.h.b16 %v230
    %v1422 = vunpack.c.l.b16 %v231
    %v1423 = vunpack.c.h.b16 %v231
    %v1424 = vunpack.c.l.b16 %v232
    %v1425 = vunpack.c.h.b16 %v232
    %v1426 = vunpack.c.l.b16 %v233
    %v1427 = vunpack.c.h.b16 %v233
    %v1428 = vunpack.c.l.b16 %v234
    %v1429 = vunpack.c.h.b16 %v234
    %v1430 = vunpack.c.l.b16 %v235
    %v1431 = vunpack.c.h.b16 %v235
    %v1432 = vunpack.c.l.b16 %v236
    %v1433 = vunpack.c.h.b16 %v236
    %v1434 = vunpack.c.l.b16 %v237
    %v1435 = vunpack.c.h.b16 %v237
    %v1436 = vunpack.c.l.b16 %v238
    %v1437 = vunpack.c.h.b16 %v238
    %v1438 = vunpack.c.l.b16 %v239
    %v1439 = vunpack.c.h.b16 %v239
    %v1440 = vunpack.c.l.b16 %v240
    %v1441 = vunpack.c.h.b16 %v240
    %v1442 = vunpack.c.l.b16 %v241
    %v1443 = vunpack.c.h.b16 %v241
    %v1444 = vunpack.c.l.b16 %v242
    %v1445 = vunpack.c.h.b16 %v242
    %v1446 = vunpack.c.l.b16 %v243
    %v1447 = vunpack.c.h.b16 %v243
    %v1448 = vunpack.c.l.b16 %v244
    %v1449 = vunpack.c.h.b16 %v244
    %v1450 = vunpack.c.l.b16 %v245
    %v1451 = vunpack.c.h.b16 %v245
    %v1452 = vunpack.c.l.b16 %v246
    %v1453 = vunpack.c.h.b16 %v246
    %v1454 = vunpack.c.l.b16 %v247
    %v1455 = vunpack.c.h.b16 %v247
    %v1456 = vunpack.c.l.b16 %v248
    %v1457 = vunpack.c.h.b16 %v248
    %v1458 = vunpack.c.l.b16 %v249
    %v1459 = vunpack.c.h.b16 %v249
    %v1460 = vunpack.c.l.b16 %v250
    %v1461 = vunpack.c.h.b16 %v250
    %v1462 = vunpack.c.l.b16 %v251
    %v1463 = vunpack.c.h.b16 %v251
    %v1464 = vunpack.c.l.b16 %v252
    %v1465 = vunpack.c.h.b16 %v252
    %v1466 = vunpack.c.l.b16 %v253
    %v1467 = vunpack.c.h.b16 %v253
    %v1468 = vunpack.c.l.b16 %v254
    %v1469 = vunpack.c.h.b16 %v254
    %v1470 = vunpack.c.l.b16 %v255
    %v1471 = vunpack.c.h.b16 %v255
    %v1472 = vunpack.c.l.b16 %v256
    %v1473 = vunpack.c.h.b16 %v256
    %v1474 = vunpack.c.l.b16 %v257
    %v1475 = vunpack.c.h.b16 %v257
    %v1476 = vunpack.c.l.b16 %v258
    %v1477 = vunpack.c.h.b16 %v258
    %v1478 = vunpack.c.l.b16 %v259
    %v1479 = vunpack.c.h.b16 %v259
    %v1480 = vunpack.c.l.b16 %v260
    %v1481 = vunpack.c.h.b16 %v260
    %v1482 = vunpack.c.l.b16 %v261
    %v1483 = vunpack.c.h.b16 %v261
    %v1484 = vunpack.c.l.b16 %v262
    %v1485 = vunpack.c.h.b16 %v262
    %v1486 = vunpack.c.l.b16 %v263
    %v1487 = vunpack.c.h.b16 %v263
    %v1488 = vunpack.c.l.b16 %v264
    %v1489 = vunpack.c.h.b16 %v264
    %v1490 = vunpack.c.l.b16 %v265
    %v1491 = vunpack.c.h.b16 %v265
    %v1492 = vunpack.c.l.b16 %v266
    %v1493 = vunpack.c.h.b16 %v266
    %v1494 = vunpack.c.l.b16 %v267
    %v1495 = vunpack.c.h.b16 %v267
    %v1496 = vunpack.c.l.b16 %v268
    %v1497 = vunpack.c.h.b16 %v268
    %v1498 = vunpack.c.l.b16 %v269
    %v1499 = vunpack.c.h.b16 %v269
    %v1500 = vunpack.c.l.b16 %v270
    %v1501 = vunpack.c.h.b16 %v270
    %v1502 = vunpack.c.l.b16 %v271
    %v1503 = vunpack.c.h.b16 %v271
    %v1504 = vunpack.c.l.b16 %v272
    %v1505 = vunpack.c.h.b16 %v272
    %v1506 = vunpack.c.l.b16 %v273
    %v1507 = vunpack.c.h.b16 %v273
    %v1508 = vunpack.c.l.b16 %v274
    %v1509 = vunpack.c.h.b16 %v274
    %v1510 = vunpack.c.l.b16 %v275
    %v1511 = vunpack.c.h.b16 %v275
    %v1512 = vunpack.c.l.b16 %v276
    %v1513 = vunpack.c.h.b16 %v276
    %v1514 = vunpack.c.l.b16 %v277
    %v1515 = vunpack.c.h.b16 %v277
    %v1516 = vunpack.c.l.b16 %v278
    %v1517 = vunpack.c.h.b16 %v278
    %v1518 = vunpack.c.l.b16 %v279
    %v1519 = vunpack.c.h.b16 %v279
    %v1520 = vunpack.c.l.b16 %v280
    %v1521 = vunpack.c.h.b16 %v280
    %v1522 = vunpack.c.l.b16 %v281
    %v1523 = vunpack.c.h.b16 %v281
    %v1524 = vunpack.c.l.b16 %v282
    %v1525 = vunpack.c.h.b16 %v282
    %v1526 = vunpack.c.l.b16 %v283
    %v1527 = vunpack.c.h.b16 %v283
    %v1528 = vunpack.c.l.b16 %v284
    %v1529 = vunpack.c.h.b16 %v284
    %v1530 = vunpack.c.l.b16 %v285
    %v1531 = vunpack.c.h.b16 %v285
    %v1532 = vunpack.c.l.b16 %v286
    %v1533 = vunpack.c.h.b16 %v286
    %v1534 = vunpack.c.l.b16 %v287
    %v1535 = vunpack.c.h.b16 %v287
    %v1536 = vunpack.c.l.b16 %v288
    %v1537 = vunpack.c.h.b16 %v288
    %v1538 = vunpack.c.l.b16 %v289
    %v1539 = vunpack.c.h.b16 %v289
    %v1540 = vunpack.c.l.b16 %v290
    %v1541 = vunpack.c.h.b16 %v290
    %v1542 = vunpack.c.l.b16 %v291
    %v1543 = vunpack.c.h.b16 %v291
    %v1544 = vunpack.c.l.b16 %v292
    %v1545 = vunpack.c.h.b16 %v292
    %v1546 = vunpack.c.l.b16 %v293
    %v1547 = vunpack.c.h.b16 %v293
    %v1548 = vunpack.c.l.b16 %v294
    %v1549 = vunpack.c.h.b16 %v294
    %v1550 = vunpack.c.l.b16 %v295
    %v1551 = vunpack.c.h.b16 %v295
    %v1552 = vunpack.c.l.b16 %v296
    %v1553 = vunpack.c.h.b16 %v296
    %v1554 = vunpack.c.l.b16 %v297
    %v1555 = vunpack.c.h.b16 %v297
    %v1556 = vunpack.c.l.b16 %v298
    %v1557 = vunpack.c.h.b16 %v298
    %v1558 = vunpack.c.l.b16 %v299
    %v1559 = vunpack.c.h.b16 %v299
    %v1560 = vunpack.c.l.b16 %v300
    %v1561 = vunpack.c.h.b16 %v300
    %v1562 = vunpack.c.l.b16 %v301
    %v1563 = vunpack.c.h.b16 %v301
    %v1564 = vunpack.c.l.b16 %v302
    %v1565 = vunpack.c.h.b16 %v302
    %v1566 = vunpack.c.l.b16 %v303
    %v1567 = vunpack.c.h.b16 %v303
    %v1568 = vunpack.c.l.b16 %v304
    %v1569 = vunpack.c.h.b16 %v304
    %v1570 = vunpack.c.l.b16 %v305
    %v1571 = vunpack.c.h.b16 %v305
    %v1572 = vunpack.c.l.b16 %v306
    %v1573 = vunpack.c.h.b16 %v306
    %v1574 = vunpack.c.l.b16 %v307
    %v1575 = vunpack.c.h.b16 %v307
    %v1576 = vunpack.c.l.b16 %v308
    %v1577 = vunpack.c.h.b16 %v308
    %v1578 = vunpack.c.l.b16 %v309
    %v1579 = vunpack.c.h.b16 %v309
    %v1580 = vunpack.c.l.b16 %v310
    %v1581 = vunpack.c.h.b16 %v310
    %v1582 = vunpack.c.l.b16 %v311
    %v1583 = vunpack.c.h.b16 %v311
    %v1584 = vunpack.c.l.b16 %v312
    %v1585 = vunpack.c.h.b16 %v312
    %v1586 = vunpack.c.l.b16 %v313
    %v1587 = vunpack.c.h.b16 %v313
    %v1588 = vunpack.c.l.b16 %v314
    %v1589 = vunpack.c.h.b16 %v314
    %v1590 = vunpack.c.l.b16 %v315
    %v1591 = vunpack.c.h.b16 %v315
    %v1592 = vunpack.c.l.b16 %v316
    %v1593 = vunpack.c.h.b16 %v316
    %v1594 = vunpack.c.l.b16 %v317
    %v1595 = vunpack.c.h.b16 %v317
    %v1596 = vunpack.c.l.b16 %v318
    %v1597 = vunpack.c.h.b16 %v318
    %v1598 = vunpack.c.l.b16 %v319
    %v1599 = vunpack.c.h.b16 %v319
    %v1600 = vunpack.c.l.b16 %v320
    %v1601 = vunpack.c.h.b16 %v320
    %v1602 = vunpack.c.l.b16 %v321
    %v1603 = vunpack.c.h.b16 %v321
    %v1604 = vunpack.c.l.b16 %v322
    %v1605 = vunpack.c.h.b16 %v322
    %v1606 = vunpack.c.l.b16 %v323
    %v1607 = vunpack.c.h.b16 %v323
    %v1608 = vunpack.c.l.b16 %v324
    %v1609 = vunpack.c.h.b16 %v324
    %v1610 = vunpack.c.l.b16 %v325
    %v1611 = vunpack.c.h.b16 %v325
    %v1612 = vunpack.c.l.b16 %v326
    %v1613 = vunpack.c.h.b16 %v326
    %v1614 = vunpack.c.l.b16 %v327
    %v1615 = vunpack.c.h.b16 %v327
    %v1616 = vunpack.c.l.b16 %v328
    %v1617 = vunpack.c.h.b16 %v328
    %v1618 = vunpack.c.l.b16 %v329
    %v1619 = vunpack.c.h.b16 %v329
    %v1620 = vunpack.c.l.b16 %v330
    %v1621 = vunpack.c.h.b16 %v330
    %v1622 = vunpack.c.l.b16 %v331
    %v1623 = vunpack.c.h.b16 %v331
    %v1624 = vunpack.c.l.b16 %v332
    %v1625 = vunpack.c.h.b16 %v332
    %v1626 = vunpack.c.l.b16 %v333
    %v1627 = vunpack.c.h.b16 %v333
    %v1628 = vunpack.c.l.b16 %v334
    %v1629 = vunpack.c.h.b16 %v334
    %v1630 = vunpack.c.l.b16 %v335
    %v1631 = vunpack.c.h.b16 %v335
    %v1632 = vunpack.c.l.b16 %v336
    %v1633 = vunpack.c.h.b16 %v336
    %v1634 = vunpack.c.l.b16 %v337
    %v1635 = vunpack.c.h.b16 %v337
    %v1636 = vunpack.c.l.b16 %v338
    %v1637 = vunpack.c.h.b16 %v338
    %v1638 = vunpack.c.l.b16 %v339
    %v1639 = vunpack.c.h.b16 %v339
    %v1640 = vunpack.c.l.b16 %v340
    %v1641 = vunpack.c.h.b16 %v340
    %v1642 = vunpack.c.l.b16 %v341
    %v1643 = vunpack.c.h.b16 %v341
    %v1644 = vunpack.c.l.b16 %v342
    %v1645 = vunpack.c.h.b16 %v342
    %v1646 = vunpack.c.l.b16 %v343
    %v1647 = vunpack.c.h.b16 %v343
    %v1648 = vunpack.c.l.b16 %v344
    %v1649 = vunpack.c.h.b16 %v344
    %v1650 = vunpack.c.l.b16 %v345
    %v1651 = vunpack.c.h.b16 %v345
    %v1652 = vunpack.c.l.b16 %v346
    %v1653 = vunpack.c.h.b16 %v346
    %v1654 = vunpack.c.l.b16 %v347
    %v1655 = vunpack.c.h.b16 %v347
    %v1656 = vunpack.c.l.b16 %v348
    %v1657 = vunpack.c.h.b16 %v348
    %v1658 = vunpack.c.l.b16 %v349
    %v1659 = vunpack.c.h.b16 %v349
    %v1660 = vunpack.c.l.b16 %v350
    %v1661 = vunpack.c.h.b16 %v350
    %v1662 = vunpack.c.l.b16 %v351
    %v1663 = vunpack.c.h.b16 %v351
    %v1664 = vunpack.c.l.b16 %v352
    %v1665 = vunpack.c.h.b16 %v352
    %v1666 = vunpack.c.l.b16 %v353
    %v1667 = vunpack.c.h.b16 %v353
    %v1668 = vunpack.c.l.b16 %v354
    %v1669 = vunpack.c.h.b16 %v354
    %v1670 = vunpack.c.l.b16 %v355
    %v1671 = vunpack.c.h.b16 %v355
    %v1672 = vunpack.c.l.b16 %v356
    %v1673 = vunpack.c.h.b16 %v356
    %v1674 = vunpack.c.l.b16 %v357
    %v1675 = vunpack.c.h.b16 %v357
    %v1676 = vunpack.c.l.b16 %v358
    %v1677 = vunpack.c.h.b16 %v358
    %v1678 = vunpack.c.l.b16 %v359
    %v1679 = vunpack.c.h.b16 %v359
    %v1680 = vunpack.c.l.b16 %v360
    %v1681 = vunpack.c.h.b16 %v360
    %v1682 = vunpack.c.l.b16 %v361
    %v1683 = vunpack.c.h.b16 %v361
    %v1684 = vunpack.c.l.b16 %v362
    %v1685 = vunpack.c.h.b16 %v362
    %v1686 = vunpack.c.l.b16 %v363
    %v1687 = vunpack.c.h.b16 %v363
    %v1688 = vunpack.c.l.b16 %v364
    %v1689 = vunpack.c.h.b16 %v364
    %v1690 = vunpack.c.l.b16 %v365
    %v1691 = vunpack.c.h.b16 %v365
    %v1692 = vunpack.c.l.b16 %v366
    %v1693 = vunpack.c.h.b16 %v366
    %v1694 = vunpack.c.l.b16 %v367
    %v1695 = vunpack.c.h.b16 %v367
    %v1696 = vunpack.c.l.b16 %v368
    %v1697 = vunpack.c.h.b16 %v368
    %v1698 = vunpack.c.l.b16 %v369
    %v1699 = vunpack.c.h.b16 %v369
    %v1700 = vunpack.c.l.b16 %v370
    %v1701 = vunpack.c.h.b16 %v370
    %v1702 = vunpack.c.l.b16 %v371
    %v1703 = vunpack.c.h.b16 %v371
    %v1704 = vunpack.c.l.b16 %v372
    %v1705 = vunpack.c.h.b16 %v372
    %v1706 = vunpack.c.l.b16 %v373
    %v1707 = vunpack.c.h.b16 %v373
    %v1708 = vunpack.c.l.b16 %v374
    %v1709 = vunpack.c.h.b16 %v374
    %v1710 = vunpack.c.l.b16 %v375
    %v1711 = vunpack.c.h.b16 %v375
    %v1712 = vunpack.c.l.b16 %v376
    %v1713 = vunpack.c.h.b16 %v376
    %v1714 = vunpack.c.l.b16 %v377
    %v1715 = vunpack.c.h.b16 %v377
    %v1716 = vunpack.c.l.b16 %v378
    %v1717 = vunpack.c.h.b16 %v378
    %v1718 = vunpack.c.l.b16 %v379
    %v1719 = vunpack.c.h.b16 %v379
    %v1720 = vunpack.c.l.b16 %v380
    %v1721 = vunpack.c.h.b16 %v380
    %v1722 = vunpack.c.l.b16 %v381
    %v1723 = vunpack.c.h.b16 %v381
    %v1724 = vunpack.c.l.b16 %v382
    %v1725 = vunpack.c.h.b16 %v382
    %v1726 = vunpack.c.l.b16 %v383
    %v1727 = vunpack.c.h.b16 %v383
    %v1728 = vunpack.c.l.b16 %v384
    %v1729 = vunpack.c.h.b16 %v384
    %v1730 = vunpack.c.l.b16 %v385
    %v1731 = vunpack.c.h.b16 %v385
    %v1732 = vunpack.c.l.b16 %v386
    %v1733 = vunpack.c.h.b16 %v386
    %v1734 = vunpack.c.l.b16 %v387
    %v1735 = vunpack.c.h.b16 %v387
    %v1736 = vunpack.c.l.b16 %v388
    %v1737 = vunpack.c.h.b16 %v388
    %v1738 = vunpack.c.l.b16 %v389
    %v1739 = vunpack.c.h.b16 %v389
    %v1740 = vunpack.c.l.b16 %v390
    %v1741 = vunpack.c.h.b16 %v390
    %v1742 = vunpack.c.l.b16 %v391
    %v1743 = vunpack.c.h.b16 %v391
    %v1744 = vunpack.c.l.b16 %v392
    %v1745 = vunpack.c.h.b16 %v392
    %v1746 = vunpack.c.l.b16 %v393
    %v1747 = vunpack.c.h.b16 %v393
    %v1748 = vunpack.c.l.b16 %v394
    %v1749 = vunpack.c.h.b16 %v394
    %v1750 = vunpack.c.l.b16 %v395
    %v1751 = vunpack.c.h.b16 %v395
    %v1752 = vunpack.c.l.b16 %v396
    %v1753 = vunpack.c.h.b16 %v396
    %v1754 = vunpack.c.l.b16 %v397
    %v1755 = vunpack.c.h.b16 %v397
    %v1756 = vunpack.c.l.b16 %v398
    %v1757 = vunpack.c.h.b16 %v398
    %v1758 = vunpack.c.l.b16 %v399
    %v1759 = vunpack.c.h.b16 %v399
    %v1760 = vunpack.c.l.b16 %v400
    %v1761 = vunpack.c.h.b16 %v400
    %v1762 = vunpack.c.l.b16 %v401
    %v1763 = vunpack.c.h.b16 %v401
    %v1764 = vunpack.c.l.b16 %v402
    %v1765 = vunpack.c.h.b16 %v402
    %v1766 = vunpack.c.l.b16 %v403
    %v1767 = vunpack.c.h.b16 %v403
    %v1768 = vunpack.c.l.b16 %v404
    %v1769 = vunpack.c.h.b16 %v404
    %v1770 = vunpack.c.l.b16 %v405
    %v1771 = vunpack.c.h.b16 %v405
    %v1772 = vunpack.c.l.b16 %v406
    %v1773 = vunpack.c.h.b16 %v406
    %v1774 = vunpack.c.l.b16 %v407
    %v1775 = vunpack.c.h.b16 %v407
    %v1776 = vunpack.c.l.b16 %v408
    %v1777 = vunpack.c.h.b16 %v408
    %v1778 = vunpack.c.l.b16 %v409
    %v1779 = vunpack.c.h.b16 %v409
    %v1780 = vunpack.c.l.b16 %v410
    %v1781 = vunpack.c.h.b16 %v410
    %v1782 = vunpack.c.l.b16 %v411
    %v1783 = vunpack.c.h.b16 %v411
    %v1784 = vunpack.c.l.b16 %v412
    %v1785 = vunpack.c.h.b16 %v412
    %v1786 = vunpack.c.l.b16 %v413
    %v1787 = vunpack.c.h.b16 %v413
    %v1788 = vunpack.c.l.b16 %v414
    %v1789 = vunpack.c.h.b16 %v414
    %v1790 = vunpack.c.l.b16 %v415
    %v1791 = vunpack.c.h.b16 %v415
    %v1792 = vunpack.c.l.b16 %v416
    %v1793 = vunpack.c.h.b16 %v416
    %v1794 = vunpack.c.l.b16 %v417
    %v1795 = vunpack.c.h.b16 %v417
    %v1796 = vunpack.c.l.b16 %v418
    %v1797 = vunpack.c.h.b16 %v418
    %v1798 = vunpack.c.l.b16 %v419
    %v1799 = vunpack.c.h.b16 %v419
    %v1800 = vunpack.c.l.b16 %v420
    %v1801 = vunpack.c.h.b16 %v420
    %v1802 = vunpack.c.l.b16 %v421
    %v1803 = vunpack.c.h.b16 %v421
    %v1804 = vunpack.c.l.b16 %v422
    %v1805 = vunpack.c.h.b16 %v422
    %v1806 = vunpack.c.l.b16 %v423
    %v1807 = vunpack.c.h.b16 %v423
    %v1808 = vunpack.c.l.b16 %v424
    %v1809 = vunpack.c.h.b16 %v424
    %v1810 = vunpack.c.l.b16 %v425
    %v1811 = vunpack.c.h.b16 %v425
    %v1812 = vunpack.c.l.b16 %v426
    %v1813 = vunpack.c.h.b16 %v426
    %v1814 = vunpack.c.l.b16 %v427
    %v1815 = vunpack.c.h.b16 %v427
    %v1816 = vunpack.c.l.b16 %v428
    %v1817 = vunpack.c.h.b16 %v428
    %v1818 = vunpack.c.l.b16 %v429
    %v1819 = vunpack.c.h.b16 %v429
    %v1820 = vunpack.c.l.b16 %v430
    %v1821 = vunpack.c.h.b16 %v430
    %v1822 = vunpack.c.l.b16 %v431
    %v1823 = vunpack.c.h.b16 %v431
    %v1824 = vunpack.c.l.b16 %v432
    %v1825 = vunpack.c.h.b16 %v432
    %v1826 = vunpack.c.l.b16 %v433
    %v1827 = vunpack.c.h.b16 %v433
    %v1828 = vunpack.c.l.b16 %v434
    %v1829 = vunpack.c.h.b16 %v434
    %v1830 = vunpack.c.l.b16 %v435
    %v1831 = vunpack.c.h.b16 %v435
    %v1832 = vunpack.c.l.b16 %v436
    %v1833 = vunpack.c.h.b16 %v436
    %v1834 = vunpack.c.l.b16 %v437
    %v1835 = vunpack.c.h.b16 %v437
    %v1836 = vunpack.c.l.b16 %v438
    %v1837 = vunpack.c.h.b16 %v438
    %v1838 = vunpack.c.l.b16 %v439
    %v1839 = vunpack.c.h.b16 %v439
    %v1840 = vunpack.c.l.b16 %v440
    %v1841 = vunpack.c.h.b16 %v440
    %v1842 = vunpack.c.l.b16 %v441
    %v1843 = vunpack.c.h.b16 %v441
    %v1844 = vunpack.c.l.b16 %v442
    %v1845 = vunpack.c.h.b16 %v442
    %v1846 = vunpack.c.l.b16 %v443
    %v1847 = vunpack.c.h.b16 %v443
    %v1848 = vunpack.c.l.b16 %v444
    %v1849 = vunpack.c.h.b16 %v444
    %v1850 = vunpack.c.l.b16 %v445
    %v1851 = vunpack.c.h.b16 %v445
    %v1852 = vunpack.c.l.b16 %v446
    %v1853 = vunpack.c.h.b16 %v446
    %v1854 = vunpack.c.l.b16 %v447
    %v1855 = vunpack.c.h.b16 %v447
    %v1856 = vunpack.c.l.b16 %v448
    %v1857 = vunpack.c.h.b16 %v448
    %v1858 = vunpack.c.l.b16 %v449
    %v1859 = vunpack.c.h.b16 %v449
    %v1860 = vunpack.c.l.b16 %v450
    %v1861 = vunpack.c.h.b16 %v450
    %v1862 = vunpack.c.l.b16 %v451
    %v1863 = vunpack.c.h.b16 %v451
    %v1864 = vunpack.c.l.b16 %v452
    %v1865 = vunpack.c.h.b16 %v452
    %v1866 = vunpack.c.l.b16 %v453
    %v1867 = vunpack.c.h.b16 %v453
    %v1868 = vunpack.c.l.b16 %v454
    %v1869 = vunpack.c.h.b16 %v454
    %v1870 = vunpack.c.l.b16 %v455
    %v1871 = vunpack.c.h.b16 %v455
    %v1872 = vunpack.c.l.b16 %v456
    %v1873 = vunpack.c.h.b16 %v456
    %v1874 = vunpack.c.l.b16 %v457
    %v1875 = vunpack.c.h.b16 %v457
    %v1876 = vunpack.c.l.b16 %v458
    %v1877 = vunpack.c.h.b16 %v458
    %v1878 = vunpack.c.l.b16 %v459
    %v1879 = vunpack.c.h.b16 %v459
    %v1880 = vunpack.c.l.b16 %v460
    %v1881 = vunpack.c.h.b16 %v460
    %v1882 = vunpack.c.l.b16 %v461
    %v1883 = vunpack.c.h.b16 %v461
    %v1884 = vunpack.c.l.b16 %v462
    %v1885 = vunpack.c.h.b16 %v462
    %v1886 = vunpack.c.l.b16 %v463
    %v1887 = vunpack.c.h.b16 %v463
    %v1888 = vunpack.c.l.b16 %v464
    %v1889 = vunpack.c.h.b16 %v464
    %v1890 = vunpack.c.l.b16 %v465
    %v1891 = vunpack.c.h.b16 %v465
    %v1892 = vunpack.c.l.b16 %v466
    %v1893 = vunpack.c.h.b16 %v466
    %v1894 = vunpack.c.l.b16 %v467
    %v1895 = vunpack.c.h.b16 %v467
    %v1896 = vunpack.c.l.b16 %v468
    %v1897 = vunpack.c.h.b16 %v468
    %v1898 = vunpack.c.l.b16 %v469
    %v1899 = vunpack.c.h.b16 %v469
    %v1900 = vunpack.c.l.b16 %v470
    %v1901 = vunpack.c.h.b16 %v470
    %v1902 = vunpack.c.l.b16 %v471
    %v1903 = vunpack.c.h.b16 %v471
    %v1904 = vunpack.c.l.b16 %v472
    %v1905 = vunpack.c.h.b16 %v472
    %v1906 = vunpack.c.l.b16 %v473
    %v1907 = vunpack.c.h.b16 %v473
    %v1908 = vunpack.c.l.b16 %v474
    %v1909 = vunpack.c.h.b16 %v474
    %v1910 = vunpack.c.l.b16 %v475
    %v1911 = vunpack.c.h.b16 %v475
    %v1912 = vunpack.c.l.b16 %v476
    %v1913 = vunpack.c.h.b16 %v476
    %v1914 = vunpack.c.l.b16 %v477
    %v1915 = vunpack.c.h.b16 %v477
    %v1916 = vunpack.c.l.b16 %v478
    %v1917 = vunpack.c.h.b16 %v478
    %v1918 = vunpack.c.l.b16 %v479
    %v1919 = vunpack.c.h.b16 %v479
    %v1920 = vunpack.c.l.b16 %v480
    %v1921 = vunpack.c.h.b16 %v480
    %v1922 = vunpack.c.l.b16 %v481
    %v1923 = vunpack.c.h.b16 %v481
    %v1924 = vunpack.c.l.b16 %v482
    %v1925 = vunpack.c.h.b16 %v482
    %v1926 = vunpack.c.l.b16 %v483
    %v1927 = vunpack.c.h.b16 %v483
    %v1928 = vunpack.c.l.b16 %v484
    %v1929 = vunpack.c.h.b16 %v484
    %v1930 = vunpack.c.l.b16 %v485
    %v1931 = vunpack.c.h.b16 %v485
    %v1932 = vunpack.c.l.b16 %v486
    %v1933 = vunpack.c.h.b16 %v486
    %v1934 = vunpack.c.l.b16 %v487
    %v1935 = vunpack.c.h.b16 %v487
    %v1936 = vunpack.c.l.b16 %v488
    %v1937 = vunpack.c.h.b16 %v488
    %v1938 = vunpack.c.l.b16 %v489
    %v1939 = vunpack.c.h.b16 %v489
    %v1940 = vunpack.c.l.b16 %v490
    %v1941 = vunpack.c.h.b16 %v490
    %v1942 = vunpack.c.l.b16 %v491
    %v1943 = vunpack.c.h.b16 %v491
    %v1944 = vunpack.c.l.b16 %v492
    %v1945 = vunpack.c.h.b16 %v492
    %v1946 = vunpack.c.l.b16 %v493
    %v1947 = vunpack.c.h.b16 %v493
    %v1948 = vunpack.c.l.b16 %v494
    %v1949 = vunpack.c.h.b16 %v494
    %v1950 = vunpack.c.l.b16 %v495
    %v1951 = vunpack.c.h.b16 %v495
    %v1952 = vunpack.c.l.b16 %v496
    %v1953 = vunpack.c.h.b16 %v496
    %v1954 = vunpack.c.l.b16 %v497
    %v1955 = vunpack.c.h.b16 %v497
    %v1956 = vunpack.c.l.b16 %v498
    %v1957 = vunpack.c.h.b16 %v498
    %v1958 = vunpack.c.l.b16 %v499
    %v1959 = vunpack.c.h.b16 %v499
    %v1960 = vunpack.c.l.b16 %v500
    %v1961 = vunpack.c.h.b16 %v500
    %v1962 = vunpack.c.l.b16 %v501
    %v1963 = vunpack.c.h.b16 %v501
    %v1964 = vunpack.c.l.b16 %v502
    %v1965 = vunpack.c.h.b16 %v502
    %v1966 = vunpack.c.l.b16 %v503
    %v1967 = vunpack.c.h.b16 %v503
    %v1968 = vunpack.c.l.b16 %v504
    %v1969 = vunpack.c.h.b16 %v504
    %v1970 = vunpack.c.l.b16 %v505
    %v1971 = vunpack.c.h.b16 %v505
    %v1972 = vunpack.c.l.b16 %v506
    %v1973 = vunpack.c.h.b16 %v506
    %v1974 = vunpack.c.l.b16 %v507
    %v1975 = vunpack.c.h.b16 %v507
    %v1976 = vunpack.c.l.b16 %v508
    %v1977 = vunpack.c.h.b16 %v508
    %v1978 = vunpack.c.l.b16 %v509
    %v1979 = vunpack.c.h.b16 %v509
    %v1980 = vunpack.c.l.b16 %v510
    %v1981 = vunpack.c.h.b16 %v510
    %v1982 = vunpack.c.l.b16 %v511
    %v1983 = vunpack.c.h.b16 %v511
    %v1984 = vunpack.c.l.b16 %v512
    %v1985 = vunpack.c.h.b16 %v512
    %v1986 = vunpack.c.l.b16 %v513
    %v1987 = vunpack.c.h.b16 %v513
    %v1988 = vunpack.c.l.b16 %v514
    %v1989 = vunpack.c.h.b16 %v514
    %v1990 = vunpack.c.l.b16 %v515
    %v1991 = vunpack.c.h.b16 %v515
    %v1992 = vunpack.c.l.b16 %v516
    %v1993 = vunpack.c.h.b16 %v516
    %v1994 = vunpack.c.l.b16 %v517
    %v1995 = vunpack.c.h.b16 %v517
    %v1996 = vunpack.c.l.b16 %v518
    %v1997 = vunpack.c.h.b16 %v518
    %v1998 = vunpack.c.l.b16 %v519
    %v1999 = vunpack.c.h.b16 %v519
    %v2000 = vunpack.c.l.b16 %v520
    %v2001 = vunpack.c.h.b16 %v520
    %v2002 = vunpack.c.l.b16 %v521
    %v2003 = vunpack.c.h.b16 %v521
    %v2004 = vunpack.c.l.b16 %v522
    %v2005 = vunpack.c.h.b16 %v522
    %v2006 = vunpack.c.l.b16 %v523
    %v2007 = vunpack.c.h.b16 %v523
    %v2008 = vunpack.c.l.b16 %v524
    %v2009 = vunpack.c.h.b16 %v524
    %v2010 = vunpack.c.l.b16 %v525
    %v2011 = vunpack.c.h.b16 %v525
    %v2012 = vunpack.c.l.b16 %v526
    %v2013 = vunpack.c.h.b16 %v526
    %v2014 = vunpack.c.l.b16 %v527
    %v2015 = vunpack.c.h.b16 %v527
    %v2016 = vunpack.c.l.b16 %v528
    %v2017 = vunpack.c.h.b16 %v528
    %v2018 = vunpack.c.l.b16 %v529
    %v2019 = vunpack.c.h.b16 %v529
    %v2020 = vunpack.c.l.b16 %v530
    %v2021 = vunpack.c.h.b16 %v530
    %v2022 = vunpack.c.l.b16 %v531
    %v2023 = vunpack.c.h.b16 %v531
    %v2024 = vunpack.c.l.b16 %v532
    %v2025 = vunpack.c.h.b16 %v532
    %v2026 = vunpack.c.l.b16 %v533
    %v2027 = vunpack.c.h.b16 %v533
    %v2028 = vunpack.c.l.b16 %v534
    %v2029 = vunpack.c.h.b16 %v534
    %v2030 = vunpack.c.l.b16 %v535
    %v2031 = vunpack.c.h.b16 %v535
    %v2032 = vunpack.c.l.b16 %v536
    %v2033 = vunpack.c.h.b16 %v536
    %v2034 = vunpack.c.l.b16 %v537
    %v2035 = vunpack.c.h.b16 %v537
    %v2036 = vunpack.c.l.b16 %v538
    %v2037 = vunpack.c.h.b16 %v538
    %v2038 = vunpack.c.l.b16 %v539
    %v2039 = vunpack.c.h.b16 %v539
    %v2040 = vunpack.c.l.b16 %v540
    %v2041 = vunpack.c.h.b16 %v540
    %v2042 = vunpack.c.l.b16 %v541
    %v2043 = vunpack.c.h.b16 %v541
    %v2044 = vunpack.c.l.b16 %v542
    %v2045 = vunpack.c.h.b16 %v542
    %v2046 = vunpack.c.l.b16 %v543
    %v2047 = vunpack.c.h.b16 %v543
    %v2048 = vunpack.c.l.b16 %v544
    %v2049 = vunpack.c.h.b16 %v544
    %v2050 = vunpack.c.l.b16 %v545
    %v2051 = vunpack.c.h.b16 %v545
    %v2052 = vunpack.c.l.b16 %v546
    %v2053 = vunpack.c.h.b16 %v546
    %v2054 = vunpack.c.l.b16 %v547
    %v2055 = vunpack.c.h.b16 %v547
    %v2056 = vunpack.c.l.b16 %v548
    %v2057 = vunpack.c.h.b16 %v548
    %v2058 = vunpack.c.l.b16 %v549
    %v2059 = vunpack.c.h.b16 %v549
    %v2060 = vunpack.c.l.b16 %v550
    %v2061 = vunpack.c.h.b16 %v550
    %v2062 = vunpack.c.l.b16 %v551
    %v2063 = vunpack.c.h.b16 %v551
    %v2064 = vunpack.c.l.b16 %v552
    %v2065 = vunpack.c.h.b16 %v552
    %v2066 = vunpack.c.l.b16 %v553
    %v2067 = vunpack.c.h.b16 %v553
    %v2068 = vunpack.c.l.b16 %v554
    %v2069 = vunpack.c.h.b16 %v554
    %v2070 = vunpack.c.l.b16 %v555
    %v2071 = vunpack.c.h.b16 %v555
    %v2072 = vunpack.c.l.b16 %v556
    %v2073 = vunpack.c.h.b16 %v556
    %v2074 = vunpack.c.l.b16 %v557
    %v2075 = vunpack.c.h.b16 %v557
    %v2076 = vunpack.c.l.b16 %v558
    %v2077 = vunpack.c.h.b16 %v558
    %v2078 = vunpack.c.l.b16 %v559
    %v2079 = vunpack.c.h.b16 %v559
    %v2080 = vunpack.c.l.b16 %v560
    %v2081 = vunpack.c.h.b16 %v560
    %v2082 = vunpack.c.l.b16 %v561
    %v2083 = vunpack.c.h.b16 %v561
    %v2084 = vunpack.c.l.b16 %v562
    %v2085 = vunpack.c.h.b16 %v562
    %v2086 = vunpack.c.l.b16 %v563
    %v2087 = vunpack.c.h.b16 %v563
    %v2088 = vunpack.c.l.b16 %v564
    %v2089 = vunpack.c.h.b16 %v564
    %v2090 = vunpack.c.l.b16 %v565
    %v2091 = vunpack.c.h.b16 %v565
    %v2092 = vunpack.c.l.b16 %v566
    %v2093 = vunpack.c.h.b16 %v566
    %v2094 = vunpack.c.l.b16 %v567
    %v2095 = vunpack.c.h.b16 %v567
    %v2096 = vunpack.c.l.b16 %v568
    %v2097 = vunpack.c.h.b16 %v568
    %v2098 = vunpack.c.l.b16 %v569
    %v2099 = vunpack.c.h.b16 %v569
    %v2100 = vunpack.c.l.b16 %v570
    %v2101 = vunpack.c.h.b16 %v570
    %v2102 = vunpack.c.l.b16 %v571
    %v2103 = vunpack.c.h.b16 %v571
    %v2104 = vunpack.c.l.b16 %v572
    %v2105 = vunpack.c.h.b16 %v572
    %v2106 = vunpack.c.l.b16 %v573
    %v2107 = vunpack.c.h.b16 %v573
    %v2108 = vunpack.c.l.b16 %v574
    %v2109 = vunpack.c.h.b16 %v574
    %v2110 = vunpack.c.l.b16 %v575
    %v2111 = vunpack.c.h.b16 %v575
    %v2112 = vunpack.c.l.b16 %v576
    %v2113 = vunpack.c.h.b16 %v576
    %v2114 = vunpack.c.l.b16 %v577
    %v2115 = vunpack.c.h.b16 %v577
    %v2116 = vunpack.c.l.b16 %v578
    %v2117 = vunpack.c.h.b16 %v578
    %v2118 = vunpack.c.l.b16 %v579
    %v2119 = vunpack.c.h.b16 %v579
    %v2120 = vunpack.c.l.b16 %v580
    %v2121 = vunpack.c.h.b16 %v580
    %v2122 = vunpack.c.l.b16 %v581
    %v2123 = vunpack.c.h.b16 %v581
    %v2124 = vunpack.c.l.b16 %v582
    %v2125 = vunpack.c.h.b16 %v582
    %v2126 = vunpack.c.l.b16 %v583
    %v2127 = vunpack.c.h.b16 %v583
    %v2128 = vunpack.c.l.b16 %v584
    %v2129 = vunpack.c.h.b16 %v584
    %v2130 = vunpack.c.l.b16 %v585
    %v2131 = vunpack.c.h.b16 %v585
    %v2132 = vunpack.c.l.b16 %v586
    %v2133 = vunpack.c.h.b16 %v586
    %v2134 = vunpack.c.l.b16 %v587
    %v2135 = vunpack.c.h.b16 %v587
    %v2136 = vunpack.c.l.b16 %v588
    %v2137 = vunpack.c.h.b16 %v588
    %v2138 = vunpack.c.l.b16 %v589
    %v2139 = vunpack.c.h.b16 %v589
    %v2140 = vunpack.c.l.b16 %v590
    %v2141 = vunpack.c.h.b16 %v590
    %v2142 = vunpack.c.l.b16 %v591
    %v2143 = vunpack.c.h.b16 %v591
    %v2144 = vunpack.c.l.b16 %v592
    %v2145 = vunpack.c.h.b16 %v592
    %v2146 = vunpack.c.l.b16 %v593
    %v2147 = vunpack.c.h.b16 %v593
    %v2148 = vunpack.c.l.b16 %v594
    %v2149 = vunpack.c.h.b16 %v594
    %v2150 = vunpack.c.l.b16 %v595
    %v2151 = vunpack.c.h.b16 %v595
    %v2152 = vunpack.c.l.b16 %v596
    %v2153 = vunpack.c.h.b16 %v596
    %v2154 = vunpack.c.l.b16 %v597
    %v2155 = vunpack.c.h.b16 %v597
    %v2156 = vunpack.c.l.b16 %v598
    %v2157 = vunpack.c.h.b16 %v598
    %v2158 = vunpack.c.l.b16 %v599
    %v2159 = vunpack.c.h.b16 %v599
    %v2160 = vunpack.c.l.b16 %v600
    %v2161 = vunpack.c.h.b16 %v600
    %v2162 = vunpack.c.l.b16 %v601
    %v2163 = vunpack.c.h.b16 %v601
    %v2164 = vunpack.c.l.b16 %v602
    %v2165 = vunpack.c.h.b16 %v602
    %v2166 = vunpack.c.l.b16 %v603
    %v2167 = vunpack.c.h.b16 %v603
    %v2168 = vpack.c.b16 %v1152, %v1144
    %v2169 = vpack.c.b16 %v1153, %v1145
    %v2170 = vpack.c.b16 %v1154, %v1146
    %v2171 = vpack.c.b16 %v1155, %v1147
    %v2172 = vpack.c.b16 %v1156, %v1148
    %v2173 = vpack.c.b16 %v1157, %v1149
    %v2174 = vpack.c.b16 %v1158, %v1150
    %v2175 = vpack.c.b16 %v1159, %v1151
    %v2176 = vpack.c.b16 %v1168, %v1160
    %v2177 = vpack.c.b16 %v1169, %v1161
    %v2178 = vpack.c.b16 %v1170, %v1162
    %v2179 = vpack.c.b16 %v1171, %v1163
    %v2180 = vpack.c.b16 %v1172, %v1164
    %v2181 = vpack.c.b16 %v1173, %v1165
    %v2182 = vpack.c.b16 %v1174, %v1166
    %v2183 = vpack.c.b16 %v1175, %v1167
    %v2184 = vpack.c.b16 %v1184, %v1176
    %v2185 = vpack.c.b16 %v1185, %v1177
    %v2186 = vpack.c.b16 %v1186, %v1178
    %v2187 = vpack.c.b16 %v1187, %v1179
    %v2188 = vpack.c.b16 %v1188, %v1180
    %v2189 = vpack.c.b16 %v1189, %v1181
    %v2190 = vpack.c.b16 %v1190, %v1182
    %v2191 = vpack.c.b16 %v1191, %v1183
    %v2192 = vpack.c.b16 %v1200, %v1192
    %v2193 = vpack.c.b16 %v1201, %v1193
    %v2194 = vpack.c.b16 %v1202, %v1194
    %v2195 = vpack.c.b16 %v1203, %v1195
    %v2196 = vpack.c.b16 %v1204, %v1196
    %v2197 = vpack.c.b16 %v1205, %v1197
    %v2198 = vpack.c.b16 %v1206, %v1198
    %v2199 = vpack.c.b16 %v1207, %v1199
    %v2200 = vpack.c.b16 %v1216, %v1208
    %v2201 = vpack.c.b16 %v1217, %v1209
    %v2202 = vpack.c.b16 %v1218, %v1210
    %v2203 = vpack.c.b16 %v1219, %v1211
    %v2204 = vpack.c.b16 %v1220, %v1212
    %v2205 = vpack.c.b16 %v1221, %v1213
    %v2206 = vpack.c.b16 %v1222, %v1214
    %v2207 = vpack.c.b16 %v1223, %v1215
    %v2208 = vpack.c.b16 %v1232, %v1224
    %v2209 = vpack.c.b16 %v1233, %v1225
    %v2210 = vpack.c.b16 %v1234, %v1226
    %v2211 = vpack.c.b16 %v1235, %v1227
    %v2212 = vpack.c.b16 %v1236, %v1228
    %v2213 = vpack.c.b16 %v1237, %v1229
    %v2214 = vpack.c.b16 %v1238, %v1230
    %v2215 = vpack.c.b16 %v1239, %v1231
    %v2216 = vpack.c.b16 %v1248, %v1240
    %v2217 = vpack.c.b16 %v1249, %v1241
    %v2218 = vpack.c.b16 %v1250, %v1242
    %v2219 = vpack.c.b16 %v1251, %v1243
    %v2220 = vpack.c.b16 %v1252, %v1244
    %v2221 = vpack.c.b16 %v1253, %v1245
    %v2222 = vpack.c.b16 %v1254, %v1246
    %v2223 = vpack.c.b16 %v1255, %v1247
    %v2224 = vpack.c.b16 %v1264, %v1256
    %v2225 = vpack.c.b16 %v1265, %v1257
    %v2226 = vpack.c.b16 %v1266, %v1258
    %v2227 = vpack.c.b16 %v1267, %v1259
    %v2228 = vpack.c.b16 %v1268, %v1260
    %v2229 = vpack.c.b16 %v1269, %v1261
    %v2230 = vpack.c.b16 %v1270, %v1262
    %v2231 = vpack.c.b16 %v1271, %v1263
    %v2232 = vpack.c.b16 %v1280, %v1272
    %v2233 = vpack.c.b16 %v1281, %v1273
    %v2234 = vpack.c.b16 %v1282, %v1274
    %v2235 = vpack.c.b16 %v1283, %v1275
    %v2236 = vpack.c.b16 %v1284, %v1276
    %v2237 = vpack.c.b16 %v1285, %v1277
    %v2238 = vpack.c.b16 %v1286, %v1278
    %v2239 = vpack.c.b16 %v1287, %v1279
    %v2240 = vpack.c.b16 %v1296, %v1288
    %v2241 = vpack.c.b16 %v1297, %v1289
    %v2242 = vpack.c.b16 %v1298, %v1290
    %v2243 = vpack.c.b16 %v1299, %v1291
    %v2244 = vpack.c.b16 %v1300, %v1292
    %v2245 = vpack.c.b16 %v1301, %v1293
    %v2246 = vpack.c.b16 %v1302, %v1294
    %v2247 = vpack.c.b16 %v1303, %v1295
    %v2248 = vpack.c.b16 %v1312, %v1304
    %v2249 = vpack.c.b16 %v1313, %v1305
    %v2250 = vpack.c.b16 %v1314, %v1306
    %v2251 = vpack.c.b16 %v1315, %v1307
    %v2252 = vpack.c.b16 %v1316, %v1308
    %v2253 = vpack.c.b16 %v1317, %v1309
    %v2254 = vpack.c.b16 %v1318, %v1310
    %v2255 = vpack.c.b16 %v1319, %v1311
    %v2256 = vpack.c.b16 %v1328, %v1320
    %v2257 = vpack.c.b16 %v1329, %v1321
    %v2258 = vpack.c.b16 %v1330, %v1322
    %v2259 = vpack.c.b16 %v1331, %v1323
    %v2260 = vpack.c.b16 %v1332, %v1324
    %v2261 = vpack.c.b16 %v1333, %v1325
    %v2262 = vpack.c.b16 %v1334, %v1326
    %v2263 = vpack.c.b16 %v1335, %v1327
    %v2264 = vpack.c.b16 %v1344, %v1336
    %v2265 = vpack.c.b16 %v1345, %v1337
    %v2266 = vpack.c.b16 %v1346, %v1338
    %v2267 = vpack.c.b16 %v1347, %v1339
    %v2268 = vpack.c.b16 %v1348, %v1340
    %v2269 = vpack.c.b16 %v1349, %v1341
    %v2270 = vpack.c.b16 %v1350, %v1342
    %v2271 = vpack.c.b16 %v1351, %v1343
    %v2272 = vpack.c.b16 %v1360, %v1352
    %v2273 = vpack.c.b16 %v1361, %v1353
    %v2274 = vpack.c.b16 %v1362, %v1354
    %v2275 = vpack.c.b16 %v1363, %v1355
    %v2276 = vpack.c.b16 %v1364, %v1356
    %v2277 = vpack.c.b16 %v1365, %v1357
    %v2278 = vpack.c.b16 %v1366, %v1358
    %v2279 = vpack.c.b16 %v1367, %v1359
    %v2280 = vpack.c.b16 %v1376, %v1368
    %v2281 = vpack.c.b16 %v1377, %v1369
    %v2282 = vpack.c.b16 %v1378, %v1370
    %v2283 = vpack.c.b16 %v1379, %v1371
    %v2284 = vpack.c.b16 %v1380, %v1372
    %v2285 = vpack.c.b16 %v1381, %v1373
    %v2286 = vpack.c.b16 %v1382, %v1374
    %v2287 = vpack.c.b16 %v1383, %v1375
    %v2288 = vpack.c.b16 %v1392, %v1384
    %v2289 = vpack.c.b16 %v1393, %v1385
    %v2290 = vpack.c.b16 %v1394, %v1386
    %v2291 = vpack.c.b16 %v1395, %v1387
    %v2292 = vpack.c.b16 %v1396, %v1388
    %v2293 = vpack.c.b16 %v1397, %v1389
    %v2294 = vpack.c.b16 %v1398, %v1390
    %v2295 = vpack.c.b16 %v1399, %v1391
    %v2296 = vpack.c.b16 %v1408, %v1400
    %v2297 = vpack.c.b16 %v1409, %v1401
    %v2298 = vpack.c.b16 %v1410, %v1402
    %v2299 = vpack.c.b16 %v1411, %v1403
    %v2300 = vpack.c.b16 %v1412, %v1404
    %v2301 = vpack.c.b16 %v1413, %v1405
    %v2302 = vpack.c.b16 %v1414, %v1406
    %v2303 = vpack.c.b16 %v1415, %v1407
    %v2304 = vpack.c.b16 %v1424, %v1416
    %v2305 = vpack.c.b16 %v1425, %v1417
    %v2306 = vpack.c.b16 %v1426, %v1418
    %v2307 = vpack.c.b16 %v1427, %v1419
    %v2308 = vpack.c.b16 %v1428, %v1420
    %v2309 = vpack.c.b16 %v1429, %v1421
    %v2310 = vpack.c.b16 %v1430, %v1422
    %v2311 = vpack.c.b16 %v1431, %v1423
    %v2312 = vpack.c.b16 %v1440, %v1432
    %v2313 = vpack.c.b16 %v1441, %v1433
    %v2314 = vpack.c.b16 %v1442, %v1434
    %v2315 = vpack.c.b16 %v1443, %v1435
    %v2316 = vpack.c.b16 %v1444, %v1436
    %v2317 = vpack.c.b16 %v1445, %v1437
    %v2318 = vpack.c.b16 %v1446, %v1438
    %v2319 = vpack.c.b16 %v1447, %v1439
    %v2320 = vpack.c.b16 %v1456, %v1448
    %v2321 = vpack.c.b16 %v1457, %v1449
    %v2322 = vpack.c.b16 %v1458, %v1450
    %v2323 = vpack.c.b16 %v1459, %v1451
    %v2324 = vpack.c.b16 %v1460, %v1452
    %v2325 = vpack.c.b16 %v1461, %v1453
    %v2326 = vpack.c.b16 %v1462, %v1454
    %v2327 = vpack.c.b16 %v1463, %v1455
    %v2328 = vpack.c.b16 %v1472, %v1464
    %v2329 = vpack.c.b16 %v1473, %v1465
    %v2330 = vpack.c.b16 %v1474, %v1466
    %v2331 = vpack.c.b16 %v1475, %v1467
    %v2332 = vpack.c.b16 %v1476, %v1468
    %v2333 = vpack.c.b16 %v1477, %v1469
    %v2334 = vpack.c.b16 %v1478, %v1470
    %v2335 = vpack.c.b16 %v1479, %v1471
    %v2336 = vpack.c.b16 %v1488, %v1480
    %v2337 = vpack.c.b16 %v1489, %v1481
    %v2338 = vpack.c.b16 %v1490, %v1482
    %v2339 = vpack.c.b16 %v1491, %v1483
    %v2340 = vpack.c.b16 %v1492, %v1484
    %v2341 = vpack.c.b16 %v1493, %v1485
    %v2342 = vpack.c.b16 %v1494, %v1486
    %v2343 = vpack.c.b16 %v1495, %v1487
    %v2344 = vpack.c.b16 %v1504, %v1496
    %v2345 = vpack.c.b16 %v1505, %v1497
    %v2346 = vpack.c.b16 %v1506, %v1498
    %v2347 = vpack.c.b16 %v1507, %v1499
    %v2348 = vpack.c.b16 %v1508, %v1500
    %v2349 = vpack.c.b16 %v1509, %v1501
    %v2350 = vpack.c.b16 %v1510, %v1502
    %v2351 = vpack.c.b16 %v1511, %v1503
    %v2352 = vpack.c.b16 %v1520, %v1512
    %v2353 = vpack.c.b16 %v1521, %v1513
    %v2354 = vpack.c.b16 %v1522, %v1514
    %v2355 = vpack.c.b16 %v1523, %v1515
    %v2356 = vpack.c.b16 %v1524, %v1516
    %v2357 = vpack.c.b16 %v1525, %v1517
    %v2358 = vpack.c.b16 %v1526, %v1518
    %v2359 = vpack.c.b16 %v1527, %v1519
    %v2360 = vpack.c.b16 %v1536, %v1528
    %v2361 = vpack.c.b16 %v1537, %v1529
    %v2362 = vpack.c.b16 %v1538, %v1530
    %v2363 = vpack.c.b16 %v1539, %v1531
    %v2364 = vpack.c.b16 %v1540, %v1532
    %v2365 = vpack.c.b16 %v1541, %v1533
    %v2366 = vpack.c.b16 %v1542, %v1534
    %v2367 = vpack.c.b16 %v1543, %v1535
    %v2368 = vpack.c.b16 %v1552, %v1544
    %v2369 = vpack.c.b16 %v1553, %v1545
    %v2370 = vpack.c.b16 %v1554, %v1546
    %v2371 = vpack.c.b16 %v1555, %v1547
    %v2372 = vpack.c.b16 %v1556, %v1548
    %v2373 = vpack.c.b16 %v1557, %v1549
    %v2374 = vpack.c.b16 %v1558, %v1550
    %v2375 = vpack.c.b16 %v1559, %v1551
    %v2376 = vpack.c.b16 %v1568, %v1560
    %v2377 = vpack.c.b16 %v1569, %v1561
    %v2378 = vpack.c.b16 %v1570, %v1562
    %v2379 = vpack.c.b16 %v1571, %v1563
    %v2380 = vpack.c.b16 %v1572, %v1564
    %v2381 = vpack.c.b16 %v1573, %v1565
    %v2382 = vpack.c.b16 %v1574, %v1566
    %v2383 = vpack.c.b16 %v1575, %v1567
    %v2384 = vpack.c.b16 %v1584, %v1576
    %v2385 = vpack.c.b16 %v1585, %v1577
    %v2386 = vpack.c.b16 %v1586, %v1578
    %v2387 = vpack.c.b16 %v1587, %v1579
    %v2388 = vpack.c.b16 %v1588, %v1580
    %v2389 = vpack.c.b16 %v1589, %v1581
    %v2390 = vpack.c.b16 %v1590, %v1582
    %v2391 = vpack.c.b16 %v1591, %v1583
    %v2392 = vpack.c.b16 %v1600, %v1592
    %v2393 = vpack.c.b16 %v1601, %v1593
    %v2394 = vpack.c.b16 %v1602, %v1594
    %v2395 = vpack.c.b16 %v1603, %v1595
    %v2396 = vpack.c.b16 %v1604, %v1596
    %v2397 = vpack.c.b16 %v1605, %v1597
    %v2398 = vpack.c.b16 %v1606, %v1598
    %v2399 = vpack.c.b16 %v1607, %v1599
    %v2400 = vpack.c.b16 %v1616, %v1608
    %v2401 = vpack.c.b16 %v1617, %v1609
    %v2402 = vpack.c.b16 %v1618, %v1610
    %v2403 = vpack.c.b16 %v1619, %v1611
    %v2404 = vpack.c.b16 %v1620, %v1612
    %v2405 = vpack.c.b16 %v1621, %v1613
    %v2406 = vpack.c.b16 %v1622, %v1614
    %v2407 = vpack.c.b16 %v1623, %v1615
    %v2408 = vpack.c.b16 %v1632, %v1624
    %v2409 = vpack.c.b16 %v1633, %v1625
    %v2410 = vpack.c.b16 %v1634, %v1626
    %v2411 = vpack.c.b16 %v1635, %v1627
    %v2412 = vpack.c.b16 %v1636, %v1628
    %v2413 = vpack.c.b16 %v1637, %v1629
    %v2414 = vpack.c.b16 %v1638, %v1630
    %v2415 = vpack.c.b16 %v1639, %v1631
    %v2416 = vpack.c.b16 %v1648, %v1640
    %v2417 = vpack.c.b16 %v1649, %v1641
    %v2418 = vpack.c.b16 %v1650, %v1642
    %v2419 = vpack.c.b16 %v1651, %v1643
    %v2420 = vpack.c.b16 %v1652, %v1644
    %v2421 = vpack.c.b16 %v1653, %v1645
    %v2422 = vpack.c.b16 %v1654, %v1646
    %v2423 = vpack.c.b16 %v1655, %v1647
    %v2424 = vpack.c.b16 %v1664, %v1656
    %v2425 = vpack.c.b16 %v1665, %v1657
    %v2426 = vpack.c.b16 %v1666, %v1658
    %v2427 = vpack.c.b16 %v1667, %v1659
    %v2428 = vpack.c.b16 %v1668, %v1660
    %v2429 = vpack.c.b16 %v1669, %v1661
    %v2430 = vpack.c.b16 %v1670, %v1662
    %v2431 = vpack.c.b16 %v1671, %v1663
    %v2432 = vpack.c.b16 %v1680, %v1672
    %v2433 = vpack.c.b16 %v1681, %v1673
    %v2434 = vpack.c.b16 %v1682, %v1674
    %v2435 = vpack.c.b16 %v1683, %v1675
    %v2436 = vpack.c.b16 %v1684, %v1676
    %v2437 = vpack.c.b16 %v1685, %v1677
    %v2438 = vpack.c.b16 %v1686, %v1678
    %v2439 = vpack.c.b16 %v1687, %v1679
    %v2440 = vpack.c.b16 %v1696, %v1688
    %v2441 = vpack.c.b16 %v1697, %v1689
    %v2442 = vpack.c.b16 %v1698, %v1690
    %v2443 = vpack.c.b16 %v1699, %v1691
    %v2444 = vpack.c.b16 %v1700, %v1692
    %v2445 = vpack.c.b16 %v1701, %v1693
    %v2446 = vpack.c.b16 %v1702, %v1694
    %v2447 = vpack.c.b16 %v1703, %v1695
    %v2448 = vpack.c.b16 %v1712, %v1704
    %v2449 = vpack.c.b16 %v1713, %v1705
    %v2450 = vpack.c.b16 %v1714, %v1706
    %v2451 = vpack.c.b16 %v1715, %v1707
    %v2452 = vpack.c.b16 %v1716, %v1708
    %v2453 = vpack.c.b16 %v1717, %v1709
    %v2454 = vpack.c.b16 %v1718, %v1710
    %v2455 = vpack.c.b16 %v1719, %v1711
    %v2456 = vpack.c.b16 %v1728, %v1720
    %v2457 = vpack.c.b16 %v1729, %v1721
    %v2458 = vpack.c.b16 %v1730, %v1722
    %v2459 = vpack.c.b16 %v1731, %v1723
    %v2460 = vpack.c.b16 %v1732, %v1724
    %v2461 = vpack.c.b16 %v1733, %v1725
    %v2462 = vpack.c.b16 %v1734, %v1726
    %v2463 = vpack.c.b16 %v1735, %v1727
    %v2464 = vpack.c.b16 %v1744, %v1736
    %v2465 = vpack.c.b16 %v1745, %v1737
    %v2466 = vpack.c.b16 %v1746, %v1738
    %v2467 = vpack.c.b16 %v1747, %v1739
    %v2468 = vpack.c.b16 %v1748, %v1740
    %v2469 = vpack.c.b16 %v1749, %v1741
    %v2470 = vpack.c.b16 %v1750, %v1742
    %v2471 = vpack.c.b16 %v1751, %v1743
    %v2472 = vpack.c.b16 %v1760, %v1752
    %v2473 = vpack.c.b16 %v1761, %v1753
    %v2474 = vpack.c.b16 %v1762, %v1754
    %v2475 = vpack.c.b16 %v1763, %v1755
    %v2476 = vpack.c.b16 %v1764, %v1756
    %v2477 = vpack.c.b16 %v1765, %v1757
    %v2478 = vpack.c.b16 %v1766, %v1758
    %v2479 = vpack.c.b16 %v1767, %v1759
    %v2480 = vpack.c.b16 %v1776, %v1768
    %v2481 = vpack.c.b16 %v1777, %v1769
    %v2482 = vpack.c.b16 %v1778, %v1770
    %v2483 = vpack.c.b16 %v1779, %v1771
    %v2484 = vpack.c.b16 %v1780, %v1772
    %v2485 = vpack.c.b16 %v1781, %v1773
    %v2486 = vpack.c.b16 %v1782, %v1774
    %v2487 = vpack.c.b16 %v1783, %v1775
    %v2488 = vpack.c.b16 %v1792, %v1784
    %v2489 = vpack.c.b16 %v1793, %v1785
    %v2490 = vpack.c.b16 %v1794, %v1786
    %v2491 = vpack.c.b16 %v1795, %v1787
    %v2492 = vpack.c.b16 %v1796, %v1788
    %v2493 = vpack.c.b16 %v1797, %v1789
    %v2494 = vpack.c.b16 %v1798, %v1790
    %v2495 = vpack.c.b16 %v1799, %v1791
    %v2496 = vpack.c.b16 %v1808, %v1800
    %v2497 = vpack.c.b16 %v1809, %v1801
    %v2498 = vpack.c.b16 %v1810, %v1802
    %v2499 = vpack.c.b16 %v1811, %v1803
    %v2500 = vpack.c.b16 %v1812, %v1804
    %v2501 = vpack.c.b16 %v1813, %v1805
    %v2502 = vpack.c.b16 %v1814, %v1806
    %v2503 = vpack.c.b16 %v1815, %v1807
    %v2504 = vpack.c.b16 %v1824, %v1816
    %v2505 = vpack.c.b16 %v1825, %v1817
    %v2506 = vpack.c.b16 %v1826, %v1818
    %v2507 = vpack.c.b16 %v1827, %v1819
    %v2508 = vpack.c.b16 %v1828, %v1820
    %v2509 = vpack.c.b16 %v1829, %v1821
    %v2510 = vpack.c.b16 %v1830, %v1822
    %v2511 = vpack.c.b16 %v1831, %v1823
    %v2512 = vpack.c.b16 %v1840, %v1832
    %v2513 = vpack.c.b16 %v1841, %v1833
    %v2514 = vpack.c.b16 %v1842, %v1834
    %v2515 = vpack.c.b16 %v1843, %v1835
    %v2516 = vpack.c.b16 %v1844, %v1836
    %v2517 = vpack.c.b16 %v1845, %v1837
    %v2518 = vpack.c.b16 %v1846, %v1838
    %v2519 = vpack.c.b16 %v1847, %v1839
    %v2520 = vpack.c.b16 %v1856, %v1848
    %v2521 = vpack.c.b16 %v1857, %v1849
    %v2522 = vpack.c.b16 %v1858, %v1850
    %v2523 = vpack.c.b16 %v1859, %v1851
    %v2524 = vpack.c.b16 %v1860, %v1852
    %v2525 = vpack.c.b16 %v1861, %v1853
    %v2526 = vpack.c.b16 %v1862, %v1854
    %v2527 = vpack.c.b16 %v1863, %v1855
    %v2528 = vpack.c.b16 %v1872, %v1864
    %v2529 = vpack.c.b16 %v1873, %v1865
    %v2530 = vpack.c.b16 %v1874, %v1866
    %v2531 = vpack.c.b16 %v1875, %v1867
    %v2532 = vpack.c.b16 %v1876, %v1868
    %v2533 = vpack.c.b16 %v1877, %v1869
    %v2534 = vpack.c.b16 %v1878, %v1870
    %v2535 = vpack.c.b16 %v1879, %v1871
    %v2536 = vpack.c.b16 %v1888, %v1880
    %v2537 = vpack.c.b16 %v1889, %v1881
    %v2538 = vpack.c.b16 %v1890, %v1882
    %v2539 = vpack.c.b16 %v1891, %v1883
    %v2540 = vpack.c.b16 %v1892, %v1884
    %v2541 = vpack.c.b16 %v1893, %v1885
    %v2542 = vpack.c.b16 %v1894, %v1886
    %v2543 = vpack.c.b16 %v1895, %v1887
    %v2544 = vpack.c.b16 %v1904, %v1896
    %v2545 = vpack.c.b16 %v1905, %v1897
    %v2546 = vpack.c.b16 %v1906, %v1898
    %v2547 = vpack.c.b16 %v1907, %v1899
    %v2548 = vpack.c.b16 %v1908, %v1900
    %v2549 = vpack.c.b16 %v1909, %v1901
    %v2550 = vpack.c.b16 %v1910, %v1902
    %v2551 = vpack.c.b16 %v1911, %v1903
    %v2552 = vpack.c.b16 %v1920, %v1912
    %v2553 = vpack.c.b16 %v1921, %v1913
    %v2554 = vpack.c.b16 %v1922, %v1914
    %v2555 = vpack.c.b16 %v1923, %v1915
    %v2556 = vpack.c.b16 %v1924, %v1916
    %v2557 = vpack.c.b16 %v1925, %v1917
    %v2558 = vpack.c.b16 %v1926, %v1918
    %v2559 = vpack.c.b16 %v1927, %v1919
    %v2560 = vpack.c.b16 %v1936, %v1928
    %v2561 = vpack.c.b16 %v1937, %v1929
    %v2562 = vpack.c.b16 %v1938, %v1930
    %v2563 = vpack.c.b16 %v1939, %v1931
    %v2564 = vpack.c.b16 %v1940, %v1932
    %v2565 = vpack.c.b16 %v1941, %v1933
    %v2566 = vpack.c.b16 %v1942, %v1934
    %v2567 = vpack.c.b16 %v1943, %v1935
    %v2568 = vpack.c.b16 %v1952, %v1944
    %v2569 = vpack.c.b16 %v1953, %v1945
    %v2570 = vpack.c.b16 %v1954, %v1946
    %v2571 = vpack.c.b16 %v1955, %v1947
    %v2572 = vpack.c.b16 %v1956, %v1948
    %v2573 = vpack.c.b16 %v1957, %v1949
    %v2574 = vpack.c.b16 %v1958, %v1950
    %v2575 = vpack.c.b16 %v1959, %v1951
    %v2576 = vpack.c.b16 %v1968, %v1960
    %v2577 = vpack.c.b16 %v1969, %v1961
    %v2578 = vpack.c.b16 %v1970, %v1962
    %v2579 = vpack.c.b16 %v1971, %v1963
    %v2580 = vpack.c.b16 %v1972, %v1964
    %v2581 = vpack.c.b16 %v1973, %v1965
    %v2582 = vpack.c.b16 %v1974, %v1966
    %v2583 = vpack.c.b16 %v1975, %v1967
    %v2584 = vpack.c.b16 %v1984, %v1976
    %v2585 = vpack.c.b16 %v1985, %v1977
    %v2586 = vpack.c.b16 %v1986, %v1978
    %v2587 = vpack.c.b16 %v1987, %v1979
    %v2588 = vpack.c.b16 %v1988, %v1980
    %v2589 = vpack.c.b16 %v1989, %v1981
    %v2590 = vpack.c.b16 %v1990, %v1982
    %v2591 = vpack.c.b16 %v1991, %v1983
    %v2592 = vpack.c.b16 %v2000, %v1992
    %v2593 = vpack.c.b16 %v2001, %v1993
    %v2594 = vpack.c.b16 %v2002, %v1994
    %v2595 = vpack.c.b16 %v2003, %v1995
    %v2596 = vpack.c.b16 %v2004, %v1996
    %v2597 = vpack.c.b16 %v2005, %v1997
    %v2598 = vpack.c.b16 %v2006, %v1998
    %v2599 = vpack.c.b16 %v2007, %v1999
    %v2600 = vpack.c.b16 %v2016, %v2008
    %v2601 = vpack.c.b16 %v2017, %v2009
    %v2602 = vpack.c.b16 %v2018, %v2010
    %v2603 = vpack.c.b16 %v2019, %v2011
    %v2604 = vpack.c.b16 %v2020, %v2012
    %v2605 = vpack.c.b16 %v2021, %v2013
    %v2606 = vpack.c.b16 %v2022, %v2014
    %v2607 = vpack.c.b16 %v2023, %v2015
    %v2608 = vpack.c.b16 %v2032, %v2024
    %v2609 = vpack.c.b16 %v2033, %v2025
    %v2610 = vpack.c.b16 %v2034, %v2026
    %v2611 = vpack.c.b16 %v2035, %v2027
    %v2612 = vpack.c.b16 %v2036, %v2028
    %v2613 = vpack.c.b16 %v2037, %v2029
    %v2614 = vpack.c.b16 %v2038, %v2030
    %v2615 = vpack.c.b16 %v2039, %v2031
    %v2616 = vpack.c.b16 %v2048, %v2040
    %v2617 = vpack.c.b16 %v2049, %v2041
    %v2618 = vpack.c.b16 %v2050, %v2042
    %v2619 = vpack.c.b16 %v2051, %v2043
    %v2620 = vpack.c.b16 %v2052, %v2044
    %v2621 = vpack.c.b16 %v2053, %v2045
    %v2622 = vpack.c.b16 %v2054, %v2046
    %v2623 = vpack.c.b16 %v2055, %v2047
    %v2624 = vpack.c.b16 %v2064, %v2056
    %v2625 = vpack.c.b16 %v2065, %v2057
    %v2626 = vpack.c.b16 %v2066, %v2058
    %v2627 = vpack.c.b16 %v2067, %v2059
    %v2628 = vpack.c.b16 %v2068, %v2060
    %v2629 = vpack.c.b16 %v2069, %v2061
    %v2630 = vpack.c.b16 %v2070, %v2062
    %v2631 = vpack.c.b16 %v2071, %v2063
    %v2632 = vpack.c.b16 %v2080, %v2072
    %v2633 = vpack.c.b16 %v2081, %v2073
    %v2634 = vpack.c.b16 %v2082, %v2074
    %v2635 = vpack.c.b16 %v2083, %v2075
    %v2636 = vpack.c.b16 %v2084, %v2076
    %v2637 = vpack.c.b16 %v2085, %v2077
    %v2638 = vpack.c.b16 %v2086, %v2078
    %v2639 = vpack.c.b16 %v2087, %v2079
    %v2640 = vpack.c.b16 %v2096, %v2088
    %v2641 = vpack.c.b16 %v2097, %v2089
    %v2642 = vpack.c.b16 %v2098, %v2090
    %v2643 = vpack.c.b16 %v2099, %v2091
    %v2644 = vpack.c.b16 %v2100, %v2092
    %v2645 = vpack.c.b16 %v2101, %v2093
    %v2646 = vpack.c.b16 %v2102, %v2094
    %v2647 = vpack.c.b16 %v2103, %v2095
    %v2648 = vpack.c.b16 %v2112, %v2104
    %v2649 = vpack.c.b16 %v2113, %v2105
    %v2650 = vpack.c.b16 %v2114, %v2106
    %v2651 = vpack.c.b16 %v2115, %v2107
    %v2652 = vpack.c.b16 %v2116, %v2108
    %v2653 = vpack.c.b16 %v2117, %v2109
    %v2654 = vpack.c.b16 %v2118, %v2110
    %v2655 = vpack.c.b16 %v2119, %v2111
    %v2656 = vpack.c.b16 %v2128, %v2120
    %v2657 = vpack.c.b16 %v2129, %v2121
    %v2658 = vpack.c.b16 %v2130, %v2122
    %v2659 = vpack.c.b16 %v2131, %v2123
    %v2660 = vpack.c.b16 %v2132, %v2124
    %v2661 = vpack.c.b16 %v2133, %v2125
    %v2662 = vpack.c.b16 %v2134, %v2126
    %v2663 = vpack.c.b16 %v2135, %v2127
    %v2664 = vpack.c.b16 %v2144, %v2136
    %v2665 = vpack.c.b16 %v2145, %v2137
    %v2666 = vpack.c.b16 %v2146, %v2138
    %v2667 = vpack.c.b16 %v2147, %v2139
    %v2668 = vpack.c.b16 %v2148, %v2140
    %v2669 = vpack.c.b16 %v2149, %v2141
    %v2670 = vpack.c.b16 %v2150, %v2142
    %v2671 = vpack.c.b16 %v2151, %v2143
    %v2672 = vpack.c.b16 %v2160, %v2152
    %v2673 = vpack.c.b16 %v2161, %v2153
    %v2674 = vpack.c.b16 %v2162, %v2154
    %v2675 = vpack.c.b16 %v2163, %v2155
    %v2676 = vpack.c.b16 %v2164, %v2156
    %v2677 = vpack.c.b16 %v2165, %v2157
    %v2678 = vpack.c.b16 %v2166, %v2158
    %v2679 = vpack.c.b16 %v2167, %v2159
    %3192 = vmatprep.subr.bf16.mxu0 %v2225
    %3193 = vmatpush1.bf16.msra.mxu0 %v2224
    %3194 = vmatprep.subr.bf16.mxu0 %v2217
    %3195 = vmatpush1.bf16.msra.mxu0 %v2216
    %3196 = vmatprep.subr.bf16.mxu0 %v2209
    %3197 = vmatpush1.bf16.msra.mxu0 %v2208
    %3198 = vmatprep.subr.bf16.mxu0 %v2201
    %3199 = vmatpush1.bf16.msra.mxu0 %v2200
    %3200 = vmatprep.subr.bf16.mxu0 %v2193
    %3201 = vmatpush1.bf16.msra.mxu0 %v2192
    %3202 = vmatprep.subr.bf16.mxu0 %v2185
    %3203 = vmatpush1.bf16.msra.mxu0 %v2184
    %3204 = vmatprep.subr.bf16.mxu0 %v2177
    %3205 = vmatpush1.bf16.msra.mxu0 %v2176
    %3206 = vmatprep.subr.bf16.mxu0 %v2169
    %3207 = vmatpush1.bf16.msra.mxu0 %v2168
    %3208 = vmatprep.subr.bf16.mxu0 %v2289
    %3209 = vmatpush2.bf16.msra.mxu0 %v2288
    %3210 = vmatprep.subr.bf16.mxu0 %v2281
    %3211 = vmatpush2.bf16.msra.mxu0 %v2280
    %3212 = vmatprep.subr.bf16.mxu0 %v2273
    %3213 = vmatpush2.bf16.msra.mxu0 %v2272
    %3214 = vmatprep.subr.bf16.mxu0 %v2265
    %3215 = vmatpush2.bf16.msra.mxu0 %v2264
    %3216 = vmatprep.subr.bf16.mxu0 %v2257
    %3217 = vmatpush2.bf16.msra.mxu0 %v2256
    %3218 = vmatprep.subr.bf16.mxu0 %v2249
    %3219 = vmatpush2.bf16.msra.mxu0 %v2248
    %3220 = vmatprep.subr.bf16.mxu0 %v2241
    %3221 = vmatpush2.bf16.msra.mxu0 %v2240
    %3222 = vmatprep.subr.bf16.mxu0 %v2233
    %3223 = vmatpush2.bf16.msra.mxu0 %v2232
    %3224 = vmatprep.mubr.bf16.mxu0 %v617
    %3225 = vmatmul.mubr.bf16.gmra.mxu0 %v616
    %v3226 = vpop.f32.mrf.mxu0
    %v3227 = vadd.f32 0.0, %v3226
    %v3228 = vpop.f32.mrf.mxu0
    %v3229 = vadd.f32 0.0, %v3228
    %v3230 = vpop.f32.mrf.mxu0
    %v3231 = vpop.f32.mrf.mxu0
    %3232 = vdwg.mxu0
    %3233 = vmatprep.subr.bf16.mxu0 %v2353
    %3234 = vmatpush1.bf16.msra.mxu0 %v2352
    %3235 = vmatprep.subr.bf16.mxu0 %v2345
    %3236 = vmatpush1.bf16.msra.mxu0 %v2344
    %3237 = vmatprep.subr.bf16.mxu0 %v2337
    %3238 = vmatpush1.bf16.msra.mxu0 %v2336
    %3239 = vmatprep.subr.bf16.mxu0 %v2329
    %3240 = vmatpush1.bf16.msra.mxu0 %v2328
    %3241 = vmatprep.subr.bf16.mxu0 %v2321
    %3242 = vmatpush1.bf16.msra.mxu0 %v2320
    %3243 = vmatprep.subr.bf16.mxu0 %v2313
    %3244 = vmatpush1.bf16.msra.mxu0 %v2312
    %3245 = vmatprep.subr.bf16.mxu0 %v2305
    %3246 = vmatpush1.bf16.msra.mxu0 %v2304
    %3247 = vmatprep.subr.bf16.mxu0 %v2297
    %3248 = vmatpush1.bf16.msra.mxu0 %v2296
    %3249 = vmatprep.subr.bf16.mxu0 %v2417
    %3250 = vmatpush2.bf16.msra.mxu0 %v2416
    %3251 = vmatprep.subr.bf16.mxu0 %v2409
    %3252 = vmatpush2.bf16.msra.mxu0 %v2408
    %3253 = vmatprep.subr.bf16.mxu0 %v2401
    %3254 = vmatpush2.bf16.msra.mxu0 %v2400
    %3255 = vmatprep.subr.bf16.mxu0 %v2393
    %3256 = vmatpush2.bf16.msra.mxu0 %v2392
    %3257 = vmatprep.subr.bf16.mxu0 %v2385
    %3258 = vmatpush2.bf16.msra.mxu0 %v2384
    %3259 = vmatprep.subr.bf16.mxu0 %v2377
    %3260 = vmatpush2.bf16.msra.mxu0 %v2376
    %3261 = vmatprep.subr.bf16.mxu0 %v2369
    %3262 = vmatpush2.bf16.msra.mxu0 %v2368
    %3263 = vmatprep.subr.bf16.mxu0 %v2361
    %3264 = vmatpush2.bf16.msra.mxu0 %v2360
    %3265 = vmatprep.mubr.bf16.mxu0 %v619
    %3266 = vmatmul.mubr.bf16.gmra.mxu0 %v618
    %v3267 = vpop.f32.mrf.mxu0
    %v3268 = vadd.f32 %v3227, %v3267
    %v3269 = vpop.f32.mrf.mxu0
    %v3270 = vadd.f32 %v3229, %v3269
    %v3271 = vpop.f32.mrf.mxu0
    %v3272 = vpop.f32.mrf.mxu0
    %3273 = vdwg.mxu0
    %3274 = vmatprep.subr.bf16.mxu0 %v2481
    %3275 = vmatpush1.bf16.msra.mxu0 %v2480
    %3276 = vmatprep.subr.bf16.mxu0 %v2473
    %3277 = vmatpush1.bf16.msra.mxu0 %v2472
    %3278 = vmatprep.subr.bf16.mxu0 %v2465
    %3279 = vmatpush1.bf16.msra.mxu0 %v2464
    %3280 = vmatprep.subr.bf16.mxu0 %v2457
    %3281 = vmatpush1.bf16.msra.mxu0 %v2456
    %3282 = vmatprep.subr.bf16.mxu0 %v2449
    %3283 = vmatpush1.bf16.msra.mxu0 %v2448
    %3284 = vmatprep.subr.bf16.mxu0 %v2441
    %3285 = vmatpush1.bf16.msra.mxu0 %v2440
    %3286 = vmatprep.subr.bf16.mxu0 %v2433
    %3287 = vmatpush1.bf16.msra.mxu0 %v2432
    %3288 = vmatprep.subr.bf16.mxu0 %v2425
    %3289 = vmatpush1.bf16.msra.mxu0 %v2424
    %3290 = vmatprep.subr.bf16.mxu0 %v2545
    %3291 = vmatpush2.bf16.msra.mxu0 %v2544
    %3292 = vmatprep.subr.bf16.mxu0 %v2537
    %3293 = vmatpush2.bf16.msra.mxu0 %v2536
    %3294 = vmatprep.subr.bf16.mxu0 %v2529
    %3295 = vmatpush2.bf16.msra.mxu0 %v2528
    %3296 = vmatprep.subr.bf16.mxu0 %v2521
    %3297 = vmatpush2.bf16.msra.mxu0 %v2520
    %3298 = vmatprep.subr.bf16.mxu0 %v2513
    %3299 = vmatpush2.bf16.msra.mxu0 %v2512
    %3300 = vmatprep.subr.bf16.mxu0 %v2505
    %3301 = vmatpush2.bf16.msra.mxu0 %v2504
    %3302 = vmatprep.subr.bf16.mxu0 %v2497
    %3303 = vmatpush2.bf16.msra.mxu0 %v2496
    %3304 = vmatprep.subr.bf16.mxu0 %v2489
    %3305 = vmatpush2.bf16.msra.mxu0 %v2488
    %3306 = vmatprep.mubr.bf16.mxu0 %v621
    %3307 = vmatmul.mubr.bf16.gmra.mxu0 %v620
    %v3308 = vpop.f32.mrf.mxu0
    %v3309 = vadd.f32 %v3268, %v3308
    %v3310 = vpop.f32.mrf.mxu0
    %v3311 = vadd.f32 %v3270, %v3310
    %v3312 = vpop.f32.mrf.mxu0
    %v3313 = vpop.f32.mrf.mxu0
    %3314 = vdwg.mxu0
    %3315 = vmatprep.subr.bf16.mxu0 %v2609
    %3316 = vmatpush1.bf16.msra.mxu0 %v2608
    %3317 = vmatprep.subr.bf16.mxu0 %v2601
    %3318 = vmatpush1.bf16.msra.mxu0 %v2600
    %3319 = vmatprep.subr.bf16.mxu0 %v2593
    %3320 = vmatpush1.bf16.msra.mxu0 %v2592
    %3321 = vmatprep.subr.bf16.mxu0 %v2585
    %3322 = vmatpush1.bf16.msra.mxu0 %v2584
    %3323 = vmatprep.subr.bf16.mxu0 %v2577
    %3324 = vmatpush1.bf16.msra.mxu0 %v2576
    %3325 = vmatprep.subr.bf16.mxu0 %v2569
    %3326 = vmatpush1.bf16.msra.mxu0 %v2568
    %3327 = vmatprep.subr.bf16.mxu0 %v2561
    %3328 = vmatpush1.bf16.msra.mxu0 %v2560
    %3329 = vmatprep.subr.bf16.mxu0 %v2553
    %3330 = vmatpush1.bf16.msra.mxu0 %v2552
    %3331 = vmatprep.subr.bf16.mxu0 %v2673
    %3332 = vmatpush2.bf16.msra.mxu0 %v2672
    %3333 = vmatprep.subr.bf16.mxu0 %v2665
    %3334 = vmatpush2.bf16.msra.mxu0 %v2664
    %3335 = vmatprep.subr.bf16.mxu0 %v2657
    %3336 = vmatpush2.bf16.msra.mxu0 %v2656
    %3337 = vmatprep.subr.bf16.mxu0 %v2649
    %3338 = vmatpush2.bf16.msra.mxu0 %v2648
    %3339 = vmatprep.subr.bf16.mxu0 %v2641
    %3340 = vmatpush2.bf16.msra.mxu0 %v2640
    %3341 = vmatprep.subr.bf16.mxu0 %v2633
    %3342 = vmatpush2.bf16.msra.mxu0 %v2632
    %3343 = vmatprep.subr.bf16.mxu0 %v2625
    %3344 = vmatpush2.bf16.msra.mxu0 %v2624
    %3345 = vmatprep.subr.bf16.mxu0 %v2617
    %3346 = vmatpush2.bf16.msra.mxu0 %v2616
    %3347 = vmatprep.mubr.bf16.mxu0 %v623
    %3348 = vmatmul.mubr.bf16.gmra.mxu0 %v622
    %v3349 = vpop.f32.mrf.mxu0
    %v3350 = vadd.f32 %v3309, %v3349
    %v3351 = vpop.f32.mrf.mxu0
    %v3352 = vadd.f32 %v3311, %v3351
    %v3353 = vpop.f32.mrf.mxu0
    %v3354 = vpop.f32.mrf.mxu0
    %3355 = vdwg.mxu0
    %3356 = vmatprep.subr.bf16.mxu0 %v2227
    %3357 = vmatpush1.bf16.msra.mxu0 %v2226
    %3358 = vmatprep.subr.bf16.mxu0 %v2219
    %3359 = vmatpush1.bf16.msra.mxu0 %v2218
    %3360 = vmatprep.subr.bf16.mxu0 %v2211
    %3361 = vmatpush1.bf16.msra.mxu0 %v2210
    %3362 = vmatprep.subr.bf16.mxu0 %v2203
    %3363 = vmatpush1.bf16.msra.mxu0 %v2202
    %3364 = vmatprep.subr.bf16.mxu0 %v2195
    %3365 = vmatpush1.bf16.msra.mxu0 %v2194
    %3366 = vmatprep.subr.bf16.mxu0 %v2187
    %3367 = vmatpush1.bf16.msra.mxu0 %v2186
    %3368 = vmatprep.subr.bf16.mxu0 %v2179
    %3369 = vmatpush1.bf16.msra.mxu0 %v2178
    %3370 = vmatprep.subr.bf16.mxu0 %v2171
    %3371 = vmatpush1.bf16.msra.mxu0 %v2170
    %3372 = vmatprep.subr.bf16.mxu0 %v2291
    %3373 = vmatpush2.bf16.msra.mxu0 %v2290
    %3374 = vmatprep.subr.bf16.mxu0 %v2283
    %3375 = vmatpush2.bf16.msra.mxu0 %v2282
    %3376 = vmatprep.subr.bf16.mxu0 %v2275
    %3377 = vmatpush2.bf16.msra.mxu0 %v2274
    %3378 = vmatprep.subr.bf16.mxu0 %v2267
    %3379 = vmatpush2.bf16.msra.mxu0 %v2266
    %3380 = vmatprep.subr.bf16.mxu0 %v2259
    %3381 = vmatpush2.bf16.msra.mxu0 %v2258
    %3382 = vmatprep.subr.bf16.mxu0 %v2251
    %3383 = vmatpush2.bf16.msra.mxu0 %v2250
    %3384 = vmatprep.subr.bf16.mxu0 %v2243
    %3385 = vmatpush2.bf16.msra.mxu0 %v2242
    %3386 = vmatprep.subr.bf16.mxu0 %v2235
    %3387 = vmatpush2.bf16.msra.mxu0 %v2234
    %3388 = vmatprep.mubr.bf16.mxu0 %v617
    %3389 = vmatmul.mubr.bf16.gmra.mxu0 %v616
    %v3390 = vpop.f32.mrf.mxu0
    %v3391 = vadd.f32 0.0, %v3390
    %v3392 = vpop.f32.mrf.mxu0
    %v3393 = vadd.f32 0.0, %v3392
    %v3394 = vpop.f32.mrf.mxu0
    %v3395 = vpop.f32.mrf.mxu0
    %3396 = vdwg.mxu0
    %3397 = vmatprep.subr.bf16.mxu0 %v2355
    %3398 = vmatpush1.bf16.msra.mxu0 %v2354
    %3399 = vmatprep.subr.bf16.mxu0 %v2347
    %3400 = vmatpush1.bf16.msra.mxu0 %v2346
    %3401 = vmatprep.subr.bf16.mxu0 %v2339
    %3402 = vmatpush1.bf16.msra.mxu0 %v2338
    %3403 = vmatprep.subr.bf16.mxu0 %v2331
    %3404 = vmatpush1.bf16.msra.mxu0 %v2330
    %3405 = vmatprep.subr.bf16.mxu0 %v2323
    %3406 = vmatpush1.bf16.msra.mxu0 %v2322
    %3407 = vmatprep.subr.bf16.mxu0 %v2315
    %3408 = vmatpush1.bf16.msra.mxu0 %v2314
    %3409 = vmatprep.subr.bf16.mxu0 %v2307
    %3410 = vmatpush1.bf16.msra.mxu0 %v2306
    %3411 = vmatprep.subr.bf16.mxu0 %v2299
    %3412 = vmatpush1.bf16.msra.mxu0 %v2298
    %3413 = vmatprep.subr.bf16.mxu0 %v2419
    %3414 = vmatpush2.bf16.msra.mxu0 %v2418
    %3415 = vmatprep.subr.bf16.mxu0 %v2411
    %3416 = vmatpush2.bf16.msra.mxu0 %v2410
    %3417 = vmatprep.subr.bf16.mxu0 %v2403
    %3418 = vmatpush2.bf16.msra.mxu0 %v2402
    %3419 = vmatprep.subr.bf16.mxu0 %v2395
    %3420 = vmatpush2.bf16.msra.mxu0 %v2394
    %3421 = vmatprep.subr.bf16.mxu0 %v2387
    %3422 = vmatpush2.bf16.msra.mxu0 %v2386
    %3423 = vmatprep.subr.bf16.mxu0 %v2379
    %3424 = vmatpush2.bf16.msra.mxu0 %v2378
    %3425 = vmatprep.subr.bf16.mxu0 %v2371
    %3426 = vmatpush2.bf16.msra.mxu0 %v2370
    %3427 = vmatprep.subr.bf16.mxu0 %v2363
    %3428 = vmatpush2.bf16.msra.mxu0 %v2362
    %3429 = vmatprep.mubr.bf16.mxu0 %v619
    %3430 = vmatmul.mubr.bf16.gmra.mxu0 %v618
    %v3431 = vpop.f32.mrf.mxu0
    %v3432 = vadd.f32 %v3391, %v3431
    %v3433 = vpop.f32.mrf.mxu0
    %v3434 = vadd.f32 %v3393, %v3433
    %v3435 = vpop.f32.mrf.mxu0
    %v3436 = vpop.f32.mrf.mxu0
    %3437 = vdwg.mxu0
    %3438 = vmatprep.subr.bf16.mxu0 %v2483
    %3439 = vmatpush1.bf16.msra.mxu0 %v2482
    %3440 = vmatprep.subr.bf16.mxu0 %v2475
    %3441 = vmatpush1.bf16.msra.mxu0 %v2474
    %3442 = vmatprep.subr.bf16.mxu0 %v2467
    %3443 = vmatpush1.bf16.msra.mxu0 %v2466
    %3444 = vmatprep.subr.bf16.mxu0 %v2459
    %3445 = vmatpush1.bf16.msra.mxu0 %v2458
    %3446 = vmatprep.subr.bf16.mxu0 %v2451
    %3447 = vmatpush1.bf16.msra.mxu0 %v2450
    %3448 = vmatprep.subr.bf16.mxu0 %v2443
    %3449 = vmatpush1.bf16.msra.mxu0 %v2442
    %3450 = vmatprep.subr.bf16.mxu0 %v2435
    %3451 = vmatpush1.bf16.msra.mxu0 %v2434
    %3452 = vmatprep.subr.bf16.mxu0 %v2427
    %3453 = vmatpush1.bf16.msra.mxu0 %v2426
    %3454 = vmatprep.subr.bf16.mxu0 %v2547
    %3455 = vmatpush2.bf16.msra.mxu0 %v2546
    %3456 = vmatprep.subr.bf16.mxu0 %v2539
    %3457 = vmatpush2.bf16.msra.mxu0 %v2538
    %3458 = vmatprep.subr.bf16.mxu0 %v2531
    %3459 = vmatpush2.bf16.msra.mxu0 %v2530
    %3460 = vmatprep.subr.bf16.mxu0 %v2523
    %3461 = vmatpush2.bf16.msra.mxu0 %v2522
    %3462 = vmatprep.subr.bf16.mxu0 %v2515
    %3463 = vmatpush2.bf16.msra.mxu0 %v2514
    %3464 = vmatprep.subr.bf16.mxu0 %v2507
    %3465 = vmatpush2.bf16.msra.mxu0 %v2506
    %3466 = vmatprep.subr.bf16.mxu0 %v2499
    %3467 = vmatpush2.bf16.msra.mxu0 %v2498
    %3468 = vmatprep.subr.bf16.mxu0 %v2491
    %3469 = vmatpush2.bf16.msra.mxu0 %v2490
    %3470 = vmatprep.mubr.bf16.mxu0 %v621
    %3471 = vmatmul.mubr.bf16.gmra.mxu0 %v620
    %v3472 = vpop.f32.mrf.mxu0
    %v3473 = vadd.f32 %v3432, %v3472
    %v3474 = vpop.f32.mrf.mxu0
    %v3475 = vadd.f32 %v3434, %v3474
    %v3476 = vpop.f32.mrf.mxu0
    %v3477 = vpop.f32.mrf.mxu0
    %3478 = vdwg.mxu0
    %3479 = vmatprep.subr.bf16.mxu0 %v2611
    %3480 = vmatpush1.bf16.msra.mxu0 %v2610
    %3481 = vmatprep.subr.bf16.mxu0 %v2603
    %3482 = vmatpush1.bf16.msra.mxu0 %v2602
    %3483 = vmatprep.subr.bf16.mxu0 %v2595
    %3484 = vmatpush1.bf16.msra.mxu0 %v2594
    %3485 = vmatprep.subr.bf16.mxu0 %v2587
    %3486 = vmatpush1.bf16.msra.mxu0 %v2586
    %3487 = vmatprep.subr.bf16.mxu0 %v2579
    %3488 = vmatpush1.bf16.msra.mxu0 %v2578
    %3489 = vmatprep.subr.bf16.mxu0 %v2571
    %3490 = vmatpush1.bf16.msra.mxu0 %v2570
    %3491 = vmatprep.subr.bf16.mxu0 %v2563
    %3492 = vmatpush1.bf16.msra.mxu0 %v2562
    %3493 = vmatprep.subr.bf16.mxu0 %v2555
    %3494 = vmatpush1.bf16.msra.mxu0 %v2554
    %3495 = vmatprep.subr.bf16.mxu0 %v2675
    %3496 = vmatpush2.bf16.msra.mxu0 %v2674
    %3497 = vmatprep.subr.bf16.mxu0 %v2667
    %3498 = vmatpush2.bf16.msra.mxu0 %v2666
    %3499 = vmatprep.subr.bf16.mxu0 %v2659
    %3500 = vmatpush2.bf16.msra.mxu0 %v2658
    %3501 = vmatprep.subr.bf16.mxu0 %v2651
    %3502 = vmatpush2.bf16.msra.mxu0 %v2650
    %3503 = vmatprep.subr.bf16.mxu0 %v2643
    %3504 = vmatpush2.bf16.msra.mxu0 %v2642
    %3505 = vmatprep.subr.bf16.mxu0 %v2635
    %3506 = vmatpush2.bf16.msra.mxu0 %v2634
    %3507 = vmatprep.subr.bf16.mxu0 %v2627
    %3508 = vmatpush2.bf16.msra.mxu0 %v2626
    %3509 = vmatprep.subr.bf16.mxu0 %v2619
    %3510 = vmatpush2.bf16.msra.mxu0 %v2618
    %3511 = vmatprep.mubr.bf16.mxu0 %v623
    %3512 = vmatmul.mubr.bf16.gmra.mxu0 %v622
    %v3513 = vpop.f32.mrf.mxu0
    %v3514 = vadd.f32 %v3473, %v3513
    %v3515 = vpop.f32.mrf.mxu0
    %v3516 = vadd.f32 %v3475, %v3515
    %v3517 = vpop.f32.mrf.mxu0
    %v3518 = vpop.f32.mrf.mxu0
    %3519 = vdwg.mxu0
    %3520 = vmatprep.subr.bf16.mxu0 %v2229
    %3521 = vmatpush1.bf16.msra.mxu0 %v2228
    %3522 = vmatprep.subr.bf16.mxu0 %v2221
    %3523 = vmatpush1.bf16.msra.mxu0 %v2220
    %3524 = vmatprep.subr.bf16.mxu0 %v2213
    %3525 = vmatpush1.bf16.msra.mxu0 %v2212
    %3526 = vmatprep.subr.bf16.mxu0 %v2205
    %3527 = vmatpush1.bf16.msra.mxu0 %v2204
    %3528 = vmatprep.subr.bf16.mxu0 %v2197
    %3529 = vmatpush1.bf16.msra.mxu0 %v2196
    %3530 = vmatprep.subr.bf16.mxu0 %v2189
    %3531 = vmatpush1.bf16.msra.mxu0 %v2188
    %3532 = vmatprep.subr.bf16.mxu0 %v2181
    %3533 = vmatpush1.bf16.msra.mxu0 %v2180
    %3534 = vmatprep.subr.bf16.mxu0 %v2173
    %3535 = vmatpush1.bf16.msra.mxu0 %v2172
    %3536 = vmatprep.subr.bf16.mxu0 %v2293
    %3537 = vmatpush2.bf16.msra.mxu0 %v2292
    %3538 = vmatprep.subr.bf16.mxu0 %v2285
    %3539 = vmatpush2.bf16.msra.mxu0 %v2284
    %3540 = vmatprep.subr.bf16.mxu0 %v2277
    %3541 = vmatpush2.bf16.msra.mxu0 %v2276
    %3542 = vmatprep.subr.bf16.mxu0 %v2269
    %3543 = vmatpush2.bf16.msra.mxu0 %v2268
    %3544 = vmatprep.subr.bf16.mxu0 %v2261
    %3545 = vmatpush2.bf16.msra.mxu0 %v2260
    %3546 = vmatprep.subr.bf16.mxu0 %v2253
    %3547 = vmatpush2.bf16.msra.mxu0 %v2252
    %3548 = vmatprep.subr.bf16.mxu0 %v2245
    %3549 = vmatpush2.bf16.msra.mxu0 %v2244
    %3550 = vmatprep.subr.bf16.mxu0 %v2237
    %3551 = vmatpush2.bf16.msra.mxu0 %v2236
    %3552 = vmatprep.mubr.bf16.mxu0 %v617
    %3553 = vmatmul.mubr.bf16.gmra.mxu0 %v616
    %v3554 = vpop.f32.mrf.mxu0
    %v3555 = vadd.f32 0.0, %v3554
    %v3556 = vpop.f32.mrf.mxu0
    %v3557 = vadd.f32 0.0, %v3556
    %v3558 = vpop.f32.mrf.mxu0
    %v3559 = vpop.f32.mrf.mxu0
    %3560 = vdwg.mxu0
    %3561 = vmatprep.subr.bf16.mxu0 %v2357
    %3562 = vmatpush1.bf16.msra.mxu0 %v2356
    %3563 = vmatprep.subr.bf16.mxu0 %v2349
    %3564 = vmatpush1.bf16.msra.mxu0 %v2348
    %3565 = vmatprep.subr.bf16.mxu0 %v2341
    %3566 = vmatpush1.bf16.msra.mxu0 %v2340
    %3567 = vmatprep.subr.bf16.mxu0 %v2333
    %3568 = vmatpush1.bf16.msra.mxu0 %v2332
    %3569 = vmatprep.subr.bf16.mxu0 %v2325
    %3570 = vmatpush1.bf16.msra.mxu0 %v2324
    %3571 = vmatprep.subr.bf16.mxu0 %v2317
    %3572 = vmatpush1.bf16.msra.mxu0 %v2316
    %3573 = vmatprep.subr.bf16.mxu0 %v2309
    %3574 = vmatpush1.bf16.msra.mxu0 %v2308
    %3575 = vmatprep.subr.bf16.mxu0 %v2301
    %3576 = vmatpush1.bf16.msra.mxu0 %v2300
    %3577 = vmatprep.subr.bf16.mxu0 %v2421
    %3578 = vmatpush2.bf16.msra.mxu0 %v2420
    %3579 = vmatprep.subr.bf16.mxu0 %v2413
    %3580 = vmatpush2.bf16.msra.mxu0 %v2412
    %3581 = vmatprep.subr.bf16.mxu0 %v2405
    %3582 = vmatpush2.bf16.msra.mxu0 %v2404
    %3583 = vmatprep.subr.bf16.mxu0 %v2397
    %3584 = vmatpush2.bf16.msra.mxu0 %v2396
    %3585 = vmatprep.subr.bf16.mxu0 %v2389
    %3586 = vmatpush2.bf16.msra.mxu0 %v2388
    %3587 = vmatprep.subr.bf16.mxu0 %v2381
    %3588 = vmatpush2.bf16.msra.mxu0 %v2380
    %3589 = vmatprep.subr.bf16.mxu0 %v2373
    %3590 = vmatpush2.bf16.msra.mxu0 %v2372
    %3591 = vmatprep.subr.bf16.mxu0 %v2365
    %3592 = vmatpush2.bf16.msra.mxu0 %v2364
    %3593 = vmatprep.mubr.bf16.mxu0 %v619
    %3594 = vmatmul.mubr.bf16.gmra.mxu0 %v618
    %v3595 = vpop.f32.mrf.mxu0
    %v3596 = vadd.f32 %v3555, %v3595
    %v3597 = vpop.f32.mrf.mxu0
    %v3598 = vadd.f32 %v3557, %v3597
    %v3599 = vpop.f32.mrf.mxu0
    %v3600 = vpop.f32.mrf.mxu0
    %3601 = vdwg.mxu0
    %3602 = vmatprep.subr.bf16.mxu0 %v2485
    %3603 = vmatpush1.bf16.msra.mxu0 %v2484
    %3604 = vmatprep.subr.bf16.mxu0 %v2477
    %3605 = vmatpush1.bf16.msra.mxu0 %v2476
    %3606 = vmatprep.subr.bf16.mxu0 %v2469
    %3607 = vmatpush1.bf16.msra.mxu0 %v2468
    %3608 = vmatprep.subr.bf16.mxu0 %v2461
    %3609 = vmatpush1.bf16.msra.mxu0 %v2460
    %3610 = vmatprep.subr.bf16.mxu0 %v2453
    %3611 = vmatpush1.bf16.msra.mxu0 %v2452
    %3612 = vmatprep.subr.bf16.mxu0 %v2445
    %3613 = vmatpush1.bf16.msra.mxu0 %v2444
    %3614 = vmatprep.subr.bf16.mxu0 %v2437
    %3615 = vmatpush1.bf16.msra.mxu0 %v2436
    %3616 = vmatprep.subr.bf16.mxu0 %v2429
    %3617 = vmatpush1.bf16.msra.mxu0 %v2428
    %3618 = vmatprep.subr.bf16.mxu0 %v2549
    %3619 = vmatpush2.bf16.msra.mxu0 %v2548
    %3620 = vmatprep.subr.bf16.mxu0 %v2541
    %3621 = vmatpush2.bf16.msra.mxu0 %v2540
    %3622 = vmatprep.subr.bf16.mxu0 %v2533
    %3623 = vmatpush2.bf16.msra.mxu0 %v2532
    %3624 = vmatprep.subr.bf16.mxu0 %v2525
    %3625 = vmatpush2.bf16.msra.mxu0 %v2524
    %3626 = vmatprep.subr.bf16.mxu0 %v2517
    %3627 = vmatpush2.bf16.msra.mxu0 %v2516
    %3628 = vmatprep.subr.bf16.mxu0 %v2509
    %3629 = vmatpush2.bf16.msra.mxu0 %v2508
    %3630 = vmatprep.subr.bf16.mxu0 %v2501
    %3631 = vmatpush2.bf16.msra.mxu0 %v2500
    %3632 = vmatprep.subr.bf16.mxu0 %v2493
    %3633 = vmatpush2.bf16.msra.mxu0 %v2492
    %3634 = vmatprep.mubr.bf16.mxu0 %v621
    %3635 = vmatmul.mubr.bf16.gmra.mxu0 %v620
    %v3636 = vpop.f32.mrf.mxu0
    %v3637 = vadd.f32 %v3596, %v3636
    %v3638 = vpop.f32.mrf.mxu0
    %v3639 = vadd.f32 %v3598, %v3638
    %v3640 = vpop.f32.mrf.mxu0
    %v3641 = vpop.f32.mrf.mxu0
    %3642 = vdwg.mxu0
    %3643 = vmatprep.subr.bf16.mxu0 %v2613
    %3644 = vmatpush1.bf16.msra.mxu0 %v2612
    %3645 = vmatprep.subr.bf16.mxu0 %v2605
    %3646 = vmatpush1.bf16.msra.mxu0 %v2604
    %3647 = vmatprep.subr.bf16.mxu0 %v2597
    %3648 = vmatpush1.bf16.msra.mxu0 %v2596
    %3649 = vmatprep.subr.bf16.mxu0 %v2589
    %3650 = vmatpush1.bf16.msra.mxu0 %v2588
    %3651 = vmatprep.subr.bf16.mxu0 %v2581
    %3652 = vmatpush1.bf16.msra.mxu0 %v2580
    %3653 = vmatprep.subr.bf16.mxu0 %v2573
    %3654 = vmatpush1.bf16.msra.mxu0 %v2572
    %3655 = vmatprep.subr.bf16.mxu0 %v2565
    %3656 = vmatpush1.bf16.msra.mxu0 %v2564
    %3657 = vmatprep.subr.bf16.mxu0 %v2557
    %3658 = vmatpush1.bf16.msra.mxu0 %v2556
    %3659 = vmatprep.subr.bf16.mxu0 %v2677
    %3660 = vmatpush2.bf16.msra.mxu0 %v2676
    %3661 = vmatprep.subr.bf16.mxu0 %v2669
    %3662 = vmatpush2.bf16.msra.mxu0 %v2668
    %3663 = vmatprep.subr.bf16.mxu0 %v2661
    %3664 = vmatpush2.bf16.msra.mxu0 %v2660
    %3665 = vmatprep.subr.bf16.mxu0 %v2653
    %3666 = vmatpush2.bf16.msra.mxu0 %v2652
    %3667 = vmatprep.subr.bf16.mxu0 %v2645
    %3668 = vmatpush2.bf16.msra.mxu0 %v2644
    %3669 = vmatprep.subr.bf16.mxu0 %v2637
    %3670 = vmatpush2.bf16.msra.mxu0 %v2636
    %3671 = vmatprep.subr.bf16.mxu0 %v2629
    %3672 = vmatpush2.bf16.msra.mxu0 %v2628
    %3673 = vmatprep.subr.bf16.mxu0 %v2621
    %3674 = vmatpush2.bf16.msra.mxu0 %v2620
    %3675 = vmatprep.mubr.bf16.mxu0 %v623
    %3676 = vmatmul.mubr.bf16.gmra.mxu0 %v622
    %v3677 = vpop.f32.mrf.mxu0
    %v3678 = vadd.f32 %v3637, %v3677
    %v3679 = vpop.f32.mrf.mxu0
    %v3680 = vadd.f32 %v3639, %v3679
    %v3681 = vpop.f32.mrf.mxu0
    %v3682 = vpop.f32.mrf.mxu0
    %3683 = vdwg.mxu0
    %3684 = vmatprep.subr.bf16.mxu0 %v2231
    %3685 = vmatpush1.bf16.msra.mxu0 %v2230
    %3686 = vmatprep.subr.bf16.mxu0 %v2223
    %3687 = vmatpush1.bf16.msra.mxu0 %v2222
    %3688 = vmatprep.subr.bf16.mxu0 %v2215
    %3689 = vmatpush1.bf16.msra.mxu0 %v2214
    %3690 = vmatprep.subr.bf16.mxu0 %v2207
    %3691 = vmatpush1.bf16.msra.mxu0 %v2206
    %3692 = vmatprep.subr.bf16.mxu0 %v2199
    %3693 = vmatpush1.bf16.msra.mxu0 %v2198
    %3694 = vmatprep.subr.bf16.mxu0 %v2191
    %3695 = vmatpush1.bf16.msra.mxu0 %v2190
    %3696 = vmatprep.subr.bf16.mxu0 %v2183
    %3697 = vmatpush1.bf16.msra.mxu0 %v2182
    %3698 = vmatprep.subr.bf16.mxu0 %v2175
    %3699 = vmatpush1.bf16.msra.mxu0 %v2174
    %3700 = vmatprep.subr.bf16.mxu0 %v2295
    %3701 = vmatpush2.bf16.msra.mxu0 %v2294
    %3702 = vmatprep.subr.bf16.mxu0 %v2287
    %3703 = vmatpush2.bf16.msra.mxu0 %v2286
    %3704 = vmatprep.subr.bf16.mxu0 %v2279
    %3705 = vmatpush2.bf16.msra.mxu0 %v2278
    %3706 = vmatprep.subr.bf16.mxu0 %v2271
    %3707 = vmatpush2.bf16.msra.mxu0 %v2270
    %3708 = vmatprep.subr.bf16.mxu0 %v2263
    %3709 = vmatpush2.bf16.msra.mxu0 %v2262
    %3710 = vmatprep.subr.bf16.mxu0 %v2255
    %3711 = vmatpush2.bf16.msra.mxu0 %v2254
    %3712 = vmatprep.subr.bf16.mxu0 %v2247
    %3713 = vmatpush2.bf16.msra.mxu0 %v2246
    %3714 = vmatprep.subr.bf16.mxu0 %v2239
    %3715 = vmatpush2.bf16.msra.mxu0 %v2238
    %3716 = vmatprep.mubr.bf16.mxu0 %v617
    %3717 = vmatmul.mubr.bf16.gmra.mxu0 %v616
    %v3718 = vpop.f32.mrf.mxu0
    %v3719 = vadd.f32 0.0, %v3718
    %v3720 = vpop.f32.mrf.mxu0
    %v3721 = vadd.f32 0.0, %v3720
    %v3722 = vpop.f32.mrf.mxu0
    %v3723 = vpop.f32.mrf.mxu0
    %3724 = vdwg.mxu0
    %3725 = vmatprep.subr.bf16.mxu0 %v2359
    %3726 = vmatpush1.bf16.msra.mxu0 %v2358
    %3727 = vmatprep.subr.bf16.mxu0 %v2351
    %3728 = vmatpush1.bf16.msra.mxu0 %v2350
    %3729 = vmatprep.subr.bf16.mxu0 %v2343
    %3730 = vmatpush1.bf16.msra.mxu0 %v2342
    %3731 = vmatprep.subr.bf16.mxu0 %v2335
    %3732 = vmatpush1.bf16.msra.mxu0 %v2334
    %3733 = vmatprep.subr.bf16.mxu0 %v2327
    %3734 = vmatpush1.bf16.msra.mxu0 %v2326
    %3735 = vmatprep.subr.bf16.mxu0 %v2319
    %3736 = vmatpush1.bf16.msra.mxu0 %v2318
    %3737 = vmatprep.subr.bf16.mxu0 %v2311
    %3738 = vmatpush1.bf16.msra.mxu0 %v2310
    %3739 = vmatprep.subr.bf16.mxu0 %v2303
    %3740 = vmatpush1.bf16.msra.mxu0 %v2302
    %3741 = vmatprep.subr.bf16.mxu0 %v2423
    %3742 = vmatpush2.bf16.msra.mxu0 %v2422
    %3743 = vmatprep.subr.bf16.mxu0 %v2415
    %3744 = vmatpush2.bf16.msra.mxu0 %v2414
    %3745 = vmatprep.subr.bf16.mxu0 %v2407
    %3746 = vmatpush2.bf16.msra.mxu0 %v2406
    %3747 = vmatprep.subr.bf16.mxu0 %v2399
    %3748 = vmatpush2.bf16.msra.mxu0 %v2398
    %3749 = vmatprep.subr.bf16.mxu0 %v2391
    %3750 = vmatpush2.bf16.msra.mxu0 %v2390
    %3751 = vmatprep.subr.bf16.mxu0 %v2383
    %3752 = vmatpush2.bf16.msra.mxu0 %v2382
    %3753 = vmatprep.subr.bf16.mxu0 %v2375
    %3754 = vmatpush2.bf16.msra.mxu0 %v2374
    %3755 = vmatprep.subr.bf16.mxu0 %v2367
    %3756 = vmatpush2.bf16.msra.mxu0 %v2366
    %3757 = vmatprep.mubr.bf16.mxu0 %v619
    %3758 = vmatmul.mubr.bf16.gmra.mxu0 %v618
    %v3759 = vpop.f32.mrf.mxu0
    %v3760 = vadd.f32 %v3719, %v3759
    %v3761 = vpop.f32.mrf.mxu0
    %v3762 = vadd.f32 %v3721, %v3761
    %v3763 = vpop.f32.mrf.mxu0
    %v3764 = vpop.f32.mrf.mxu0
    %3765 = vdwg.mxu0
    %3766 = vmatprep.subr.bf16.mxu0 %v2487
    %3767 = vmatpush1.bf16.msra.mxu0 %v2486
    %3768 = vmatprep.subr.bf16.mxu0 %v2479
    %3769 = vmatpush1.bf16.msra.mxu0 %v2478
    %3770 = vmatprep.subr.bf16.mxu0 %v2471
    %3771 = vmatpush1.bf16.msra.mxu0 %v2470
    %3772 = vmatprep.subr.bf16.mxu0 %v2463
    %3773 = vmatpush1.bf16.msra.mxu0 %v2462
    %3774 = vmatprep.subr.bf16.mxu0 %v2455
    %3775 = vmatpush1.bf16.msra.mxu0 %v2454
    %3776 = vmatprep.subr.bf16.mxu0 %v2447
    %3777 = vmatpush1.bf16.msra.mxu0 %v2446
    %3778 = vmatprep.subr.bf16.mxu0 %v2439
    %3779 = vmatpush1.bf16.msra.mxu0 %v2438
    %3780 = vmatprep.subr.bf16.mxu0 %v2431
    %3781 = vmatpush1.bf16.msra.mxu0 %v2430
    %3782 = vmatprep.subr.bf16.mxu0 %v2551
    %3783 = vmatpush2.bf16.msra.mxu0 %v2550
    %3784 = vmatprep.subr.bf16.mxu0 %v2543
    %3785 = vmatpush2.bf16.msra.mxu0 %v2542
    %3786 = vmatprep.subr.bf16.mxu0 %v2535
    %3787 = vmatpush2.bf16.msra.mxu0 %v2534
    %3788 = vmatprep.subr.bf16.mxu0 %v2527
    %3789 = vmatpush2.bf16.msra.mxu0 %v2526
    %3790 = vmatprep.subr.bf16.mxu0 %v2519
    %3791 = vmatpush2.bf16.msra.mxu0 %v2518
    %3792 = vmatprep.subr.bf16.mxu0 %v2511
    %3793 = vmatpush2.bf16.msra.mxu0 %v2510
    %3794 = vmatprep.subr.bf16.mxu0 %v2503
    %3795 = vmatpush2.bf16.msra.mxu0 %v2502
    %3796 = vmatprep.subr.bf16.mxu0 %v2495
    %3797 = vmatpush2.bf16.msra.mxu0 %v2494
    %3798 = vmatprep.mubr.bf16.mxu0 %v621
    %3799 = vmatmul.mubr.bf16.gmra.mxu0 %v620
    %v3800 = vpop.f32.mrf.mxu0
    %v3801 = vadd.f32 %v3760, %v3800
    %v3802 = vpop.f32.mrf.mxu0
    %v3803 = vadd.f32 %v3762, %v3802
    %v3804 = vpop.f32.mrf.mxu0
    %v3805 = vpop.f32.mrf.mxu0
    %3806 = vdwg.mxu0
    %3807 = vmatprep.subr.bf16.mxu0 %v2615
    %3808 = vmatpush1.bf16.msra.mxu0 %v2614
    %3809 = vmatprep.subr.bf16.mxu0 %v2607
    %3810 = vmatpush1.bf16.msra.mxu0 %v2606
    %3811 = vmatprep.subr.bf16.mxu0 %v2599
    %3812 = vmatpush1.bf16.msra.mxu0 %v2598
    %3813 = vmatprep.subr.bf16.mxu0 %v2591
    %3814 = vmatpush1.bf16.msra.mxu0 %v2590
    %3815 = vmatprep.subr.bf16.mxu0 %v2583
    %3816 = vmatpush1.bf16.msra.mxu0 %v2582
    %3817 = vmatprep.subr.bf16.mxu0 %v2575
    %3818 = vmatpush1.bf16.msra.mxu0 %v2574
    %3819 = vmatprep.subr.bf16.mxu0 %v2567
    %3820 = vmatpush1.bf16.msra.mxu0 %v2566
    %3821 = vmatprep.subr.bf16.mxu0 %v2559
    %3822 = vmatpush1.bf16.msra.mxu0 %v2558
    %3823 = vmatprep.subr.bf16.mxu0 %v2679
    %3824 = vmatpush2.bf16.msra.mxu0 %v2678
    %3825 = vmatprep.subr.bf16.mxu0 %v2671
    %3826 = vmatpush2.bf16.msra.mxu0 %v2670
    %3827 = vmatprep.subr.bf16.mxu0 %v2663
    %3828 = vmatpush2.bf16.msra.mxu0 %v2662
    %3829 = vmatprep.subr.bf16.mxu0 %v2655
    %3830 = vmatpush2.bf16.msra.mxu0 %v2654
    %3831 = vmatprep.subr.bf16.mxu0 %v2647
    %3832 = vmatpush2.bf16.msra.mxu0 %v2646
    %3833 = vmatprep.subr.bf16.mxu0 %v2639
    %3834 = vmatpush2.bf16.msra.mxu0 %v2638
    %3835 = vmatprep.subr.bf16.mxu0 %v2631
    %3836 = vmatpush2.bf16.msra.mxu0 %v2630
    %3837 = vmatprep.subr.bf16.mxu0 %v2623
    %3838 = vmatpush2.bf16.msra.mxu0 %v2622
    %3839 = vmatprep.mubr.bf16.mxu0 %v623
    %3840 = vmatmul.mubr.bf16.gmra.mxu0 %v622
    %v3841 = vpop.f32.mrf.mxu0
    %v3842 = vadd.f32 %v3801, %v3841
    %v3843 = vpop.f32.mrf.mxu0
    %v3844 = vadd.f32 %v3803, %v3843
    %v3845 = vpop.f32.mrf.mxu0
    %v3846 = vpop.f32.mrf.mxu0
    %3847 = vdwg.mxu0
    %v3848 = vpack.c.bf16 %v3350, %v3350
    %v3849 = vpack.c.bf16 %v3352, %v3352
    %v3850 = vpack.c.bf16 %v3514, %v3514
    %v3851 = vpack.c.bf16 %v3516, %v3516
    %v3852 = vpack.c.bf16 %v3678, %v3678
    %v3853 = vpack.c.bf16 %v3680, %v3680
    %v3854 = vpack.c.bf16 %v3842, %v3842
    %v3855 = vpack.c.bf16 %v3844, %v3844
    %v3856 = vld [vmem:[#allocation4] sm:$0xff]
    %v3857 = vld [vmem:[#allocation4 + $0x8] sm:$0xff]
    %v3858 = vld [vmem:[#allocation4 + $0x10] sm:$0xff]
    %v3859 = vld [vmem:[#allocation4 + $0x18] sm:$0xff]
    %v3860 = vld [vmem:[#allocation4 + $0x20] sm:$0xff]
    %v3861 = vld [vmem:[#allocation4 + $0x28] sm:$0xff]
    %v3862 = vld [vmem:[#allocation4 + $0x30] sm:$0xff]
    %v3863 = vld [vmem:[#allocation4 + $0x38] sm:$0xff]
    %v3864 = vld [vmem:[#allocation4 + $0x40] sm:$0xff]
    %v3865 = vld [vmem:[#allocation4 + $0x48] sm:$0xff]
    %v3866 = vld [vmem:[#allocation4 + $0x50] sm:$0xff]
    %v3867 = vld [vmem:[#allocation4 + $0x58] sm:$0xff]
    %v3868 = vld [vmem:[#allocation4 + $0x60] sm:$0xff]
    %v3869 = vld [vmem:[#allocation4 + $0x68] sm:$0xff]
    %v3870 = vld [vmem:[#allocation4 + $0x70] sm:$0xff]
    %v3871 = vld [vmem:[#allocation4 + $0x78] sm:$0xff]
    %v3872 = vld [vmem:[#allocation4 + $0x80] sm:$0xff]
    %v3873 = vld [vmem:[#allocation4 + $0x88] sm:$0xff]
    %v3874 = vld [vmem:[#allocation4 + $0x90] sm:$0xff]
    %v3875 = vld [vmem:[#allocation4 + $0x98] sm:$0xff]
    %v3876 = vld [vmem:[#allocation4 + $0xa0] sm:$0xff]
    %v3877 = vld [vmem:[#allocation4 + $0xa8] sm:$0xff]
    %v3878 = vld [vmem:[#allocation4 + $0xb0] sm:$0xff]
    %v3879 = vld [vmem:[#allocation4 + $0xb8] sm:$0xff]
    %v3880 = vld [vmem:[#allocation4 + $0xc0] sm:$0xff]
    %v3881 = vld [vmem:[#allocation4 + $0xc8] sm:$0xff]
    %v3882 = vld [vmem:[#allocation4 + $0xd0] sm:$0xff]
    %v3883 = vld [vmem:[#allocation4 + $0xd8] sm:$0xff]
    %v3884 = vld [vmem:[#allocation4 + $0xe0] sm:$0xff]
    %v3885 = vld [vmem:[#allocation4 + $0xe8] sm:$0xff]
    %v3886 = vld [vmem:[#allocation4 + $0xf0] sm:$0xff]
    %v3887 = vld [vmem:[#allocation4 + $0xf8] sm:$0xff]
    %v3888 = vld [vmem:[#allocation4 + $0x100] sm:$0xff]
    %v3889 = vld [vmem:[#allocation4 + $0x108] sm:$0xff]
    %v3890 = vld [vmem:[#allocation4 + $0x110] sm:$0xff]
    %v3891 = vld [vmem:[#allocation4 + $0x118] sm:$0xff]
    %v3892 = vld [vmem:[#allocation4 + $0x120] sm:$0xff]
    %v3893 = vld [vmem:[#allocation4 + $0x128] sm:$0xff]
    %v3894 = vld [vmem:[#allocation4 + $0x130] sm:$0xff]
    %v3895 = vld [vmem:[#allocation4 + $0x138] sm:$0xff]
    %v3896 = vld [vmem:[#allocation4 + $0x140] sm:$0xff]
    %v3897 = vld [vmem:[#allocation4 + $0x148] sm:$0xff]
    %v3898 = vld [vmem:[#allocation4 + $0x150] sm:$0xff]
    %v3899 = vld [vmem:[#allocation4 + $0x158] sm:$0xff]
    %v3900 = vld [vmem:[#allocation4 + $0x160] sm:$0xff]
    %v3901 = vld [vmem:[#allocation4 + $0x168] sm:$0xff]
    %v3902 = vld [vmem:[#allocation4 + $0x170] sm:$0xff]
    %v3903 = vld [vmem:[#allocation4 + $0x178] sm:$0xff]
    %v3904 = vld [vmem:[#allocation4 + $0x180] sm:$0xff]
    %v3905 = vld [vmem:[#allocation4 + $0x188] sm:$0xff]
    %v3906 = vld [vmem:[#allocation4 + $0x190] sm:$0xff]
    %v3907 = vld [vmem:[#allocation4 + $0x198] sm:$0xff]
    %v3908 = vld [vmem:[#allocation4 + $0x1a0] sm:$0xff]
    %v3909 = vld [vmem:[#allocation4 + $0x1a8] sm:$0xff]
    %v3910 = vld [vmem:[#allocation4 + $0x1b0] sm:$0xff]
    %v3911 = vld [vmem:[#allocation4 + $0x1b8] sm:$0xff]
    %v3912 = vld [vmem:[#allocation4 + $0x1c0] sm:$0xff]
    %v3913 = vld [vmem:[#allocation4 + $0x1c8] sm:$0xff]
    %v3914 = vld [vmem:[#allocation4 + $0x1d0] sm:$0xff]
    %v3915 = vld [vmem:[#allocation4 + $0x1d8] sm:$0xff]
    %v3916 = vld [vmem:[#allocation4 + $0x1e0] sm:$0xff]
    %v3917 = vld [vmem:[#allocation4 + $0x1e8] sm:$0xff]
    %v3918 = vld [vmem:[#allocation4 + $0x1f0] sm:$0xff]
    %v3919 = vld [vmem:[#allocation4 + $0x1f8] sm:$0xff]
    %v3920 = vld [vmem:[#allocation4 + $0x200] sm:$0xff]
    %v3921 = vld [vmem:[#allocation4 + $0x208] sm:$0xff]
    %v3922 = vld [vmem:[#allocation4 + $0x210] sm:$0xff]
    %v3923 = vld [vmem:[#allocation4 + $0x218] sm:$0xff]
    %v3924 = vld [vmem:[#allocation4 + $0x220] sm:$0xff]
    %v3925 = vld [vmem:[#allocation4 + $0x228] sm:$0xff]
    %v3926 = vld [vmem:[#allocation4 + $0x230] sm:$0xff]
    %v3927 = vld [vmem:[#allocation4 + $0x238] sm:$0xff]
    %v3928 = vld [vmem:[#allocation4 + $0x240] sm:$0xff]
    %v3929 = vld [vmem:[#allocation4 + $0x248] sm:$0xff]
    %v3930 = vld [vmem:[#allocation4 + $0x250] sm:$0xff]
    %v3931 = vld [vmem:[#allocation4 + $0x258] sm:$0xff]
    %v3932 = vld [vmem:[#allocation4 + $0x260] sm:$0xff]
    %v3933 = vld [vmem:[#allocation4 + $0x268] sm:$0xff]
    %v3934 = vld [vmem:[#allocation4 + $0x270] sm:$0xff]
    %v3935 = vld [vmem:[#allocation4 + $0x278] sm:$0xff]
    %v3936 = vld [vmem:[#allocation4 + $0x280] sm:$0xff]
    %v3937 = vld [vmem:[#allocation4 + $0x288] sm:$0xff]
    %v3938 = vld [vmem:[#allocation4 + $0x290] sm:$0xff]
    %v3939 = vld [vmem:[#allocation4 + $0x298] sm:$0xff]
    %v3940 = vld [vmem:[#allocation4 + $0x2a0] sm:$0xff]
    %v3941 = vld [vmem:[#allocation4 + $0x2a8] sm:$0xff]
    %v3942 = vld [vmem:[#allocation4 + $0x2b0] sm:$0xff]
    %v3943 = vld [vmem:[#allocation4 + $0x2b8] sm:$0xff]
    %v3944 = vld [vmem:[#allocation4 + $0x2c0] sm:$0xff]
    %v3945 = vld [vmem:[#allocation4 + $0x2c8] sm:$0xff]
    %v3946 = vld [vmem:[#allocation4 + $0x2d0] sm:$0xff]
    %v3947 = vld [vmem:[#allocation4 + $0x2d8] sm:$0xff]
    %v3948 = vld [vmem:[#allocation4 + $0x2e0] sm:$0xff]
    %v3949 = vld [vmem:[#allocation4 + $0x2e8] sm:$0xff]
    %v3950 = vld [vmem:[#allocation4 + $0x2f0] sm:$0xff]
    %v3951 = vld [vmem:[#allocation4 + $0x2f8] sm:$0xff]
    %v3952 = vld [vmem:[#allocation4 + $0x300] sm:$0xff]
    %v3953 = vld [vmem:[#allocation4 + $0x308] sm:$0xff]
    %v3954 = vld [vmem:[#allocation4 + $0x310] sm:$0xff]
    %v3955 = vld [vmem:[#allocation4 + $0x318] sm:$0xff]
    %v3956 = vld [vmem:[#allocation4 + $0x320] sm:$0xff]
    %v3957 = vld [vmem:[#allocation4 + $0x328] sm:$0xff]
    %v3958 = vld [vmem:[#allocation4 + $0x330] sm:$0xff]
    %v3959 = vld [vmem:[#allocation4 + $0x338] sm:$0xff]
    %v3960 = vld [vmem:[#allocation4 + $0x340] sm:$0xff]
    %v3961 = vld [vmem:[#allocation4 + $0x348] sm:$0xff]
    %v3962 = vld [vmem:[#allocation4 + $0x350] sm:$0xff]
    %v3963 = vld [vmem:[#allocation4 + $0x358] sm:$0xff]
    %v3964 = vld [vmem:[#allocation4 + $0x360] sm:$0xff]
    %v3965 = vld [vmem:[#allocation4 + $0x368] sm:$0xff]
    %v3966 = vld [vmem:[#allocation4 + $0x370] sm:$0xff]
    %v3967 = vld [vmem:[#allocation4 + $0x378] sm:$0xff]
    %v3968 = vld [vmem:[#allocation4 + $0x380] sm:$0xff]
    %v3969 = vld [vmem:[#allocation4 + $0x388] sm:$0xff]
    %v3970 = vld [vmem:[#allocation4 + $0x390] sm:$0xff]
    %v3971 = vld [vmem:[#allocation4 + $0x398] sm:$0xff]
    %v3972 = vld [vmem:[#allocation4 + $0x3a0] sm:$0xff]
    %v3973 = vld [vmem:[#allocation4 + $0x3a8] sm:$0xff]
    %v3974 = vld [vmem:[#allocation4 + $0x3b0] sm:$0xff]
    %v3975 = vld [vmem:[#allocation4 + $0x3b8] sm:$0xff]
    %v3976 = vld [vmem:[#allocation4 + $0x3c0] sm:$0xff]
    %v3977 = vld [vmem:[#allocation4 + $0x3c8] sm:$0xff]
    %v3978 = vld [vmem:[#allocation4 + $0x3d0] sm:$0xff]
    %v3979 = vld [vmem:[#allocation4 + $0x3d8] sm:$0xff]
    %v3980 = vld [vmem:[#allocation4 + $0x3e0] sm:$0xff]
    %v3981 = vld [vmem:[#allocation4 + $0x3e8] sm:$0xff]
    %v3982 = vld [vmem:[#allocation4 + $0x3f0] sm:$0xff]
    %v3983 = vld [vmem:[#allocation4 + $0x3f8] sm:$0xff]
    %v3984 = vld [vmem:[#allocation4 + $0x400] sm:$0xff]
    %v3985 = vld [vmem:[#allocation4 + $0x408] sm:$0xff]
    %v3986 = vld [vmem:[#allocation4 + $0x410] sm:$0xff]
    %v3987 = vld [vmem:[#allocation4 + $0x418] sm:$0xff]
    %v3988 = vld [vmem:[#allocation4 + $0x420] sm:$0xff]
    %v3989 = vld [vmem:[#allocation4 + $0x428] sm:$0xff]
    %v3990 = vld [vmem:[#allocation4 + $0x430] sm:$0xff]
    %v3991 = vld [vmem:[#allocation4 + $0x438] sm:$0xff]
    %v3992 = vld [vmem:[#allocation4 + $0x440] sm:$0xff]
    %v3993 = vld [vmem:[#allocation4 + $0x448] sm:$0xff]
    %v3994 = vld [vmem:[#allocation4 + $0x450] sm:$0xff]
    %v3995 = vld [vmem:[#allocation4 + $0x458] sm:$0xff]
    %v3996 = vld [vmem:[#allocation4 + $0x460] sm:$0xff]
    %v3997 = vld [vmem:[#allocation4 + $0x468] sm:$0xff]
    %v3998 = vld [vmem:[#allocation4 + $0x470] sm:$0xff]
    %v3999 = vld [vmem:[#allocation4 + $0x478] sm:$0xff]
    %v4000 = vld [vmem:[#allocation4 + $0x480] sm:$0xff]
    %v4001 = vld [vmem:[#allocation4 + $0x488] sm:$0xff]
    %v4002 = vld [vmem:[#allocation4 + $0x490] sm:$0xff]
    %v4003 = vld [vmem:[#allocation4 + $0x498] sm:$0xff]
    %v4004 = vld [vmem:[#allocation4 + $0x4a0] sm:$0xff]
    %v4005 = vld [vmem:[#allocation4 + $0x4a8] sm:$0xff]
    %v4006 = vld [vmem:[#allocation4 + $0x4b0] sm:$0xff]
    %v4007 = vld [vmem:[#allocation4 + $0x4b8] sm:$0xff]
    %v4008 = vld [vmem:[#allocation4 + $0x4c0] sm:$0xff]
    %v4009 = vld [vmem:[#allocation4 + $0x4c8] sm:$0xff]
    %v4010 = vld [vmem:[#allocation4 + $0x4d0] sm:$0xff]
    %v4011 = vld [vmem:[#allocation4 + $0x4d8] sm:$0xff]
    %v4012 = vld [vmem:[#allocation4 + $0x4e0] sm:$0xff]
    %v4013 = vld [vmem:[#allocation4 + $0x4e8] sm:$0xff]
    %v4014 = vld [vmem:[#allocation4 + $0x4f0] sm:$0xff]
    %v4015 = vld [vmem:[#allocation4 + $0x4f8] sm:$0xff]
    %v4016 = vld [vmem:[#allocation4 + $0x500] sm:$0xff]
    %v4017 = vld [vmem:[#allocation4 + $0x508] sm:$0xff]
    %v4018 = vld [vmem:[#allocation4 + $0x510] sm:$0xff]
    %v4019 = vld [vmem:[#allocation4 + $0x518] sm:$0xff]
    %v4020 = vld [vmem:[#allocation4 + $0x520] sm:$0xff]
    %v4021 = vld [vmem:[#allocation4 + $0x528] sm:$0xff]
    %v4022 = vld [vmem:[#allocation4 + $0x530] sm:$0xff]
    %v4023 = vld [vmem:[#allocation4 + $0x538] sm:$0xff]
    %v4024 = vld [vmem:[#allocation4 + $0x540] sm:$0xff]
    %v4025 = vld [vmem:[#allocation4 + $0x548] sm:$0xff]
    %v4026 = vld [vmem:[#allocation4 + $0x550] sm:$0xff]
    %v4027 = vld [vmem:[#allocation4 + $0x558] sm:$0xff]
    %v4028 = vld [vmem:[#allocation4 + $0x560] sm:$0xff]
    %v4029 = vld [vmem:[#allocation4 + $0x568] sm:$0xff]
    %v4030 = vld [vmem:[#allocation4 + $0x570] sm:$0xff]
    %v4031 = vld [vmem:[#allocation4 + $0x578] sm:$0xff]
    %v4032 = vld [vmem:[#allocation4 + $0x580] sm:$0xff]
    %v4033 = vld [vmem:[#allocation4 + $0x588] sm:$0xff]
    %v4034 = vld [vmem:[#allocation4 + $0x590] sm:$0xff]
    %v4035 = vld [vmem:[#allocation4 + $0x598] sm:$0xff]
    %v4036 = vld [vmem:[#allocation4 + $0x5a0] sm:$0xff]
    %v4037 = vld [vmem:[#allocation4 + $0x5a8] sm:$0xff]
    %v4038 = vld [vmem:[#allocation4 + $0x5b0] sm:$0xff]
    %v4039 = vld [vmem:[#allocation4 + $0x5b8] sm:$0xff]
    %v4040 = vld [vmem:[#allocation4 + $0x5c0] sm:$0xff]
    %v4041 = vld [vmem:[#allocation4 + $0x5c8] sm:$0xff]
    %v4042 = vld [vmem:[#allocation4 + $0x5d0] sm:$0xff]
    %v4043 = vld [vmem:[#allocation4 + $0x5d8] sm:$0xff]
    %v4044 = vld [vmem:[#allocation4 + $0x5e0] sm:$0xff]
    %v4045 = vld [vmem:[#allocation4 + $0x5e8] sm:$0xff]
    %v4046 = vld [vmem:[#allocation4 + $0x5f0] sm:$0xff]
    %v4047 = vld [vmem:[#allocation4 + $0x5f8] sm:$0xff]
    %v4048 = vld [vmem:[#allocation4 + $0x600] sm:$0xff]
    %v4049 = vld [vmem:[#allocation4 + $0x608] sm:$0xff]
    %v4050 = vld [vmem:[#allocation4 + $0x610] sm:$0xff]
    %v4051 = vld [vmem:[#allocation4 + $0x618] sm:$0xff]
    %v4052 = vld [vmem:[#allocation4 + $0x620] sm:$0xff]
    %v4053 = vld [vmem:[#allocation4 + $0x628] sm:$0xff]
    %v4054 = vld [vmem:[#allocation4 + $0x630] sm:$0xff]
    %v4055 = vld [vmem:[#allocation4 + $0x638] sm:$0xff]
    %v4056 = vld [vmem:[#allocation4 + $0x640] sm:$0xff]
    %v4057 = vld [vmem:[#allocation4 + $0x648] sm:$0xff]
    %v4058 = vld [vmem:[#allocation4 + $0x650] sm:$0xff]
    %v4059 = vld [vmem:[#allocation4 + $0x658] sm:$0xff]
    %v4060 = vld [vmem:[#allocation4 + $0x660] sm:$0xff]
    %v4061 = vld [vmem:[#allocation4 + $0x668] sm:$0xff]
    %v4062 = vld [vmem:[#allocation4 + $0x670] sm:$0xff]
    %v4063 = vld [vmem:[#allocation4 + $0x678] sm:$0xff]
    %v4064 = vld [vmem:[#allocation4 + $0x680] sm:$0xff]
    %v4065 = vld [vmem:[#allocation4 + $0x688] sm:$0xff]
    %v4066 = vld [vmem:[#allocation4 + $0x690] sm:$0xff]
    %v4067 = vld [vmem:[#allocation4 + $0x698] sm:$0xff]
    %v4068 = vld [vmem:[#allocation4 + $0x6a0] sm:$0xff]
    %v4069 = vld [vmem:[#allocation4 + $0x6a8] sm:$0xff]
    %v4070 = vld [vmem:[#allocation4 + $0x6b0] sm:$0xff]
    %v4071 = vld [vmem:[#allocation4 + $0x6b8] sm:$0xff]
    %v4072 = vld [vmem:[#allocation4 + $0x6c0] sm:$0xff]
    %v4073 = vld [vmem:[#allocation4 + $0x6c8] sm:$0xff]
    %v4074 = vld [vmem:[#allocation4 + $0x6d0] sm:$0xff]
    %v4075 = vld [vmem:[#allocation4 + $0x6d8] sm:$0xff]
    %v4076 = vld [vmem:[#allocation4 + $0x6e0] sm:$0xff]
    %v4077 = vld [vmem:[#allocation4 + $0x6e8] sm:$0xff]
    %v4078 = vld [vmem:[#allocation4 + $0x6f0] sm:$0xff]
    %v4079 = vld [vmem:[#allocation4 + $0x6f8] sm:$0xff]
    %v4080 = vld [vmem:[#allocation4 + $0x700] sm:$0xff]
    %v4081 = vld [vmem:[#allocation4 + $0x708] sm:$0xff]
    %v4082 = vld [vmem:[#allocation4 + $0x710] sm:$0xff]
    %v4083 = vld [vmem:[#allocation4 + $0x718] sm:$0xff]
    %v4084 = vld [vmem:[#allocation4 + $0x720] sm:$0xff]
    %v4085 = vld [vmem:[#allocation4 + $0x728] sm:$0xff]
    %v4086 = vld [vmem:[#allocation4 + $0x730] sm:$0xff]
    %v4087 = vld [vmem:[#allocation4 + $0x738] sm:$0xff]
    %v4088 = vld [vmem:[#allocation4 + $0x740] sm:$0xff]
    %v4089 = vld [vmem:[#allocation4 + $0x748] sm:$0xff]
    %v4090 = vld [vmem:[#allocation4 + $0x750] sm:$0xff]
    %v4091 = vld [vmem:[#allocation4 + $0x758] sm:$0xff]
    %v4092 = vld [vmem:[#allocation4 + $0x760] sm:$0xff]
    %v4093 = vld [vmem:[#allocation4 + $0x768] sm:$0xff]
    %v4094 = vld [vmem:[#allocation4 + $0x770] sm:$0xff]
    %v4095 = vld [vmem:[#allocation4 + $0x778] sm:$0xff]
    %v4096 = vld [vmem:[#allocation4 + $0x780] sm:$0xff]
    %v4097 = vld [vmem:[#allocation4 + $0x788] sm:$0xff]
    %v4098 = vld [vmem:[#allocation4 + $0x790] sm:$0xff]
    %v4099 = vld [vmem:[#allocation4 + $0x798] sm:$0xff]
    %v4100 = vld [vmem:[#allocation4 + $0x7a0] sm:$0xff]
    %v4101 = vld [vmem:[#allocation4 + $0x7a8] sm:$0xff]
    %v4102 = vld [vmem:[#allocation4 + $0x7b0] sm:$0xff]
    %v4103 = vld [vmem:[#allocation4 + $0x7b8] sm:$0xff]
    %v4104 = vld [vmem:[#allocation4 + $0x7c0] sm:$0xff]
    %v4105 = vld [vmem:[#allocation4 + $0x7c8] sm:$0xff]
    %v4106 = vld [vmem:[#allocation4 + $0x7d0] sm:$0xff]
    %v4107 = vld [vmem:[#allocation4 + $0x7d8] sm:$0xff]
    %v4108 = vld [vmem:[#allocation4 + $0x7e0] sm:$0xff]
    %v4109 = vld [vmem:[#allocation4 + $0x7e8] sm:$0xff]
    %v4110 = vld [vmem:[#allocation4 + $0x7f0] sm:$0xff]
    %v4111 = vld [vmem:[#allocation4 + $0x7f8] sm:$0xff]
    %v4112 = vld [vmem:[#allocation4 + $0x800] sm:$0xff]
    %v4113 = vld [vmem:[#allocation4 + $0x808] sm:$0xff]
    %v4114 = vld [vmem:[#allocation4 + $0x810] sm:$0xff]
    %v4115 = vld [vmem:[#allocation4 + $0x818] sm:$0xff]
    %v4116 = vld [vmem:[#allocation4 + $0x820] sm:$0xff]
    %v4117 = vld [vmem:[#allocation4 + $0x828] sm:$0xff]
    %v4118 = vld [vmem:[#allocation4 + $0x830] sm:$0xff]
    %v4119 = vld [vmem:[#allocation4 + $0x838] sm:$0xff]
    %v4120 = vld [vmem:[#allocation4 + $0x840] sm:$0xff]
    %v4121 = vld [vmem:[#allocation4 + $0x848] sm:$0xff]
    %v4122 = vld [vmem:[#allocation4 + $0x850] sm:$0xff]
    %v4123 = vld [vmem:[#allocation4 + $0x858] sm:$0xff]
    %v4124 = vld [vmem:[#allocation4 + $0x860] sm:$0xff]
    %v4125 = vld [vmem:[#allocation4 + $0x868] sm:$0xff]
    %v4126 = vld [vmem:[#allocation4 + $0x870] sm:$0xff]
    %v4127 = vld [vmem:[#allocation4 + $0x878] sm:$0xff]
    %v4128 = vld [vmem:[#allocation4 + $0x880] sm:$0xff]
    %v4129 = vld [vmem:[#allocation4 + $0x888] sm:$0xff]
    %v4130 = vld [vmem:[#allocation4 + $0x890] sm:$0xff]
    %v4131 = vld [vmem:[#allocation4 + $0x898] sm:$0xff]
    %v4132 = vld [vmem:[#allocation4 + $0x8a0] sm:$0xff]
    %v4133 = vld [vmem:[#allocation4 + $0x8a8] sm:$0xff]
    %v4134 = vld [vmem:[#allocation4 + $0x8b0] sm:$0xff]
    %v4135 = vld [vmem:[#allocation4 + $0x8b8] sm:$0xff]
    %v4136 = vld [vmem:[#allocation4 + $0x8c0] sm:$0xff]
    %v4137 = vld [vmem:[#allocation4 + $0x8c8] sm:$0xff]
    %v4138 = vld [vmem:[#allocation4 + $0x8d0] sm:$0xff]
    %v4139 = vld [vmem:[#allocation4 + $0x8d8] sm:$0xff]
    %v4140 = vld [vmem:[#allocation4 + $0x8e0] sm:$0xff]
    %v4141 = vld [vmem:[#allocation4 + $0x8e8] sm:$0xff]
    %v4142 = vld [vmem:[#allocation4 + $0x8f0] sm:$0xff]
    %v4143 = vld [vmem:[#allocation4 + $0x8f8] sm:$0xff]
    %v4144 = vld [vmem:[#allocation4 + $0x900] sm:$0xff]
    %v4145 = vld [vmem:[#allocation4 + $0x908] sm:$0xff]
    %v4146 = vld [vmem:[#allocation4 + $0x910] sm:$0xff]
    %v4147 = vld [vmem:[#allocation4 + $0x918] sm:$0xff]
    %v4148 = vld [vmem:[#allocation4 + $0x920] sm:$0xff]
    %v4149 = vld [vmem:[#allocation4 + $0x928] sm:$0xff]
    %v4150 = vld [vmem:[#allocation4 + $0x930] sm:$0xff]
    %v4151 = vld [vmem:[#allocation4 + $0x938] sm:$0xff]
    %v4152 = vld [vmem:[#allocation4 + $0x940] sm:$0xff]
    %v4153 = vld [vmem:[#allocation4 + $0x948] sm:$0xff]
    %v4154 = vld [vmem:[#allocation4 + $0x950] sm:$0xff]
    %v4155 = vld [vmem:[#allocation4 + $0x958] sm:$0xff]
    %v4156 = vld [vmem:[#allocation4 + $0x960] sm:$0xff]
    %v4157 = vld [vmem:[#allocation4 + $0x968] sm:$0xff]
    %v4158 = vld [vmem:[#allocation4 + $0x970] sm:$0xff]
    %v4159 = vld [vmem:[#allocation4 + $0x978] sm:$0xff]
    %v4160 = vld [vmem:[#allocation4 + $0x980] sm:$0xff]
    %v4161 = vld [vmem:[#allocation4 + $0x988] sm:$0xff]
    %v4162 = vld [vmem:[#allocation4 + $0x990] sm:$0xff]
    %v4163 = vld [vmem:[#allocation4 + $0x998] sm:$0xff]
    %v4164 = vld [vmem:[#allocation4 + $0x9a0] sm:$0xff]
    %v4165 = vld [vmem:[#allocation4 + $0x9a8] sm:$0xff]
    %v4166 = vld [vmem:[#allocation4 + $0x9b0] sm:$0xff]
    %v4167 = vld [vmem:[#allocation4 + $0x9b8] sm:$0xff]
    %v4168 = vld [vmem:[#allocation4 + $0x9c0] sm:$0xff]
    %v4169 = vld [vmem:[#allocation4 + $0x9c8] sm:$0xff]
    %v4170 = vld [vmem:[#allocation4 + $0x9d0] sm:$0xff]
    %v4171 = vld [vmem:[#allocation4 + $0x9d8] sm:$0xff]
    %v4172 = vld [vmem:[#allocation4 + $0x9e0] sm:$0xff]
    %v4173 = vld [vmem:[#allocation4 + $0x9e8] sm:$0xff]
    %v4174 = vld [vmem:[#allocation4 + $0x9f0] sm:$0xff]
    %v4175 = vld [vmem:[#allocation4 + $0x9f8] sm:$0xff]
    %v4176 = vld [vmem:[#allocation4 + $0xa00] sm:$0xff]
    %v4177 = vld [vmem:[#allocation4 + $0xa08] sm:$0xff]
    %v4178 = vld [vmem:[#allocation4 + $0xa10] sm:$0xff]
    %v4179 = vld [vmem:[#allocation4 + $0xa18] sm:$0xff]
    %v4180 = vld [vmem:[#allocation4 + $0xa20] sm:$0xff]
    %v4181 = vld [vmem:[#allocation4 + $0xa28] sm:$0xff]
    %v4182 = vld [vmem:[#allocation4 + $0xa30] sm:$0xff]
    %v4183 = vld [vmem:[#allocation4 + $0xa38] sm:$0xff]
    %v4184 = vld [vmem:[#allocation4 + $0xa40] sm:$0xff]
    %v4185 = vld [vmem:[#allocation4 + $0xa48] sm:$0xff]
    %v4186 = vld [vmem:[#allocation4 + $0xa50] sm:$0xff]
    %v4187 = vld [vmem:[#allocation4 + $0xa58] sm:$0xff]
    %v4188 = vld [vmem:[#allocation4 + $0xa60] sm:$0xff]
    %v4189 = vld [vmem:[#allocation4 + $0xa68] sm:$0xff]
    %v4190 = vld [vmem:[#allocation4 + $0xa70] sm:$0xff]
    %v4191 = vld [vmem:[#allocation4 + $0xa78] sm:$0xff]
    %v4192 = vld [vmem:[#allocation4 + $0xa80] sm:$0xff]
    %v4193 = vld [vmem:[#allocation4 + $0xa88] sm:$0xff]
    %v4194 = vld [vmem:[#allocation4 + $0xa90] sm:$0xff]
    %v4195 = vld [vmem:[#allocation4 + $0xa98] sm:$0xff]
    %v4196 = vld [vmem:[#allocation4 + $0xaa0] sm:$0xff]
    %v4197 = vld [vmem:[#allocation4 + $0xaa8] sm:$0xff]
    %v4198 = vld [vmem:[#allocation4 + $0xab0] sm:$0xff]
    %v4199 = vld [vmem:[#allocation4 + $0xab8] sm:$0xff]
    %v4200 = vld [vmem:[#allocation4 + $0xac0] sm:$0xff]
    %v4201 = vld [vmem:[#allocation4 + $0xac8] sm:$0xff]
    %v4202 = vld [vmem:[#allocation4 + $0xad0] sm:$0xff]
    %v4203 = vld [vmem:[#allocation4 + $0xad8] sm:$0xff]
    %v4204 = vld [vmem:[#allocation4 + $0xae0] sm:$0xff]
    %v4205 = vld [vmem:[#allocation4 + $0xae8] sm:$0xff]
    %v4206 = vld [vmem:[#allocation4 + $0xaf0] sm:$0xff]
    %v4207 = vld [vmem:[#allocation4 + $0xaf8] sm:$0xff]
    %v4208 = vld [vmem:[#allocation4 + $0xb00] sm:$0xff]
    %v4209 = vld [vmem:[#allocation4 + $0xb08] sm:$0xff]
    %v4210 = vld [vmem:[#allocation4 + $0xb10] sm:$0xff]
    %v4211 = vld [vmem:[#allocation4 + $0xb18] sm:$0xff]
    %v4212 = vld [vmem:[#allocation4 + $0xb20] sm:$0xff]
    %v4213 = vld [vmem:[#allocation4 + $0xb28] sm:$0xff]
    %v4214 = vld [vmem:[#allocation4 + $0xb30] sm:$0xff]
    %v4215 = vld [vmem:[#allocation4 + $0xb38] sm:$0xff]
    %v4216 = vld [vmem:[#allocation4 + $0xb40] sm:$0xff]
    %v4217 = vld [vmem:[#allocation4 + $0xb48] sm:$0xff]
    %v4218 = vld [vmem:[#allocation4 + $0xb50] sm:$0xff]
    %v4219 = vld [vmem:[#allocation4 + $0xb58] sm:$0xff]
    %v4220 = vld [vmem:[#allocation4 + $0xb60] sm:$0xff]
    %v4221 = vld [vmem:[#allocation4 + $0xb68] sm:$0xff]
    %v4222 = vld [vmem:[#allocation4 + $0xb70] sm:$0xff]
    %v4223 = vld [vmem:[#allocation4 + $0xb78] sm:$0xff]
    %v4224 = vld [vmem:[#allocation4 + $0xb80] sm:$0xff]
    %v4225 = vld [vmem:[#allocation4 + $0xb88] sm:$0xff]
    %v4226 = vld [vmem:[#allocation4 + $0xb90] sm:$0xff]
    %v4227 = vld [vmem:[#allocation4 + $0xb98] sm:$0xff]
    %v4228 = vld [vmem:[#allocation4 + $0xba0] sm:$0xff]
    %v4229 = vld [vmem:[#allocation4 + $0xba8] sm:$0xff]
    %v4230 = vld [vmem:[#allocation4 + $0xbb0] sm:$0xff]
    %v4231 = vld [vmem:[#allocation4 + $0xbb8] sm:$0xff]
    %v4232 = vld [vmem:[#allocation4 + $0xbc0] sm:$0xff]
    %v4233 = vld [vmem:[#allocation4 + $0xbc8] sm:$0xff]
    %v4234 = vld [vmem:[#allocation4 + $0xbd0] sm:$0xff]
    %v4235 = vld [vmem:[#allocation4 + $0xbd8] sm:$0xff]
    %v4236 = vld [vmem:[#allocation4 + $0xbe0] sm:$0xff]
    %v4237 = vld [vmem:[#allocation4 + $0xbe8] sm:$0xff]
    %v4238 = vld [vmem:[#allocation4 + $0xbf0] sm:$0xff]
    %v4239 = vld [vmem:[#allocation4 + $0xbf8] sm:$0xff]
    %v4240 = vld [vmem:[#allocation4 + $0xc00] sm:$0xff]
    %v4241 = vld [vmem:[#allocation4 + $0xc08] sm:$0xff]
    %v4242 = vld [vmem:[#allocation4 + $0xc10] sm:$0xff]
    %v4243 = vld [vmem:[#allocation4 + $0xc18] sm:$0xff]
    %v4244 = vld [vmem:[#allocation4 + $0xc20] sm:$0xff]
    %v4245 = vld [vmem:[#allocation4 + $0xc28] sm:$0xff]
    %v4246 = vld [vmem:[#allocation4 + $0xc30] sm:$0xff]
    %v4247 = vld [vmem:[#allocation4 + $0xc38] sm:$0xff]
    %v4248 = vld [vmem:[#allocation4 + $0xc40] sm:$0xff]
    %v4249 = vld [vmem:[#allocation4 + $0xc48] sm:$0xff]
    %v4250 = vld [vmem:[#allocation4 + $0xc50] sm:$0xff]
    %v4251 = vld [vmem:[#allocation4 + $0xc58] sm:$0xff]
    %v4252 = vld [vmem:[#allocation4 + $0xc60] sm:$0xff]
    %v4253 = vld [vmem:[#allocation4 + $0xc68] sm:$0xff]
    %v4254 = vld [vmem:[#allocation4 + $0xc70] sm:$0xff]
    %v4255 = vld [vmem:[#allocation4 + $0xc78] sm:$0xff]
    %v4256 = vld [vmem:[#allocation4 + $0xc80] sm:$0xff]
    %v4257 = vld [vmem:[#allocation4 + $0xc88] sm:$0xff]
    %v4258 = vld [vmem:[#allocation4 + $0xc90] sm:$0xff]
    %v4259 = vld [vmem:[#allocation4 + $0xc98] sm:$0xff]
    %v4260 = vld [vmem:[#allocation4 + $0xca0] sm:$0xff]
    %v4261 = vld [vmem:[#allocation4 + $0xca8] sm:$0xff]
    %v4262 = vld [vmem:[#allocation4 + $0xcb0] sm:$0xff]
    %v4263 = vld [vmem:[#allocation4 + $0xcb8] sm:$0xff]
    %v4264 = vld [vmem:[#allocation4 + $0xcc0] sm:$0xff]
    %v4265 = vld [vmem:[#allocation4 + $0xcc8] sm:$0xff]
    %v4266 = vld [vmem:[#allocation4 + $0xcd0] sm:$0xff]
    %v4267 = vld [vmem:[#allocation4 + $0xcd8] sm:$0xff]
    %v4268 = vld [vmem:[#allocation4 + $0xce0] sm:$0xff]
    %v4269 = vld [vmem:[#allocation4 + $0xce8] sm:$0xff]
    %v4270 = vld [vmem:[#allocation4 + $0xcf0] sm:$0xff]
    %v4271 = vld [vmem:[#allocation4 + $0xcf8] sm:$0xff]
    %v4272 = vld [vmem:[#allocation4 + $0xd00] sm:$0xff]
    %v4273 = vld [vmem:[#allocation4 + $0xd08] sm:$0xff]
    %v4274 = vld [vmem:[#allocation4 + $0xd10] sm:$0xff]
    %v4275 = vld [vmem:[#allocation4 + $0xd18] sm:$0xff]
    %v4276 = vld [vmem:[#allocation4 + $0xd20] sm:$0xff]
    %v4277 = vld [vmem:[#allocation4 + $0xd28] sm:$0xff]
    %v4278 = vld [vmem:[#allocation4 + $0xd30] sm:$0xff]
    %v4279 = vld [vmem:[#allocation4 + $0xd38] sm:$0xff]
    %v4280 = vld [vmem:[#allocation4 + $0xd40] sm:$0xff]
    %v4281 = vld [vmem:[#allocation4 + $0xd48] sm:$0xff]
    %v4282 = vld [vmem:[#allocation4 + $0xd50] sm:$0xff]
    %v4283 = vld [vmem:[#allocation4 + $0xd58] sm:$0xff]
    %v4284 = vld [vmem:[#allocation4 + $0xd60] sm:$0xff]
    %v4285 = vld [vmem:[#allocation4 + $0xd68] sm:$0xff]
    %v4286 = vld [vmem:[#allocation4 + $0xd70] sm:$0xff]
    %v4287 = vld [vmem:[#allocation4 + $0xd78] sm:$0xff]
    %v4288 = vld [vmem:[#allocation4 + $0xd80] sm:$0xff]
    %v4289 = vld [vmem:[#allocation4 + $0xd88] sm:$0xff]
    %v4290 = vld [vmem:[#allocation4 + $0xd90] sm:$0xff]
    %v4291 = vld [vmem:[#allocation4 + $0xd98] sm:$0xff]
    %v4292 = vld [vmem:[#allocation4 + $0xda0] sm:$0xff]
    %v4293 = vld [vmem:[#allocation4 + $0xda8] sm:$0xff]
    %v4294 = vld [vmem:[#allocation4 + $0xdb0] sm:$0xff]
    %v4295 = vld [vmem:[#allocation4 + $0xdb8] sm:$0xff]
    %v4296 = vld [vmem:[#allocation4 + $0xdc0] sm:$0xff]
    %v4297 = vld [vmem:[#allocation4 + $0xdc8] sm:$0xff]
    %v4298 = vld [vmem:[#allocation4 + $0xdd0] sm:$0xff]
    %v4299 = vld [vmem:[#allocation4 + $0xdd8] sm:$0xff]
    %v4300 = vld [vmem:[#allocation4 + $0xde0] sm:$0xff]
    %v4301 = vld [vmem:[#allocation4 + $0xde8] sm:$0xff]
    %v4302 = vld [vmem:[#allocation4 + $0xdf0] sm:$0xff]
    %v4303 = vld [vmem:[#allocation4 + $0xdf8] sm:$0xff]
    %v4304 = vld [vmem:[#allocation4 + $0xe00] sm:$0xff]
    %v4305 = vld [vmem:[#allocation4 + $0xe08] sm:$0xff]
    %v4306 = vld [vmem:[#allocation4 + $0xe10] sm:$0xff]
    %v4307 = vld [vmem:[#allocation4 + $0xe18] sm:$0xff]
    %v4308 = vld [vmem:[#allocation4 + $0xe20] sm:$0xff]
    %v4309 = vld [vmem:[#allocation4 + $0xe28] sm:$0xff]
    %v4310 = vld [vmem:[#allocation4 + $0xe30] sm:$0xff]
    %v4311 = vld [vmem:[#allocation4 + $0xe38] sm:$0xff]
    %v4312 = vld [vmem:[#allocation4 + $0xe40] sm:$0xff]
    %v4313 = vld [vmem:[#allocation4 + $0xe48] sm:$0xff]
    %v4314 = vld [vmem:[#allocation4 + $0xe50] sm:$0xff]
    %v4315 = vld [vmem:[#allocation4 + $0xe58] sm:$0xff]
    %v4316 = vld [vmem:[#allocation4 + $0xe60] sm:$0xff]
    %v4317 = vld [vmem:[#allocation4 + $0xe68] sm:$0xff]
    %v4318 = vld [vmem:[#allocation4 + $0xe70] sm:$0xff]
    %v4319 = vld [vmem:[#allocation4 + $0xe78] sm:$0xff]
    %v4320 = vld [vmem:[#allocation4 + $0xe80] sm:$0xff]
    %v4321 = vld [vmem:[#allocation4 + $0xe88] sm:$0xff]
    %v4322 = vld [vmem:[#allocation4 + $0xe90] sm:$0xff]
    %v4323 = vld [vmem:[#allocation4 + $0xe98] sm:$0xff]
    %v4324 = vld [vmem:[#allocation4 + $0xea0] sm:$0xff]
    %v4325 = vld [vmem:[#allocation4 + $0xea8] sm:$0xff]
    %v4326 = vld [vmem:[#allocation4 + $0xeb0] sm:$0xff]
    %v4327 = vld [vmem:[#allocation4 + $0xeb8] sm:$0xff]
    %v4328 = vld [vmem:[#allocation4 + $0xec0] sm:$0xff]
    %v4329 = vld [vmem:[#allocation4 + $0xec8] sm:$0xff]
    %v4330 = vld [vmem:[#allocation4 + $0xed0] sm:$0xff]
    %v4331 = vld [vmem:[#allocation4 + $0xed8] sm:$0xff]
    %v4332 = vld [vmem:[#allocation4 + $0xee0] sm:$0xff]
    %v4333 = vld [vmem:[#allocation4 + $0xee8] sm:$0xff]
    %v4334 = vld [vmem:[#allocation4 + $0xef0] sm:$0xff]
    %v4335 = vld [vmem:[#allocation4 + $0xef8] sm:$0xff]
    %v4336 = vld [vmem:[#allocation4 + $0xf00] sm:$0xff]
    %v4337 = vld [vmem:[#allocation4 + $0xf08] sm:$0xff]
    %v4338 = vld [vmem:[#allocation4 + $0xf10] sm:$0xff]
    %v4339 = vld [vmem:[#allocation4 + $0xf18] sm:$0xff]
    %v4340 = vld [vmem:[#allocation4 + $0xf20] sm:$0xff]
    %v4341 = vld [vmem:[#allocation4 + $0xf28] sm:$0xff]
    %v4342 = vld [vmem:[#allocation4 + $0xf30] sm:$0xff]
    %v4343 = vld [vmem:[#allocation4 + $0xf38] sm:$0xff]
    %v4344 = vld [vmem:[#allocation4 + $0xf40] sm:$0xff]
    %v4345 = vld [vmem:[#allocation4 + $0xf48] sm:$0xff]
    %v4346 = vld [vmem:[#allocation4 + $0xf50] sm:$0xff]
    %v4347 = vld [vmem:[#allocation4 + $0xf58] sm:$0xff]
    %v4348 = vld [vmem:[#allocation4 + $0xf60] sm:$0xff]
    %v4349 = vld [vmem:[#allocation4 + $0xf68] sm:$0xff]
    %v4350 = vld [vmem:[#allocation4 + $0xf70] sm:$0xff]
    %v4351 = vld [vmem:[#allocation4 + $0xf78] sm:$0xff]
    %v4352 = vld [vmem:[#allocation4 + $0xf80] sm:$0xff]
    %v4353 = vld [vmem:[#allocation4 + $0xf88] sm:$0xff]
    %v4354 = vld [vmem:[#allocation4 + $0xf90] sm:$0xff]
    %v4355 = vld [vmem:[#allocation4 + $0xf98] sm:$0xff]
    %v4356 = vld [vmem:[#allocation4 + $0xfa0] sm:$0xff]
    %v4357 = vld [vmem:[#allocation4 + $0xfa8] sm:$0xff]
    %v4358 = vld [vmem:[#allocation4 + $0xfb0] sm:$0xff]
    %v4359 = vld [vmem:[#allocation4 + $0xfb8] sm:$0xff]
    %v4360 = vld [vmem:[#allocation4 + $0xfc0] sm:$0xff]
    %v4361 = vld [vmem:[#allocation4 + $0xfc8] sm:$0xff]
    %v4362 = vld [vmem:[#allocation4 + $0xfd0] sm:$0xff]
    %v4363 = vld [vmem:[#allocation4 + $0xfd8] sm:$0xff]
    %v4364 = vld [vmem:[#allocation4 + $0xfe0] sm:$0xff]
    %v4365 = vld [vmem:[#allocation4 + $0xfe8] sm:$0xff]
    %v4366 = vld [vmem:[#allocation4 + $0xff0] sm:$0xff]
    %v4367 = vld [vmem:[#allocation4 + $0xff8] sm:$0xff]
    %v4368 = vld [vmem:[#allocation6] sm:$0xff]
    %v4370 = vlaneseq
    %v4371 = vshrl.u32 %v4370, 7
    %v4372 = vsub.s32 0, %v4371
    %v4373 = vrot.slane %v4368, %v4372
    %v4374 = vlaneseq
    %v4375 = vshrl.u32 %v4374, 7
    %v4376 = vsub.s32 1, %v4375
    %v4377 = vrot.slane %v4368, %v4376
    %v4378 = vlaneseq
    %v4379 = vshrl.u32 %v4378, 7
    %v4380 = vsub.s32 2, %v4379
    %v4381 = vrot.slane %v4368, %v4380
    %v4382 = vlaneseq
    %v4383 = vshrl.u32 %v4382, 7
    %v4384 = vsub.s32 3, %v4383
    %v4385 = vrot.slane %v4368, %v4384
    %v4386 = vlaneseq
    %v4387 = vshrl.u32 %v4386, 7
    %v4388 = vsub.s32 4, %v4387
    %v4389 = vrot.slane %v4368, %v4388
    %v4390 = vlaneseq
    %v4391 = vshrl.u32 %v4390, 7
    %v4392 = vsub.s32 5, %v4391
    %v4393 = vrot.slane %v4368, %v4392
    %v4394 = vlaneseq
    %v4395 = vshrl.u32 %v4394, 7
    %v4396 = vsub.s32 6, %v4395
    %v4397 = vrot.slane %v4368, %v4396
    %v4398 = vlaneseq
    %v4399 = vshrl.u32 %v4398, 7
    %v4400 = vsub.s32 7, %v4399
    %v4401 = vrot.slane %v4368, %v4400
    %v4922 = vunpack.c.l.b16 %v3856
    %v4923 = vunpack.c.h.b16 %v3856
    %v4924 = vunpack.c.l.b16 %v3857
    %v4925 = vunpack.c.h.b16 %v3857
    %v4926 = vunpack.c.l.b16 %v3858
    %v4927 = vunpack.c.h.b16 %v3858
    %v4928 = vunpack.c.l.b16 %v3859
    %v4929 = vunpack.c.h.b16 %v3859
    %v4930 = vunpack.c.l.b16 %v3860
    %v4931 = vunpack.c.h.b16 %v3860
    %v4932 = vunpack.c.l.b16 %v3861
    %v4933 = vunpack.c.h.b16 %v3861
    %v4934 = vunpack.c.l.b16 %v3862
    %v4935 = vunpack.c.h.b16 %v3862
    %v4936 = vunpack.c.l.b16 %v3863
    %v4937 = vunpack.c.h.b16 %v3863
    %v4938 = vunpack.c.l.b16 %v3864
    %v4939 = vunpack.c.h.b16 %v3864
    %v4940 = vunpack.c.l.b16 %v3865
    %v4941 = vunpack.c.h.b16 %v3865
    %v4942 = vunpack.c.l.b16 %v3866
    %v4943 = vunpack.c.h.b16 %v3866
    %v4944 = vunpack.c.l.b16 %v3867
    %v4945 = vunpack.c.h.b16 %v3867
    %v4946 = vunpack.c.l.b16 %v3868
    %v4947 = vunpack.c.h.b16 %v3868
    %v4948 = vunpack.c.l.b16 %v3869
    %v4949 = vunpack.c.h.b16 %v3869
    %v4950 = vunpack.c.l.b16 %v3870
    %v4951 = vunpack.c.h.b16 %v3870
    %v4952 = vunpack.c.l.b16 %v3871
    %v4953 = vunpack.c.h.b16 %v3871
    %v4954 = vunpack.c.l.b16 %v3872
    %v4955 = vunpack.c.h.b16 %v3872
    %v4956 = vunpack.c.l.b16 %v3873
    %v4957 = vunpack.c.h.b16 %v3873
    %v4958 = vunpack.c.l.b16 %v3874
    %v4959 = vunpack.c.h.b16 %v3874
    %v4960 = vunpack.c.l.b16 %v3875
    %v4961 = vunpack.c.h.b16 %v3875
    %v4962 = vunpack.c.l.b16 %v3876
    %v4963 = vunpack.c.h.b16 %v3876
    %v4964 = vunpack.c.l.b16 %v3877
    %v4965 = vunpack.c.h.b16 %v3877
    %v4966 = vunpack.c.l.b16 %v3878
    %v4967 = vunpack.c.h.b16 %v3878
    %v4968 = vunpack.c.l.b16 %v3879
    %v4969 = vunpack.c.h.b16 %v3879
    %v4970 = vunpack.c.l.b16 %v3880
    %v4971 = vunpack.c.h.b16 %v3880
    %v4972 = vunpack.c.l.b16 %v3881
    %v4973 = vunpack.c.h.b16 %v3881
    %v4974 = vunpack.c.l.b16 %v3882
    %v4975 = vunpack.c.h.b16 %v3882
    %v4976 = vunpack.c.l.b16 %v3883
    %v4977 = vunpack.c.h.b16 %v3883
    %v4978 = vunpack.c.l.b16 %v3884
    %v4979 = vunpack.c.h.b16 %v3884
    %v4980 = vunpack.c.l.b16 %v3885
    %v4981 = vunpack.c.h.b16 %v3885
    %v4982 = vunpack.c.l.b16 %v3886
    %v4983 = vunpack.c.h.b16 %v3886
    %v4984 = vunpack.c.l.b16 %v3887
    %v4985 = vunpack.c.h.b16 %v3887
    %v4986 = vunpack.c.l.b16 %v3888
    %v4987 = vunpack.c.h.b16 %v3888
    %v4988 = vunpack.c.l.b16 %v3889
    %v4989 = vunpack.c.h.b16 %v3889
    %v4990 = vunpack.c.l.b16 %v3890
    %v4991 = vunpack.c.h.b16 %v3890
    %v4992 = vunpack.c.l.b16 %v3891
    %v4993 = vunpack.c.h.b16 %v3891
    %v4994 = vunpack.c.l.b16 %v3892
    %v4995 = vunpack.c.h.b16 %v3892
    %v4996 = vunpack.c.l.b16 %v3893
    %v4997 = vunpack.c.h.b16 %v3893
    %v4998 = vunpack.c.l.b16 %v3894
    %v4999 = vunpack.c.h.b16 %v3894
    %v5000 = vunpack.c.l.b16 %v3895
    %v5001 = vunpack.c.h.b16 %v3895
    %v5002 = vunpack.c.l.b16 %v3896
    %v5003 = vunpack.c.h.b16 %v3896
    %v5004 = vunpack.c.l.b16 %v3897
    %v5005 = vunpack.c.h.b16 %v3897
    %v5006 = vunpack.c.l.b16 %v3898
    %v5007 = vunpack.c.h.b16 %v3898
    %v5008 = vunpack.c.l.b16 %v3899
    %v5009 = vunpack.c.h.b16 %v3899
    %v5010 = vunpack.c.l.b16 %v3900
    %v5011 = vunpack.c.h.b16 %v3900
    %v5012 = vunpack.c.l.b16 %v3901
    %v5013 = vunpack.c.h.b16 %v3901
    %v5014 = vunpack.c.l.b16 %v3902
    %v5015 = vunpack.c.h.b16 %v3902
    %v5016 = vunpack.c.l.b16 %v3903
    %v5017 = vunpack.c.h.b16 %v3903
    %v5018 = vunpack.c.l.b16 %v3904
    %v5019 = vunpack.c.h.b16 %v3904
    %v5020 = vunpack.c.l.b16 %v3905
    %v5021 = vunpack.c.h.b16 %v3905
    %v5022 = vunpack.c.l.b16 %v3906
    %v5023 = vunpack.c.h.b16 %v3906
    %v5024 = vunpack.c.l.b16 %v3907
    %v5025 = vunpack.c.h.b16 %v3907
    %v5026 = vunpack.c.l.b16 %v3908
    %v5027 = vunpack.c.h.b16 %v3908
    %v5028 = vunpack.c.l.b16 %v3909
    %v5029 = vunpack.c.h.b16 %v3909
    %v5030 = vunpack.c.l.b16 %v3910
    %v5031 = vunpack.c.h.b16 %v3910
    %v5032 = vunpack.c.l.b16 %v3911
    %v5033 = vunpack.c.h.b16 %v3911
    %v5034 = vunpack.c.l.b16 %v3912
    %v5035 = vunpack.c.h.b16 %v3912
    %v5036 = vunpack.c.l.b16 %v3913
    %v5037 = vunpack.c.h.b16 %v3913
    %v5038 = vunpack.c.l.b16 %v3914
    %v5039 = vunpack.c.h.b16 %v3914
    %v5040 = vunpack.c.l.b16 %v3915
    %v5041 = vunpack.c.h.b16 %v3915
    %v5042 = vunpack.c.l.b16 %v3916
    %v5043 = vunpack.c.h.b16 %v3916
    %v5044 = vunpack.c.l.b16 %v3917
    %v5045 = vunpack.c.h.b16 %v3917
    %v5046 = vunpack.c.l.b16 %v3918
    %v5047 = vunpack.c.h.b16 %v3918
    %v5048 = vunpack.c.l.b16 %v3919
    %v5049 = vunpack.c.h.b16 %v3919
    %v5050 = vunpack.c.l.b16 %v3920
    %v5051 = vunpack.c.h.b16 %v3920
    %v5052 = vunpack.c.l.b16 %v3921
    %v5053 = vunpack.c.h.b16 %v3921
    %v5054 = vunpack.c.l.b16 %v3922
    %v5055 = vunpack.c.h.b16 %v3922
    %v5056 = vunpack.c.l.b16 %v3923
    %v5057 = vunpack.c.h.b16 %v3923
    %v5058 = vunpack.c.l.b16 %v3924
    %v5059 = vunpack.c.h.b16 %v3924
    %v5060 = vunpack.c.l.b16 %v3925
    %v5061 = vunpack.c.h.b16 %v3925
    %v5062 = vunpack.c.l.b16 %v3926
    %v5063 = vunpack.c.h.b16 %v3926
    %v5064 = vunpack.c.l.b16 %v3927
    %v5065 = vunpack.c.h.b16 %v3927
    %v5066 = vunpack.c.l.b16 %v3928
    %v5067 = vunpack.c.h.b16 %v3928
    %v5068 = vunpack.c.l.b16 %v3929
    %v5069 = vunpack.c.h.b16 %v3929
    %v5070 = vunpack.c.l.b16 %v3930
    %v5071 = vunpack.c.h.b16 %v3930
    %v5072 = vunpack.c.l.b16 %v3931
    %v5073 = vunpack.c.h.b16 %v3931
    %v5074 = vunpack.c.l.b16 %v3932
    %v5075 = vunpack.c.h.b16 %v3932
    %v5076 = vunpack.c.l.b16 %v3933
    %v5077 = vunpack.c.h.b16 %v3933
    %v5078 = vunpack.c.l.b16 %v3934
    %v5079 = vunpack.c.h.b16 %v3934
    %v5080 = vunpack.c.l.b16 %v3935
    %v5081 = vunpack.c.h.b16 %v3935
    %v5082 = vunpack.c.l.b16 %v3936
    %v5083 = vunpack.c.h.b16 %v3936
    %v5084 = vunpack.c.l.b16 %v3937
    %v5085 = vunpack.c.h.b16 %v3937
    %v5086 = vunpack.c.l.b16 %v3938
    %v5087 = vunpack.c.h.b16 %v3938
    %v5088 = vunpack.c.l.b16 %v3939
    %v5089 = vunpack.c.h.b16 %v3939
    %v5090 = vunpack.c.l.b16 %v3940
    %v5091 = vunpack.c.h.b16 %v3940
    %v5092 = vunpack.c.l.b16 %v3941
    %v5093 = vunpack.c.h.b16 %v3941
    %v5094 = vunpack.c.l.b16 %v3942
    %v5095 = vunpack.c.h.b16 %v3942
    %v5096 = vunpack.c.l.b16 %v3943
    %v5097 = vunpack.c.h.b16 %v3943
    %v5098 = vunpack.c.l.b16 %v3944
    %v5099 = vunpack.c.h.b16 %v3944
    %v5100 = vunpack.c.l.b16 %v3945
    %v5101 = vunpack.c.h.b16 %v3945
    %v5102 = vunpack.c.l.b16 %v3946
    %v5103 = vunpack.c.h.b16 %v3946
    %v5104 = vunpack.c.l.b16 %v3947
    %v5105 = vunpack.c.h.b16 %v3947
    %v5106 = vunpack.c.l.b16 %v3948
    %v5107 = vunpack.c.h.b16 %v3948
    %v5108 = vunpack.c.l.b16 %v3949
    %v5109 = vunpack.c.h.b16 %v3949
    %v5110 = vunpack.c.l.b16 %v3950
    %v5111 = vunpack.c.h.b16 %v3950
    %v5112 = vunpack.c.l.b16 %v3951
    %v5113 = vunpack.c.h.b16 %v3951
    %v5114 = vunpack.c.l.b16 %v3952
    %v5115 = vunpack.c.h.b16 %v3952
    %v5116 = vunpack.c.l.b16 %v3953
    %v5117 = vunpack.c.h.b16 %v3953
    %v5118 = vunpack.c.l.b16 %v3954
    %v5119 = vunpack.c.h.b16 %v3954
    %v5120 = vunpack.c.l.b16 %v3955
    %v5121 = vunpack.c.h.b16 %v3955
    %v5122 = vunpack.c.l.b16 %v3956
    %v5123 = vunpack.c.h.b16 %v3956
    %v5124 = vunpack.c.l.b16 %v3957
    %v5125 = vunpack.c.h.b16 %v3957
    %v5126 = vunpack.c.l.b16 %v3958
    %v5127 = vunpack.c.h.b16 %v3958
    %v5128 = vunpack.c.l.b16 %v3959
    %v5129 = vunpack.c.h.b16 %v3959
    %v5130 = vunpack.c.l.b16 %v3960
    %v5131 = vunpack.c.h.b16 %v3960
    %v5132 = vunpack.c.l.b16 %v3961
    %v5133 = vunpack.c.h.b16 %v3961
    %v5134 = vunpack.c.l.b16 %v3962
    %v5135 = vunpack.c.h.b16 %v3962
    %v5136 = vunpack.c.l.b16 %v3963
    %v5137 = vunpack.c.h.b16 %v3963
    %v5138 = vunpack.c.l.b16 %v3964
    %v5139 = vunpack.c.h.b16 %v3964
    %v5140 = vunpack.c.l.b16 %v3965
    %v5141 = vunpack.c.h.b16 %v3965
    %v5142 = vunpack.c.l.b16 %v3966
    %v5143 = vunpack.c.h.b16 %v3966
    %v5144 = vunpack.c.l.b16 %v3967
    %v5145 = vunpack.c.h.b16 %v3967
    %v5146 = vunpack.c.l.b16 %v3968
    %v5147 = vunpack.c.h.b16 %v3968
    %v5148 = vunpack.c.l.b16 %v3969
    %v5149 = vunpack.c.h.b16 %v3969
    %v5150 = vunpack.c.l.b16 %v3970
    %v5151 = vunpack.c.h.b16 %v3970
    %v5152 = vunpack.c.l.b16 %v3971
    %v5153 = vunpack.c.h.b16 %v3971
    %v5154 = vunpack.c.l.b16 %v3972
    %v5155 = vunpack.c.h.b16 %v3972
    %v5156 = vunpack.c.l.b16 %v3973
    %v5157 = vunpack.c.h.b16 %v3973
    %v5158 = vunpack.c.l.b16 %v3974
    %v5159 = vunpack.c.h.b16 %v3974
    %v5160 = vunpack.c.l.b16 %v3975
    %v5161 = vunpack.c.h.b16 %v3975
    %v5162 = vunpack.c.l.b16 %v3976
    %v5163 = vunpack.c.h.b16 %v3976
    %v5164 = vunpack.c.l.b16 %v3977
    %v5165 = vunpack.c.h.b16 %v3977
    %v5166 = vunpack.c.l.b16 %v3978
    %v5167 = vunpack.c.h.b16 %v3978
    %v5168 = vunpack.c.l.b16 %v3979
    %v5169 = vunpack.c.h.b16 %v3979
    %v5170 = vunpack.c.l.b16 %v3980
    %v5171 = vunpack.c.h.b16 %v3980
    %v5172 = vunpack.c.l.b16 %v3981
    %v5173 = vunpack.c.h.b16 %v3981
    %v5174 = vunpack.c.l.b16 %v3982
    %v5175 = vunpack.c.h.b16 %v3982
    %v5176 = vunpack.c.l.b16 %v3983
    %v5177 = vunpack.c.h.b16 %v3983
    %v5178 = vunpack.c.l.b16 %v3984
    %v5179 = vunpack.c.h.b16 %v3984
    %v5180 = vunpack.c.l.b16 %v3985
    %v5181 = vunpack.c.h.b16 %v3985
    %v5182 = vunpack.c.l.b16 %v3986
    %v5183 = vunpack.c.h.b16 %v3986
    %v5184 = vunpack.c.l.b16 %v3987
    %v5185 = vunpack.c.h.b16 %v3987
    %v5186 = vunpack.c.l.b16 %v3988
    %v5187 = vunpack.c.h.b16 %v3988
    %v5188 = vunpack.c.l.b16 %v3989
    %v5189 = vunpack.c.h.b16 %v3989
    %v5190 = vunpack.c.l.b16 %v3990
    %v5191 = vunpack.c.h.b16 %v3990
    %v5192 = vunpack.c.l.b16 %v3991
    %v5193 = vunpack.c.h.b16 %v3991
    %v5194 = vunpack.c.l.b16 %v3992
    %v5195 = vunpack.c.h.b16 %v3992
    %v5196 = vunpack.c.l.b16 %v3993
    %v5197 = vunpack.c.h.b16 %v3993
    %v5198 = vunpack.c.l.b16 %v3994
    %v5199 = vunpack.c.h.b16 %v3994
    %v5200 = vunpack.c.l.b16 %v3995
    %v5201 = vunpack.c.h.b16 %v3995
    %v5202 = vunpack.c.l.b16 %v3996
    %v5203 = vunpack.c.h.b16 %v3996
    %v5204 = vunpack.c.l.b16 %v3997
    %v5205 = vunpack.c.h.b16 %v3997
    %v5206 = vunpack.c.l.b16 %v3998
    %v5207 = vunpack.c.h.b16 %v3998
    %v5208 = vunpack.c.l.b16 %v3999
    %v5209 = vunpack.c.h.b16 %v3999
    %v5210 = vunpack.c.l.b16 %v4000
    %v5211 = vunpack.c.h.b16 %v4000
    %v5212 = vunpack.c.l.b16 %v4001
    %v5213 = vunpack.c.h.b16 %v4001
    %v5214 = vunpack.c.l.b16 %v4002
    %v5215 = vunpack.c.h.b16 %v4002
    %v5216 = vunpack.c.l.b16 %v4003
    %v5217 = vunpack.c.h.b16 %v4003
    %v5218 = vunpack.c.l.b16 %v4004
    %v5219 = vunpack.c.h.b16 %v4004
    %v5220 = vunpack.c.l.b16 %v4005
    %v5221 = vunpack.c.h.b16 %v4005
    %v5222 = vunpack.c.l.b16 %v4006
    %v5223 = vunpack.c.h.b16 %v4006
    %v5224 = vunpack.c.l.b16 %v4007
    %v5225 = vunpack.c.h.b16 %v4007
    %v5226 = vunpack.c.l.b16 %v4008
    %v5227 = vunpack.c.h.b16 %v4008
    %v5228 = vunpack.c.l.b16 %v4009
    %v5229 = vunpack.c.h.b16 %v4009
    %v5230 = vunpack.c.l.b16 %v4010
    %v5231 = vunpack.c.h.b16 %v4010
    %v5232 = vunpack.c.l.b16 %v4011
    %v5233 = vunpack.c.h.b16 %v4011
    %v5234 = vunpack.c.l.b16 %v4012
    %v5235 = vunpack.c.h.b16 %v4012
    %v5236 = vunpack.c.l.b16 %v4013
    %v5237 = vunpack.c.h.b16 %v4013
    %v5238 = vunpack.c.l.b16 %v4014
    %v5239 = vunpack.c.h.b16 %v4014
    %v5240 = vunpack.c.l.b16 %v4015
    %v5241 = vunpack.c.h.b16 %v4015
    %v5242 = vunpack.c.l.b16 %v4016
    %v5243 = vunpack.c.h.b16 %v4016
    %v5244 = vunpack.c.l.b16 %v4017
    %v5245 = vunpack.c.h.b16 %v4017
    %v5246 = vunpack.c.l.b16 %v4018
    %v5247 = vunpack.c.h.b16 %v4018
    %v5248 = vunpack.c.l.b16 %v4019
    %v5249 = vunpack.c.h.b16 %v4019
    %v5250 = vunpack.c.l.b16 %v4020
    %v5251 = vunpack.c.h.b16 %v4020
    %v5252 = vunpack.c.l.b16 %v4021
    %v5253 = vunpack.c.h.b16 %v4021
    %v5254 = vunpack.c.l.b16 %v4022
    %v5255 = vunpack.c.h.b16 %v4022
    %v5256 = vunpack.c.l.b16 %v4023
    %v5257 = vunpack.c.h.b16 %v4023
    %v5258 = vunpack.c.l.b16 %v4024
    %v5259 = vunpack.c.h.b16 %v4024
    %v5260 = vunpack.c.l.b16 %v4025
    %v5261 = vunpack.c.h.b16 %v4025
    %v5262 = vunpack.c.l.b16 %v4026
    %v5263 = vunpack.c.h.b16 %v4026
    %v5264 = vunpack.c.l.b16 %v4027
    %v5265 = vunpack.c.h.b16 %v4027
    %v5266 = vunpack.c.l.b16 %v4028
    %v5267 = vunpack.c.h.b16 %v4028
    %v5268 = vunpack.c.l.b16 %v4029
    %v5269 = vunpack.c.h.b16 %v4029
    %v5270 = vunpack.c.l.b16 %v4030
    %v5271 = vunpack.c.h.b16 %v4030
    %v5272 = vunpack.c.l.b16 %v4031
    %v5273 = vunpack.c.h.b16 %v4031
    %v5274 = vunpack.c.l.b16 %v4032
    %v5275 = vunpack.c.h.b16 %v4032
    %v5276 = vunpack.c.l.b16 %v4033
    %v5277 = vunpack.c.h.b16 %v4033
    %v5278 = vunpack.c.l.b16 %v4034
    %v5279 = vunpack.c.h.b16 %v4034
    %v5280 = vunpack.c.l.b16 %v4035
    %v5281 = vunpack.c.h.b16 %v4035
    %v5282 = vunpack.c.l.b16 %v4036
    %v5283 = vunpack.c.h.b16 %v4036
    %v5284 = vunpack.c.l.b16 %v4037
    %v5285 = vunpack.c.h.b16 %v4037
    %v5286 = vunpack.c.l.b16 %v4038
    %v5287 = vunpack.c.h.b16 %v4038
    %v5288 = vunpack.c.l.b16 %v4039
    %v5289 = vunpack.c.h.b16 %v4039
    %v5290 = vunpack.c.l.b16 %v4040
    %v5291 = vunpack.c.h.b16 %v4040
    %v5292 = vunpack.c.l.b16 %v4041
    %v5293 = vunpack.c.h.b16 %v4041
    %v5294 = vunpack.c.l.b16 %v4042
    %v5295 = vunpack.c.h.b16 %v4042
    %v5296 = vunpack.c.l.b16 %v4043
    %v5297 = vunpack.c.h.b16 %v4043
    %v5298 = vunpack.c.l.b16 %v4044
    %v5299 = vunpack.c.h.b16 %v4044
    %v5300 = vunpack.c.l.b16 %v4045
    %v5301 = vunpack.c.h.b16 %v4045
    %v5302 = vunpack.c.l.b16 %v4046
    %v5303 = vunpack.c.h.b16 %v4046
    %v5304 = vunpack.c.l.b16 %v4047
    %v5305 = vunpack.c.h.b16 %v4047
    %v5306 = vunpack.c.l.b16 %v4048
    %v5307 = vunpack.c.h.b16 %v4048
    %v5308 = vunpack.c.l.b16 %v4049
    %v5309 = vunpack.c.h.b16 %v4049
    %v5310 = vunpack.c.l.b16 %v4050
    %v5311 = vunpack.c.h.b16 %v4050
    %v5312 = vunpack.c.l.b16 %v4051
    %v5313 = vunpack.c.h.b16 %v4051
    %v5314 = vunpack.c.l.b16 %v4052
    %v5315 = vunpack.c.h.b16 %v4052
    %v5316 = vunpack.c.l.b16 %v4053
    %v5317 = vunpack.c.h.b16 %v4053
    %v5318 = vunpack.c.l.b16 %v4054
    %v5319 = vunpack.c.h.b16 %v4054
    %v5320 = vunpack.c.l.b16 %v4055
    %v5321 = vunpack.c.h.b16 %v4055
    %v5322 = vunpack.c.l.b16 %v4056
    %v5323 = vunpack.c.h.b16 %v4056
    %v5324 = vunpack.c.l.b16 %v4057
    %v5325 = vunpack.c.h.b16 %v4057
    %v5326 = vunpack.c.l.b16 %v4058
    %v5327 = vunpack.c.h.b16 %v4058
    %v5328 = vunpack.c.l.b16 %v4059
    %v5329 = vunpack.c.h.b16 %v4059
    %v5330 = vunpack.c.l.b16 %v4060
    %v5331 = vunpack.c.h.b16 %v4060
    %v5332 = vunpack.c.l.b16 %v4061
    %v5333 = vunpack.c.h.b16 %v4061
    %v5334 = vunpack.c.l.b16 %v4062
    %v5335 = vunpack.c.h.b16 %v4062
    %v5336 = vunpack.c.l.b16 %v4063
    %v5337 = vunpack.c.h.b16 %v4063
    %v5338 = vunpack.c.l.b16 %v4064
    %v5339 = vunpack.c.h.b16 %v4064
    %v5340 = vunpack.c.l.b16 %v4065
    %v5341 = vunpack.c.h.b16 %v4065
    %v5342 = vunpack.c.l.b16 %v4066
    %v5343 = vunpack.c.h.b16 %v4066
    %v5344 = vunpack.c.l.b16 %v4067
    %v5345 = vunpack.c.h.b16 %v4067
    %v5346 = vunpack.c.l.b16 %v4068
    %v5347 = vunpack.c.h.b16 %v4068
    %v5348 = vunpack.c.l.b16 %v4069
    %v5349 = vunpack.c.h.b16 %v4069
    %v5350 = vunpack.c.l.b16 %v4070
    %v5351 = vunpack.c.h.b16 %v4070
    %v5352 = vunpack.c.l.b16 %v4071
    %v5353 = vunpack.c.h.b16 %v4071
    %v5354 = vunpack.c.l.b16 %v4072
    %v5355 = vunpack.c.h.b16 %v4072
    %v5356 = vunpack.c.l.b16 %v4073
    %v5357 = vunpack.c.h.b16 %v4073
    %v5358 = vunpack.c.l.b16 %v4074
    %v5359 = vunpack.c.h.b16 %v4074
    %v5360 = vunpack.c.l.b16 %v4075
    %v5361 = vunpack.c.h.b16 %v4075
    %v5362 = vunpack.c.l.b16 %v4076
    %v5363 = vunpack.c.h.b16 %v4076
    %v5364 = vunpack.c.l.b16 %v4077
    %v5365 = vunpack.c.h.b16 %v4077
    %v5366 = vunpack.c.l.b16 %v4078
    %v5367 = vunpack.c.h.b16 %v4078
    %v5368 = vunpack.c.l.b16 %v4079
    %v5369 = vunpack.c.h.b16 %v4079
    %v5370 = vunpack.c.l.b16 %v4080
    %v5371 = vunpack.c.h.b16 %v4080
    %v5372 = vunpack.c.l.b16 %v4081
    %v5373 = vunpack.c.h.b16 %v4081
    %v5374 = vunpack.c.l.b16 %v4082
    %v5375 = vunpack.c.h.b16 %v4082
    %v5376 = vunpack.c.l.b16 %v4083
    %v5377 = vunpack.c.h.b16 %v4083
    %v5378 = vunpack.c.l.b16 %v4084
    %v5379 = vunpack.c.h.b16 %v4084
    %v5380 = vunpack.c.l.b16 %v4085
    %v5381 = vunpack.c.h.b16 %v4085
    %v5382 = vunpack.c.l.b16 %v4086
    %v5383 = vunpack.c.h.b16 %v4086
    %v5384 = vunpack.c.l.b16 %v4087
    %v5385 = vunpack.c.h.b16 %v4087
    %v5386 = vunpack.c.l.b16 %v4088
    %v5387 = vunpack.c.h.b16 %v4088
    %v5388 = vunpack.c.l.b16 %v4089
    %v5389 = vunpack.c.h.b16 %v4089
    %v5390 = vunpack.c.l.b16 %v4090
    %v5391 = vunpack.c.h.b16 %v4090
    %v5392 = vunpack.c.l.b16 %v4091
    %v5393 = vunpack.c.h.b16 %v4091
    %v5394 = vunpack.c.l.b16 %v4092
    %v5395 = vunpack.c.h.b16 %v4092
    %v5396 = vunpack.c.l.b16 %v4093
    %v5397 = vunpack.c.h.b16 %v4093
    %v5398 = vunpack.c.l.b16 %v4094
    %v5399 = vunpack.c.h.b16 %v4094
    %v5400 = vunpack.c.l.b16 %v4095
    %v5401 = vunpack.c.h.b16 %v4095
    %v5402 = vunpack.c.l.b16 %v4096
    %v5403 = vunpack.c.h.b16 %v4096
    %v5404 = vunpack.c.l.b16 %v4097
    %v5405 = vunpack.c.h.b16 %v4097
    %v5406 = vunpack.c.l.b16 %v4098
    %v5407 = vunpack.c.h.b16 %v4098
    %v5408 = vunpack.c.l.b16 %v4099
    %v5409 = vunpack.c.h.b16 %v4099
    %v5410 = vunpack.c.l.b16 %v4100
    %v5411 = vunpack.c.h.b16 %v4100
    %v5412 = vunpack.c.l.b16 %v4101
    %v5413 = vunpack.c.h.b16 %v4101
    %v5414 = vunpack.c.l.b16 %v4102
    %v5415 = vunpack.c.h.b16 %v4102
    %v5416 = vunpack.c.l.b16 %v4103
    %v5417 = vunpack.c.h.b16 %v4103
    %v5418 = vunpack.c.l.b16 %v4104
    %v5419 = vunpack.c.h.b16 %v4104
    %v5420 = vunpack.c.l.b16 %v4105
    %v5421 = vunpack.c.h.b16 %v4105
    %v5422 = vunpack.c.l.b16 %v4106
    %v5423 = vunpack.c.h.b16 %v4106
    %v5424 = vunpack.c.l.b16 %v4107
    %v5425 = vunpack.c.h.b16 %v4107
    %v5426 = vunpack.c.l.b16 %v4108
    %v5427 = vunpack.c.h.b16 %v4108
    %v5428 = vunpack.c.l.b16 %v4109
    %v5429 = vunpack.c.h.b16 %v4109
    %v5430 = vunpack.c.l.b16 %v4110
    %v5431 = vunpack.c.h.b16 %v4110
    %v5432 = vunpack.c.l.b16 %v4111
    %v5433 = vunpack.c.h.b16 %v4111
    %v5434 = vunpack.c.l.b16 %v4112
    %v5435 = vunpack.c.h.b16 %v4112
    %v5436 = vunpack.c.l.b16 %v4113
    %v5437 = vunpack.c.h.b16 %v4113
    %v5438 = vunpack.c.l.b16 %v4114
    %v5439 = vunpack.c.h.b16 %v4114
    %v5440 = vunpack.c.l.b16 %v4115
    %v5441 = vunpack.c.h.b16 %v4115
    %v5442 = vunpack.c.l.b16 %v4116
    %v5443 = vunpack.c.h.b16 %v4116
    %v5444 = vunpack.c.l.b16 %v4117
    %v5445 = vunpack.c.h.b16 %v4117
    %v5446 = vunpack.c.l.b16 %v4118
    %v5447 = vunpack.c.h.b16 %v4118
    %v5448 = vunpack.c.l.b16 %v4119
    %v5449 = vunpack.c.h.b16 %v4119
    %v5450 = vunpack.c.l.b16 %v4120
    %v5451 = vunpack.c.h.b16 %v4120
    %v5452 = vunpack.c.l.b16 %v4121
    %v5453 = vunpack.c.h.b16 %v4121
    %v5454 = vunpack.c.l.b16 %v4122
    %v5455 = vunpack.c.h.b16 %v4122
    %v5456 = vunpack.c.l.b16 %v4123
    %v5457 = vunpack.c.h.b16 %v4123
    %v5458 = vunpack.c.l.b16 %v4124
    %v5459 = vunpack.c.h.b16 %v4124
    %v5460 = vunpack.c.l.b16 %v4125
    %v5461 = vunpack.c.h.b16 %v4125
    %v5462 = vunpack.c.l.b16 %v4126
    %v5463 = vunpack.c.h.b16 %v4126
    %v5464 = vunpack.c.l.b16 %v4127
    %v5465 = vunpack.c.h.b16 %v4127
    %v5466 = vunpack.c.l.b16 %v4128
    %v5467 = vunpack.c.h.b16 %v4128
    %v5468 = vunpack.c.l.b16 %v4129
    %v5469 = vunpack.c.h.b16 %v4129
    %v5470 = vunpack.c.l.b16 %v4130
    %v5471 = vunpack.c.h.b16 %v4130
    %v5472 = vunpack.c.l.b16 %v4131
    %v5473 = vunpack.c.h.b16 %v4131
    %v5474 = vunpack.c.l.b16 %v4132
    %v5475 = vunpack.c.h.b16 %v4132
    %v5476 = vunpack.c.l.b16 %v4133
    %v5477 = vunpack.c.h.b16 %v4133
    %v5478 = vunpack.c.l.b16 %v4134
    %v5479 = vunpack.c.h.b16 %v4134
    %v5480 = vunpack.c.l.b16 %v4135
    %v5481 = vunpack.c.h.b16 %v4135
    %v5482 = vunpack.c.l.b16 %v4136
    %v5483 = vunpack.c.h.b16 %v4136
    %v5484 = vunpack.c.l.b16 %v4137
    %v5485 = vunpack.c.h.b16 %v4137
    %v5486 = vunpack.c.l.b16 %v4138
    %v5487 = vunpack.c.h.b16 %v4138
    %v5488 = vunpack.c.l.b16 %v4139
    %v5489 = vunpack.c.h.b16 %v4139
    %v5490 = vunpack.c.l.b16 %v4140
    %v5491 = vunpack.c.h.b16 %v4140
    %v5492 = vunpack.c.l.b16 %v4141
    %v5493 = vunpack.c.h.b16 %v4141
    %v5494 = vunpack.c.l.b16 %v4142
    %v5495 = vunpack.c.h.b16 %v4142
    %v5496 = vunpack.c.l.b16 %v4143
    %v5497 = vunpack.c.h.b16 %v4143
    %v5498 = vunpack.c.l.b16 %v4144
    %v5499 = vunpack.c.h.b16 %v4144
    %v5500 = vunpack.c.l.b16 %v4145
    %v5501 = vunpack.c.h.b16 %v4145
    %v5502 = vunpack.c.l.b16 %v4146
    %v5503 = vunpack.c.h.b16 %v4146
    %v5504 = vunpack.c.l.b16 %v4147
    %v5505 = vunpack.c.h.b16 %v4147
    %v5506 = vunpack.c.l.b16 %v4148
    %v5507 = vunpack.c.h.b16 %v4148
    %v5508 = vunpack.c.l.b16 %v4149
    %v5509 = vunpack.c.h.b16 %v4149
    %v5510 = vunpack.c.l.b16 %v4150
    %v5511 = vunpack.c.h.b16 %v4150
    %v5512 = vunpack.c.l.b16 %v4151
    %v5513 = vunpack.c.h.b16 %v4151
    %v5514 = vunpack.c.l.b16 %v4152
    %v5515 = vunpack.c.h.b16 %v4152
    %v5516 = vunpack.c.l.b16 %v4153
    %v5517 = vunpack.c.h.b16 %v4153
    %v5518 = vunpack.c.l.b16 %v4154
    %v5519 = vunpack.c.h.b16 %v4154
    %v5520 = vunpack.c.l.b16 %v4155
    %v5521 = vunpack.c.h.b16 %v4155
    %v5522 = vunpack.c.l.b16 %v4156
    %v5523 = vunpack.c.h.b16 %v4156
    %v5524 = vunpack.c.l.b16 %v4157
    %v5525 = vunpack.c.h.b16 %v4157
    %v5526 = vunpack.c.l.b16 %v4158
    %v5527 = vunpack.c.h.b16 %v4158
    %v5528 = vunpack.c.l.b16 %v4159
    %v5529 = vunpack.c.h.b16 %v4159
    %v5530 = vunpack.c.l.b16 %v4160
    %v5531 = vunpack.c.h.b16 %v4160
    %v5532 = vunpack.c.l.b16 %v4161
    %v5533 = vunpack.c.h.b16 %v4161
    %v5534 = vunpack.c.l.b16 %v4162
    %v5535 = vunpack.c.h.b16 %v4162
    %v5536 = vunpack.c.l.b16 %v4163
    %v5537 = vunpack.c.h.b16 %v4163
    %v5538 = vunpack.c.l.b16 %v4164
    %v5539 = vunpack.c.h.b16 %v4164
    %v5540 = vunpack.c.l.b16 %v4165
    %v5541 = vunpack.c.h.b16 %v4165
    %v5542 = vunpack.c.l.b16 %v4166
    %v5543 = vunpack.c.h.b16 %v4166
    %v5544 = vunpack.c.l.b16 %v4167
    %v5545 = vunpack.c.h.b16 %v4167
    %v5546 = vunpack.c.l.b16 %v4168
    %v5547 = vunpack.c.h.b16 %v4168
    %v5548 = vunpack.c.l.b16 %v4169
    %v5549 = vunpack.c.h.b16 %v4169
    %v5550 = vunpack.c.l.b16 %v4170
    %v5551 = vunpack.c.h.b16 %v4170
    %v5552 = vunpack.c.l.b16 %v4171
    %v5553 = vunpack.c.h.b16 %v4171
    %v5554 = vunpack.c.l.b16 %v4172
    %v5555 = vunpack.c.h.b16 %v4172
    %v5556 = vunpack.c.l.b16 %v4173
    %v5557 = vunpack.c.h.b16 %v4173
    %v5558 = vunpack.c.l.b16 %v4174
    %v5559 = vunpack.c.h.b16 %v4174
    %v5560 = vunpack.c.l.b16 %v4175
    %v5561 = vunpack.c.h.b16 %v4175
    %v5562 = vunpack.c.l.b16 %v4176
    %v5563 = vunpack.c.h.b16 %v4176
    %v5564 = vunpack.c.l.b16 %v4177
    %v5565 = vunpack.c.h.b16 %v4177
    %v5566 = vunpack.c.l.b16 %v4178
    %v5567 = vunpack.c.h.b16 %v4178
    %v5568 = vunpack.c.l.b16 %v4179
    %v5569 = vunpack.c.h.b16 %v4179
    %v5570 = vunpack.c.l.b16 %v4180
    %v5571 = vunpack.c.h.b16 %v4180
    %v5572 = vunpack.c.l.b16 %v4181
    %v5573 = vunpack.c.h.b16 %v4181
    %v5574 = vunpack.c.l.b16 %v4182
    %v5575 = vunpack.c.h.b16 %v4182
    %v5576 = vunpack.c.l.b16 %v4183
    %v5577 = vunpack.c.h.b16 %v4183
    %v5578 = vunpack.c.l.b16 %v4184
    %v5579 = vunpack.c.h.b16 %v4184
    %v5580 = vunpack.c.l.b16 %v4185
    %v5581 = vunpack.c.h.b16 %v4185
    %v5582 = vunpack.c.l.b16 %v4186
    %v5583 = vunpack.c.h.b16 %v4186
    %v5584 = vunpack.c.l.b16 %v4187
    %v5585 = vunpack.c.h.b16 %v4187
    %v5586 = vunpack.c.l.b16 %v4188
    %v5587 = vunpack.c.h.b16 %v4188
    %v5588 = vunpack.c.l.b16 %v4189
    %v5589 = vunpack.c.h.b16 %v4189
    %v5590 = vunpack.c.l.b16 %v4190
    %v5591 = vunpack.c.h.b16 %v4190
    %v5592 = vunpack.c.l.b16 %v4191
    %v5593 = vunpack.c.h.b16 %v4191
    %v5594 = vunpack.c.l.b16 %v4192
    %v5595 = vunpack.c.h.b16 %v4192
    %v5596 = vunpack.c.l.b16 %v4193
    %v5597 = vunpack.c.h.b16 %v4193
    %v5598 = vunpack.c.l.b16 %v4194
    %v5599 = vunpack.c.h.b16 %v4194
    %v5600 = vunpack.c.l.b16 %v4195
    %v5601 = vunpack.c.h.b16 %v4195
    %v5602 = vunpack.c.l.b16 %v4196
    %v5603 = vunpack.c.h.b16 %v4196
    %v5604 = vunpack.c.l.b16 %v4197
    %v5605 = vunpack.c.h.b16 %v4197
    %v5606 = vunpack.c.l.b16 %v4198
    %v5607 = vunpack.c.h.b16 %v4198
    %v5608 = vunpack.c.l.b16 %v4199
    %v5609 = vunpack.c.h.b16 %v4199
    %v5610 = vunpack.c.l.b16 %v4200
    %v5611 = vunpack.c.h.b16 %v4200
    %v5612 = vunpack.c.l.b16 %v4201
    %v5613 = vunpack.c.h.b16 %v4201
    %v5614 = vunpack.c.l.b16 %v4202
    %v5615 = vunpack.c.h.b16 %v4202
    %v5616 = vunpack.c.l.b16 %v4203
    %v5617 = vunpack.c.h.b16 %v4203
    %v5618 = vunpack.c.l.b16 %v4204
    %v5619 = vunpack.c.h.b16 %v4204
    %v5620 = vunpack.c.l.b16 %v4205
    %v5621 = vunpack.c.h.b16 %v4205
    %v5622 = vunpack.c.l.b16 %v4206
    %v5623 = vunpack.c.h.b16 %v4206
    %v5624 = vunpack.c.l.b16 %v4207
    %v5625 = vunpack.c.h.b16 %v4207
    %v5626 = vunpack.c.l.b16 %v4208
    %v5627 = vunpack.c.h.b16 %v4208
    %v5628 = vunpack.c.l.b16 %v4209
    %v5629 = vunpack.c.h.b16 %v4209
    %v5630 = vunpack.c.l.b16 %v4210
    %v5631 = vunpack.c.h.b16 %v4210
    %v5632 = vunpack.c.l.b16 %v4211
    %v5633 = vunpack.c.h.b16 %v4211
    %v5634 = vunpack.c.l.b16 %v4212
    %v5635 = vunpack.c.h.b16 %v4212
    %v5636 = vunpack.c.l.b16 %v4213
    %v5637 = vunpack.c.h.b16 %v4213
    %v5638 = vunpack.c.l.b16 %v4214
    %v5639 = vunpack.c.h.b16 %v4214
    %v5640 = vunpack.c.l.b16 %v4215
    %v5641 = vunpack.c.h.b16 %v4215
    %v5642 = vunpack.c.l.b16 %v4216
    %v5643 = vunpack.c.h.b16 %v4216
    %v5644 = vunpack.c.l.b16 %v4217
    %v5645 = vunpack.c.h.b16 %v4217
    %v5646 = vunpack.c.l.b16 %v4218
    %v5647 = vunpack.c.h.b16 %v4218
    %v5648 = vunpack.c.l.b16 %v4219
    %v5649 = vunpack.c.h.b16 %v4219
    %v5650 = vunpack.c.l.b16 %v4220
    %v5651 = vunpack.c.h.b16 %v4220
    %v5652 = vunpack.c.l.b16 %v4221
    %v5653 = vunpack.c.h.b16 %v4221
    %v5654 = vunpack.c.l.b16 %v4222
    %v5655 = vunpack.c.h.b16 %v4222
    %v5656 = vunpack.c.l.b16 %v4223
    %v5657 = vunpack.c.h.b16 %v4223
    %v5658 = vunpack.c.l.b16 %v4224
    %v5659 = vunpack.c.h.b16 %v4224
    %v5660 = vunpack.c.l.b16 %v4225
    %v5661 = vunpack.c.h.b16 %v4225
    %v5662 = vunpack.c.l.b16 %v4226
    %v5663 = vunpack.c.h.b16 %v4226
    %v5664 = vunpack.c.l.b16 %v4227
    %v5665 = vunpack.c.h.b16 %v4227
    %v5666 = vunpack.c.l.b16 %v4228
    %v5667 = vunpack.c.h.b16 %v4228
    %v5668 = vunpack.c.l.b16 %v4229
    %v5669 = vunpack.c.h.b16 %v4229
    %v5670 = vunpack.c.l.b16 %v4230
    %v5671 = vunpack.c.h.b16 %v4230
    %v5672 = vunpack.c.l.b16 %v4231
    %v5673 = vunpack.c.h.b16 %v4231
    %v5674 = vunpack.c.l.b16 %v4232
    %v5675 = vunpack.c.h.b16 %v4232
    %v5676 = vunpack.c.l.b16 %v4233
    %v5677 = vunpack.c.h.b16 %v4233
    %v5678 = vunpack.c.l.b16 %v4234
    %v5679 = vunpack.c.h.b16 %v4234
    %v5680 = vunpack.c.l.b16 %v4235
    %v5681 = vunpack.c.h.b16 %v4235
    %v5682 = vunpack.c.l.b16 %v4236
    %v5683 = vunpack.c.h.b16 %v4236
    %v5684 = vunpack.c.l.b16 %v4237
    %v5685 = vunpack.c.h.b16 %v4237
    %v5686 = vunpack.c.l.b16 %v4238
    %v5687 = vunpack.c.h.b16 %v4238
    %v5688 = vunpack.c.l.b16 %v4239
    %v5689 = vunpack.c.h.b16 %v4239
    %v5690 = vunpack.c.l.b16 %v4240
    %v5691 = vunpack.c.h.b16 %v4240
    %v5692 = vunpack.c.l.b16 %v4241
    %v5693 = vunpack.c.h.b16 %v4241
    %v5694 = vunpack.c.l.b16 %v4242
    %v5695 = vunpack.c.h.b16 %v4242
    %v5696 = vunpack.c.l.b16 %v4243
    %v5697 = vunpack.c.h.b16 %v4243
    %v5698 = vunpack.c.l.b16 %v4244
    %v5699 = vunpack.c.h.b16 %v4244
    %v5700 = vunpack.c.l.b16 %v4245
    %v5701 = vunpack.c.h.b16 %v4245
    %v5702 = vunpack.c.l.b16 %v4246
    %v5703 = vunpack.c.h.b16 %v4246
    %v5704 = vunpack.c.l.b16 %v4247
    %v5705 = vunpack.c.h.b16 %v4247
    %v5706 = vunpack.c.l.b16 %v4248
    %v5707 = vunpack.c.h.b16 %v4248
    %v5708 = vunpack.c.l.b16 %v4249
    %v5709 = vunpack.c.h.b16 %v4249
    %v5710 = vunpack.c.l.b16 %v4250
    %v5711 = vunpack.c.h.b16 %v4250
    %v5712 = vunpack.c.l.b16 %v4251
    %v5713 = vunpack.c.h.b16 %v4251
    %v5714 = vunpack.c.l.b16 %v4252
    %v5715 = vunpack.c.h.b16 %v4252
    %v5716 = vunpack.c.l.b16 %v4253
    %v5717 = vunpack.c.h.b16 %v4253
    %v5718 = vunpack.c.l.b16 %v4254
    %v5719 = vunpack.c.h.b16 %v4254
    %v5720 = vunpack.c.l.b16 %v4255
    %v5721 = vunpack.c.h.b16 %v4255
    %v5722 = vunpack.c.l.b16 %v4256
    %v5723 = vunpack.c.h.b16 %v4256
    %v5724 = vunpack.c.l.b16 %v4257
    %v5725 = vunpack.c.h.b16 %v4257
    %v5726 = vunpack.c.l.b16 %v4258
    %v5727 = vunpack.c.h.b16 %v4258
    %v5728 = vunpack.c.l.b16 %v4259
    %v5729 = vunpack.c.h.b16 %v4259
    %v5730 = vunpack.c.l.b16 %v4260
    %v5731 = vunpack.c.h.b16 %v4260
    %v5732 = vunpack.c.l.b16 %v4261
    %v5733 = vunpack.c.h.b16 %v4261
    %v5734 = vunpack.c.l.b16 %v4262
    %v5735 = vunpack.c.h.b16 %v4262
    %v5736 = vunpack.c.l.b16 %v4263
    %v5737 = vunpack.c.h.b16 %v4263
    %v5738 = vunpack.c.l.b16 %v4264
    %v5739 = vunpack.c.h.b16 %v4264
    %v5740 = vunpack.c.l.b16 %v4265
    %v5741 = vunpack.c.h.b16 %v4265
    %v5742 = vunpack.c.l.b16 %v4266
    %v5743 = vunpack.c.h.b16 %v4266
    %v5744 = vunpack.c.l.b16 %v4267
    %v5745 = vunpack.c.h.b16 %v4267
    %v5746 = vunpack.c.l.b16 %v4268
    %v5747 = vunpack.c.h.b16 %v4268
    %v5748 = vunpack.c.l.b16 %v4269
    %v5749 = vunpack.c.h.b16 %v4269
    %v5750 = vunpack.c.l.b16 %v4270
    %v5751 = vunpack.c.h.b16 %v4270
    %v5752 = vunpack.c.l.b16 %v4271
    %v5753 = vunpack.c.h.b16 %v4271
    %v5754 = vunpack.c.l.b16 %v4272
    %v5755 = vunpack.c.h.b16 %v4272
    %v5756 = vunpack.c.l.b16 %v4273
    %v5757 = vunpack.c.h.b16 %v4273
    %v5758 = vunpack.c.l.b16 %v4274
    %v5759 = vunpack.c.h.b16 %v4274
    %v5760 = vunpack.c.l.b16 %v4275
    %v5761 = vunpack.c.h.b16 %v4275
    %v5762 = vunpack.c.l.b16 %v4276
    %v5763 = vunpack.c.h.b16 %v4276
    %v5764 = vunpack.c.l.b16 %v4277
    %v5765 = vunpack.c.h.b16 %v4277
    %v5766 = vunpack.c.l.b16 %v4278
    %v5767 = vunpack.c.h.b16 %v4278
    %v5768 = vunpack.c.l.b16 %v4279
    %v5769 = vunpack.c.h.b16 %v4279
    %v5770 = vunpack.c.l.b16 %v4280
    %v5771 = vunpack.c.h.b16 %v4280
    %v5772 = vunpack.c.l.b16 %v4281
    %v5773 = vunpack.c.h.b16 %v4281
    %v5774 = vunpack.c.l.b16 %v4282
    %v5775 = vunpack.c.h.b16 %v4282
    %v5776 = vunpack.c.l.b16 %v4283
    %v5777 = vunpack.c.h.b16 %v4283
    %v5778 = vunpack.c.l.b16 %v4284
    %v5779 = vunpack.c.h.b16 %v4284
    %v5780 = vunpack.c.l.b16 %v4285
    %v5781 = vunpack.c.h.b16 %v4285
    %v5782 = vunpack.c.l.b16 %v4286
    %v5783 = vunpack.c.h.b16 %v4286
    %v5784 = vunpack.c.l.b16 %v4287
    %v5785 = vunpack.c.h.b16 %v4287
    %v5786 = vunpack.c.l.b16 %v4288
    %v5787 = vunpack.c.h.b16 %v4288
    %v5788 = vunpack.c.l.b16 %v4289
    %v5789 = vunpack.c.h.b16 %v4289
    %v5790 = vunpack.c.l.b16 %v4290
    %v5791 = vunpack.c.h.b16 %v4290
    %v5792 = vunpack.c.l.b16 %v4291
    %v5793 = vunpack.c.h.b16 %v4291
    %v5794 = vunpack.c.l.b16 %v4292
    %v5795 = vunpack.c.h.b16 %v4292
    %v5796 = vunpack.c.l.b16 %v4293
    %v5797 = vunpack.c.h.b16 %v4293
    %v5798 = vunpack.c.l.b16 %v4294
    %v5799 = vunpack.c.h.b16 %v4294
    %v5800 = vunpack.c.l.b16 %v4295
    %v5801 = vunpack.c.h.b16 %v4295
    %v5802 = vunpack.c.l.b16 %v4296
    %v5803 = vunpack.c.h.b16 %v4296
    %v5804 = vunpack.c.l.b16 %v4297
    %v5805 = vunpack.c.h.b16 %v4297
    %v5806 = vunpack.c.l.b16 %v4298
    %v5807 = vunpack.c.h.b16 %v4298
    %v5808 = vunpack.c.l.b16 %v4299
    %v5809 = vunpack.c.h.b16 %v4299
    %v5810 = vunpack.c.l.b16 %v4300
    %v5811 = vunpack.c.h.b16 %v4300
    %v5812 = vunpack.c.l.b16 %v4301
    %v5813 = vunpack.c.h.b16 %v4301
    %v5814 = vunpack.c.l.b16 %v4302
    %v5815 = vunpack.c.h.b16 %v4302
    %v5816 = vunpack.c.l.b16 %v4303
    %v5817 = vunpack.c.h.b16 %v4303
    %v5818 = vunpack.c.l.b16 %v4304
    %v5819 = vunpack.c.h.b16 %v4304
    %v5820 = vunpack.c.l.b16 %v4305
    %v5821 = vunpack.c.h.b16 %v4305
    %v5822 = vunpack.c.l.b16 %v4306
    %v5823 = vunpack.c.h.b16 %v4306
    %v5824 = vunpack.c.l.b16 %v4307
    %v5825 = vunpack.c.h.b16 %v4307
    %v5826 = vunpack.c.l.b16 %v4308
    %v5827 = vunpack.c.h.b16 %v4308
    %v5828 = vunpack.c.l.b16 %v4309
    %v5829 = vunpack.c.h.b16 %v4309
    %v5830 = vunpack.c.l.b16 %v4310
    %v5831 = vunpack.c.h.b16 %v4310
    %v5832 = vunpack.c.l.b16 %v4311
    %v5833 = vunpack.c.h.b16 %v4311
    %v5834 = vunpack.c.l.b16 %v4312
    %v5835 = vunpack.c.h.b16 %v4312
    %v5836 = vunpack.c.l.b16 %v4313
    %v5837 = vunpack.c.h.b16 %v4313
    %v5838 = vunpack.c.l.b16 %v4314
    %v5839 = vunpack.c.h.b16 %v4314
    %v5840 = vunpack.c.l.b16 %v4315
    %v5841 = vunpack.c.h.b16 %v4315
    %v5842 = vunpack.c.l.b16 %v4316
    %v5843 = vunpack.c.h.b16 %v4316
    %v5844 = vunpack.c.l.b16 %v4317
    %v5845 = vunpack.c.h.b16 %v4317
    %v5846 = vunpack.c.l.b16 %v4318
    %v5847 = vunpack.c.h.b16 %v4318
    %v5848 = vunpack.c.l.b16 %v4319
    %v5849 = vunpack.c.h.b16 %v4319
    %v5850 = vunpack.c.l.b16 %v4320
    %v5851 = vunpack.c.h.b16 %v4320
    %v5852 = vunpack.c.l.b16 %v4321
    %v5853 = vunpack.c.h.b16 %v4321
    %v5854 = vunpack.c.l.b16 %v4322
    %v5855 = vunpack.c.h.b16 %v4322
    %v5856 = vunpack.c.l.b16 %v4323
    %v5857 = vunpack.c.h.b16 %v4323
    %v5858 = vunpack.c.l.b16 %v4324
    %v5859 = vunpack.c.h.b16 %v4324
    %v5860 = vunpack.c.l.b16 %v4325
    %v5861 = vunpack.c.h.b16 %v4325
    %v5862 = vunpack.c.l.b16 %v4326
    %v5863 = vunpack.c.h.b16 %v4326
    %v5864 = vunpack.c.l.b16 %v4327
    %v5865 = vunpack.c.h.b16 %v4327
    %v5866 = vunpack.c.l.b16 %v4328
    %v5867 = vunpack.c.h.b16 %v4328
    %v5868 = vunpack.c.l.b16 %v4329
    %v5869 = vunpack.c.h.b16 %v4329
    %v5870 = vunpack.c.l.b16 %v4330
    %v5871 = vunpack.c.h.b16 %v4330
    %v5872 = vunpack.c.l.b16 %v4331
    %v5873 = vunpack.c.h.b16 %v4331
    %v5874 = vunpack.c.l.b16 %v4332
    %v5875 = vunpack.c.h.b16 %v4332
    %v5876 = vunpack.c.l.b16 %v4333
    %v5877 = vunpack.c.h.b16 %v4333
    %v5878 = vunpack.c.l.b16 %v4334
    %v5879 = vunpack.c.h.b16 %v4334
    %v5880 = vunpack.c.l.b16 %v4335
    %v5881 = vunpack.c.h.b16 %v4335
    %v5882 = vunpack.c.l.b16 %v4336
    %v5883 = vunpack.c.h.b16 %v4336
    %v5884 = vunpack.c.l.b16 %v4337
    %v5885 = vunpack.c.h.b16 %v4337
    %v5886 = vunpack.c.l.b16 %v4338
    %v5887 = vunpack.c.h.b16 %v4338
    %v5888 = vunpack.c.l.b16 %v4339
    %v5889 = vunpack.c.h.b16 %v4339
    %v5890 = vunpack.c.l.b16 %v4340
    %v5891 = vunpack.c.h.b16 %v4340
    %v5892 = vunpack.c.l.b16 %v4341
    %v5893 = vunpack.c.h.b16 %v4341
    %v5894 = vunpack.c.l.b16 %v4342
    %v5895 = vunpack.c.h.b16 %v4342
    %v5896 = vunpack.c.l.b16 %v4343
    %v5897 = vunpack.c.h.b16 %v4343
    %v5898 = vunpack.c.l.b16 %v4344
    %v5899 = vunpack.c.h.b16 %v4344
    %v5900 = vunpack.c.l.b16 %v4345
    %v5901 = vunpack.c.h.b16 %v4345
    %v5902 = vunpack.c.l.b16 %v4346
    %v5903 = vunpack.c.h.b16 %v4346
    %v5904 = vunpack.c.l.b16 %v4347
    %v5905 = vunpack.c.h.b16 %v4347
    %v5906 = vunpack.c.l.b16 %v4348
    %v5907 = vunpack.c.h.b16 %v4348
    %v5908 = vunpack.c.l.b16 %v4349
    %v5909 = vunpack.c.h.b16 %v4349
    %v5910 = vunpack.c.l.b16 %v4350
    %v5911 = vunpack.c.h.b16 %v4350
    %v5912 = vunpack.c.l.b16 %v4351
    %v5913 = vunpack.c.h.b16 %v4351
    %v5914 = vunpack.c.l.b16 %v4352
    %v5915 = vunpack.c.h.b16 %v4352
    %v5916 = vunpack.c.l.b16 %v4353
    %v5917 = vunpack.c.h.b16 %v4353
    %v5918 = vunpack.c.l.b16 %v4354
    %v5919 = vunpack.c.h.b16 %v4354
    %v5920 = vunpack.c.l.b16 %v4355
    %v5921 = vunpack.c.h.b16 %v4355
    %v5922 = vunpack.c.l.b16 %v4356
    %v5923 = vunpack.c.h.b16 %v4356
    %v5924 = vunpack.c.l.b16 %v4357
    %v5925 = vunpack.c.h.b16 %v4357
    %v5926 = vunpack.c.l.b16 %v4358
    %v5927 = vunpack.c.h.b16 %v4358
    %v5928 = vunpack.c.l.b16 %v4359
    %v5929 = vunpack.c.h.b16 %v4359
    %v5930 = vunpack.c.l.b16 %v4360
    %v5931 = vunpack.c.h.b16 %v4360
    %v5932 = vunpack.c.l.b16 %v4361
    %v5933 = vunpack.c.h.b16 %v4361
    %v5934 = vunpack.c.l.b16 %v4362
    %v5935 = vunpack.c.h.b16 %v4362
    %v5936 = vunpack.c.l.b16 %v4363
    %v5937 = vunpack.c.h.b16 %v4363
    %v5938 = vunpack.c.l.b16 %v4364
    %v5939 = vunpack.c.h.b16 %v4364
    %v5940 = vunpack.c.l.b16 %v4365
    %v5941 = vunpack.c.h.b16 %v4365
    %v5942 = vunpack.c.l.b16 %v4366
    %v5943 = vunpack.c.h.b16 %v4366
    %v5944 = vunpack.c.l.b16 %v4367
    %v5945 = vunpack.c.h.b16 %v4367
    %v5946 = vpack.c.b16 %v4930, %v4922
    %v5947 = vpack.c.b16 %v4931, %v4923
    %v5948 = vpack.c.b16 %v4932, %v4924
    %v5949 = vpack.c.b16 %v4933, %v4925
    %v5950 = vpack.c.b16 %v4934, %v4926
    %v5951 = vpack.c.b16 %v4935, %v4927
    %v5952 = vpack.c.b16 %v4936, %v4928
    %v5953 = vpack.c.b16 %v4937, %v4929
    %v5954 = vpack.c.b16 %v4946, %v4938
    %v5955 = vpack.c.b16 %v4947, %v4939
    %v5956 = vpack.c.b16 %v4948, %v4940
    %v5957 = vpack.c.b16 %v4949, %v4941
    %v5958 = vpack.c.b16 %v4950, %v4942
    %v5959 = vpack.c.b16 %v4951, %v4943
    %v5960 = vpack.c.b16 %v4952, %v4944
    %v5961 = vpack.c.b16 %v4953, %v4945
    %v5962 = vpack.c.b16 %v4962, %v4954
    %v5963 = vpack.c.b16 %v4963, %v4955
    %v5964 = vpack.c.b16 %v4964, %v4956
    %v5965 = vpack.c.b16 %v4965, %v4957
    %v5966 = vpack.c.b16 %v4966, %v4958
    %v5967 = vpack.c.b16 %v4967, %v4959
    %v5968 = vpack.c.b16 %v4968, %v4960
    %v5969 = vpack.c.b16 %v4969, %v4961
    %v5970 = vpack.c.b16 %v4978, %v4970
    %v5971 = vpack.c.b16 %v4979, %v4971
    %v5972 = vpack.c.b16 %v4980, %v4972
    %v5973 = vpack.c.b16 %v4981, %v4973
    %v5974 = vpack.c.b16 %v4982, %v4974
    %v5975 = vpack.c.b16 %v4983, %v4975
    %v5976 = vpack.c.b16 %v4984, %v4976
    %v5977 = vpack.c.b16 %v4985, %v4977
    %v5978 = vpack.c.b16 %v4994, %v4986
    %v5979 = vpack.c.b16 %v4995, %v4987
    %v5980 = vpack.c.b16 %v4996, %v4988
    %v5981 = vpack.c.b16 %v4997, %v4989
    %v5982 = vpack.c.b16 %v4998, %v4990
    %v5983 = vpack.c.b16 %v4999, %v4991
    %v5984 = vpack.c.b16 %v5000, %v4992
    %v5985 = vpack.c.b16 %v5001, %v4993
    %v5986 = vpack.c.b16 %v5010, %v5002
    %v5987 = vpack.c.b16 %v5011, %v5003
    %v5988 = vpack.c.b16 %v5012, %v5004
    %v5989 = vpack.c.b16 %v5013, %v5005
    %v5990 = vpack.c.b16 %v5014, %v5006
    %v5991 = vpack.c.b16 %v5015, %v5007
    %v5992 = vpack.c.b16 %v5016, %v5008
    %v5993 = vpack.c.b16 %v5017, %v5009
    %v5994 = vpack.c.b16 %v5026, %v5018
    %v5995 = vpack.c.b16 %v5027, %v5019
    %v5996 = vpack.c.b16 %v5028, %v5020
    %v5997 = vpack.c.b16 %v5029, %v5021
    %v5998 = vpack.c.b16 %v5030, %v5022
    %v5999 = vpack.c.b16 %v5031, %v5023
    %v6000 = vpack.c.b16 %v5032, %v5024
    %v6001 = vpack.c.b16 %v5033, %v5025
    %v6002 = vpack.c.b16 %v5042, %v5034
    %v6003 = vpack.c.b16 %v5043, %v5035
    %v6004 = vpack.c.b16 %v5044, %v5036
    %v6005 = vpack.c.b16 %v5045, %v5037
    %v6006 = vpack.c.b16 %v5046, %v5038
    %v6007 = vpack.c.b16 %v5047, %v5039
    %v6008 = vpack.c.b16 %v5048, %v5040
    %v6009 = vpack.c.b16 %v5049, %v5041
    %v6010 = vpack.c.b16 %v5058, %v5050
    %v6011 = vpack.c.b16 %v5059, %v5051
    %v6012 = vpack.c.b16 %v5060, %v5052
    %v6013 = vpack.c.b16 %v5061, %v5053
    %v6014 = vpack.c.b16 %v5062, %v5054
    %v6015 = vpack.c.b16 %v5063, %v5055
    %v6016 = vpack.c.b16 %v5064, %v5056
    %v6017 = vpack.c.b16 %v5065, %v5057
    %v6018 = vpack.c.b16 %v5074, %v5066
    %v6019 = vpack.c.b16 %v5075, %v5067
    %v6020 = vpack.c.b16 %v5076, %v5068
    %v6021 = vpack.c.b16 %v5077, %v5069
    %v6022 = vpack.c.b16 %v5078, %v5070
    %v6023 = vpack.c.b16 %v5079, %v5071
    %v6024 = vpack.c.b16 %v5080, %v5072
    %v6025 = vpack.c.b16 %v5081, %v5073
    %v6026 = vpack.c.b16 %v5090, %v5082
    %v6027 = vpack.c.b16 %v5091, %v5083
    %v6028 = vpack.c.b16 %v5092, %v5084
    %v6029 = vpack.c.b16 %v5093, %v5085
    %v6030 = vpack.c.b16 %v5094, %v5086
    %v6031 = vpack.c.b16 %v5095, %v5087
    %v6032 = vpack.c.b16 %v5096, %v5088
    %v6033 = vpack.c.b16 %v5097, %v5089
    %v6034 = vpack.c.b16 %v5106, %v5098
    %v6035 = vpack.c.b16 %v5107, %v5099
    %v6036 = vpack.c.b16 %v5108, %v5100
    %v6037 = vpack.c.b16 %v5109, %v5101
    %v6038 = vpack.c.b16 %v5110, %v5102
    %v6039 = vpack.c.b16 %v5111, %v5103
    %v6040 = vpack.c.b16 %v5112, %v5104
    %v6041 = vpack.c.b16 %v5113, %v5105
    %v6042 = vpack.c.b16 %v5122, %v5114
    %v6043 = vpack.c.b16 %v5123, %v5115
    %v6044 = vpack.c.b16 %v5124, %v5116
    %v6045 = vpack.c.b16 %v5125, %v5117
    %v6046 = vpack.c.b16 %v5126, %v5118
    %v6047 = vpack.c.b16 %v5127, %v5119
    %v6048 = vpack.c.b16 %v5128, %v5120
    %v6049 = vpack.c.b16 %v5129, %v5121
    %v6050 = vpack.c.b16 %v5138, %v5130
    %v6051 = vpack.c.b16 %v5139, %v5131
    %v6052 = vpack.c.b16 %v5140, %v5132
    %v6053 = vpack.c.b16 %v5141, %v5133
    %v6054 = vpack.c.b16 %v5142, %v5134
    %v6055 = vpack.c.b16 %v5143, %v5135
    %v6056 = vpack.c.b16 %v5144, %v5136
    %v6057 = vpack.c.b16 %v5145, %v5137
    %v6058 = vpack.c.b16 %v5154, %v5146
    %v6059 = vpack.c.b16 %v5155, %v5147
    %v6060 = vpack.c.b16 %v5156, %v5148
    %v6061 = vpack.c.b16 %v5157, %v5149
    %v6062 = vpack.c.b16 %v5158, %v5150
    %v6063 = vpack.c.b16 %v5159, %v5151
    %v6064 = vpack.c.b16 %v5160, %v5152
    %v6065 = vpack.c.b16 %v5161, %v5153
    %v6066 = vpack.c.b16 %v5170, %v5162
    %v6067 = vpack.c.b16 %v5171, %v5163
    %v6068 = vpack.c.b16 %v5172, %v5164
    %v6069 = vpack.c.b16 %v5173, %v5165
    %v6070 = vpack.c.b16 %v5174, %v5166
    %v6071 = vpack.c.b16 %v5175, %v5167
    %v6072 = vpack.c.b16 %v5176, %v5168
    %v6073 = vpack.c.b16 %v5177, %v5169
    %v6074 = vpack.c.b16 %v5186, %v5178
    %v6075 = vpack.c.b16 %v5187, %v5179
    %v6076 = vpack.c.b16 %v5188, %v5180
    %v6077 = vpack.c.b16 %v5189, %v5181
    %v6078 = vpack.c.b16 %v5190, %v5182
    %v6079 = vpack.c.b16 %v5191, %v5183
    %v6080 = vpack.c.b16 %v5192, %v5184
    %v6081 = vpack.c.b16 %v5193, %v5185
    %v6082 = vpack.c.b16 %v5202, %v5194
    %v6083 = vpack.c.b16 %v5203, %v5195
    %v6084 = vpack.c.b16 %v5204, %v5196
    %v6085 = vpack.c.b16 %v5205, %v5197
    %v6086 = vpack.c.b16 %v5206, %v5198
    %v6087 = vpack.c.b16 %v5207, %v5199
    %v6088 = vpack.c.b16 %v5208, %v5200
    %v6089 = vpack.c.b16 %v5209, %v5201
    %v6090 = vpack.c.b16 %v5218, %v5210
    %v6091 = vpack.c.b16 %v5219, %v5211
    %v6092 = vpack.c.b16 %v5220, %v5212
    %v6093 = vpack.c.b16 %v5221, %v5213
    %v6094 = vpack.c.b16 %v5222, %v5214
    %v6095 = vpack.c.b16 %v5223, %v5215
    %v6096 = vpack.c.b16 %v5224, %v5216
    %v6097 = vpack.c.b16 %v5225, %v5217
    %v6098 = vpack.c.b16 %v5234, %v5226
    %v6099 = vpack.c.b16 %v5235, %v5227
    %v6100 = vpack.c.b16 %v5236, %v5228
    %v6101 = vpack.c.b16 %v5237, %v5229
    %v6102 = vpack.c.b16 %v5238, %v5230
    %v6103 = vpack.c.b16 %v5239, %v5231
    %v6104 = vpack.c.b16 %v5240, %v5232
    %v6105 = vpack.c.b16 %v5241, %v5233
    %v6106 = vpack.c.b16 %v5250, %v5242
    %v6107 = vpack.c.b16 %v5251, %v5243
    %v6108 = vpack.c.b16 %v5252, %v5244
    %v6109 = vpack.c.b16 %v5253, %v5245
    %v6110 = vpack.c.b16 %v5254, %v5246
    %v6111 = vpack.c.b16 %v5255, %v5247
    %v6112 = vpack.c.b16 %v5256, %v5248
    %v6113 = vpack.c.b16 %v5257, %v5249
    %v6114 = vpack.c.b16 %v5266, %v5258
    %v6115 = vpack.c.b16 %v5267, %v5259
    %v6116 = vpack.c.b16 %v5268, %v5260
    %v6117 = vpack.c.b16 %v5269, %v5261
    %v6118 = vpack.c.b16 %v5270, %v5262
    %v6119 = vpack.c.b16 %v5271, %v5263
    %v6120 = vpack.c.b16 %v5272, %v5264
    %v6121 = vpack.c.b16 %v5273, %v5265
    %v6122 = vpack.c.b16 %v5282, %v5274
    %v6123 = vpack.c.b16 %v5283, %v5275
    %v6124 = vpack.c.b16 %v5284, %v5276
    %v6125 = vpack.c.b16 %v5285, %v5277
    %v6126 = vpack.c.b16 %v5286, %v5278
    %v6127 = vpack.c.b16 %v5287, %v5279
    %v6128 = vpack.c.b16 %v5288, %v5280
    %v6129 = vpack.c.b16 %v5289, %v5281
    %v6130 = vpack.c.b16 %v5298, %v5290
    %v6131 = vpack.c.b16 %v5299, %v5291
    %v6132 = vpack.c.b16 %v5300, %v5292
    %v6133 = vpack.c.b16 %v5301, %v5293
    %v6134 = vpack.c.b16 %v5302, %v5294
    %v6135 = vpack.c.b16 %v5303, %v5295
    %v6136 = vpack.c.b16 %v5304, %v5296
    %v6137 = vpack.c.b16 %v5305, %v5297
    %v6138 = vpack.c.b16 %v5314, %v5306
    %v6139 = vpack.c.b16 %v5315, %v5307
    %v6140 = vpack.c.b16 %v5316, %v5308
    %v6141 = vpack.c.b16 %v5317, %v5309
    %v6142 = vpack.c.b16 %v5318, %v5310
    %v6143 = vpack.c.b16 %v5319, %v5311
    %v6144 = vpack.c.b16 %v5320, %v5312
    %v6145 = vpack.c.b16 %v5321, %v5313
    %v6146 = vpack.c.b16 %v5330, %v5322
    %v6147 = vpack.c.b16 %v5331, %v5323
    %v6148 = vpack.c.b16 %v5332, %v5324
    %v6149 = vpack.c.b16 %v5333, %v5325
    %v6150 = vpack.c.b16 %v5334, %v5326
    %v6151 = vpack.c.b16 %v5335, %v5327
    %v6152 = vpack.c.b16 %v5336, %v5328
    %v6153 = vpack.c.b16 %v5337, %v5329
    %v6154 = vpack.c.b16 %v5346, %v5338
    %v6155 = vpack.c.b16 %v5347, %v5339
    %v6156 = vpack.c.b16 %v5348, %v5340
    %v6157 = vpack.c.b16 %v5349, %v5341
    %v6158 = vpack.c.b16 %v5350, %v5342
    %v6159 = vpack.c.b16 %v5351, %v5343
    %v6160 = vpack.c.b16 %v5352, %v5344
    %v6161 = vpack.c.b16 %v5353, %v5345
    %v6162 = vpack.c.b16 %v5362, %v5354
    %v6163 = vpack.c.b16 %v5363, %v5355
    %v6164 = vpack.c.b16 %v5364, %v5356
    %v6165 = vpack.c.b16 %v5365, %v5357
    %v6166 = vpack.c.b16 %v5366, %v5358
    %v6167 = vpack.c.b16 %v5367, %v5359
    %v6168 = vpack.c.b16 %v5368, %v5360
    %v6169 = vpack.c.b16 %v5369, %v5361
    %v6170 = vpack.c.b16 %v5378, %v5370
    %v6171 = vpack.c.b16 %v5379, %v5371
    %v6172 = vpack.c.b16 %v5380, %v5372
    %v6173 = vpack.c.b16 %v5381, %v5373
    %v6174 = vpack.c.b16 %v5382, %v5374
    %v6175 = vpack.c.b16 %v5383, %v5375
    %v6176 = vpack.c.b16 %v5384, %v5376
    %v6177 = vpack.c.b16 %v5385, %v5377
    %v6178 = vpack.c.b16 %v5394, %v5386
    %v6179 = vpack.c.b16 %v5395, %v5387
    %v6180 = vpack.c.b16 %v5396, %v5388
    %v6181 = vpack.c.b16 %v5397, %v5389
    %v6182 = vpack.c.b16 %v5398, %v5390
    %v6183 = vpack.c.b16 %v5399, %v5391
    %v6184 = vpack.c.b16 %v5400, %v5392
    %v6185 = vpack.c.b16 %v5401, %v5393
    %v6186 = vpack.c.b16 %v5410, %v5402
    %v6187 = vpack.c.b16 %v5411, %v5403
    %v6188 = vpack.c.b16 %v5412, %v5404
    %v6189 = vpack.c.b16 %v5413, %v5405
    %v6190 = vpack.c.b16 %v5414, %v5406
    %v6191 = vpack.c.b16 %v5415, %v5407
    %v6192 = vpack.c.b16 %v5416, %v5408
    %v6193 = vpack.c.b16 %v5417, %v5409
    %v6194 = vpack.c.b16 %v5426, %v5418
    %v6195 = vpack.c.b16 %v5427, %v5419
    %v6196 = vpack.c.b16 %v5428, %v5420
    %v6197 = vpack.c.b16 %v5429, %v5421
    %v6198 = vpack.c.b16 %v5430, %v5422
    %v6199 = vpack.c.b16 %v5431, %v5423
    %v6200 = vpack.c.b16 %v5432, %v5424
    %v6201 = vpack.c.b16 %v5433, %v5425
    %v6202 = vpack.c.b16 %v5442, %v5434
    %v6203 = vpack.c.b16 %v5443, %v5435
    %v6204 = vpack.c.b16 %v5444, %v5436
    %v6205 = vpack.c.b16 %v5445, %v5437
    %v6206 = vpack.c.b16 %v5446, %v5438
    %v6207 = vpack.c.b16 %v5447, %v5439
    %v6208 = vpack.c.b16 %v5448, %v5440
    %v6209 = vpack.c.b16 %v5449, %v5441
    %v6210 = vpack.c.b16 %v5458, %v5450
    %v6211 = vpack.c.b16 %v5459, %v5451
    %v6212 = vpack.c.b16 %v5460, %v5452
    %v6213 = vpack.c.b16 %v5461, %v5453
    %v6214 = vpack.c.b16 %v5462, %v5454
    %v6215 = vpack.c.b16 %v5463, %v5455
    %v6216 = vpack.c.b16 %v5464, %v5456
    %v6217 = vpack.c.b16 %v5465, %v5457
    %v6218 = vpack.c.b16 %v5474, %v5466
    %v6219 = vpack.c.b16 %v5475, %v5467
    %v6220 = vpack.c.b16 %v5476, %v5468
    %v6221 = vpack.c.b16 %v5477, %v5469
    %v6222 = vpack.c.b16 %v5478, %v5470
    %v6223 = vpack.c.b16 %v5479, %v5471
    %v6224 = vpack.c.b16 %v5480, %v5472
    %v6225 = vpack.c.b16 %v5481, %v5473
    %v6226 = vpack.c.b16 %v5490, %v5482
    %v6227 = vpack.c.b16 %v5491, %v5483
    %v6228 = vpack.c.b16 %v5492, %v5484
    %v6229 = vpack.c.b16 %v5493, %v5485
    %v6230 = vpack.c.b16 %v5494, %v5486
    %v6231 = vpack.c.b16 %v5495, %v5487
    %v6232 = vpack.c.b16 %v5496, %v5488
    %v6233 = vpack.c.b16 %v5497, %v5489
    %v6234 = vpack.c.b16 %v5506, %v5498
    %v6235 = vpack.c.b16 %v5507, %v5499
    %v6236 = vpack.c.b16 %v5508, %v5500
    %v6237 = vpack.c.b16 %v5509, %v5501
    %v6238 = vpack.c.b16 %v5510, %v5502
    %v6239 = vpack.c.b16 %v5511, %v5503
    %v6240 = vpack.c.b16 %v5512, %v5504
    %v6241 = vpack.c.b16 %v5513, %v5505
    %v6242 = vpack.c.b16 %v5522, %v5514
    %v6243 = vpack.c.b16 %v5523, %v5515
    %v6244 = vpack.c.b16 %v5524, %v5516
    %v6245 = vpack.c.b16 %v5525, %v5517
    %v6246 = vpack.c.b16 %v5526, %v5518
    %v6247 = vpack.c.b16 %v5527, %v5519
    %v6248 = vpack.c.b16 %v5528, %v5520
    %v6249 = vpack.c.b16 %v5529, %v5521
    %v6250 = vpack.c.b16 %v5538, %v5530
    %v6251 = vpack.c.b16 %v5539, %v5531
    %v6252 = vpack.c.b16 %v5540, %v5532
    %v6253 = vpack.c.b16 %v5541, %v5533
    %v6254 = vpack.c.b16 %v5542, %v5534
    %v6255 = vpack.c.b16 %v5543, %v5535
    %v6256 = vpack.c.b16 %v5544, %v5536
    %v6257 = vpack.c.b16 %v5545, %v5537
    %v6258 = vpack.c.b16 %v5554, %v5546
    %v6259 = vpack.c.b16 %v5555, %v5547
    %v6260 = vpack.c.b16 %v5556, %v5548
    %v6261 = vpack.c.b16 %v5557, %v5549
    %v6262 = vpack.c.b16 %v5558, %v5550
    %v6263 = vpack.c.b16 %v5559, %v5551
    %v6264 = vpack.c.b16 %v5560, %v5552
    %v6265 = vpack.c.b16 %v5561, %v5553
    %v6266 = vpack.c.b16 %v5570, %v5562
    %v6267 = vpack.c.b16 %v5571, %v5563
    %v6268 = vpack.c.b16 %v5572, %v5564
    %v6269 = vpack.c.b16 %v5573, %v5565
    %v6270 = vpack.c.b16 %v5574, %v5566
    %v6271 = vpack.c.b16 %v5575, %v5567
    %v6272 = vpack.c.b16 %v5576, %v5568
    %v6273 = vpack.c.b16 %v5577, %v5569
    %v6274 = vpack.c.b16 %v5586, %v5578
    %v6275 = vpack.c.b16 %v5587, %v5579
    %v6276 = vpack.c.b16 %v5588, %v5580
    %v6277 = vpack.c.b16 %v5589, %v5581
    %v6278 = vpack.c.b16 %v5590, %v5582
    %v6279 = vpack.c.b16 %v5591, %v5583
    %v6280 = vpack.c.b16 %v5592, %v5584
    %v6281 = vpack.c.b16 %v5593, %v5585
    %v6282 = vpack.c.b16 %v5602, %v5594
    %v6283 = vpack.c.b16 %v5603, %v5595
    %v6284 = vpack.c.b16 %v5604, %v5596
    %v6285 = vpack.c.b16 %v5605, %v5597
    %v6286 = vpack.c.b16 %v5606, %v5598
    %v6287 = vpack.c.b16 %v5607, %v5599
    %v6288 = vpack.c.b16 %v5608, %v5600
    %v6289 = vpack.c.b16 %v5609, %v5601
    %v6290 = vpack.c.b16 %v5618, %v5610
    %v6291 = vpack.c.b16 %v5619, %v5611
    %v6292 = vpack.c.b16 %v5620, %v5612
    %v6293 = vpack.c.b16 %v5621, %v5613
    %v6294 = vpack.c.b16 %v5622, %v5614
    %v6295 = vpack.c.b16 %v5623, %v5615
    %v6296 = vpack.c.b16 %v5624, %v5616
    %v6297 = vpack.c.b16 %v5625, %v5617
    %v6298 = vpack.c.b16 %v5634, %v5626
    %v6299 = vpack.c.b16 %v5635, %v5627
    %v6300 = vpack.c.b16 %v5636, %v5628
    %v6301 = vpack.c.b16 %v5637, %v5629
    %v6302 = vpack.c.b16 %v5638, %v5630
    %v6303 = vpack.c.b16 %v5639, %v5631
    %v6304 = vpack.c.b16 %v5640, %v5632
    %v6305 = vpack.c.b16 %v5641, %v5633
    %v6306 = vpack.c.b16 %v5650, %v5642
    %v6307 = vpack.c.b16 %v5651, %v5643
    %v6308 = vpack.c.b16 %v5652, %v5644
    %v6309 = vpack.c.b16 %v5653, %v5645
    %v6310 = vpack.c.b16 %v5654, %v5646
    %v6311 = vpack.c.b16 %v5655, %v5647
    %v6312 = vpack.c.b16 %v5656, %v5648
    %v6313 = vpack.c.b16 %v5657, %v5649
    %v6314 = vpack.c.b16 %v5666, %v5658
    %v6315 = vpack.c.b16 %v5667, %v5659
    %v6316 = vpack.c.b16 %v5668, %v5660
    %v6317 = vpack.c.b16 %v5669, %v5661
    %v6318 = vpack.c.b16 %v5670, %v5662
    %v6319 = vpack.c.b16 %v5671, %v5663
    %v6320 = vpack.c.b16 %v5672, %v5664
    %v6321 = vpack.c.b16 %v5673, %v5665
    %v6322 = vpack.c.b16 %v5682, %v5674
    %v6323 = vpack.c.b16 %v5683, %v5675
    %v6324 = vpack.c.b16 %v5684, %v5676
    %v6325 = vpack.c.b16 %v5685, %v5677
    %v6326 = vpack.c.b16 %v5686, %v5678
    %v6327 = vpack.c.b16 %v5687, %v5679
    %v6328 = vpack.c.b16 %v5688, %v5680
    %v6329 = vpack.c.b16 %v5689, %v5681
    %v6330 = vpack.c.b16 %v5698, %v5690
    %v6331 = vpack.c.b16 %v5699, %v5691
    %v6332 = vpack.c.b16 %v5700, %v5692
    %v6333 = vpack.c.b16 %v5701, %v5693
    %v6334 = vpack.c.b16 %v5702, %v5694
    %v6335 = vpack.c.b16 %v5703, %v5695
    %v6336 = vpack.c.b16 %v5704, %v5696
    %v6337 = vpack.c.b16 %v5705, %v5697
    %v6338 = vpack.c.b16 %v5714, %v5706
    %v6339 = vpack.c.b16 %v5715, %v5707
    %v6340 = vpack.c.b16 %v5716, %v5708
    %v6341 = vpack.c.b16 %v5717, %v5709
    %v6342 = vpack.c.b16 %v5718, %v5710
    %v6343 = vpack.c.b16 %v5719, %v5711
    %v6344 = vpack.c.b16 %v5720, %v5712
    %v6345 = vpack.c.b16 %v5721, %v5713
    %v6346 = vpack.c.b16 %v5730, %v5722
    %v6347 = vpack.c.b16 %v5731, %v5723
    %v6348 = vpack.c.b16 %v5732, %v5724
    %v6349 = vpack.c.b16 %v5733, %v5725
    %v6350 = vpack.c.b16 %v5734, %v5726
    %v6351 = vpack.c.b16 %v5735, %v5727
    %v6352 = vpack.c.b16 %v5736, %v5728
    %v6353 = vpack.c.b16 %v5737, %v5729
    %v6354 = vpack.c.b16 %v5746, %v5738
    %v6355 = vpack.c.b16 %v5747, %v5739
    %v6356 = vpack.c.b16 %v5748, %v5740
    %v6357 = vpack.c.b16 %v5749, %v5741
    %v6358 = vpack.c.b16 %v5750, %v5742
    %v6359 = vpack.c.b16 %v5751, %v5743
    %v6360 = vpack.c.b16 %v5752, %v5744
    %v6361 = vpack.c.b16 %v5753, %v5745
    %v6362 = vpack.c.b16 %v5762, %v5754
    %v6363 = vpack.c.b16 %v5763, %v5755
    %v6364 = vpack.c.b16 %v5764, %v5756
    %v6365 = vpack.c.b16 %v5765, %v5757
    %v6366 = vpack.c.b16 %v5766, %v5758
    %v6367 = vpack.c.b16 %v5767, %v5759
    %v6368 = vpack.c.b16 %v5768, %v5760
    %v6369 = vpack.c.b16 %v5769, %v5761
    %v6370 = vpack.c.b16 %v5778, %v5770
    %v6371 = vpack.c.b16 %v5779, %v5771
    %v6372 = vpack.c.b16 %v5780, %v5772
    %v6373 = vpack.c.b16 %v5781, %v5773
    %v6374 = vpack.c.b16 %v5782, %v5774
    %v6375 = vpack.c.b16 %v5783, %v5775
    %v6376 = vpack.c.b16 %v5784, %v5776
    %v6377 = vpack.c.b16 %v5785, %v5777
    %v6378 = vpack.c.b16 %v5794, %v5786
    %v6379 = vpack.c.b16 %v5795, %v5787
    %v6380 = vpack.c.b16 %v5796, %v5788
    %v6381 = vpack.c.b16 %v5797, %v5789
    %v6382 = vpack.c.b16 %v5798, %v5790
    %v6383 = vpack.c.b16 %v5799, %v5791
    %v6384 = vpack.c.b16 %v5800, %v5792
    %v6385 = vpack.c.b16 %v5801, %v5793
    %v6386 = vpack.c.b16 %v5810, %v5802
    %v6387 = vpack.c.b16 %v5811, %v5803
    %v6388 = vpack.c.b16 %v5812, %v5804
    %v6389 = vpack.c.b16 %v5813, %v5805
    %v6390 = vpack.c.b16 %v5814, %v5806
    %v6391 = vpack.c.b16 %v5815, %v5807
    %v6392 = vpack.c.b16 %v5816, %v5808
    %v6393 = vpack.c.b16 %v5817, %v5809
    %v6394 = vpack.c.b16 %v5826, %v5818
    %v6395 = vpack.c.b16 %v5827, %v5819
    %v6396 = vpack.c.b16 %v5828, %v5820
    %v6397 = vpack.c.b16 %v5829, %v5821
    %v6398 = vpack.c.b16 %v5830, %v5822
    %v6399 = vpack.c.b16 %v5831, %v5823
    %v6400 = vpack.c.b16 %v5832, %v5824
    %v6401 = vpack.c.b16 %v5833, %v5825
    %v6402 = vpack.c.b16 %v5842, %v5834
    %v6403 = vpack.c.b16 %v5843, %v5835
    %v6404 = vpack.c.b16 %v5844, %v5836
    %v6405 = vpack.c.b16 %v5845, %v5837
    %v6406 = vpack.c.b16 %v5846, %v5838
    %v6407 = vpack.c.b16 %v5847, %v5839
    %v6408 = vpack.c.b16 %v5848, %v5840
    %v6409 = vpack.c.b16 %v5849, %v5841
    %v6410 = vpack.c.b16 %v5858, %v5850
    %v6411 = vpack.c.b16 %v5859, %v5851
    %v6412 = vpack.c.b16 %v5860, %v5852
    %v6413 = vpack.c.b16 %v5861, %v5853
    %v6414 = vpack.c.b16 %v5862, %v5854
    %v6415 = vpack.c.b16 %v5863, %v5855
    %v6416 = vpack.c.b16 %v5864, %v5856
    %v6417 = vpack.c.b16 %v5865, %v5857
    %v6418 = vpack.c.b16 %v5874, %v5866
    %v6419 = vpack.c.b16 %v5875, %v5867
    %v6420 = vpack.c.b16 %v5876, %v5868
    %v6421 = vpack.c.b16 %v5877, %v5869
    %v6422 = vpack.c.b16 %v5878, %v5870
    %v6423 = vpack.c.b16 %v5879, %v5871
    %v6424 = vpack.c.b16 %v5880, %v5872
    %v6425 = vpack.c.b16 %v5881, %v5873
    %v6426 = vpack.c.b16 %v5890, %v5882
    %v6427 = vpack.c.b16 %v5891, %v5883
    %v6428 = vpack.c.b16 %v5892, %v5884
    %v6429 = vpack.c.b16 %v5893, %v5885
    %v6430 = vpack.c.b16 %v5894, %v5886
    %v6431 = vpack.c.b16 %v5895, %v5887
    %v6432 = vpack.c.b16 %v5896, %v5888
    %v6433 = vpack.c.b16 %v5897, %v5889
    %v6434 = vpack.c.b16 %v5906, %v5898
    %v6435 = vpack.c.b16 %v5907, %v5899
    %v6436 = vpack.c.b16 %v5908, %v5900
    %v6437 = vpack.c.b16 %v5909, %v5901
    %v6438 = vpack.c.b16 %v5910, %v5902
    %v6439 = vpack.c.b16 %v5911, %v5903
    %v6440 = vpack.c.b16 %v5912, %v5904
    %v6441 = vpack.c.b16 %v5913, %v5905
    %v6442 = vpack.c.b16 %v5922, %v5914
    %v6443 = vpack.c.b16 %v5923, %v5915
    %v6444 = vpack.c.b16 %v5924, %v5916
    %v6445 = vpack.c.b16 %v5925, %v5917
    %v6446 = vpack.c.b16 %v5926, %v5918
    %v6447 = vpack.c.b16 %v5927, %v5919
    %v6448 = vpack.c.b16 %v5928, %v5920
    %v6449 = vpack.c.b16 %v5929, %v5921
    %v6450 = vpack.c.b16 %v5938, %v5930
    %v6451 = vpack.c.b16 %v5939, %v5931
    %v6452 = vpack.c.b16 %v5940, %v5932
    %v6453 = vpack.c.b16 %v5941, %v5933
    %v6454 = vpack.c.b16 %v5942, %v5934
    %v6455 = vpack.c.b16 %v5943, %v5935
    %v6456 = vpack.c.b16 %v5944, %v5936
    %v6457 = vpack.c.b16 %v5945, %v5937
    %6970 = vmatprep.subr.bf16.mxu0 %v6003
    %6971 = vmatpush1.bf16.msra.mxu0 %v6002
    %6972 = vmatprep.subr.bf16.mxu0 %v5995
    %6973 = vmatpush1.bf16.msra.mxu0 %v5994
    %6974 = vmatprep.subr.bf16.mxu0 %v5987
    %6975 = vmatpush1.bf16.msra.mxu0 %v5986
    %6976 = vmatprep.subr.bf16.mxu0 %v5979
    %6977 = vmatpush1.bf16.msra.mxu0 %v5978
    %6978 = vmatprep.subr.bf16.mxu0 %v5971
    %6979 = vmatpush1.bf16.msra.mxu0 %v5970
    %6980 = vmatprep.subr.bf16.mxu0 %v5963
    %6981 = vmatpush1.bf16.msra.mxu0 %v5962
    %6982 = vmatprep.subr.bf16.mxu0 %v5955
    %6983 = vmatpush1.bf16.msra.mxu0 %v5954
    %6984 = vmatprep.subr.bf16.mxu0 %v5947
    %6985 = vmatpush1.bf16.msra.mxu0 %v5946
    %6986 = vmatprep.subr.bf16.mxu0 %v6067
    %6987 = vmatpush2.bf16.msra.mxu0 %v6066
    %6988 = vmatprep.subr.bf16.mxu0 %v6059
    %6989 = vmatpush2.bf16.msra.mxu0 %v6058
    %6990 = vmatprep.subr.bf16.mxu0 %v6051
    %6991 = vmatpush2.bf16.msra.mxu0 %v6050
    %6992 = vmatprep.subr.bf16.mxu0 %v6043
    %6993 = vmatpush2.bf16.msra.mxu0 %v6042
    %6994 = vmatprep.subr.bf16.mxu0 %v6035
    %6995 = vmatpush2.bf16.msra.mxu0 %v6034
    %6996 = vmatprep.subr.bf16.mxu0 %v6027
    %6997 = vmatpush2.bf16.msra.mxu0 %v6026
    %6998 = vmatprep.subr.bf16.mxu0 %v6019
    %6999 = vmatpush2.bf16.msra.mxu0 %v6018
    %7000 = vmatprep.subr.bf16.mxu0 %v6011
    %7001 = vmatpush2.bf16.msra.mxu0 %v6010
    %7002 = vmatprep.mubr.bf16.mxu0 %v3849
    %7003 = vmatmul.mubr.bf16.gmra.mxu0 %v3848
    %v7004 = vpop.f32.mrf.mxu0
    %v7005 = vadd.f32 %v4373, %v7004
    %v7006 = vpop.f32.mrf.mxu0
    %v7007 = vadd.f32 %v4377, %v7006
    %v7008 = vpop.f32.mrf.mxu0
    %v7009 = vpop.f32.mrf.mxu0
    %7010 = vdwg.mxu0
    %7011 = vmatprep.subr.bf16.mxu0 %v6131
    %7012 = vmatpush1.bf16.msra.mxu0 %v6130
    %7013 = vmatprep.subr.bf16.mxu0 %v6123
    %7014 = vmatpush1.bf16.msra.mxu0 %v6122
    %7015 = vmatprep.subr.bf16.mxu0 %v6115
    %7016 = vmatpush1.bf16.msra.mxu0 %v6114
    %7017 = vmatprep.subr.bf16.mxu0 %v6107
    %7018 = vmatpush1.bf16.msra.mxu0 %v6106
    %7019 = vmatprep.subr.bf16.mxu0 %v6099
    %7020 = vmatpush1.bf16.msra.mxu0 %v6098
    %7021 = vmatprep.subr.bf16.mxu0 %v6091
    %7022 = vmatpush1.bf16.msra.mxu0 %v6090
    %7023 = vmatprep.subr.bf16.mxu0 %v6083
    %7024 = vmatpush1.bf16.msra.mxu0 %v6082
    %7025 = vmatprep.subr.bf16.mxu0 %v6075
    %7026 = vmatpush1.bf16.msra.mxu0 %v6074
    %7027 = vmatprep.subr.bf16.mxu0 %v6195
    %7028 = vmatpush2.bf16.msra.mxu0 %v6194
    %7029 = vmatprep.subr.bf16.mxu0 %v6187
    %7030 = vmatpush2.bf16.msra.mxu0 %v6186
    %7031 = vmatprep.subr.bf16.mxu0 %v6179
    %7032 = vmatpush2.bf16.msra.mxu0 %v6178
    %7033 = vmatprep.subr.bf16.mxu0 %v6171
    %7034 = vmatpush2.bf16.msra.mxu0 %v6170
    %7035 = vmatprep.subr.bf16.mxu0 %v6163
    %7036 = vmatpush2.bf16.msra.mxu0 %v6162
    %7037 = vmatprep.subr.bf16.mxu0 %v6155
    %7038 = vmatpush2.bf16.msra.mxu0 %v6154
    %7039 = vmatprep.subr.bf16.mxu0 %v6147
    %7040 = vmatpush2.bf16.msra.mxu0 %v6146
    %7041 = vmatprep.subr.bf16.mxu0 %v6139
    %7042 = vmatpush2.bf16.msra.mxu0 %v6138
    %7043 = vmatprep.mubr.bf16.mxu0 %v3851
    %7044 = vmatmul.mubr.bf16.gmra.mxu0 %v3850
    %v7045 = vpop.f32.mrf.mxu0
    %v7046 = vadd.f32 %v7005, %v7045
    %v7047 = vpop.f32.mrf.mxu0
    %v7048 = vadd.f32 %v7007, %v7047
    %v7049 = vpop.f32.mrf.mxu0
    %v7050 = vpop.f32.mrf.mxu0
    %7051 = vdwg.mxu0
    %7052 = vmatprep.subr.bf16.mxu0 %v6259
    %7053 = vmatpush1.bf16.msra.mxu0 %v6258
    %7054 = vmatprep.subr.bf16.mxu0 %v6251
    %7055 = vmatpush1.bf16.msra.mxu0 %v6250
    %7056 = vmatprep.subr.bf16.mxu0 %v6243
    %7057 = vmatpush1.bf16.msra.mxu0 %v6242
    %7058 = vmatprep.subr.bf16.mxu0 %v6235
    %7059 = vmatpush1.bf16.msra.mxu0 %v6234
    %7060 = vmatprep.subr.bf16.mxu0 %v6227
    %7061 = vmatpush1.bf16.msra.mxu0 %v6226
    %7062 = vmatprep.subr.bf16.mxu0 %v6219
    %7063 = vmatpush1.bf16.msra.mxu0 %v6218
    %7064 = vmatprep.subr.bf16.mxu0 %v6211
    %7065 = vmatpush1.bf16.msra.mxu0 %v6210
    %7066 = vmatprep.subr.bf16.mxu0 %v6203
    %7067 = vmatpush1.bf16.msra.mxu0 %v6202
    %7068 = vmatprep.subr.bf16.mxu0 %v6323
    %7069 = vmatpush2.bf16.msra.mxu0 %v6322
    %7070 = vmatprep.subr.bf16.mxu0 %v6315
    %7071 = vmatpush2.bf16.msra.mxu0 %v6314
    %7072 = vmatprep.subr.bf16.mxu0 %v6307
    %7073 = vmatpush2.bf16.msra.mxu0 %v6306
    %7074 = vmatprep.subr.bf16.mxu0 %v6299
    %7075 = vmatpush2.bf16.msra.mxu0 %v6298
    %7076 = vmatprep.subr.bf16.mxu0 %v6291
    %7077 = vmatpush2.bf16.msra.mxu0 %v6290
    %7078 = vmatprep.subr.bf16.mxu0 %v6283
    %7079 = vmatpush2.bf16.msra.mxu0 %v6282
    %7080 = vmatprep.subr.bf16.mxu0 %v6275
    %7081 = vmatpush2.bf16.msra.mxu0 %v6274
    %7082 = vmatprep.subr.bf16.mxu0 %v6267
    %7083 = vmatpush2.bf16.msra.mxu0 %v6266
    %7084 = vmatprep.mubr.bf16.mxu0 %v3853
    %7085 = vmatmul.mubr.bf16.gmra.mxu0 %v3852
    %v7086 = vpop.f32.mrf.mxu0
    %v7087 = vadd.f32 %v7046, %v7086
    %v7088 = vpop.f32.mrf.mxu0
    %v7089 = vadd.f32 %v7048, %v7088
    %v7090 = vpop.f32.mrf.mxu0
    %v7091 = vpop.f32.mrf.mxu0
    %7092 = vdwg.mxu0
    %7093 = vmatprep.subr.bf16.mxu0 %v6387
    %7094 = vmatpush1.bf16.msra.mxu0 %v6386
    %7095 = vmatprep.subr.bf16.mxu0 %v6379
    %7096 = vmatpush1.bf16.msra.mxu0 %v6378
    %7097 = vmatprep.subr.bf16.mxu0 %v6371
    %7098 = vmatpush1.bf16.msra.mxu0 %v6370
    %7099 = vmatprep.subr.bf16.mxu0 %v6363
    %7100 = vmatpush1.bf16.msra.mxu0 %v6362
    %7101 = vmatprep.subr.bf16.mxu0 %v6355
    %7102 = vmatpush1.bf16.msra.mxu0 %v6354
    %7103 = vmatprep.subr.bf16.mxu0 %v6347
    %7104 = vmatpush1.bf16.msra.mxu0 %v6346
    %7105 = vmatprep.subr.bf16.mxu0 %v6339
    %7106 = vmatpush1.bf16.msra.mxu0 %v6338
    %7107 = vmatprep.subr.bf16.mxu0 %v6331
    %7108 = vmatpush1.bf16.msra.mxu0 %v6330
    %7109 = vmatprep.subr.bf16.mxu0 %v6451
    %7110 = vmatpush2.bf16.msra.mxu0 %v6450
    %7111 = vmatprep.subr.bf16.mxu0 %v6443
    %7112 = vmatpush2.bf16.msra.mxu0 %v6442
    %7113 = vmatprep.subr.bf16.mxu0 %v6435
    %7114 = vmatpush2.bf16.msra.mxu0 %v6434
    %7115 = vmatprep.subr.bf16.mxu0 %v6427
    %7116 = vmatpush2.bf16.msra.mxu0 %v6426
    %7117 = vmatprep.subr.bf16.mxu0 %v6419
    %7118 = vmatpush2.bf16.msra.mxu0 %v6418
    %7119 = vmatprep.subr.bf16.mxu0 %v6411
    %7120 = vmatpush2.bf16.msra.mxu0 %v6410
    %7121 = vmatprep.subr.bf16.mxu0 %v6403
    %7122 = vmatpush2.bf16.msra.mxu0 %v6402
    %7123 = vmatprep.subr.bf16.mxu0 %v6395
    %7124 = vmatpush2.bf16.msra.mxu0 %v6394
    %7125 = vmatprep.mubr.bf16.mxu0 %v3855
    %7126 = vmatmul.mubr.bf16.gmra.mxu0 %v3854
    %v7127 = vpop.f32.mrf.mxu0
    %v7128 = vadd.f32 %v7087, %v7127
    %v7129 = vpop.f32.mrf.mxu0
    %v7130 = vadd.f32 %v7089, %v7129
    %v7131 = vpop.f32.mrf.mxu0
    %v7132 = vpop.f32.mrf.mxu0
    %7133 = vdwg.mxu0
    %7134 = vmatprep.subr.bf16.mxu0 %v6005
    %7135 = vmatpush1.bf16.msra.mxu0 %v6004
    %7136 = vmatprep.subr.bf16.mxu0 %v5997
    %7137 = vmatpush1.bf16.msra.mxu0 %v5996
    %7138 = vmatprep.subr.bf16.mxu0 %v5989
    %7139 = vmatpush1.bf16.msra.mxu0 %v5988
    %7140 = vmatprep.subr.bf16.mxu0 %v5981
    %7141 = vmatpush1.bf16.msra.mxu0 %v5980
    %7142 = vmatprep.subr.bf16.mxu0 %v5973
    %7143 = vmatpush1.bf16.msra.mxu0 %v5972
    %7144 = vmatprep.subr.bf16.mxu0 %v5965
    %7145 = vmatpush1.bf16.msra.mxu0 %v5964
    %7146 = vmatprep.subr.bf16.mxu0 %v5957
    %7147 = vmatpush1.bf16.msra.mxu0 %v5956
    %7148 = vmatprep.subr.bf16.mxu0 %v5949
    %7149 = vmatpush1.bf16.msra.mxu0 %v5948
    %7150 = vmatprep.subr.bf16.mxu0 %v6069
    %7151 = vmatpush2.bf16.msra.mxu0 %v6068
    %7152 = vmatprep.subr.bf16.mxu0 %v6061
    %7153 = vmatpush2.bf16.msra.mxu0 %v6060
    %7154 = vmatprep.subr.bf16.mxu0 %v6053
    %7155 = vmatpush2.bf16.msra.mxu0 %v6052
    %7156 = vmatprep.subr.bf16.mxu0 %v6045
    %7157 = vmatpush2.bf16.msra.mxu0 %v6044
    %7158 = vmatprep.subr.bf16.mxu0 %v6037
    %7159 = vmatpush2.bf16.msra.mxu0 %v6036
    %7160 = vmatprep.subr.bf16.mxu0 %v6029
    %7161 = vmatpush2.bf16.msra.mxu0 %v6028
    %7162 = vmatprep.subr.bf16.mxu0 %v6021
    %7163 = vmatpush2.bf16.msra.mxu0 %v6020
    %7164 = vmatprep.subr.bf16.mxu0 %v6013
    %7165 = vmatpush2.bf16.msra.mxu0 %v6012
    %7166 = vmatprep.mubr.bf16.mxu0 %v3849
    %7167 = vmatmul.mubr.bf16.gmra.mxu0 %v3848
    %v7168 = vpop.f32.mrf.mxu0
    %v7169 = vadd.f32 %v4381, %v7168
    %v7170 = vpop.f32.mrf.mxu0
    %v7171 = vadd.f32 %v4385, %v7170
    %v7172 = vpop.f32.mrf.mxu0
    %v7173 = vpop.f32.mrf.mxu0
    %7174 = vdwg.mxu0
    %7175 = vmatprep.subr.bf16.mxu0 %v6133
    %7176 = vmatpush1.bf16.msra.mxu0 %v6132
    %7177 = vmatprep.subr.bf16.mxu0 %v6125
    %7178 = vmatpush1.bf16.msra.mxu0 %v6124
    %7179 = vmatprep.subr.bf16.mxu0 %v6117
    %7180 = vmatpush1.bf16.msra.mxu0 %v6116
    %7181 = vmatprep.subr.bf16.mxu0 %v6109
    %7182 = vmatpush1.bf16.msra.mxu0 %v6108
    %7183 = vmatprep.subr.bf16.mxu0 %v6101
    %7184 = vmatpush1.bf16.msra.mxu0 %v6100
    %7185 = vmatprep.subr.bf16.mxu0 %v6093
    %7186 = vmatpush1.bf16.msra.mxu0 %v6092
    %7187 = vmatprep.subr.bf16.mxu0 %v6085
    %7188 = vmatpush1.bf16.msra.mxu0 %v6084
    %7189 = vmatprep.subr.bf16.mxu0 %v6077
    %7190 = vmatpush1.bf16.msra.mxu0 %v6076
    %7191 = vmatprep.subr.bf16.mxu0 %v6197
    %7192 = vmatpush2.bf16.msra.mxu0 %v6196
    %7193 = vmatprep.subr.bf16.mxu0 %v6189
    %7194 = vmatpush2.bf16.msra.mxu0 %v6188
    %7195 = vmatprep.subr.bf16.mxu0 %v6181
    %7196 = vmatpush2.bf16.msra.mxu0 %v6180
    %7197 = vmatprep.subr.bf16.mxu0 %v6173
    %7198 = vmatpush2.bf16.msra.mxu0 %v6172
    %7199 = vmatprep.subr.bf16.mxu0 %v6165
    %7200 = vmatpush2.bf16.msra.mxu0 %v6164
    %7201 = vmatprep.subr.bf16.mxu0 %v6157
    %7202 = vmatpush2.bf16.msra.mxu0 %v6156
    %7203 = vmatprep.subr.bf16.mxu0 %v6149
    %7204 = vmatpush2.bf16.msra.mxu0 %v6148
    %7205 = vmatprep.subr.bf16.mxu0 %v6141
    %7206 = vmatpush2.bf16.msra.mxu0 %v6140
    %7207 = vmatprep.mubr.bf16.mxu0 %v3851
    %7208 = vmatmul.mubr.bf16.gmra.mxu0 %v3850
    %v7209 = vpop.f32.mrf.mxu0
    %v7210 = vadd.f32 %v7169, %v7209
    %v7211 = vpop.f32.mrf.mxu0
    %v7212 = vadd.f32 %v7171, %v7211
    %v7213 = vpop.f32.mrf.mxu0
    %v7214 = vpop.f32.mrf.mxu0
    %7215 = vdwg.mxu0
    %7216 = vmatprep.subr.bf16.mxu0 %v6261
    %7217 = vmatpush1.bf16.msra.mxu0 %v6260
    %7218 = vmatprep.subr.bf16.mxu0 %v6253
    %7219 = vmatpush1.bf16.msra.mxu0 %v6252
    %7220 = vmatprep.subr.bf16.mxu0 %v6245
    %7221 = vmatpush1.bf16.msra.mxu0 %v6244
    %7222 = vmatprep.subr.bf16.mxu0 %v6237
    %7223 = vmatpush1.bf16.msra.mxu0 %v6236
    %7224 = vmatprep.subr.bf16.mxu0 %v6229
    %7225 = vmatpush1.bf16.msra.mxu0 %v6228
    %7226 = vmatprep.subr.bf16.mxu0 %v6221
    %7227 = vmatpush1.bf16.msra.mxu0 %v6220
    %7228 = vmatprep.subr.bf16.mxu0 %v6213
    %7229 = vmatpush1.bf16.msra.mxu0 %v6212
    %7230 = vmatprep.subr.bf16.mxu0 %v6205
    %7231 = vmatpush1.bf16.msra.mxu0 %v6204
    %7232 = vmatprep.subr.bf16.mxu0 %v6325
    %7233 = vmatpush2.bf16.msra.mxu0 %v6324
    %7234 = vmatprep.subr.bf16.mxu0 %v6317
    %7235 = vmatpush2.bf16.msra.mxu0 %v6316
    %7236 = vmatprep.subr.bf16.mxu0 %v6309
    %7237 = vmatpush2.bf16.msra.mxu0 %v6308
    %7238 = vmatprep.subr.bf16.mxu0 %v6301
    %7239 = vmatpush2.bf16.msra.mxu0 %v6300
    %7240 = vmatprep.subr.bf16.mxu0 %v6293
    %7241 = vmatpush2.bf16.msra.mxu0 %v6292
    %7242 = vmatprep.subr.bf16.mxu0 %v6285
    %7243 = vmatpush2.bf16.msra.mxu0 %v6284
    %7244 = vmatprep.subr.bf16.mxu0 %v6277
    %7245 = vmatpush2.bf16.msra.mxu0 %v6276
    %7246 = vmatprep.subr.bf16.mxu0 %v6269
    %7247 = vmatpush2.bf16.msra.mxu0 %v6268
    %7248 = vmatprep.mubr.bf16.mxu0 %v3853
    %7249 = vmatmul.mubr.bf16.gmra.mxu0 %v3852
    %v7250 = vpop.f32.mrf.mxu0
    %v7251 = vadd.f32 %v7210, %v7250
    %v7252 = vpop.f32.mrf.mxu0
    %v7253 = vadd.f32 %v7212, %v7252
    %v7254 = vpop.f32.mrf.mxu0
    %v7255 = vpop.f32.mrf.mxu0
    %7256 = vdwg.mxu0
    %7257 = vmatprep.subr.bf16.mxu0 %v6389
    %7258 = vmatpush1.bf16.msra.mxu0 %v6388
    %7259 = vmatprep.subr.bf16.mxu0 %v6381
    %7260 = vmatpush1.bf16.msra.mxu0 %v6380
    %7261 = vmatprep.subr.bf16.mxu0 %v6373
    %7262 = vmatpush1.bf16.msra.mxu0 %v6372
    %7263 = vmatprep.subr.bf16.mxu0 %v6365
    %7264 = vmatpush1.bf16.msra.mxu0 %v6364
    %7265 = vmatprep.subr.bf16.mxu0 %v6357
    %7266 = vmatpush1.bf16.msra.mxu0 %v6356
    %7267 = vmatprep.subr.bf16.mxu0 %v6349
    %7268 = vmatpush1.bf16.msra.mxu0 %v6348
    %7269 = vmatprep.subr.bf16.mxu0 %v6341
    %7270 = vmatpush1.bf16.msra.mxu0 %v6340
    %7271 = vmatprep.subr.bf16.mxu0 %v6333
    %7272 = vmatpush1.bf16.msra.mxu0 %v6332
    %7273 = vmatprep.subr.bf16.mxu0 %v6453
    %7274 = vmatpush2.bf16.msra.mxu0 %v6452
    %7275 = vmatprep.subr.bf16.mxu0 %v6445
    %7276 = vmatpush2.bf16.msra.mxu0 %v6444
    %7277 = vmatprep.subr.bf16.mxu0 %v6437
    %7278 = vmatpush2.bf16.msra.mxu0 %v6436
    %7279 = vmatprep.subr.bf16.mxu0 %v6429
    %7280 = vmatpush2.bf16.msra.mxu0 %v6428
    %7281 = vmatprep.subr.bf16.mxu0 %v6421
    %7282 = vmatpush2.bf16.msra.mxu0 %v6420
    %7283 = vmatprep.subr.bf16.mxu0 %v6413
    %7284 = vmatpush2.bf16.msra.mxu0 %v6412
    %7285 = vmatprep.subr.bf16.mxu0 %v6405
    %7286 = vmatpush2.bf16.msra.mxu0 %v6404
    %7287 = vmatprep.subr.bf16.mxu0 %v6397
    %7288 = vmatpush2.bf16.msra.mxu0 %v6396
    %7289 = vmatprep.mubr.bf16.mxu0 %v3855
    %7290 = vmatmul.mubr.bf16.gmra.mxu0 %v3854
    %v7291 = vpop.f32.mrf.mxu0
    %v7292 = vadd.f32 %v7251, %v7291
    %v7293 = vpop.f32.mrf.mxu0
    %v7294 = vadd.f32 %v7253, %v7293
    %v7295 = vpop.f32.mrf.mxu0
    %v7296 = vpop.f32.mrf.mxu0
    %7297 = vdwg.mxu0
    %7298 = vmatprep.subr.bf16.mxu0 %v6007
    %7299 = vmatpush1.bf16.msra.mxu0 %v6006
    %7300 = vmatprep.subr.bf16.mxu0 %v5999
    %7301 = vmatpush1.bf16.msra.mxu0 %v5998
    %7302 = vmatprep.subr.bf16.mxu0 %v5991
    %7303 = vmatpush1.bf16.msra.mxu0 %v5990
    %7304 = vmatprep.subr.bf16.mxu0 %v5983
    %7305 = vmatpush1.bf16.msra.mxu0 %v5982
    %7306 = vmatprep.subr.bf16.mxu0 %v5975
    %7307 = vmatpush1.bf16.msra.mxu0 %v5974
    %7308 = vmatprep.subr.bf16.mxu0 %v5967
    %7309 = vmatpush1.bf16.msra.mxu0 %v5966
    %7310 = vmatprep.subr.bf16.mxu0 %v5959
    %7311 = vmatpush1.bf16.msra.mxu0 %v5958
    %7312 = vmatprep.subr.bf16.mxu0 %v5951
    %7313 = vmatpush1.bf16.msra.mxu0 %v5950
    %7314 = vmatprep.subr.bf16.mxu0 %v6071
    %7315 = vmatpush2.bf16.msra.mxu0 %v6070
    %7316 = vmatprep.subr.bf16.mxu0 %v6063
    %7317 = vmatpush2.bf16.msra.mxu0 %v6062
    %7318 = vmatprep.subr.bf16.mxu0 %v6055
    %7319 = vmatpush2.bf16.msra.mxu0 %v6054
    %7320 = vmatprep.subr.bf16.mxu0 %v6047
    %7321 = vmatpush2.bf16.msra.mxu0 %v6046
    %7322 = vmatprep.subr.bf16.mxu0 %v6039
    %7323 = vmatpush2.bf16.msra.mxu0 %v6038
    %7324 = vmatprep.subr.bf16.mxu0 %v6031
    %7325 = vmatpush2.bf16.msra.mxu0 %v6030
    %7326 = vmatprep.subr.bf16.mxu0 %v6023
    %7327 = vmatpush2.bf16.msra.mxu0 %v6022
    %7328 = vmatprep.subr.bf16.mxu0 %v6015
    %7329 = vmatpush2.bf16.msra.mxu0 %v6014
    %7330 = vmatprep.mubr.bf16.mxu0 %v3849
    %7331 = vmatmul.mubr.bf16.gmra.mxu0 %v3848
    %v7332 = vpop.f32.mrf.mxu0
    %v7333 = vadd.f32 %v4389, %v7332
    %v7334 = vpop.f32.mrf.mxu0
    %v7335 = vadd.f32 %v4393, %v7334
    %v7336 = vpop.f32.mrf.mxu0
    %v7337 = vpop.f32.mrf.mxu0
    %7338 = vdwg.mxu0
    %7339 = vmatprep.subr.bf16.mxu0 %v6135
    %7340 = vmatpush1.bf16.msra.mxu0 %v6134
    %7341 = vmatprep.subr.bf16.mxu0 %v6127
    %7342 = vmatpush1.bf16.msra.mxu0 %v6126
    %7343 = vmatprep.subr.bf16.mxu0 %v6119
    %7344 = vmatpush1.bf16.msra.mxu0 %v6118
    %7345 = vmatprep.subr.bf16.mxu0 %v6111
    %7346 = vmatpush1.bf16.msra.mxu0 %v6110
    %7347 = vmatprep.subr.bf16.mxu0 %v6103
    %7348 = vmatpush1.bf16.msra.mxu0 %v6102
    %7349 = vmatprep.subr.bf16.mxu0 %v6095
    %7350 = vmatpush1.bf16.msra.mxu0 %v6094
    %7351 = vmatprep.subr.bf16.mxu0 %v6087
    %7352 = vmatpush1.bf16.msra.mxu0 %v6086
    %7353 = vmatprep.subr.bf16.mxu0 %v6079
    %7354 = vmatpush1.bf16.msra.mxu0 %v6078
    %7355 = vmatprep.subr.bf16.mxu0 %v6199
    %7356 = vmatpush2.bf16.msra.mxu0 %v6198
    %7357 = vmatprep.subr.bf16.mxu0 %v6191
    %7358 = vmatpush2.bf16.msra.mxu0 %v6190
    %7359 = vmatprep.subr.bf16.mxu0 %v6183
    %7360 = vmatpush2.bf16.msra.mxu0 %v6182
    %7361 = vmatprep.subr.bf16.mxu0 %v6175
    %7362 = vmatpush2.bf16.msra.mxu0 %v6174
    %7363 = vmatprep.subr.bf16.mxu0 %v6167
    %7364 = vmatpush2.bf16.msra.mxu0 %v6166
    %7365 = vmatprep.subr.bf16.mxu0 %v6159
    %7366 = vmatpush2.bf16.msra.mxu0 %v6158
    %7367 = vmatprep.subr.bf16.mxu0 %v6151
    %7368 = vmatpush2.bf16.msra.mxu0 %v6150
    %7369 = vmatprep.subr.bf16.mxu0 %v6143
    %7370 = vmatpush2.bf16.msra.mxu0 %v6142
    %7371 = vmatprep.mubr.bf16.mxu0 %v3851
    %7372 = vmatmul.mubr.bf16.gmra.mxu0 %v3850
    %v7373 = vpop.f32.mrf.mxu0
    %v7374 = vadd.f32 %v7333, %v7373
    %v7375 = vpop.f32.mrf.mxu0
    %v7376 = vadd.f32 %v7335, %v7375
    %v7377 = vpop.f32.mrf.mxu0
    %v7378 = vpop.f32.mrf.mxu0
    %7379 = vdwg.mxu0
    %7380 = vmatprep.subr.bf16.mxu0 %v6263
    %7381 = vmatpush1.bf16.msra.mxu0 %v6262
    %7382 = vmatprep.subr.bf16.mxu0 %v6255
    %7383 = vmatpush1.bf16.msra.mxu0 %v6254
    %7384 = vmatprep.subr.bf16.mxu0 %v6247
    %7385 = vmatpush1.bf16.msra.mxu0 %v6246
    %7386 = vmatprep.subr.bf16.mxu0 %v6239
    %7387 = vmatpush1.bf16.msra.mxu0 %v6238
    %7388 = vmatprep.subr.bf16.mxu0 %v6231
    %7389 = vmatpush1.bf16.msra.mxu0 %v6230
    %7390 = vmatprep.subr.bf16.mxu0 %v6223
    %7391 = vmatpush1.bf16.msra.mxu0 %v6222
    %7392 = vmatprep.subr.bf16.mxu0 %v6215
    %7393 = vmatpush1.bf16.msra.mxu0 %v6214
    %7394 = vmatprep.subr.bf16.mxu0 %v6207
    %7395 = vmatpush1.bf16.msra.mxu0 %v6206
    %7396 = vmatprep.subr.bf16.mxu0 %v6327
    %7397 = vmatpush2.bf16.msra.mxu0 %v6326
    %7398 = vmatprep.subr.bf16.mxu0 %v6319
    %7399 = vmatpush2.bf16.msra.mxu0 %v6318
    %7400 = vmatprep.subr.bf16.mxu0 %v6311
    %7401 = vmatpush2.bf16.msra.mxu0 %v6310
    %7402 = vmatprep.subr.bf16.mxu0 %v6303
    %7403 = vmatpush2.bf16.msra.mxu0 %v6302
    %7404 = vmatprep.subr.bf16.mxu0 %v6295
    %7405 = vmatpush2.bf16.msra.mxu0 %v6294
    %7406 = vmatprep.subr.bf16.mxu0 %v6287
    %7407 = vmatpush2.bf16.msra.mxu0 %v6286
    %7408 = vmatprep.subr.bf16.mxu0 %v6279
    %7409 = vmatpush2.bf16.msra.mxu0 %v6278
    %7410 = vmatprep.subr.bf16.mxu0 %v6271
    %7411 = vmatpush2.bf16.msra.mxu0 %v6270
    %7412 = vmatprep.mubr.bf16.mxu0 %v3853
    %7413 = vmatmul.mubr.bf16.gmra.mxu0 %v3852
    %v7414 = vpop.f32.mrf.mxu0
    %v7415 = vadd.f32 %v7374, %v7414
    %v7416 = vpop.f32.mrf.mxu0
    %v7417 = vadd.f32 %v7376, %v7416
    %v7418 = vpop.f32.mrf.mxu0
    %v7419 = vpop.f32.mrf.mxu0
    %7420 = vdwg.mxu0
    %7421 = vmatprep.subr.bf16.mxu0 %v6391
    %7422 = vmatpush1.bf16.msra.mxu0 %v6390
    %7423 = vmatprep.subr.bf16.mxu0 %v6383
    %7424 = vmatpush1.bf16.msra.mxu0 %v6382
    %7425 = vmatprep.subr.bf16.mxu0 %v6375
    %7426 = vmatpush1.bf16.msra.mxu0 %v6374
    %7427 = vmatprep.subr.bf16.mxu0 %v6367
    %7428 = vmatpush1.bf16.msra.mxu0 %v6366
    %7429 = vmatprep.subr.bf16.mxu0 %v6359
    %7430 = vmatpush1.bf16.msra.mxu0 %v6358
    %7431 = vmatprep.subr.bf16.mxu0 %v6351
    %7432 = vmatpush1.bf16.msra.mxu0 %v6350
    %7433 = vmatprep.subr.bf16.mxu0 %v6343
    %7434 = vmatpush1.bf16.msra.mxu0 %v6342
    %7435 = vmatprep.subr.bf16.mxu0 %v6335
    %7436 = vmatpush1.bf16.msra.mxu0 %v6334
    %7437 = vmatprep.subr.bf16.mxu0 %v6455
    %7438 = vmatpush2.bf16.msra.mxu0 %v6454
    %7439 = vmatprep.subr.bf16.mxu0 %v6447
    %7440 = vmatpush2.bf16.msra.mxu0 %v6446
    %7441 = vmatprep.subr.bf16.mxu0 %v6439
    %7442 = vmatpush2.bf16.msra.mxu0 %v6438
    %7443 = vmatprep.subr.bf16.mxu0 %v6431
    %7444 = vmatpush2.bf16.msra.mxu0 %v6430
    %7445 = vmatprep.subr.bf16.mxu0 %v6423
    %7446 = vmatpush2.bf16.msra.mxu0 %v6422
    %7447 = vmatprep.subr.bf16.mxu0 %v6415
    %7448 = vmatpush2.bf16.msra.mxu0 %v6414
    %7449 = vmatprep.subr.bf16.mxu0 %v6407
    %7450 = vmatpush2.bf16.msra.mxu0 %v6406
    %7451 = vmatprep.subr.bf16.mxu0 %v6399
    %7452 = vmatpush2.bf16.msra.mxu0 %v6398
    %7453 = vmatprep.mubr.bf16.mxu0 %v3855
    %7454 = vmatmul.mubr.bf16.gmra.mxu0 %v3854
    %v7455 = vpop.f32.mrf.mxu0
    %v7456 = vadd.f32 %v7415, %v7455
    %v7457 = vpop.f32.mrf.mxu0
    %v7458 = vadd.f32 %v7417, %v7457
    %v7459 = vpop.f32.mrf.mxu0
    %v7460 = vpop.f32.mrf.mxu0
    %7461 = vdwg.mxu0
    %7462 = vmatprep.subr.bf16.mxu0 %v6009
    %7463 = vmatpush1.bf16.msra.mxu0 %v6008
    %7464 = vmatprep.subr.bf16.mxu0 %v6001
    %7465 = vmatpush1.bf16.msra.mxu0 %v6000
    %7466 = vmatprep.subr.bf16.mxu0 %v5993
    %7467 = vmatpush1.bf16.msra.mxu0 %v5992
    %7468 = vmatprep.subr.bf16.mxu0 %v5985
    %7469 = vmatpush1.bf16.msra.mxu0 %v5984
    %7470 = vmatprep.subr.bf16.mxu0 %v5977
    %7471 = vmatpush1.bf16.msra.mxu0 %v5976
    %7472 = vmatprep.subr.bf16.mxu0 %v5969
    %7473 = vmatpush1.bf16.msra.mxu0 %v5968
    %7474 = vmatprep.subr.bf16.mxu0 %v5961
    %7475 = vmatpush1.bf16.msra.mxu0 %v5960
    %7476 = vmatprep.subr.bf16.mxu0 %v5953
    %7477 = vmatpush1.bf16.msra.mxu0 %v5952
    %7478 = vmatprep.subr.bf16.mxu0 %v6073
    %7479 = vmatpush2.bf16.msra.mxu0 %v6072
    %7480 = vmatprep.subr.bf16.mxu0 %v6065
    %7481 = vmatpush2.bf16.msra.mxu0 %v6064
    %7482 = vmatprep.subr.bf16.mxu0 %v6057
    %7483 = vmatpush2.bf16.msra.mxu0 %v6056
    %7484 = vmatprep.subr.bf16.mxu0 %v6049
    %7485 = vmatpush2.bf16.msra.mxu0 %v6048
    %7486 = vmatprep.subr.bf16.mxu0 %v6041
    %7487 = vmatpush2.bf16.msra.mxu0 %v6040
    %7488 = vmatprep.subr.bf16.mxu0 %v6033
    %7489 = vmatpush2.bf16.msra.mxu0 %v6032
    %7490 = vmatprep.subr.bf16.mxu0 %v6025
    %7491 = vmatpush2.bf16.msra.mxu0 %v6024
    %7492 = vmatprep.subr.bf16.mxu0 %v6017
    %7493 = vmatpush2.bf16.msra.mxu0 %v6016
    %7494 = vmatprep.mubr.bf16.mxu0 %v3849
    %7495 = vmatmul.mubr.bf16.gmra.mxu0 %v3848
    %v7496 = vpop.f32.mrf.mxu0
    %v7497 = vadd.f32 %v4397, %v7496
    %v7498 = vpop.f32.mrf.mxu0
    %v7499 = vadd.f32 %v4401, %v7498
    %v7500 = vpop.f32.mrf.mxu0
    %v7501 = vpop.f32.mrf.mxu0
    %7502 = vdwg.mxu0
    %7503 = vmatprep.subr.bf16.mxu0 %v6137
    %7504 = vmatpush1.bf16.msra.mxu0 %v6136
    %7505 = vmatprep.subr.bf16.mxu0 %v6129
    %7506 = vmatpush1.bf16.msra.mxu0 %v6128
    %7507 = vmatprep.subr.bf16.mxu0 %v6121
    %7508 = vmatpush1.bf16.msra.mxu0 %v6120
    %7509 = vmatprep.subr.bf16.mxu0 %v6113
    %7510 = vmatpush1.bf16.msra.mxu0 %v6112
    %7511 = vmatprep.subr.bf16.mxu0 %v6105
    %7512 = vmatpush1.bf16.msra.mxu0 %v6104
    %7513 = vmatprep.subr.bf16.mxu0 %v6097
    %7514 = vmatpush1.bf16.msra.mxu0 %v6096
    %7515 = vmatprep.subr.bf16.mxu0 %v6089
    %7516 = vmatpush1.bf16.msra.mxu0 %v6088
    %7517 = vmatprep.subr.bf16.mxu0 %v6081
    %7518 = vmatpush1.bf16.msra.mxu0 %v6080
    %7519 = vmatprep.subr.bf16.mxu0 %v6201
    %7520 = vmatpush2.bf16.msra.mxu0 %v6200
    %7521 = vmatprep.subr.bf16.mxu0 %v6193
    %7522 = vmatpush2.bf16.msra.mxu0 %v6192
    %7523 = vmatprep.subr.bf16.mxu0 %v6185
    %7524 = vmatpush2.bf16.msra.mxu0 %v6184
    %7525 = vmatprep.subr.bf16.mxu0 %v6177
    %7526 = vmatpush2.bf16.msra.mxu0 %v6176
    %7527 = vmatprep.subr.bf16.mxu0 %v6169
    %7528 = vmatpush2.bf16.msra.mxu0 %v6168
    %7529 = vmatprep.subr.bf16.mxu0 %v6161
    %7530 = vmatpush2.bf16.msra.mxu0 %v6160
    %7531 = vmatprep.subr.bf16.mxu0 %v6153
    %7532 = vmatpush2.bf16.msra.mxu0 %v6152
    %7533 = vmatprep.subr.bf16.mxu0 %v6145
    %7534 = vmatpush2.bf16.msra.mxu0 %v6144
    %7535 = vmatprep.mubr.bf16.mxu0 %v3851
    %7536 = vmatmul.mubr.bf16.gmra.mxu0 %v3850
    %v7537 = vpop.f32.mrf.mxu0
    %v7538 = vadd.f32 %v7497, %v7537
    %v7539 = vpop.f32.mrf.mxu0
    %v7540 = vadd.f32 %v7499, %v7539
    %v7541 = vpop.f32.mrf.mxu0
    %v7542 = vpop.f32.mrf.mxu0
    %7543 = vdwg.mxu0
    %7544 = vmatprep.subr.bf16.mxu0 %v6265
    %7545 = vmatpush1.bf16.msra.mxu0 %v6264
    %7546 = vmatprep.subr.bf16.mxu0 %v6257
    %7547 = vmatpush1.bf16.msra.mxu0 %v6256
    %7548 = vmatprep.subr.bf16.mxu0 %v6249
    %7549 = vmatpush1.bf16.msra.mxu0 %v6248
    %7550 = vmatprep.subr.bf16.mxu0 %v6241
    %7551 = vmatpush1.bf16.msra.mxu0 %v6240
    %7552 = vmatprep.subr.bf16.mxu0 %v6233
    %7553 = vmatpush1.bf16.msra.mxu0 %v6232
    %7554 = vmatprep.subr.bf16.mxu0 %v6225
    %7555 = vmatpush1.bf16.msra.mxu0 %v6224
    %7556 = vmatprep.subr.bf16.mxu0 %v6217
    %7557 = vmatpush1.bf16.msra.mxu0 %v6216
    %7558 = vmatprep.subr.bf16.mxu0 %v6209
    %7559 = vmatpush1.bf16.msra.mxu0 %v6208
    %7560 = vmatprep.subr.bf16.mxu0 %v6329
    %7561 = vmatpush2.bf16.msra.mxu0 %v6328
    %7562 = vmatprep.subr.bf16.mxu0 %v6321
    %7563 = vmatpush2.bf16.msra.mxu0 %v6320
    %7564 = vmatprep.subr.bf16.mxu0 %v6313
    %7565 = vmatpush2.bf16.msra.mxu0 %v6312
    %7566 = vmatprep.subr.bf16.mxu0 %v6305
    %7567 = vmatpush2.bf16.msra.mxu0 %v6304
    %7568 = vmatprep.subr.bf16.mxu0 %v6297
    %7569 = vmatpush2.bf16.msra.mxu0 %v6296
    %7570 = vmatprep.subr.bf16.mxu0 %v6289
    %7571 = vmatpush2.bf16.msra.mxu0 %v6288
    %7572 = vmatprep.subr.bf16.mxu0 %v6281
    %7573 = vmatpush2.bf16.msra.mxu0 %v6280
    %7574 = vmatprep.subr.bf16.mxu0 %v6273
    %7575 = vmatpush2.bf16.msra.mxu0 %v6272
    %7576 = vmatprep.mubr.bf16.mxu0 %v3853
    %7577 = vmatmul.mubr.bf16.gmra.mxu0 %v3852
    %v7578 = vpop.f32.mrf.mxu0
    %v7579 = vadd.f32 %v7538, %v7578
    %v7580 = vpop.f32.mrf.mxu0
    %v7581 = vadd.f32 %v7540, %v7580
    %v7582 = vpop.f32.mrf.mxu0
    %v7583 = vpop.f32.mrf.mxu0
    %7584 = vdwg.mxu0
    %7585 = vmatprep.subr.bf16.mxu0 %v6393
    %7586 = vmatpush1.bf16.msra.mxu0 %v6392
    %7587 = vmatprep.subr.bf16.mxu0 %v6385
    %7588 = vmatpush1.bf16.msra.mxu0 %v6384
    %7589 = vmatprep.subr.bf16.mxu0 %v6377
    %7590 = vmatpush1.bf16.msra.mxu0 %v6376
    %7591 = vmatprep.subr.bf16.mxu0 %v6369
    %7592 = vmatpush1.bf16.msra.mxu0 %v6368
    %7593 = vmatprep.subr.bf16.mxu0 %v6361
    %7594 = vmatpush1.bf16.msra.mxu0 %v6360
    %7595 = vmatprep.subr.bf16.mxu0 %v6353
    %7596 = vmatpush1.bf16.msra.mxu0 %v6352
    %7597 = vmatprep.subr.bf16.mxu0 %v6345
    %7598 = vmatpush1.bf16.msra.mxu0 %v6344
    %7599 = vmatprep.subr.bf16.mxu0 %v6337
    %7600 = vmatpush1.bf16.msra.mxu0 %v6336
    %7601 = vmatprep.subr.bf16.mxu0 %v6457
    %7602 = vmatpush2.bf16.msra.mxu0 %v6456
    %7603 = vmatprep.subr.bf16.mxu0 %v6449
    %7604 = vmatpush2.bf16.msra.mxu0 %v6448
    %7605 = vmatprep.subr.bf16.mxu0 %v6441
    %7606 = vmatpush2.bf16.msra.mxu0 %v6440
    %7607 = vmatprep.subr.bf16.mxu0 %v6433
    %7608 = vmatpush2.bf16.msra.mxu0 %v6432
    %7609 = vmatprep.subr.bf16.mxu0 %v6425
    %7610 = vmatpush2.bf16.msra.mxu0 %v6424
    %7611 = vmatprep.subr.bf16.mxu0 %v6417
    %7612 = vmatpush2.bf16.msra.mxu0 %v6416
    %7613 = vmatprep.subr.bf16.mxu0 %v6409
    %7614 = vmatpush2.bf16.msra.mxu0 %v6408
    %7615 = vmatprep.subr.bf16.mxu0 %v6401
    %7616 = vmatpush2.bf16.msra.mxu0 %v6400
    %7617 = vmatprep.mubr.bf16.mxu0 %v3855
    %7618 = vmatmul.mubr.bf16.gmra.mxu0 %v3854
    %v7619 = vpop.f32.mrf.mxu0
    %v7620 = vadd.f32 %v7579, %v7619
    %v7621 = vpop.f32.mrf.mxu0
    %v7622 = vadd.f32 %v7581, %v7621
    %v7623 = vpop.f32.mrf.mxu0
    %v7624 = vpop.f32.mrf.mxu0
    %7625 = vdwg.mxu0
    %v7626 = vpack.c.bf16 %v7128, %v7128
    %v7627 = vpack.c.bf16 %v7130, %v7130
    %v7628 = vpack.c.bf16 %v7292, %v7292
    %v7629 = vpack.c.bf16 %v7294, %v7294
    %v7630 = vpack.c.bf16 %v7456, %v7456
    %v7631 = vpack.c.bf16 %v7458, %v7458
    %v7632 = vpack.c.bf16 %v7620, %v7620
    %v7633 = vpack.c.bf16 %v7622, %v7622
    %v7634 = vld [vmem:[#allocation7] sm:$0xf]
    %v7635 = vld [vmem:[#allocation7 + $0x4] sm:$0xf]
    %v7636 = vld [vmem:[#allocation7 + $0x8] sm:$0xf]
    %v7637 = vld [vmem:[#allocation7 + $0xc] sm:$0xf]
    %v7638 = vld [vmem:[#allocation7 + $0x10] sm:$0xf]
    %v7639 = vld [vmem:[#allocation7 + $0x14] sm:$0xf]
    %v7640 = vld [vmem:[#allocation7 + $0x18] sm:$0xf]
    %v7641 = vld [vmem:[#allocation7 + $0x1c] sm:$0xf]
    %v7642 = vld [vmem:[#allocation7 + $0x20] sm:$0xf]
    %v7643 = vld [vmem:[#allocation7 + $0x24] sm:$0xf]
    %v7644 = vld [vmem:[#allocation7 + $0x28] sm:$0xf]
    %v7645 = vld [vmem:[#allocation7 + $0x2c] sm:$0xf]
    %v7646 = vld [vmem:[#allocation7 + $0x30] sm:$0xf]
    %v7647 = vld [vmem:[#allocation7 + $0x34] sm:$0xf]
    %v7648 = vld [vmem:[#allocation7 + $0x38] sm:$0xf]
    %v7649 = vld [vmem:[#allocation7 + $0x3c] sm:$0xf]
    %v7650 = vld [vmem:[#allocation7 + $0x40] sm:$0xf]
    %v7651 = vld [vmem:[#allocation7 + $0x44] sm:$0xf]
    %v7652 = vld [vmem:[#allocation7 + $0x48] sm:$0xf]
    %v7653 = vld [vmem:[#allocation7 + $0x4c] sm:$0xf]
    %v7654 = vld [vmem:[#allocation7 + $0x50] sm:$0xf]
    %v7655 = vld [vmem:[#allocation7 + $0x54] sm:$0xf]
    %v7656 = vld [vmem:[#allocation7 + $0x58] sm:$0xf]
    %v7657 = vld [vmem:[#allocation7 + $0x5c] sm:$0xf]
    %v7658 = vld [vmem:[#allocation7 + $0x60] sm:$0xf]
    %v7659 = vld [vmem:[#allocation7 + $0x64] sm:$0xf]
    %v7660 = vld [vmem:[#allocation7 + $0x68] sm:$0xf]
    %v7661 = vld [vmem:[#allocation7 + $0x6c] sm:$0xf]
    %v7662 = vld [vmem:[#allocation7 + $0x70] sm:$0xf]
    %v7663 = vld [vmem:[#allocation7 + $0x74] sm:$0xf]
    %v7664 = vld [vmem:[#allocation7 + $0x78] sm:$0xf]
    %v7665 = vld [vmem:[#allocation7 + $0x7c] sm:$0xf]
    %v7666 = vld [vmem:[#allocation7 + $0x80] sm:$0xf]
    %v7667 = vld [vmem:[#allocation7 + $0x84] sm:$0xf]
    %v7668 = vld [vmem:[#allocation7 + $0x88] sm:$0xf]
    %v7669 = vld [vmem:[#allocation7 + $0x8c] sm:$0xf]
    %v7670 = vld [vmem:[#allocation7 + $0x90] sm:$0xf]
    %v7671 = vld [vmem:[#allocation7 + $0x94] sm:$0xf]
    %v7672 = vld [vmem:[#allocation7 + $0x98] sm:$0xf]
    %v7673 = vld [vmem:[#allocation7 + $0x9c] sm:$0xf]
    %v7674 = vld [vmem:[#allocation7 + $0xa0] sm:$0xf]
    %v7675 = vld [vmem:[#allocation7 + $0xa4] sm:$0xf]
    %v7676 = vld [vmem:[#allocation7 + $0xa8] sm:$0xf]
    %v7677 = vld [vmem:[#allocation7 + $0xac] sm:$0xf]
    %v7678 = vld [vmem:[#allocation7 + $0xb0] sm:$0xf]
    %v7679 = vld [vmem:[#allocation7 + $0xb4] sm:$0xf]
    %v7680 = vld [vmem:[#allocation7 + $0xb8] sm:$0xf]
    %v7681 = vld [vmem:[#allocation7 + $0xbc] sm:$0xf]
    %v7682 = vld [vmem:[#allocation7 + $0xc0] sm:$0xf]
    %v7683 = vld [vmem:[#allocation7 + $0xc4] sm:$0xf]
    %v7684 = vld [vmem:[#allocation7 + $0xc8] sm:$0xf]
    %v7685 = vld [vmem:[#allocation7 + $0xcc] sm:$0xf]
    %v7686 = vld [vmem:[#allocation7 + $0xd0] sm:$0xf]
    %v7687 = vld [vmem:[#allocation7 + $0xd4] sm:$0xf]
    %v7688 = vld [vmem:[#allocation7 + $0xd8] sm:$0xf]
    %v7689 = vld [vmem:[#allocation7 + $0xdc] sm:$0xf]
    %v7690 = vld [vmem:[#allocation7 + $0xe0] sm:$0xf]
    %v7691 = vld [vmem:[#allocation7 + $0xe4] sm:$0xf]
    %v7692 = vld [vmem:[#allocation7 + $0xe8] sm:$0xf]
    %v7693 = vld [vmem:[#allocation7 + $0xec] sm:$0xf]
    %v7694 = vld [vmem:[#allocation7 + $0xf0] sm:$0xf]
    %v7695 = vld [vmem:[#allocation7 + $0xf4] sm:$0xf]
    %v7696 = vld [vmem:[#allocation7 + $0xf8] sm:$0xf]
    %v7697 = vld [vmem:[#allocation7 + $0xfc] sm:$0xf]
    %v7698 = vld [vmem:[#allocation7 + $0x100] sm:$0xf]
    %v7699 = vld [vmem:[#allocation7 + $0x104] sm:$0xf]
    %v7700 = vld [vmem:[#allocation7 + $0x108] sm:$0xf]
    %v7701 = vld [vmem:[#allocation7 + $0x10c] sm:$0xf]
    %v7702 = vld [vmem:[#allocation7 + $0x110] sm:$0xf]
    %v7703 = vld [vmem:[#allocation7 + $0x114] sm:$0xf]
    %v7704 = vld [vmem:[#allocation7 + $0x118] sm:$0xf]
    %v7705 = vld [vmem:[#allocation7 + $0x11c] sm:$0xf]
    %v7706 = vld [vmem:[#allocation7 + $0x120] sm:$0xf]
    %v7707 = vld [vmem:[#allocation7 + $0x124] sm:$0xf]
    %v7708 = vld [vmem:[#allocation7 + $0x128] sm:$0xf]
    %v7709 = vld [vmem:[#allocation7 + $0x12c] sm:$0xf]
    %v7710 = vld [vmem:[#allocation7 + $0x130] sm:$0xf]
    %v7711 = vld [vmem:[#allocation7 + $0x134] sm:$0xf]
    %v7712 = vld [vmem:[#allocation7 + $0x138] sm:$0xf]
    %v7713 = vld [vmem:[#allocation7 + $0x13c] sm:$0xf]
    %v7714 = vld [vmem:[#allocation7 + $0x140] sm:$0xf]
    %v7715 = vld [vmem:[#allocation7 + $0x144] sm:$0xf]
    %v7716 = vld [vmem:[#allocation7 + $0x148] sm:$0xf]
    %v7717 = vld [vmem:[#allocation7 + $0x14c] sm:$0xf]
    %v7718 = vld [vmem:[#allocation7 + $0x150] sm:$0xf]
    %v7719 = vld [vmem:[#allocation7 + $0x154] sm:$0xf]
    %v7720 = vld [vmem:[#allocation7 + $0x158] sm:$0xf]
    %v7721 = vld [vmem:[#allocation7 + $0x15c] sm:$0xf]
    %v7722 = vld [vmem:[#allocation7 + $0x160] sm:$0xf]
    %v7723 = vld [vmem:[#allocation7 + $0x164] sm:$0xf]
    %v7724 = vld [vmem:[#allocation7 + $0x168] sm:$0xf]
    %v7725 = vld [vmem:[#allocation7 + $0x16c] sm:$0xf]
    %v7726 = vld [vmem:[#allocation7 + $0x170] sm:$0xf]
    %v7727 = vld [vmem:[#allocation7 + $0x174] sm:$0xf]
    %v7728 = vld [vmem:[#allocation7 + $0x178] sm:$0xf]
    %v7729 = vld [vmem:[#allocation7 + $0x17c] sm:$0xf]
    %v7730 = vld [vmem:[#allocation7 + $0x180] sm:$0xf]
    %v7731 = vld [vmem:[#allocation7 + $0x184] sm:$0xf]
    %v7732 = vld [vmem:[#allocation7 + $0x188] sm:$0xf]
    %v7733 = vld [vmem:[#allocation7 + $0x18c] sm:$0xf]
    %v7734 = vld [vmem:[#allocation7 + $0x190] sm:$0xf]
    %v7735 = vld [vmem:[#allocation7 + $0x194] sm:$0xf]
    %v7736 = vld [vmem:[#allocation7 + $0x198] sm:$0xf]
    %v7737 = vld [vmem:[#allocation7 + $0x19c] sm:$0xf]
    %v7738 = vld [vmem:[#allocation7 + $0x1a0] sm:$0xf]
    %v7739 = vld [vmem:[#allocation7 + $0x1a4] sm:$0xf]
    %v7740 = vld [vmem:[#allocation7 + $0x1a8] sm:$0xf]
    %v7741 = vld [vmem:[#allocation7 + $0x1ac] sm:$0xf]
    %v7742 = vld [vmem:[#allocation7 + $0x1b0] sm:$0xf]
    %v7743 = vld [vmem:[#allocation7 + $0x1b4] sm:$0xf]
    %v7744 = vld [vmem:[#allocation7 + $0x1b8] sm:$0xf]
    %v7745 = vld [vmem:[#allocation7 + $0x1bc] sm:$0xf]
    %v7746 = vld [vmem:[#allocation7 + $0x1c0] sm:$0xf]
    %v7747 = vld [vmem:[#allocation7 + $0x1c4] sm:$0xf]
    %v7748 = vld [vmem:[#allocation7 + $0x1c8] sm:$0xf]
    %v7749 = vld [vmem:[#allocation7 + $0x1cc] sm:$0xf]
    %v7750 = vld [vmem:[#allocation7 + $0x1d0] sm:$0xf]
    %v7751 = vld [vmem:[#allocation7 + $0x1d4] sm:$0xf]
    %v7752 = vld [vmem:[#allocation7 + $0x1d8] sm:$0xf]
    %v7753 = vld [vmem:[#allocation7 + $0x1dc] sm:$0xf]
    %v7754 = vld [vmem:[#allocation7 + $0x1e0] sm:$0xf]
    %v7755 = vld [vmem:[#allocation7 + $0x1e4] sm:$0xf]
    %v7756 = vld [vmem:[#allocation7 + $0x1e8] sm:$0xf]
    %v7757 = vld [vmem:[#allocation7 + $0x1ec] sm:$0xf]
    %v7758 = vld [vmem:[#allocation7 + $0x1f0] sm:$0xf]
    %v7759 = vld [vmem:[#allocation7 + $0x1f4] sm:$0xf]
    %v7760 = vld [vmem:[#allocation7 + $0x1f8] sm:$0xf]
    %v7761 = vld [vmem:[#allocation7 + $0x1fc] sm:$0xf]
    %v7762 = vld [vmem:[#allocation9] sm:$0x1]
    %v7764 = vlaneseq
    %v7765 = vshrl.u32 %v7764, 7
    %v7766 = vsub.s32 0, %v7765
    %v7767 = vrot.slane %v7762, %v7766
    %v7897 = vunpack.c.l.b16 %v7634
    %v7898 = vunpack.c.l.b16 %v7635
    %v7899 = vunpack.c.l.b16 %v7636
    %v7900 = vunpack.c.l.b16 %v7637
    %v7901 = vunpack.c.l.b16 %v7638
    %v7902 = vunpack.c.l.b16 %v7639
    %v7903 = vunpack.c.l.b16 %v7640
    %v7904 = vunpack.c.l.b16 %v7641
    %v7905 = vunpack.c.l.b16 %v7642
    %v7906 = vunpack.c.l.b16 %v7643
    %v7907 = vunpack.c.l.b16 %v7644
    %v7908 = vunpack.c.l.b16 %v7645
    %v7909 = vunpack.c.l.b16 %v7646
    %v7910 = vunpack.c.l.b16 %v7647
    %v7911 = vunpack.c.l.b16 %v7648
    %v7912 = vunpack.c.l.b16 %v7649
    %v7913 = vunpack.c.l.b16 %v7650
    %v7914 = vunpack.c.l.b16 %v7651
    %v7915 = vunpack.c.l.b16 %v7652
    %v7916 = vunpack.c.l.b16 %v7653
    %v7917 = vunpack.c.l.b16 %v7654
    %v7918 = vunpack.c.l.b16 %v7655
    %v7919 = vunpack.c.l.b16 %v7656
    %v7920 = vunpack.c.l.b16 %v7657
    %v7921 = vunpack.c.l.b16 %v7658
    %v7922 = vunpack.c.l.b16 %v7659
    %v7923 = vunpack.c.l.b16 %v7660
    %v7924 = vunpack.c.l.b16 %v7661
    %v7925 = vunpack.c.l.b16 %v7662
    %v7926 = vunpack.c.l.b16 %v7663
    %v7927 = vunpack.c.l.b16 %v7664
    %v7928 = vunpack.c.l.b16 %v7665
    %v7929 = vunpack.c.l.b16 %v7666
    %v7930 = vunpack.c.l.b16 %v7667
    %v7931 = vunpack.c.l.b16 %v7668
    %v7932 = vunpack.c.l.b16 %v7669
    %v7933 = vunpack.c.l.b16 %v7670
    %v7934 = vunpack.c.l.b16 %v7671
    %v7935 = vunpack.c.l.b16 %v7672
    %v7936 = vunpack.c.l.b16 %v7673
    %v7937 = vunpack.c.l.b16 %v7674
    %v7938 = vunpack.c.l.b16 %v7675
    %v7939 = vunpack.c.l.b16 %v7676
    %v7940 = vunpack.c.l.b16 %v7677
    %v7941 = vunpack.c.l.b16 %v7678
    %v7942 = vunpack.c.l.b16 %v7679
    %v7943 = vunpack.c.l.b16 %v7680
    %v7944 = vunpack.c.l.b16 %v7681
    %v7945 = vunpack.c.l.b16 %v7682
    %v7946 = vunpack.c.l.b16 %v7683
    %v7947 = vunpack.c.l.b16 %v7684
    %v7948 = vunpack.c.l.b16 %v7685
    %v7949 = vunpack.c.l.b16 %v7686
    %v7950 = vunpack.c.l.b16 %v7687
    %v7951 = vunpack.c.l.b16 %v7688
    %v7952 = vunpack.c.l.b16 %v7689
    %v7953 = vunpack.c.l.b16 %v7690
    %v7954 = vunpack.c.l.b16 %v7691
    %v7955 = vunpack.c.l.b16 %v7692
    %v7956 = vunpack.c.l.b16 %v7693
    %v7957 = vunpack.c.l.b16 %v7694
    %v7958 = vunpack.c.l.b16 %v7695
    %v7959 = vunpack.c.l.b16 %v7696
    %v7960 = vunpack.c.l.b16 %v7697
    %v7961 = vunpack.c.l.b16 %v7698
    %v7962 = vunpack.c.l.b16 %v7699
    %v7963 = vunpack.c.l.b16 %v7700
    %v7964 = vunpack.c.l.b16 %v7701
    %v7965 = vunpack.c.l.b16 %v7702
    %v7966 = vunpack.c.l.b16 %v7703
    %v7967 = vunpack.c.l.b16 %v7704
    %v7968 = vunpack.c.l.b16 %v7705
    %v7969 = vunpack.c.l.b16 %v7706
    %v7970 = vunpack.c.l.b16 %v7707
    %v7971 = vunpack.c.l.b16 %v7708
    %v7972 = vunpack.c.l.b16 %v7709
    %v7973 = vunpack.c.l.b16 %v7710
    %v7974 = vunpack.c.l.b16 %v7711
    %v7975 = vunpack.c.l.b16 %v7712
    %v7976 = vunpack.c.l.b16 %v7713
    %v7977 = vunpack.c.l.b16 %v7714
    %v7978 = vunpack.c.l.b16 %v7715
    %v7979 = vunpack.c.l.b16 %v7716
    %v7980 = vunpack.c.l.b16 %v7717
    %v7981 = vunpack.c.l.b16 %v7718
    %v7982 = vunpack.c.l.b16 %v7719
    %v7983 = vunpack.c.l.b16 %v7720
    %v7984 = vunpack.c.l.b16 %v7721
    %v7985 = vunpack.c.l.b16 %v7722
    %v7986 = vunpack.c.l.b16 %v7723
    %v7987 = vunpack.c.l.b16 %v7724
    %v7988 = vunpack.c.l.b16 %v7725
    %v7989 = vunpack.c.l.b16 %v7726
    %v7990 = vunpack.c.l.b16 %v7727
    %v7991 = vunpack.c.l.b16 %v7728
    %v7992 = vunpack.c.l.b16 %v7729
    %v7993 = vunpack.c.l.b16 %v7730
    %v7994 = vunpack.c.l.b16 %v7731
    %v7995 = vunpack.c.l.b16 %v7732
    %v7996 = vunpack.c.l.b16 %v7733
    %v7997 = vunpack.c.l.b16 %v7734
    %v7998 = vunpack.c.l.b16 %v7735
    %v7999 = vunpack.c.l.b16 %v7736
    %v8000 = vunpack.c.l.b16 %v7737
    %v8001 = vunpack.c.l.b16 %v7738
    %v8002 = vunpack.c.l.b16 %v7739
    %v8003 = vunpack.c.l.b16 %v7740
    %v8004 = vunpack.c.l.b16 %v7741
    %v8005 = vunpack.c.l.b16 %v7742
    %v8006 = vunpack.c.l.b16 %v7743
    %v8007 = vunpack.c.l.b16 %v7744
    %v8008 = vunpack.c.l.b16 %v7745
    %v8009 = vunpack.c.l.b16 %v7746
    %v8010 = vunpack.c.l.b16 %v7747
    %v8011 = vunpack.c.l.b16 %v7748
    %v8012 = vunpack.c.l.b16 %v7749
    %v8013 = vunpack.c.l.b16 %v7750
    %v8014 = vunpack.c.l.b16 %v7751
    %v8015 = vunpack.c.l.b16 %v7752
    %v8016 = vunpack.c.l.b16 %v7753
    %v8017 = vunpack.c.l.b16 %v7754
    %v8018 = vunpack.c.l.b16 %v7755
    %v8019 = vunpack.c.l.b16 %v7756
    %v8020 = vunpack.c.l.b16 %v7757
    %v8021 = vunpack.c.l.b16 %v7758
    %v8022 = vunpack.c.l.b16 %v7759
    %v8023 = vunpack.c.l.b16 %v7760
    %v8024 = vunpack.c.l.b16 %v7761
    %v8025 = vpack.c.b16 %v7898, %v7897
    %v8026 = vpack.c.b16 %v7900, %v7899
    %v8027 = vpack.c.b16 %v7902, %v7901
    %v8028 = vpack.c.b16 %v7904, %v7903
    %v8029 = vpack.c.b16 %v7906, %v7905
    %v8030 = vpack.c.b16 %v7908, %v7907
    %v8031 = vpack.c.b16 %v7910, %v7909
    %v8032 = vpack.c.b16 %v7912, %v7911
    %v8033 = vpack.c.b16 %v7914, %v7913
    %v8034 = vpack.c.b16 %v7916, %v7915
    %v8035 = vpack.c.b16 %v7918, %v7917
    %v8036 = vpack.c.b16 %v7920, %v7919
    %v8037 = vpack.c.b16 %v7922, %v7921
    %v8038 = vpack.c.b16 %v7924, %v7923
    %v8039 = vpack.c.b16 %v7926, %v7925
    %v8040 = vpack.c.b16 %v7928, %v7927
    %v8041 = vpack.c.b16 %v7930, %v7929
    %v8042 = vpack.c.b16 %v7932, %v7931
    %v8043 = vpack.c.b16 %v7934, %v7933
    %v8044 = vpack.c.b16 %v7936, %v7935
    %v8045 = vpack.c.b16 %v7938, %v7937
    %v8046 = vpack.c.b16 %v7940, %v7939
    %v8047 = vpack.c.b16 %v7942, %v7941
    %v8048 = vpack.c.b16 %v7944, %v7943
    %v8049 = vpack.c.b16 %v7946, %v7945
    %v8050 = vpack.c.b16 %v7948, %v7947
    %v8051 = vpack.c.b16 %v7950, %v7949
    %v8052 = vpack.c.b16 %v7952, %v7951
    %v8053 = vpack.c.b16 %v7954, %v7953
    %v8054 = vpack.c.b16 %v7956, %v7955
    %v8055 = vpack.c.b16 %v7958, %v7957
    %v8056 = vpack.c.b16 %v7960, %v7959
    %v8057 = vpack.c.b16 %v7962, %v7961
    %v8058 = vpack.c.b16 %v7964, %v7963
    %v8059 = vpack.c.b16 %v7966, %v7965
    %v8060 = vpack.c.b16 %v7968, %v7967
    %v8061 = vpack.c.b16 %v7970, %v7969
    %v8062 = vpack.c.b16 %v7972, %v7971
    %v8063 = vpack.c.b16 %v7974, %v7973
    %v8064 = vpack.c.b16 %v7976, %v7975
    %v8065 = vpack.c.b16 %v7978, %v7977
    %v8066 = vpack.c.b16 %v7980, %v7979
    %v8067 = vpack.c.b16 %v7982, %v7981
    %v8068 = vpack.c.b16 %v7984, %v7983
    %v8069 = vpack.c.b16 %v7986, %v7985
    %v8070 = vpack.c.b16 %v7988, %v7987
    %v8071 = vpack.c.b16 %v7990, %v7989
    %v8072 = vpack.c.b16 %v7992, %v7991
    %v8073 = vpack.c.b16 %v7994, %v7993
    %v8074 = vpack.c.b16 %v7996, %v7995
    %v8075 = vpack.c.b16 %v7998, %v7997
    %v8076 = vpack.c.b16 %v8000, %v7999
    %v8077 = vpack.c.b16 %v8002, %v8001
    %v8078 = vpack.c.b16 %v8004, %v8003
    %v8079 = vpack.c.b16 %v8006, %v8005
    %v8080 = vpack.c.b16 %v8008, %v8007
    %v8081 = vpack.c.b16 %v8010, %v8009
    %v8082 = vpack.c.b16 %v8012, %v8011
    %v8083 = vpack.c.b16 %v8014, %v8013
    %v8084 = vpack.c.b16 %v8016, %v8015
    %v8085 = vpack.c.b16 %v8018, %v8017
    %v8086 = vpack.c.b16 %v8020, %v8019
    %v8087 = vpack.c.b16 %v8022, %v8021
    %v8088 = vpack.c.b16 %v8024, %v8023
    %8153 = vmatprep.subr.bf16.mxu0 0
    %8154 = vmatpush1.bf16.msra.mxu0 %v8032
    %8155 = vmatprep.subr.bf16.mxu0 0
    %8156 = vmatpush1.bf16.msra.mxu0 %v8031
    %8157 = vmatprep.subr.bf16.mxu0 0
    %8158 = vmatpush1.bf16.msra.mxu0 %v8030
    %8159 = vmatprep.subr.bf16.mxu0 0
    %8160 = vmatpush1.bf16.msra.mxu0 %v8029
    %8161 = vmatprep.subr.bf16.mxu0 0
    %8162 = vmatpush1.bf16.msra.mxu0 %v8028
    %8163 = vmatprep.subr.bf16.mxu0 0
    %8164 = vmatpush1.bf16.msra.mxu0 %v8027
    %8165 = vmatprep.subr.bf16.mxu0 0
    %8166 = vmatpush1.bf16.msra.mxu0 %v8026
    %8167 = vmatprep.subr.bf16.mxu0 0
    %8168 = vmatpush1.bf16.msra.mxu0 %v8025
    %8169 = vmatprep.subr.bf16.mxu0 0
    %8170 = vmatpush2.bf16.msra.mxu0 %v8040
    %8171 = vmatprep.subr.bf16.mxu0 0
    %8172 = vmatpush2.bf16.msra.mxu0 %v8039
    %8173 = vmatprep.subr.bf16.mxu0 0
    %8174 = vmatpush2.bf16.msra.mxu0 %v8038
    %8175 = vmatprep.subr.bf16.mxu0 0
    %8176 = vmatpush2.bf16.msra.mxu0 %v8037
    %8177 = vmatprep.subr.bf16.mxu0 0
    %8178 = vmatpush2.bf16.msra.mxu0 %v8036
    %8179 = vmatprep.subr.bf16.mxu0 0
    %8180 = vmatpush2.bf16.msra.mxu0 %v8035
    %8181 = vmatprep.subr.bf16.mxu0 0
    %8182 = vmatpush2.bf16.msra.mxu0 %v8034
    %8183 = vmatprep.subr.bf16.mxu0 0
    %8184 = vmatpush2.bf16.msra.mxu0 %v8033
    %8185 = vmatprep.mubr.bf16.mxu0 %v7627
    %8186 = vmatmul.mubr.bf16.gmra.mxu0 %v7626
    %v8187 = vpop.f32.mrf.mxu0
    %v8188 = vadd.f32 %v7767, %v8187
    %v8189 = vpop.f32.mrf.mxu0
    %v8190 = vpop.f32.mrf.mxu0
    %v8191 = vpop.f32.mrf.mxu0
    %8192 = vdwg.mxu0
    %8193 = vmatprep.subr.bf16.mxu0 0
    %8194 = vmatpush1.bf16.msra.mxu0 %v8048
    %8195 = vmatprep.subr.bf16.mxu0 0
    %8196 = vmatpush1.bf16.msra.mxu0 %v8047
    %8197 = vmatprep.subr.bf16.mxu0 0
    %8198 = vmatpush1.bf16.msra.mxu0 %v8046
    %8199 = vmatprep.subr.bf16.mxu0 0
    %8200 = vmatpush1.bf16.msra.mxu0 %v8045
    %8201 = vmatprep.subr.bf16.mxu0 0
    %8202 = vmatpush1.bf16.msra.mxu0 %v8044
    %8203 = vmatprep.subr.bf16.mxu0 0
    %8204 = vmatpush1.bf16.msra.mxu0 %v8043
    %8205 = vmatprep.subr.bf16.mxu0 0
    %8206 = vmatpush1.bf16.msra.mxu0 %v8042
    %8207 = vmatprep.subr.bf16.mxu0 0
    %8208 = vmatpush1.bf16.msra.mxu0 %v8041
    %8209 = vmatprep.subr.bf16.mxu0 0
    %8210 = vmatpush2.bf16.msra.mxu0 %v8056
    %8211 = vmatprep.subr.bf16.mxu0 0
    %8212 = vmatpush2.bf16.msra.mxu0 %v8055
    %8213 = vmatprep.subr.bf16.mxu0 0
    %8214 = vmatpush2.bf16.msra.mxu0 %v8054
    %8215 = vmatprep.subr.bf16.mxu0 0
    %8216 = vmatpush2.bf16.msra.mxu0 %v8053
    %8217 = vmatprep.subr.bf16.mxu0 0
    %8218 = vmatpush2.bf16.msra.mxu0 %v8052
    %8219 = vmatprep.subr.bf16.mxu0 0
    %8220 = vmatpush2.bf16.msra.mxu0 %v8051
    %8221 = vmatprep.subr.bf16.mxu0 0
    %8222 = vmatpush2.bf16.msra.mxu0 %v8050
    %8223 = vmatprep.subr.bf16.mxu0 0
    %8224 = vmatpush2.bf16.msra.mxu0 %v8049
    %8225 = vmatprep.mubr.bf16.mxu0 %v7629
    %8226 = vmatmul.mubr.bf16.gmra.mxu0 %v7628
    %v8227 = vpop.f32.mrf.mxu0
    %v8228 = vadd.f32 %v8188, %v8227
    %v8229 = vpop.f32.mrf.mxu0
    %v8230 = vpop.f32.mrf.mxu0
    %v8231 = vpop.f32.mrf.mxu0
    %8232 = vdwg.mxu0
    %8233 = vmatprep.subr.bf16.mxu0 0
    %8234 = vmatpush1.bf16.msra.mxu0 %v8064
    %8235 = vmatprep.subr.bf16.mxu0 0
    %8236 = vmatpush1.bf16.msra.mxu0 %v8063
    %8237 = vmatprep.subr.bf16.mxu0 0
    %8238 = vmatpush1.bf16.msra.mxu0 %v8062
    %8239 = vmatprep.subr.bf16.mxu0 0
    %8240 = vmatpush1.bf16.msra.mxu0 %v8061
    %8241 = vmatprep.subr.bf16.mxu0 0
    %8242 = vmatpush1.bf16.msra.mxu0 %v8060
    %8243 = vmatprep.subr.bf16.mxu0 0
    %8244 = vmatpush1.bf16.msra.mxu0 %v8059
    %8245 = vmatprep.subr.bf16.mxu0 0
    %8246 = vmatpush1.bf16.msra.mxu0 %v8058
    %8247 = vmatprep.subr.bf16.mxu0 0
    %8248 = vmatpush1.bf16.msra.mxu0 %v8057
    %8249 = vmatprep.subr.bf16.mxu0 0
    %8250 = vmatpush2.bf16.msra.mxu0 %v8072
    %8251 = vmatprep.subr.bf16.mxu0 0
    %8252 = vmatpush2.bf16.msra.mxu0 %v8071
    %8253 = vmatprep.subr.bf16.mxu0 0
    %8254 = vmatpush2.bf16.msra.mxu0 %v8070
    %8255 = vmatprep.subr.bf16.mxu0 0
    %8256 = vmatpush2.bf16.msra.mxu0 %v8069
    %8257 = vmatprep.subr.bf16.mxu0 0
    %8258 = vmatpush2.bf16.msra.mxu0 %v8068
    %8259 = vmatprep.subr.bf16.mxu0 0
    %8260 = vmatpush2.bf16.msra.mxu0 %v8067
    %8261 = vmatprep.subr.bf16.mxu0 0
    %8262 = vmatpush2.bf16.msra.mxu0 %v8066
    %8263 = vmatprep.subr.bf16.mxu0 0
    %8264 = vmatpush2.bf16.msra.mxu0 %v8065
    %8265 = vmatprep.mubr.bf16.mxu0 %v7631
    %8266 = vmatmul.mubr.bf16.gmra.mxu0 %v7630
    %v8267 = vpop.f32.mrf.mxu0
    %v8268 = vadd.f32 %v8228, %v8267
    %v8269 = vpop.f32.mrf.mxu0
    %v8270 = vpop.f32.mrf.mxu0
    %v8271 = vpop.f32.mrf.mxu0
    %8272 = vdwg.mxu0
    %8273 = vmatprep.subr.bf16.mxu0 0
    %8274 = vmatpush1.bf16.msra.mxu0 %v8080
    %8275 = vmatprep.subr.bf16.mxu0 0
    %8276 = vmatpush1.bf16.msra.mxu0 %v8079
    %8277 = vmatprep.subr.bf16.mxu0 0
    %8278 = vmatpush1.bf16.msra.mxu0 %v8078
    %8279 = vmatprep.subr.bf16.mxu0 0
    %8280 = vmatpush1.bf16.msra.mxu0 %v8077
    %8281 = vmatprep.subr.bf16.mxu0 0
    %8282 = vmatpush1.bf16.msra.mxu0 %v8076
    %8283 = vmatprep.subr.bf16.mxu0 0
    %8284 = vmatpush1.bf16.msra.mxu0 %v8075
    %8285 = vmatprep.subr.bf16.mxu0 0
    %8286 = vmatpush1.bf16.msra.mxu0 %v8074
    %8287 = vmatprep.subr.bf16.mxu0 0
    %8288 = vmatpush1.bf16.msra.mxu0 %v8073
    %8289 = vmatprep.subr.bf16.mxu0 0
    %8290 = vmatpush2.bf16.msra.mxu0 %v8088
    %8291 = vmatprep.subr.bf16.mxu0 0
    %8292 = vmatpush2.bf16.msra.mxu0 %v8087
    %8293 = vmatprep.subr.bf16.mxu0 0
    %8294 = vmatpush2.bf16.msra.mxu0 %v8086
    %8295 = vmatprep.subr.bf16.mxu0 0
    %8296 = vmatpush2.bf16.msra.mxu0 %v8085
    %8297 = vmatprep.subr.bf16.mxu0 0
    %8298 = vmatpush2.bf16.msra.mxu0 %v8084
    %8299 = vmatprep.subr.bf16.mxu0 0
    %8300 = vmatpush2.bf16.msra.mxu0 %v8083
    %8301 = vmatprep.subr.bf16.mxu0 0
    %8302 = vmatpush2.bf16.msra.mxu0 %v8082
    %8303 = vmatprep.subr.bf16.mxu0 0
    %8304 = vmatpush2.bf16.msra.mxu0 %v8081
    %8305 = vmatprep.mubr.bf16.mxu0 %v7633
    %8306 = vmatmul.mubr.bf16.gmra.mxu0 %v7632
    %v8307 = vpop.f32.mrf.mxu0
    %v8308 = vadd.f32 %v8268, %v8307
    %v8309 = vpop.f32.mrf.mxu0
    %v8310 = vpop.f32.mrf.mxu0
    %v8311 = vpop.f32.mrf.mxu0
    %8312 = vdwg.mxu0
    %8313 = vst [vmem:[%s6] sm:$0xff] %v8308
    // Predicated region
    $region46: #{light_angles_head_fused.1} parent=1 // pred_check
      _
    $region47: #{light_angles_head_fused.1} parent=1 // pred_check_branch
      %8315 = sbr.rel (0) target = $region49
    $region48: #{light_angles_head_fused.1} parent=1 // pred_region
      _
    $region49: #{light_angles_head_fused.1} parent=1 // pred_fallthru
      _
    // Predicated region
    $region50: #{light_angles_head_fused.1} parent=1 // pred_check
      _
    $region51: #{light_angles_head_fused.1} parent=1 // pred_check_branch
      %8317 = sbr.rel (0) target = $region53
    $region52: #{light_angles_head_fused.1} parent=1 // pred_region
      _
    $region53: #{light_angles_head_fused.1} parent=1 // pred_fallthru
      _
    %8318 = vsyncpa [#allocation3], 1
    %8319 = vsyncpa [#allocation5], 1
    %8320 = vsyncpa [#allocation8], 1

</llo_original>
